<compile_context>
chip_gen: v5e
topology: v5e:2x2
jax: 0.10.0
libtpu: 0.0.40
codegen_flags: <defaults>
</compile_context>

<pallas_src>
import jax
import jax.numpy as jnp
from jax.experimental import pallas as pl
from jax.experimental.pallas import tpu as pltpu

IN_FEATURES = 1 * 128 * 128   # 16384
HIDDEN = 100                  # NOT padded in HBM (padding = +28% W1 bytes, pure loss)
OUT = 10
OUT_PAD = 128                 # lane-dense fc2 / output block (unmasked stores)


def mlp_kernel(x_ref, w1_ref, b1_ref, w2_ref, b2_ref, o_ref):
    # fc1: cast x to bf16 inside the kernel (x comes from HBM as f32, one pass).
    x_bf = x_ref[...].astype(jnp.bfloat16)
    h = jnp.dot(x_bf, w1_ref[...], preferred_element_type=jnp.float32)
    h = jnp.maximum(h + b1_ref[...], 0.0)                        # bias + ReLU (f32)
    # fc2 against the zero-padded (100, 128) W2 -> lane-dense (bm, 128) store.
    out = jnp.dot(h, w2_ref[...], preferred_element_type=jnp.float32) + b2_ref[...]
    o_ref[...] = out.astype(o_ref.dtype)


def _pick_batch_tile(batch):
    # Cap bm at 128 so the VMEM plan (f32 x tile double-buffered + resident W1
    # + in-kernel bf16 temp) stays ~30 MiB: inside v7x's 64 MiB physical VMEM
    # and a modest explicit raise over v5e's 16 MiB default scope.
    for cand in (128, 64, 32, 16, 8):
        if batch % cand == 0:
            return cand
    return batch   # e.g. B=2 -> one block equal to the full batch dim (legal)


def prepare_params(w1_t, b1, w2_t, b2):
    """One-time conversion to kernel layout.  Call once at model setup, NOT per
    forward pass (the whole point is to avoid per-call cast/pad HBM traffic).

      w1_t: (16384, 100)  -> bf16, stored transposed (in, out)
      b1  : (100,)        -> (1, 100) f32
      w2_t: (100, 10)     -> (100, 128) f32, zero-padded output lanes
      b2  : (10,)         -> (1, 128) f32, zero-padded
    """
    w1_bf = w1_t.astype(jnp.bfloat16)
    b1_2d = b1.reshape(1, HIDDEN).astype(jnp.float32)
    w2_pad = jnp.zeros((HIDDEN, OUT_PAD), jnp.float32).at[:, :OUT].set(
        w2_t.astype(jnp.float32))
    b2_pad = jnp.zeros((1, OUT_PAD), jnp.float32).at[:, :OUT].set(
        b2.reshape(1, OUT).astype(jnp.float32))
    return w1_bf, b1_2d, w2_pad, b2_pad


def mnist_model_forward(image, w1_bf, b1_2d, w2_pad, b2_pad):
    """image: (B, 1, 128, 128) float32 -> logits (B, 10) float32."""
    B = image.shape[0]
    x = image.reshape(B, IN_FEATURES)            # free reshape, stays f32

    bm = _pick_batch_tile(B)
    grid = (B // bm,)

    cost = pl.CostEstimate(
        flops=2 * B * IN_FEATURES * HIDDEN + 2 * B * HIDDEN * OUT_PAD,
        transcendentals=0,
        bytes_accessed=(B * IN_FEATURES * 4          # x (f32, read once)
                        + IN_FEATURES * HIDDEN * 2   # W1 (bf16, resident, read once)
                        + HIDDEN * 4                 # b1
                        + HIDDEN * OUT_PAD * 4       # W2 (padded)
                        + OUT_PAD * 4                # b2 (padded)
                        + B * OUT_PAD * 4),          # padded logits out
    )

    out_pad = pl.pallas_call(
        mlp_kernel,
        out_shape=jax.ShapeDtypeStruct((B, OUT_PAD), jnp.float32),
        grid_spec=pltpu.PrefetchScalarGridSpec(
            num_scalar_prefetch=0,
            grid=grid,
            in_specs=[
                # x: one batch tile, full K (single fc1 matmul, no K grid axis).
                pl.BlockSpec((bm, IN_FEATURES), lambda i: (i, 0)),
                # W1/W2/biases: constant block index -> DMA'd once, then resident.
                pl.BlockSpec((IN_FEATURES, HIDDEN), lambda i: (0, 0)),
                pl.BlockSpec((1, HIDDEN), lambda i: (0, 0)),
                pl.BlockSpec((HIDDEN, OUT_PAD), lambda i: (0, 0)),
                pl.BlockSpec((1, OUT_PAD), lambda i: (0, 0)),
            ],
            out_specs=pl.BlockSpec((bm, OUT_PAD), lambda i: (i, 0)),
        ),
        compiler_params=pltpu.CompilerParams(
            dimension_semantics=("parallel",),
            vmem_limit_bytes=40 * 1024 * 1024),
        cost_estimate=cost,
    )(x, w1_bf, b1_2d, w2_pad, b2_pad)

    return out_pad[:, :OUT]


if __name__ == "__main__":
    key = jax.random.PRNGKey(0)
    k_img, k_w1, k_b1, k_w2, k_b2 = jax.random.split(key, 5)

    B = 2
    image = jax.random.normal(k_img, (B, 1, 128, 128), dtype=jnp.float32)

    # Deterministic synthetic parameters (shapes match nn.Linear(16384,100),
    # nn.Linear(100,10)); stored as (in_features, out_features) = W^T of PyTorch.
    w1_t = jax.random.normal(k_w1, (IN_FEATURES, HIDDEN), dtype=jnp.float32) * 0.01
    b1 = jax.random.normal(k_b1, (HIDDEN,), dtype=jnp.float32) * 0.01
    w2_t = jax.random.normal(k_w2, (HIDDEN, OUT), dtype=jnp.float32) * 0.1
    b2 = jax.random.normal(k_b2, (OUT,), dtype=jnp.float32) * 0.1

    # One-time parameter preparation (bf16 W1, padded fc2) -- not per call.
    w1_bf, b1_2d, w2_pad, b2_pad = prepare_params(w1_t, b1, w2_t, b2)

    out = mnist_model_forward(image, w1_bf, b1_2d, w2_pad, b2_pad)
    out = jax.block_until_ready(out)
    assert out.shape == (B, OUT)

    # Reference 1: same precision scheme as the kernel (bf16 fc1 operands,
    # f32 accumulation) -- tight check.
    x_flat = image.reshape(B, IN_FEATURES)
    h_ref = jnp.maximum(
        jnp.dot(x_flat.astype(jnp.bfloat16), w1_t.astype(jnp.bfloat16),
                preferred_element_type=jnp.float32) + b1, 0.0)
    ref_bf = jnp.dot(h_ref, w2_t, preferred_element_type=jnp.float32) + b2
    assert jnp.allclose(out, ref_bf, atol=1e-2, rtol=1e-2)

    # Reference 2: full f32 PyTorch-equivalent forward (loose check; bf16 fc1
    # streaming is an intentional precision choice with bounded drift).
    ref_f32 = jnp.maximum(x_flat @ w1_t + b1, 0.0) @ w2_t + b2
    assert jnp.allclose(out, ref_f32, atol=1e-1, rtol=1e-1)

    print("KERNEL_OK")
</pallas_src>

<mosaic_0001>
module attributes {stable_mosaic.version = 11 : i64} {
  func.func @mlp_kernel(%arg0: i32, %arg1: memref<2x16384xf32, #tpu.memory_space<vmem>>, %arg2: memref<16384x100xbf16, #tpu.memory_space<vmem>>, %arg3: memref<1x100xf32, #tpu.memory_space<vmem>>, %arg4: memref<100x128xf32, #tpu.memory_space<vmem>>, %arg5: memref<1x128xf32, #tpu.memory_space<vmem>>, %arg6: memref<2x128xf32, #tpu.memory_space<vmem>>) attributes {dimension_semantics = [#tpu.dimension_semantics<parallel>], iteration_bounds = array<i64: 1>, scalar_prefetch = 0 : i64, scratch_operands = 0 : i64, tpu.core_type = #tpu.core_type<tc>, window_params = [{transform_indices = @transform_0, window_bounds = array<i64: 2, 16384>}, {pipeline_mode = #tpu.pipeline_mode<synchronous>, transform_indices = @transform_1, window_bounds = array<i64: 16384, 100>}, {pipeline_mode = #tpu.pipeline_mode<synchronous>, transform_indices = @transform_2, window_bounds = array<i64: 1, 100>}, {pipeline_mode = #tpu.pipeline_mode<synchronous>, transform_indices = @transform_3, window_bounds = array<i64: 100, 128>}, {pipeline_mode = #tpu.pipeline_mode<synchronous>, transform_indices = @transform_4, window_bounds = array<i64: 1, 128>}, {transform_indices = @transform_5, window_bounds = array<i64: 2, 128>}]} {
    %c0 = arith.constant 0 : index
    %c0_0 = arith.constant 0 : index
    %0 = vector.load %arg1[%c0, %c0_0] : memref<2x16384xf32, #tpu.memory_space<vmem>>, vector<2x16384xf32>
    %1 = arith.truncf %0 : vector<2x16384xf32> to vector<2x16384xbf16>
    %c0_1 = arith.constant 0 : index
    %c0_2 = arith.constant 0 : index
    %2 = vector.load %arg2[%c0_1, %c0_2] : memref<16384x100xbf16, #tpu.memory_space<vmem>>, vector<16384x100xbf16>
    %cst = arith.constant dense<0.000000e+00> : vector<2x100xf32>
    %3 = tpu.matmul %1, %2, %cst {dimension_numbers = #tpu.dot_dimension_numbers<[1], [0], [0], [1], [0, 0, 1, 1], [], []>} : vector<2x16384xbf16>, vector<16384x100xbf16>, vector<2x100xf32> -> vector<2x100xf32>
    %c0_3 = arith.constant 0 : index
    %c0_4 = arith.constant 0 : index
    %4 = vector.load %arg3[%c0_3, %c0_4] : memref<1x100xf32, #tpu.memory_space<vmem>>, vector<1x100xf32>
    %5 = vector.broadcast %4 : vector<1x100xf32> to vector<2x100xf32>
    %6 = arith.addf %3, %5 : vector<2x100xf32>
    %cst_5 = arith.constant 0.000000e+00 : f32
    %7 = vector.broadcast %cst_5 : f32 to vector<2x100xf32>
    %8 = arith.maximumf %6, %7 : vector<2x100xf32>
    %c0_6 = arith.constant 0 : index
    %c0_7 = arith.constant 0 : index
    %9 = vector.load %arg4[%c0_6, %c0_7] : memref<100x128xf32, #tpu.memory_space<vmem>>, vector<100x128xf32>
    %cst_8 = arith.constant dense<0.000000e+00> : vector<2x128xf32>
    %10 = tpu.matmul %8, %9, %cst_8 {dimension_numbers = #tpu.dot_dimension_numbers<[1], [0], [0], [1], [0, 0, 1, 1], [], []>} : vector<2x100xf32>, vector<100x128xf32>, vector<2x128xf32> -> vector<2x128xf32>
    %c0_9 = arith.constant 0 : index
    %c0_10 = arith.constant 0 : index
    %11 = vector.load %arg5[%c0_9, %c0_10] : memref<1x128xf32, #tpu.memory_space<vmem>>, vector<1x128xf32>
    %12 = vector.broadcast %11 : vector<1x128xf32> to vector<2x128xf32>
    %13 = arith.addf %10, %12 : vector<2x128xf32>
    %c0_11 = arith.constant 0 : index
    %c0_12 = arith.constant 0 : index
    %14 = vector.load %arg6[%c0_11, %c0_12] : memref<2x128xf32, #tpu.memory_space<vmem>>, vector<2x128xf32>
    tpu.vector_store %arg6[%c0_11, %c0_12], %13 {strides = array<i32>} : memref<2x128xf32, #tpu.memory_space<vmem>>, vector<2x128xf32>,
    return
  }
  func.func @transform_0(%arg0: i32) -> (i32, i32) {
    %c0_i32 = arith.constant 0 : i32
    %c0_i32_0 = arith.constant 0 : i32
    return %arg0, %c0_i32 : i32, i32
  }
  func.func @transform_1(%arg0: i32) -> (i32, i32) {
    %c0_i32 = arith.constant 0 : i32
    %c0_i32_0 = arith.constant 0 : i32
    %c0_i32_1 = arith.constant 0 : i32
    return %c0_i32, %c0_i32_0 : i32, i32
  }
  func.func @transform_2(%arg0: i32) -> (i32, i32) {
    %c0_i32 = arith.constant 0 : i32
    %c0_i32_0 = arith.constant 0 : i32
    %c0_i32_1 = arith.constant 0 : i32
    return %c0_i32, %c0_i32_0 : i32, i32
  }
  func.func @transform_3(%arg0: i32) -> (i32, i32) {
    %c0_i32 = arith.constant 0 : i32
    %c0_i32_0 = arith.constant 0 : i32
    %c0_i32_1 = arith.constant 0 : i32
    return %c0_i32, %c0_i32_0 : i32, i32
  }
  func.func @transform_4(%arg0: i32) -> (i32, i32) {
    %c0_i32 = arith.constant 0 : i32
    %c0_i32_0 = arith.constant 0 : i32
    %c0_i32_1 = arith.constant 0 : i32
    return %c0_i32, %c0_i32_0 : i32, i32
  }
  func.func @transform_5(%arg0: i32) -> (i32, i32) {
    %c0_i32 = arith.constant 0 : i32
    %c0_i32_0 = arith.constant 0 : i32
    return %arg0, %c0_i32 : i32, i32
  }
}

</mosaic_0001>

<llo_original>
// kernel: tpu_custom_call.1
$region0: #{tpu_custom_call.1}
  #allocation0 [shape = 'u32[]', space=smem, size = 0x4, offset = 0x4, fixed_abs, tag = 'smem constant byte address 0x4 - core index']
  #allocation1 [shape = 'u32[72,128]{1,0:T(1,128)}', space=vmem, size = 0x9000, scoped, tag = 'internal scratch']
  %s0 = inlined_call_operand.vmem [shape: f32[2,16384], index: 0, kind: input, shape index: {}]
  %s1 = inlined_call_operand.vmem [shape: bf16[16384,100], index: 1, kind: input, shape index: {}]
  %s2 = inlined_call_operand.vmem [shape: f32[1,100], index: 2, kind: input, shape index: {}]
  %s3 = inlined_call_operand.vmem [shape: f32[100,128], index: 3, kind: input, shape index: {}]
  %s4 = inlined_call_operand.vmem [shape: f32[1,128], index: 4, kind: input, shape index: {}]
  %s5 = inlined_call_operand.hbm [shape: f32[2,128], index: 5, kind: output, shape index: {}]
  %s6 = sld [smem:[#allocation0]]
  $region30: #{tpu_custom_call.1} parent=0
    _
  %s8 = ssub.s32 1, %s6
  %s9 = scalar_select 0, %s8, %s6
  $region1: #{tpu_custom_call.1} parent=0
    #allocation2 [shape = 'u8[1024]{0}', space=vmem, size = 0x400, scoped, tag = 'output window, operand 0, single buffered']
    #allocation3 [shape = 's32[1]{0}', space=sflag, size = 0x4, scoped, tag = 'scoped memory for tpu_custom_call.1']
    %10 = vsyncpa [#allocation3], 0
    // Predicated region
    $region2: #{tpu_custom_call.1} parent=1 // pred_check
      _
    $region3: #{tpu_custom_call.1} parent=1 // pred_check_branch
      %12 = sbr.rel (0) target = $region5
    $region4: #{tpu_custom_call.1} parent=1 // pred_region
      _
    $region5: #{tpu_custom_call.1} parent=1 // pred_fallthru
      _
    // Predicated region
    $region6: #{tpu_custom_call.1} parent=1 // pred_check
      _
    $region7: #{tpu_custom_call.1} parent=1 // pred_check_branch
      %14 = sbr.rel (0) target = $region9
    $region8: #{tpu_custom_call.1} parent=1 // pred_region
      _
    $region9: #{tpu_custom_call.1} parent=1 // pred_fallthru
      _
    // Predicated region
    $region10: #{tpu_custom_call.1} parent=1 // pred_check
      _
    $region11: #{tpu_custom_call.1} parent=1 // pred_check_branch
      %16 = sbr.rel (0) target = $region13
    $region12: #{tpu_custom_call.1} parent=1 // pred_region
      _
    $region13: #{tpu_custom_call.1} parent=1 // pred_fallthru
      _
    // Predicated region
    $region14: #{tpu_custom_call.1} parent=1 // pred_check
      _
    $region15: #{tpu_custom_call.1} parent=1 // pred_check_branch
      %18 = sbr.rel (0) target = $region17
    $region16: #{tpu_custom_call.1} parent=1 // pred_region
      _
    $region17: #{tpu_custom_call.1} parent=1 // pred_fallthru
      _
    // Predicated region
    $region18: #{tpu_custom_call.1} parent=1 // pred_check
      _
    $region19: #{tpu_custom_call.1} parent=1 // pred_check_branch
      %20 = sbr.rel (0) target = $region21
    $region20: #{tpu_custom_call.1} parent=1 // pred_region
      _
    $region21: #{tpu_custom_call.1} parent=1 // pred_fallthru
      _
    %v21 = vld [vmem:[%s0] sm:$0xff]
    %v22 = vld [vmem:[%s0 + $0x8] sm:$0xff]
    %v23 = vld [vmem:[%s0 + $0x10] sm:$0xff]
    %v24 = vld [vmem:[%s0 + $0x18] sm:$0xff]
    %v25 = vld [vmem:[%s0 + $0x20] sm:$0xff]
    %v26 = vld [vmem:[%s0 + $0x28] sm:$0xff]
    %v27 = vld [vmem:[%s0 + $0x30] sm:$0xff]
    %v28 = vld [vmem:[%s0 + $0x38] sm:$0xff]
    %v29 = vld [vmem:[%s0 + $0x40] sm:$0xff]
    %v30 = vld [vmem:[%s0 + $0x48] sm:$0xff]
    %v31 = vld [vmem:[%s0 + $0x50] sm:$0xff]
    %v32 = vld [vmem:[%s0 + $0x58] sm:$0xff]
    %v33 = vld [vmem:[%s0 + $0x60] sm:$0xff]
    %v34 = vld [vmem:[%s0 + $0x68] sm:$0xff]
    %v35 = vld [vmem:[%s0 + $0x70] sm:$0xff]
    %v36 = vld [vmem:[%s0 + $0x78] sm:$0xff]
    %v37 = vld [vmem:[%s0 + $0x80] sm:$0xff]
    %v38 = vld [vmem:[%s0 + $0x88] sm:$0xff]
    %v39 = vld [vmem:[%s0 + $0x90] sm:$0xff]
    %v40 = vld [vmem:[%s0 + $0x98] sm:$0xff]
    %v41 = vld [vmem:[%s0 + $0xa0] sm:$0xff]
    %v42 = vld [vmem:[%s0 + $0xa8] sm:$0xff]
    %v43 = vld [vmem:[%s0 + $0xb0] sm:$0xff]
    %v44 = vld [vmem:[%s0 + $0xb8] sm:$0xff]
    %v45 = vld [vmem:[%s0 + $0xc0] sm:$0xff]
    %v46 = vld [vmem:[%s0 + $0xc8] sm:$0xff]
    %v47 = vld [vmem:[%s0 + $0xd0] sm:$0xff]
    %v48 = vld [vmem:[%s0 + $0xd8] sm:$0xff]
    %v49 = vld [vmem:[%s0 + $0xe0] sm:$0xff]
    %v50 = vld [vmem:[%s0 + $0xe8] sm:$0xff]
    %v51 = vld [vmem:[%s0 + $0xf0] sm:$0xff]
    %v52 = vld [vmem:[%s0 + $0xf8] sm:$0xff]
    %85 = vst [vmem:[#allocation1] ss:$4 sm:$0xff] %v21
    %s86 = scalar_lea.vmem [#allocation1], 32
    %87 = vst [vmem:[%s86] ss:$4 sm:$0xff] %v22
    %v88 = vld.sshfl [vmem:[#allocation1] sm:$0xff pattern:$0x73625140]
    %v89 = vld.sshfl [vmem:[#allocation1 + $0x8] sm:$0xff pattern:$0x73625140]
    %v90 = vld.sshfl [vmem:[#allocation1 + $0x10] sm:$0xff pattern:$0x73625140]
    %v91 = vld.sshfl [vmem:[#allocation1 + $0x18] sm:$0xff pattern:$0x73625140]
    %v92 = vld.sshfl [vmem:[#allocation1 + $0x20] sm:$0xff pattern:$0x73625140]
    %v93 = vld.sshfl [vmem:[#allocation1 + $0x28] sm:$0xff pattern:$0x73625140]
    %v94 = vld.sshfl [vmem:[#allocation1 + $0x30] sm:$0xff pattern:$0x73625140]
    %v95 = vld.sshfl [vmem:[#allocation1 + $0x38] sm:$0xff pattern:$0x73625140]
    %96 = vst [vmem:[#allocation1] ss:$4 sm:$0xff] %v23
    %97 = vst [vmem:[%s86] ss:$4 sm:$0xff] %v24
    %v98 = vld.sshfl [vmem:[#allocation1] sm:$0xff pattern:$0x73625140]
    %v99 = vld.sshfl [vmem:[#allocation1 + $0x8] sm:$0xff pattern:$0x73625140]
    %v100 = vld.sshfl [vmem:[#allocation1 + $0x10] sm:$0xff pattern:$0x73625140]
    %v101 = vld.sshfl [vmem:[#allocation1 + $0x18] sm:$0xff pattern:$0x73625140]
    %v102 = vld.sshfl [vmem:[#allocation1 + $0x20] sm:$0xff pattern:$0x73625140]
    %v103 = vld.sshfl [vmem:[#allocation1 + $0x28] sm:$0xff pattern:$0x73625140]
    %v104 = vld.sshfl [vmem:[#allocation1 + $0x30] sm:$0xff pattern:$0x73625140]
    %v105 = vld.sshfl [vmem:[#allocation1 + $0x38] sm:$0xff pattern:$0x73625140]
    %106 = vst [vmem:[#allocation1] ss:$4 sm:$0xff] %v25
    %107 = vst [vmem:[%s86] ss:$4 sm:$0xff] %v26
    %v108 = vld.sshfl [vmem:[#allocation1] sm:$0xff pattern:$0x73625140]
    %v109 = vld.sshfl [vmem:[#allocation1 + $0x8] sm:$0xff pattern:$0x73625140]
    %v110 = vld.sshfl [vmem:[#allocation1 + $0x10] sm:$0xff pattern:$0x73625140]
    %v111 = vld.sshfl [vmem:[#allocation1 + $0x18] sm:$0xff pattern:$0x73625140]
    %v112 = vld.sshfl [vmem:[#allocation1 + $0x20] sm:$0xff pattern:$0x73625140]
    %v113 = vld.sshfl [vmem:[#allocation1 + $0x28] sm:$0xff pattern:$0x73625140]
    %v114 = vld.sshfl [vmem:[#allocation1 + $0x30] sm:$0xff pattern:$0x73625140]
    %v115 = vld.sshfl [vmem:[#allocation1 + $0x38] sm:$0xff pattern:$0x73625140]
    %116 = vst [vmem:[#allocation1] ss:$4 sm:$0xff] %v27
    %117 = vst [vmem:[%s86] ss:$4 sm:$0xff] %v28
    %v118 = vld.sshfl [vmem:[#allocation1] sm:$0xff pattern:$0x73625140]
    %v119 = vld.sshfl [vmem:[#allocation1 + $0x8] sm:$0xff pattern:$0x73625140]
    %v120 = vld.sshfl [vmem:[#allocation1 + $0x10] sm:$0xff pattern:$0x73625140]
    %v121 = vld.sshfl [vmem:[#allocation1 + $0x18] sm:$0xff pattern:$0x73625140]
    %v122 = vld.sshfl [vmem:[#allocation1 + $0x20] sm:$0xff pattern:$0x73625140]
    %v123 = vld.sshfl [vmem:[#allocation1 + $0x28] sm:$0xff pattern:$0x73625140]
    %v124 = vld.sshfl [vmem:[#allocation1 + $0x30] sm:$0xff pattern:$0x73625140]
    %v125 = vld.sshfl [vmem:[#allocation1 + $0x38] sm:$0xff pattern:$0x73625140]
    %126 = vst [vmem:[#allocation1] ss:$4 sm:$0xff] %v29
    %127 = vst [vmem:[%s86] ss:$4 sm:$0xff] %v30
    %v128 = vld.sshfl [vmem:[#allocation1] sm:$0xff pattern:$0x73625140]
    %v129 = vld.sshfl [vmem:[#allocation1 + $0x8] sm:$0xff pattern:$0x73625140]
    %v130 = vld.sshfl [vmem:[#allocation1 + $0x10] sm:$0xff pattern:$0x73625140]
    %v131 = vld.sshfl [vmem:[#allocation1 + $0x18] sm:$0xff pattern:$0x73625140]
    %v132 = vld.sshfl [vmem:[#allocation1 + $0x20] sm:$0xff pattern:$0x73625140]
    %v133 = vld.sshfl [vmem:[#allocation1 + $0x28] sm:$0xff pattern:$0x73625140]
    %v134 = vld.sshfl [vmem:[#allocation1 + $0x30] sm:$0xff pattern:$0x73625140]
    %v135 = vld.sshfl [vmem:[#allocation1 + $0x38] sm:$0xff pattern:$0x73625140]
    %136 = vst [vmem:[#allocation1] ss:$4 sm:$0xff] %v31
    %137 = vst [vmem:[%s86] ss:$4 sm:$0xff] %v32
    %v138 = vld.sshfl [vmem:[#allocation1] sm:$0xff pattern:$0x73625140]
    %v139 = vld.sshfl [vmem:[#allocation1 + $0x8] sm:$0xff pattern:$0x73625140]
    %v140 = vld.sshfl [vmem:[#allocation1 + $0x10] sm:$0xff pattern:$0x73625140]
    %v141 = vld.sshfl [vmem:[#allocation1 + $0x18] sm:$0xff pattern:$0x73625140]
    %v142 = vld.sshfl [vmem:[#allocation1 + $0x20] sm:$0xff pattern:$0x73625140]
    %v143 = vld.sshfl [vmem:[#allocation1 + $0x28] sm:$0xff pattern:$0x73625140]
    %v144 = vld.sshfl [vmem:[#allocation1 + $0x30] sm:$0xff pattern:$0x73625140]
    %v145 = vld.sshfl [vmem:[#allocation1 + $0x38] sm:$0xff pattern:$0x73625140]
    %146 = vst [vmem:[#allocation1] ss:$4 sm:$0xff] %v33
    %147 = vst [vmem:[%s86] ss:$4 sm:$0xff] %v34
    %v148 = vld.sshfl [vmem:[#allocation1] sm:$0xff pattern:$0x73625140]
    %v149 = vld.sshfl [vmem:[#allocation1 + $0x8] sm:$0xff pattern:$0x73625140]
    %v150 = vld.sshfl [vmem:[#allocation1 + $0x10] sm:$0xff pattern:$0x73625140]
    %v151 = vld.sshfl [vmem:[#allocation1 + $0x18] sm:$0xff pattern:$0x73625140]
    %v152 = vld.sshfl [vmem:[#allocation1 + $0x20] sm:$0xff pattern:$0x73625140]
    %v153 = vld.sshfl [vmem:[#allocation1 + $0x28] sm:$0xff pattern:$0x73625140]
    %v154 = vld.sshfl [vmem:[#allocation1 + $0x30] sm:$0xff pattern:$0x73625140]
    %v155 = vld.sshfl [vmem:[#allocation1 + $0x38] sm:$0xff pattern:$0x73625140]
    %156 = vst [vmem:[#allocation1] ss:$4 sm:$0xff] %v35
    %157 = vst [vmem:[%s86] ss:$4 sm:$0xff] %v36
    %v158 = vld.sshfl [vmem:[#allocation1] sm:$0xff pattern:$0x73625140]
    %v159 = vld.sshfl [vmem:[#allocation1 + $0x8] sm:$0xff pattern:$0x73625140]
    %v160 = vld.sshfl [vmem:[#allocation1 + $0x10] sm:$0xff pattern:$0x73625140]
    %v161 = vld.sshfl [vmem:[#allocation1 + $0x18] sm:$0xff pattern:$0x73625140]
    %v162 = vld.sshfl [vmem:[#allocation1 + $0x20] sm:$0xff pattern:$0x73625140]
    %v163 = vld.sshfl [vmem:[#allocation1 + $0x28] sm:$0xff pattern:$0x73625140]
    %v164 = vld.sshfl [vmem:[#allocation1 + $0x30] sm:$0xff pattern:$0x73625140]
    %v165 = vld.sshfl [vmem:[#allocation1 + $0x38] sm:$0xff pattern:$0x73625140]
    %166 = vst [vmem:[#allocation1] ss:$4 sm:$0xff] %v37
    %167 = vst [vmem:[%s86] ss:$4 sm:$0xff] %v38
    %v168 = vld.sshfl [vmem:[#allocation1] sm:$0xff pattern:$0x73625140]
    %v169 = vld.sshfl [vmem:[#allocation1 + $0x8] sm:$0xff pattern:$0x73625140]
    %v170 = vld.sshfl [vmem:[#allocation1 + $0x10] sm:$0xff pattern:$0x73625140]
    %v171 = vld.sshfl [vmem:[#allocation1 + $0x18] sm:$0xff pattern:$0x73625140]
    %v172 = vld.sshfl [vmem:[#allocation1 + $0x20] sm:$0xff pattern:$0x73625140]
    %v173 = vld.sshfl [vmem:[#allocation1 + $0x28] sm:$0xff pattern:$0x73625140]
    %v174 = vld.sshfl [vmem:[#allocation1 + $0x30] sm:$0xff pattern:$0x73625140]
    %v175 = vld.sshfl [vmem:[#allocation1 + $0x38] sm:$0xff pattern:$0x73625140]
    %176 = vst [vmem:[#allocation1] ss:$4 sm:$0xff] %v39
    %177 = vst [vmem:[%s86] ss:$4 sm:$0xff] %v40
    %v178 = vld.sshfl [vmem:[#allocation1] sm:$0xff pattern:$0x73625140]
    %v179 = vld.sshfl [vmem:[#allocation1 + $0x8] sm:$0xff pattern:$0x73625140]
    %v180 = vld.sshfl [vmem:[#allocation1 + $0x10] sm:$0xff pattern:$0x73625140]
    %v181 = vld.sshfl [vmem:[#allocation1 + $0x18] sm:$0xff pattern:$0x73625140]
    %v182 = vld.sshfl [vmem:[#allocation1 + $0x20] sm:$0xff pattern:$0x73625140]
    %v183 = vld.sshfl [vmem:[#allocation1 + $0x28] sm:$0xff pattern:$0x73625140]
    %v184 = vld.sshfl [vmem:[#allocation1 + $0x30] sm:$0xff pattern:$0x73625140]
    %v185 = vld.sshfl [vmem:[#allocation1 + $0x38] sm:$0xff pattern:$0x73625140]
    %186 = vst [vmem:[#allocation1] ss:$4 sm:$0xff] %v41
    %187 = vst [vmem:[%s86] ss:$4 sm:$0xff] %v42
    %v188 = vld.sshfl [vmem:[#allocation1] sm:$0xff pattern:$0x73625140]
    %v189 = vld.sshfl [vmem:[#allocation1 + $0x8] sm:$0xff pattern:$0x73625140]
    %v190 = vld.sshfl [vmem:[#allocation1 + $0x10] sm:$0xff pattern:$0x73625140]
    %v191 = vld.sshfl [vmem:[#allocation1 + $0x18] sm:$0xff pattern:$0x73625140]
    %v192 = vld.sshfl [vmem:[#allocation1 + $0x20] sm:$0xff pattern:$0x73625140]
    %v193 = vld.sshfl [vmem:[#allocation1 + $0x28] sm:$0xff pattern:$0x73625140]
    %v194 = vld.sshfl [vmem:[#allocation1 + $0x30] sm:$0xff pattern:$0x73625140]
    %v195 = vld.sshfl [vmem:[#allocation1 + $0x38] sm:$0xff pattern:$0x73625140]
    %196 = vst [vmem:[#allocation1] ss:$4 sm:$0xff] %v43
    %197 = vst [vmem:[%s86] ss:$4 sm:$0xff] %v44
    %v198 = vld.sshfl [vmem:[#allocation1] sm:$0xff pattern:$0x73625140]
    %v199 = vld.sshfl [vmem:[#allocation1 + $0x8] sm:$0xff pattern:$0x73625140]
    %v200 = vld.sshfl [vmem:[#allocation1 + $0x10] sm:$0xff pattern:$0x73625140]
    %v201 = vld.sshfl [vmem:[#allocation1 + $0x18] sm:$0xff pattern:$0x73625140]
    %v202 = vld.sshfl [vmem:[#allocation1 + $0x20] sm:$0xff pattern:$0x73625140]
    %v203 = vld.sshfl [vmem:[#allocation1 + $0x28] sm:$0xff pattern:$0x73625140]
    %v204 = vld.sshfl [vmem:[#allocation1 + $0x30] sm:$0xff pattern:$0x73625140]
    %v205 = vld.sshfl [vmem:[#allocation1 + $0x38] sm:$0xff pattern:$0x73625140]
    %206 = vst [vmem:[#allocation1] ss:$4 sm:$0xff] %v45
    %207 = vst [vmem:[%s86] ss:$4 sm:$0xff] %v46
    %v208 = vld.sshfl [vmem:[#allocation1] sm:$0xff pattern:$0x73625140]
    %v209 = vld.sshfl [vmem:[#allocation1 + $0x8] sm:$0xff pattern:$0x73625140]
    %v210 = vld.sshfl [vmem:[#allocation1 + $0x10] sm:$0xff pattern:$0x73625140]
    %v211 = vld.sshfl [vmem:[#allocation1 + $0x18] sm:$0xff pattern:$0x73625140]
    %v212 = vld.sshfl [vmem:[#allocation1 + $0x20] sm:$0xff pattern:$0x73625140]
    %v213 = vld.sshfl [vmem:[#allocation1 + $0x28] sm:$0xff pattern:$0x73625140]
    %v214 = vld.sshfl [vmem:[#allocation1 + $0x30] sm:$0xff pattern:$0x73625140]
    %v215 = vld.sshfl [vmem:[#allocation1 + $0x38] sm:$0xff pattern:$0x73625140]
    %216 = vst [vmem:[#allocation1] ss:$4 sm:$0xff] %v47
    %217 = vst [vmem:[%s86] ss:$4 sm:$0xff] %v48
    %v218 = vld.sshfl [vmem:[#allocation1] sm:$0xff pattern:$0x73625140]
    %v219 = vld.sshfl [vmem:[#allocation1 + $0x8] sm:$0xff pattern:$0x73625140]
    %v220 = vld.sshfl [vmem:[#allocation1 + $0x10] sm:$0xff pattern:$0x73625140]
    %v221 = vld.sshfl [vmem:[#allocation1 + $0x18] sm:$0xff pattern:$0x73625140]
    %v222 = vld.sshfl [vmem:[#allocation1 + $0x20] sm:$0xff pattern:$0x73625140]
    %v223 = vld.sshfl [vmem:[#allocation1 + $0x28] sm:$0xff pattern:$0x73625140]
    %v224 = vld.sshfl [vmem:[#allocation1 + $0x30] sm:$0xff pattern:$0x73625140]
    %v225 = vld.sshfl [vmem:[#allocation1 + $0x38] sm:$0xff pattern:$0x73625140]
    %226 = vst [vmem:[#allocation1] ss:$4 sm:$0xff] %v49
    %227 = vst [vmem:[%s86] ss:$4 sm:$0xff] %v50
    %v228 = vld.sshfl [vmem:[#allocation1] sm:$0xff pattern:$0x73625140]
    %v229 = vld.sshfl [vmem:[#allocation1 + $0x8] sm:$0xff pattern:$0x73625140]
    %v230 = vld.sshfl [vmem:[#allocation1 + $0x10] sm:$0xff pattern:$0x73625140]
    %v231 = vld.sshfl [vmem:[#allocation1 + $0x18] sm:$0xff pattern:$0x73625140]
    %v232 = vld.sshfl [vmem:[#allocation1 + $0x20] sm:$0xff pattern:$0x73625140]
    %v233 = vld.sshfl [vmem:[#allocation1 + $0x28] sm:$0xff pattern:$0x73625140]
    %v234 = vld.sshfl [vmem:[#allocation1 + $0x30] sm:$0xff pattern:$0x73625140]
    %v235 = vld.sshfl [vmem:[#allocation1 + $0x38] sm:$0xff pattern:$0x73625140]
    %236 = vst [vmem:[#allocation1] ss:$4 sm:$0xff] %v51
    %237 = vst [vmem:[%s86] ss:$4 sm:$0xff] %v52
    %v238 = vld.sshfl [vmem:[#allocation1] sm:$0xff pattern:$0x73625140]
    %v239 = vld.sshfl [vmem:[#allocation1 + $0x8] sm:$0xff pattern:$0x73625140]
    %v240 = vld.sshfl [vmem:[#allocation1 + $0x10] sm:$0xff pattern:$0x73625140]
    %v241 = vld.sshfl [vmem:[#allocation1 + $0x18] sm:$0xff pattern:$0x73625140]
    %v242 = vld.sshfl [vmem:[#allocation1 + $0x20] sm:$0xff pattern:$0x73625140]
    %v243 = vld.sshfl [vmem:[#allocation1 + $0x28] sm:$0xff pattern:$0x73625140]
    %v244 = vld.sshfl [vmem:[#allocation1 + $0x30] sm:$0xff pattern:$0x73625140]
    %v245 = vld.sshfl [vmem:[#allocation1 + $0x38] sm:$0xff pattern:$0x73625140]
    %v374 = vpack.c.bf16 %v88, %v88
    %v375 = vpack.c.bf16 %v89, %v89
    %v376 = vpack.c.bf16 %v90, %v90
    %v377 = vpack.c.bf16 %v91, %v91
    %v378 = vpack.c.bf16 %v92, %v92
    %v379 = vpack.c.bf16 %v93, %v93
    %v380 = vpack.c.bf16 %v94, %v94
    %v381 = vpack.c.bf16 %v95, %v95
    %v382 = vpack.c.bf16 %v98, %v98
    %v383 = vpack.c.bf16 %v99, %v99
    %v384 = vpack.c.bf16 %v100, %v100
    %v385 = vpack.c.bf16 %v101, %v101
    %v386 = vpack.c.bf16 %v102, %v102
    %v387 = vpack.c.bf16 %v103, %v103
    %v388 = vpack.c.bf16 %v104, %v104
    %v389 = vpack.c.bf16 %v105, %v105
    %v390 = vpack.c.bf16 %v108, %v108
    %v391 = vpack.c.bf16 %v109, %v109
    %v392 = vpack.c.bf16 %v110, %v110
    %v393 = vpack.c.bf16 %v111, %v111
    %v394 = vpack.c.bf16 %v112, %v112
    %v395 = vpack.c.bf16 %v113, %v113
    %v396 = vpack.c.bf16 %v114, %v114
    %v397 = vpack.c.bf16 %v115, %v115
    %v398 = vpack.c.bf16 %v118, %v118
    %v399 = vpack.c.bf16 %v119, %v119
    %v400 = vpack.c.bf16 %v120, %v120
    %v401 = vpack.c.bf16 %v121, %v121
    %v402 = vpack.c.bf16 %v122, %v122
    %v403 = vpack.c.bf16 %v123, %v123
    %v404 = vpack.c.bf16 %v124, %v124
    %v405 = vpack.c.bf16 %v125, %v125
    %v406 = vpack.c.bf16 %v128, %v128
    %v407 = vpack.c.bf16 %v129, %v129
    %v408 = vpack.c.bf16 %v130, %v130
    %v409 = vpack.c.bf16 %v131, %v131
    %v410 = vpack.c.bf16 %v132, %v132
    %v411 = vpack.c.bf16 %v133, %v133
    %v412 = vpack.c.bf16 %v134, %v134
    %v413 = vpack.c.bf16 %v135, %v135
    %v414 = vpack.c.bf16 %v138, %v138
    %v415 = vpack.c.bf16 %v139, %v139
    %v416 = vpack.c.bf16 %v140, %v140
    %v417 = vpack.c.bf16 %v141, %v141
    %v418 = vpack.c.bf16 %v142, %v142
    %v419 = vpack.c.bf16 %v143, %v143
    %v420 = vpack.c.bf16 %v144, %v144
    %v421 = vpack.c.bf16 %v145, %v145
    %v422 = vpack.c.bf16 %v148, %v148
    %v423 = vpack.c.bf16 %v149, %v149
    %v424 = vpack.c.bf16 %v150, %v150
    %v425 = vpack.c.bf16 %v151, %v151
    %v426 = vpack.c.bf16 %v152, %v152
    %v427 = vpack.c.bf16 %v153, %v153
    %v428 = vpack.c.bf16 %v154, %v154
    %v429 = vpack.c.bf16 %v155, %v155
    %v430 = vpack.c.bf16 %v158, %v158
    %v431 = vpack.c.bf16 %v159, %v159
    %v432 = vpack.c.bf16 %v160, %v160
    %v433 = vpack.c.bf16 %v161, %v161
    %v434 = vpack.c.bf16 %v162, %v162
    %v435 = vpack.c.bf16 %v163, %v163
    %v436 = vpack.c.bf16 %v164, %v164
    %v437 = vpack.c.bf16 %v165, %v165
    %v438 = vpack.c.bf16 %v168, %v168
    %v439 = vpack.c.bf16 %v169, %v169
    %v440 = vpack.c.bf16 %v170, %v170
    %v441 = vpack.c.bf16 %v171, %v171
    %v442 = vpack.c.bf16 %v172, %v172
    %v443 = vpack.c.bf16 %v173, %v173
    %v444 = vpack.c.bf16 %v174, %v174
    %v445 = vpack.c.bf16 %v175, %v175
    %v446 = vpack.c.bf16 %v178, %v178
    %v447 = vpack.c.bf16 %v179, %v179
    %v448 = vpack.c.bf16 %v180, %v180
    %v449 = vpack.c.bf16 %v181, %v181
    %v450 = vpack.c.bf16 %v182, %v182
    %v451 = vpack.c.bf16 %v183, %v183
    %v452 = vpack.c.bf16 %v184, %v184
    %v453 = vpack.c.bf16 %v185, %v185
    %v454 = vpack.c.bf16 %v188, %v188
    %v455 = vpack.c.bf16 %v189, %v189
    %v456 = vpack.c.bf16 %v190, %v190
    %v457 = vpack.c.bf16 %v191, %v191
    %v458 = vpack.c.bf16 %v192, %v192
    %v459 = vpack.c.bf16 %v193, %v193
    %v460 = vpack.c.bf16 %v194, %v194
    %v461 = vpack.c.bf16 %v195, %v195
    %v462 = vpack.c.bf16 %v198, %v198
    %v463 = vpack.c.bf16 %v199, %v199
    %v464 = vpack.c.bf16 %v200, %v200
    %v465 = vpack.c.bf16 %v201, %v201
    %v466 = vpack.c.bf16 %v202, %v202
    %v467 = vpack.c.bf16 %v203, %v203
    %v468 = vpack.c.bf16 %v204, %v204
    %v469 = vpack.c.bf16 %v205, %v205
    %v470 = vpack.c.bf16 %v208, %v208
    %v471 = vpack.c.bf16 %v209, %v209
    %v472 = vpack.c.bf16 %v210, %v210
    %v473 = vpack.c.bf16 %v211, %v211
    %v474 = vpack.c.bf16 %v212, %v212
    %v475 = vpack.c.bf16 %v213, %v213
    %v476 = vpack.c.bf16 %v214, %v214
    %v477 = vpack.c.bf16 %v215, %v215
    %v478 = vpack.c.bf16 %v218, %v218
    %v479 = vpack.c.bf16 %v219, %v219
    %v480 = vpack.c.bf16 %v220, %v220
    %v481 = vpack.c.bf16 %v221, %v221
    %v482 = vpack.c.bf16 %v222, %v222
    %v483 = vpack.c.bf16 %v223, %v223
    %v484 = vpack.c.bf16 %v224, %v224
    %v485 = vpack.c.bf16 %v225, %v225
    %v486 = vpack.c.bf16 %v228, %v228
    %v487 = vpack.c.bf16 %v229, %v229
    %v488 = vpack.c.bf16 %v230, %v230
    %v489 = vpack.c.bf16 %v231, %v231
    %v490 = vpack.c.bf16 %v232, %v232
    %v491 = vpack.c.bf16 %v233, %v233
    %v492 = vpack.c.bf16 %v234, %v234
    %v493 = vpack.c.bf16 %v235, %v235
    %v494 = vpack.c.bf16 %v238, %v238
    %v495 = vpack.c.bf16 %v239, %v239
    %v496 = vpack.c.bf16 %v240, %v240
    %v497 = vpack.c.bf16 %v241, %v241
    %v498 = vpack.c.bf16 %v242, %v242
    %v499 = vpack.c.bf16 %v243, %v243
    %v500 = vpack.c.bf16 %v244, %v244
    %v501 = vpack.c.bf16 %v245, %v245
    %v502 = vld [vmem:[%s1] sm:$0xf]
    %v503 = vld [vmem:[%s1 + $0x4] sm:$0xf]
    %v504 = vld [vmem:[%s1 + $0x8] sm:$0xf]
    %v505 = vld [vmem:[%s1 + $0xc] sm:$0xf]
    %v506 = vld [vmem:[%s1 + $0x10] sm:$0xf]
    %v507 = vld [vmem:[%s1 + $0x14] sm:$0xf]
    %v508 = vld [vmem:[%s1 + $0x18] sm:$0xf]
    %v509 = vld [vmem:[%s1 + $0x1c] sm:$0xf]
    %v510 = vld [vmem:[%s1 + $0x20] sm:$0xf]
    %v511 = vld [vmem:[%s1 + $0x24] sm:$0xf]
    %v512 = vld [vmem:[%s1 + $0x28] sm:$0xf]
    %v513 = vld [vmem:[%s1 + $0x2c] sm:$0xf]
    %v514 = vld [vmem:[%s1 + $0x30] sm:$0xf]
    %v515 = vld [vmem:[%s1 + $0x34] sm:$0xf]
    %v516 = vld [vmem:[%s1 + $0x38] sm:$0xf]
    %v517 = vld [vmem:[%s1 + $0x3c] sm:$0xf]
    %v518 = vld [vmem:[%s1 + $0x40] sm:$0xf]
    %v519 = vld [vmem:[%s1 + $0x44] sm:$0xf]
    %v520 = vld [vmem:[%s1 + $0x48] sm:$0xf]
    %v521 = vld [vmem:[%s1 + $0x4c] sm:$0xf]
    %v522 = vld [vmem:[%s1 + $0x50] sm:$0xf]
    %v523 = vld [vmem:[%s1 + $0x54] sm:$0xf]
    %v524 = vld [vmem:[%s1 + $0x58] sm:$0xf]
    %v525 = vld [vmem:[%s1 + $0x5c] sm:$0xf]
    %v526 = vld [vmem:[%s1 + $0x60] sm:$0xf]
    %v527 = vld [vmem:[%s1 + $0x64] sm:$0xf]
    %v528 = vld [vmem:[%s1 + $0x68] sm:$0xf]
    %v529 = vld [vmem:[%s1 + $0x6c] sm:$0xf]
    %v530 = vld [vmem:[%s1 + $0x70] sm:$0xf]
    %v531 = vld [vmem:[%s1 + $0x74] sm:$0xf]
    %v532 = vld [vmem:[%s1 + $0x78] sm:$0xf]
    %v533 = vld [vmem:[%s1 + $0x7c] sm:$0xf]
    %v534 = vld [vmem:[%s1 + $0x80] sm:$0xf]
    %v535 = vld [vmem:[%s1 + $0x84] sm:$0xf]
    %v536 = vld [vmem:[%s1 + $0x88] sm:$0xf]
    %v537 = vld [vmem:[%s1 + $0x8c] sm:$0xf]
    %v538 = vld [vmem:[%s1 + $0x90] sm:$0xf]
    %v539 = vld [vmem:[%s1 + $0x94] sm:$0xf]
    %v540 = vld [vmem:[%s1 + $0x98] sm:$0xf]
    %v541 = vld [vmem:[%s1 + $0x9c] sm:$0xf]
    %v542 = vld [vmem:[%s1 + $0xa0] sm:$0xf]
    %v543 = vld [vmem:[%s1 + $0xa4] sm:$0xf]
    %v544 = vld [vmem:[%s1 + $0xa8] sm:$0xf]
    %v545 = vld [vmem:[%s1 + $0xac] sm:$0xf]
    %v546 = vld [vmem:[%s1 + $0xb0] sm:$0xf]
    %v547 = vld [vmem:[%s1 + $0xb4] sm:$0xf]
    %v548 = vld [vmem:[%s1 + $0xb8] sm:$0xf]
    %v549 = vld [vmem:[%s1 + $0xbc] sm:$0xf]
    %v550 = vld [vmem:[%s1 + $0xc0] sm:$0xf]
    %v551 = vld [vmem:[%s1 + $0xc4] sm:$0xf]
    %v552 = vld [vmem:[%s1 + $0xc8] sm:$0xf]
    %v553 = vld [vmem:[%s1 + $0xcc] sm:$0xf]
    %v554 = vld [vmem:[%s1 + $0xd0] sm:$0xf]
    %v555 = vld [vmem:[%s1 + $0xd4] sm:$0xf]
    %v556 = vld [vmem:[%s1 + $0xd8] sm:$0xf]
    %v557 = vld [vmem:[%s1 + $0xdc] sm:$0xf]
    %v558 = vld [vmem:[%s1 + $0xe0] sm:$0xf]
    %v559 = vld [vmem:[%s1 + $0xe4] sm:$0xf]
    %v560 = vld [vmem:[%s1 + $0xe8] sm:$0xf]
    %v561 = vld [vmem:[%s1 + $0xec] sm:$0xf]
    %v562 = vld [vmem:[%s1 + $0xf0] sm:$0xf]
    %v563 = vld [vmem:[%s1 + $0xf4] sm:$0xf]
    %v564 = vld [vmem:[%s1 + $0xf8] sm:$0xf]
    %v565 = vld [vmem:[%s1 + $0xfc] sm:$0xf]
    %v566 = vld [vmem:[%s1 + $0x100] sm:$0xf]
    %v567 = vld [vmem:[%s1 + $0x104] sm:$0xf]
    %v568 = vld [vmem:[%s1 + $0x108] sm:$0xf]
    %v569 = vld [vmem:[%s1 + $0x10c] sm:$0xf]
    %v570 = vld [vmem:[%s1 + $0x110] sm:$0xf]
    %v571 = vld [vmem:[%s1 + $0x114] sm:$0xf]
    %v572 = vld [vmem:[%s1 + $0x118] sm:$0xf]
    %v573 = vld [vmem:[%s1 + $0x11c] sm:$0xf]
    %v574 = vld [vmem:[%s1 + $0x120] sm:$0xf]
    %v575 = vld [vmem:[%s1 + $0x124] sm:$0xf]
    %v576 = vld [vmem:[%s1 + $0x128] sm:$0xf]
    %v577 = vld [vmem:[%s1 + $0x12c] sm:$0xf]
    %v578 = vld [vmem:[%s1 + $0x130] sm:$0xf]
    %v579 = vld [vmem:[%s1 + $0x134] sm:$0xf]
    %v580 = vld [vmem:[%s1 + $0x138] sm:$0xf]
    %v581 = vld [vmem:[%s1 + $0x13c] sm:$0xf]
    %v582 = vld [vmem:[%s1 + $0x140] sm:$0xf]
    %v583 = vld [vmem:[%s1 + $0x144] sm:$0xf]
    %v584 = vld [vmem:[%s1 + $0x148] sm:$0xf]
    %v585 = vld [vmem:[%s1 + $0x14c] sm:$0xf]
    %v586 = vld [vmem:[%s1 + $0x150] sm:$0xf]
    %v587 = vld [vmem:[%s1 + $0x154] sm:$0xf]
    %v588 = vld [vmem:[%s1 + $0x158] sm:$0xf]
    %v589 = vld [vmem:[%s1 + $0x15c] sm:$0xf]
    %v590 = vld [vmem:[%s1 + $0x160] sm:$0xf]
    %v591 = vld [vmem:[%s1 + $0x164] sm:$0xf]
    %v592 = vld [vmem:[%s1 + $0x168] sm:$0xf]
    %v593 = vld [vmem:[%s1 + $0x16c] sm:$0xf]
    %v594 = vld [vmem:[%s1 + $0x170] sm:$0xf]
    %v595 = vld [vmem:[%s1 + $0x174] sm:$0xf]
    %v596 = vld [vmem:[%s1 + $0x178] sm:$0xf]
    %v597 = vld [vmem:[%s1 + $0x17c] sm:$0xf]
    %v598 = vld [vmem:[%s1 + $0x180] sm:$0xf]
    %v599 = vld [vmem:[%s1 + $0x184] sm:$0xf]
    %v600 = vld [vmem:[%s1 + $0x188] sm:$0xf]
    %v601 = vld [vmem:[%s1 + $0x18c] sm:$0xf]
    %v602 = vld [vmem:[%s1 + $0x190] sm:$0xf]
    %v603 = vld [vmem:[%s1 + $0x194] sm:$0xf]
    %v604 = vld [vmem:[%s1 + $0x198] sm:$0xf]
    %v605 = vld [vmem:[%s1 + $0x19c] sm:$0xf]
    %v606 = vld [vmem:[%s1 + $0x1a0] sm:$0xf]
    %v607 = vld [vmem:[%s1 + $0x1a4] sm:$0xf]
    %v608 = vld [vmem:[%s1 + $0x1a8] sm:$0xf]
    %v609 = vld [vmem:[%s1 + $0x1ac] sm:$0xf]
    %v610 = vld [vmem:[%s1 + $0x1b0] sm:$0xf]
    %v611 = vld [vmem:[%s1 + $0x1b4] sm:$0xf]
    %v612 = vld [vmem:[%s1 + $0x1b8] sm:$0xf]
    %v613 = vld [vmem:[%s1 + $0x1bc] sm:$0xf]
    %v614 = vld [vmem:[%s1 + $0x1c0] sm:$0xf]
    %v615 = vld [vmem:[%s1 + $0x1c4] sm:$0xf]
    %v616 = vld [vmem:[%s1 + $0x1c8] sm:$0xf]
    %v617 = vld [vmem:[%s1 + $0x1cc] sm:$0xf]
    %v618 = vld [vmem:[%s1 + $0x1d0] sm:$0xf]
    %v619 = vld [vmem:[%s1 + $0x1d4] sm:$0xf]
    %v620 = vld [vmem:[%s1 + $0x1d8] sm:$0xf]
    %v621 = vld [vmem:[%s1 + $0x1dc] sm:$0xf]
    %v622 = vld [vmem:[%s1 + $0x1e0] sm:$0xf]
    %v623 = vld [vmem:[%s1 + $0x1e4] sm:$0xf]
    %v624 = vld [vmem:[%s1 + $0x1e8] sm:$0xf]
    %v625 = vld [vmem:[%s1 + $0x1ec] sm:$0xf]
    %v626 = vld [vmem:[%s1 + $0x1f0] sm:$0xf]
    %v627 = vld [vmem:[%s1 + $0x1f4] sm:$0xf]
    %v628 = vld [vmem:[%s1 + $0x1f8] sm:$0xf]
    %v629 = vld [vmem:[%s1 + $0x1fc] sm:$0xf]
    %v630 = vld [vmem:[%s1 + $0x200] sm:$0xf]
    %v631 = vld [vmem:[%s1 + $0x204] sm:$0xf]
    %v632 = vld [vmem:[%s1 + $0x208] sm:$0xf]
    %v633 = vld [vmem:[%s1 + $0x20c] sm:$0xf]
    %v634 = vld [vmem:[%s1 + $0x210] sm:$0xf]
    %v635 = vld [vmem:[%s1 + $0x214] sm:$0xf]
    %v636 = vld [vmem:[%s1 + $0x218] sm:$0xf]
    %v637 = vld [vmem:[%s1 + $0x21c] sm:$0xf]
    %v638 = vld [vmem:[%s1 + $0x220] sm:$0xf]
    %v639 = vld [vmem:[%s1 + $0x224] sm:$0xf]
    %v640 = vld [vmem:[%s1 + $0x228] sm:$0xf]
    %v641 = vld [vmem:[%s1 + $0x22c] sm:$0xf]
    %v642 = vld [vmem:[%s1 + $0x230] sm:$0xf]
    %v643 = vld [vmem:[%s1 + $0x234] sm:$0xf]
    %v644 = vld [vmem:[%s1 + $0x238] sm:$0xf]
    %v645 = vld [vmem:[%s1 + $0x23c] sm:$0xf]
    %v646 = vld [vmem:[%s1 + $0x240] sm:$0xf]
    %v647 = vld [vmem:[%s1 + $0x244] sm:$0xf]
    %v648 = vld [vmem:[%s1 + $0x248] sm:$0xf]
    %v649 = vld [vmem:[%s1 + $0x24c] sm:$0xf]
    %v650 = vld [vmem:[%s1 + $0x250] sm:$0xf]
    %v651 = vld [vmem:[%s1 + $0x254] sm:$0xf]
    %v652 = vld [vmem:[%s1 + $0x258] sm:$0xf]
    %v653 = vld [vmem:[%s1 + $0x25c] sm:$0xf]
    %v654 = vld [vmem:[%s1 + $0x260] sm:$0xf]
    %v655 = vld [vmem:[%s1 + $0x264] sm:$0xf]
    %v656 = vld [vmem:[%s1 + $0x268] sm:$0xf]
    %v657 = vld [vmem:[%s1 + $0x26c] sm:$0xf]
    %v658 = vld [vmem:[%s1 + $0x270] sm:$0xf]
    %v659 = vld [vmem:[%s1 + $0x274] sm:$0xf]
    %v660 = vld [vmem:[%s1 + $0x278] sm:$0xf]
    %v661 = vld [vmem:[%s1 + $0x27c] sm:$0xf]
    %v662 = vld [vmem:[%s1 + $0x280] sm:$0xf]
    %v663 = vld [vmem:[%s1 + $0x284] sm:$0xf]
    %v664 = vld [vmem:[%s1 + $0x288] sm:$0xf]
    %v665 = vld [vmem:[%s1 + $0x28c] sm:$0xf]
    %v666 = vld [vmem:[%s1 + $0x290] sm:$0xf]
    %v667 = vld [vmem:[%s1 + $0x294] sm:$0xf]
    %v668 = vld [vmem:[%s1 + $0x298] sm:$0xf]
    %v669 = vld [vmem:[%s1 + $0x29c] sm:$0xf]
    %v670 = vld [vmem:[%s1 + $0x2a0] sm:$0xf]
    %v671 = vld [vmem:[%s1 + $0x2a4] sm:$0xf]
    %v672 = vld [vmem:[%s1 + $0x2a8] sm:$0xf]
    %v673 = vld [vmem:[%s1 + $0x2ac] sm:$0xf]
    %v674 = vld [vmem:[%s1 + $0x2b0] sm:$0xf]
    %v675 = vld [vmem:[%s1 + $0x2b4] sm:$0xf]
    %v676 = vld [vmem:[%s1 + $0x2b8] sm:$0xf]
    %v677 = vld [vmem:[%s1 + $0x2bc] sm:$0xf]
    %v678 = vld [vmem:[%s1 + $0x2c0] sm:$0xf]
    %v679 = vld [vmem:[%s1 + $0x2c4] sm:$0xf]
    %v680 = vld [vmem:[%s1 + $0x2c8] sm:$0xf]
    %v681 = vld [vmem:[%s1 + $0x2cc] sm:$0xf]
    %v682 = vld [vmem:[%s1 + $0x2d0] sm:$0xf]
    %v683 = vld [vmem:[%s1 + $0x2d4] sm:$0xf]
    %v684 = vld [vmem:[%s1 + $0x2d8] sm:$0xf]
    %v685 = vld [vmem:[%s1 + $0x2dc] sm:$0xf]
    %v686 = vld [vmem:[%s1 + $0x2e0] sm:$0xf]
    %v687 = vld [vmem:[%s1 + $0x2e4] sm:$0xf]
    %v688 = vld [vmem:[%s1 + $0x2e8] sm:$0xf]
    %v689 = vld [vmem:[%s1 + $0x2ec] sm:$0xf]
    %v690 = vld [vmem:[%s1 + $0x2f0] sm:$0xf]
    %v691 = vld [vmem:[%s1 + $0x2f4] sm:$0xf]
    %v692 = vld [vmem:[%s1 + $0x2f8] sm:$0xf]
    %v693 = vld [vmem:[%s1 + $0x2fc] sm:$0xf]
    %v694 = vld [vmem:[%s1 + $0x300] sm:$0xf]
    %v695 = vld [vmem:[%s1 + $0x304] sm:$0xf]
    %v696 = vld [vmem:[%s1 + $0x308] sm:$0xf]
    %v697 = vld [vmem:[%s1 + $0x30c] sm:$0xf]
    %v698 = vld [vmem:[%s1 + $0x310] sm:$0xf]
    %v699 = vld [vmem:[%s1 + $0x314] sm:$0xf]
    %v700 = vld [vmem:[%s1 + $0x318] sm:$0xf]
    %v701 = vld [vmem:[%s1 + $0x31c] sm:$0xf]
    %v702 = vld [vmem:[%s1 + $0x320] sm:$0xf]
    %v703 = vld [vmem:[%s1 + $0x324] sm:$0xf]
    %v704 = vld [vmem:[%s1 + $0x328] sm:$0xf]
    %v705 = vld [vmem:[%s1 + $0x32c] sm:$0xf]
    %v706 = vld [vmem:[%s1 + $0x330] sm:$0xf]
    %v707 = vld [vmem:[%s1 + $0x334] sm:$0xf]
    %v708 = vld [vmem:[%s1 + $0x338] sm:$0xf]
    %v709 = vld [vmem:[%s1 + $0x33c] sm:$0xf]
    %v710 = vld [vmem:[%s1 + $0x340] sm:$0xf]
    %v711 = vld [vmem:[%s1 + $0x344] sm:$0xf]
    %v712 = vld [vmem:[%s1 + $0x348] sm:$0xf]
    %v713 = vld [vmem:[%s1 + $0x34c] sm:$0xf]
    %v714 = vld [vmem:[%s1 + $0x350] sm:$0xf]
    %v715 = vld [vmem:[%s1 + $0x354] sm:$0xf]
    %v716 = vld [vmem:[%s1 + $0x358] sm:$0xf]
    %v717 = vld [vmem:[%s1 + $0x35c] sm:$0xf]
    %v718 = vld [vmem:[%s1 + $0x360] sm:$0xf]
    %v719 = vld [vmem:[%s1 + $0x364] sm:$0xf]
    %v720 = vld [vmem:[%s1 + $0x368] sm:$0xf]
    %v721 = vld [vmem:[%s1 + $0x36c] sm:$0xf]
    %v722 = vld [vmem:[%s1 + $0x370] sm:$0xf]
    %v723 = vld [vmem:[%s1 + $0x374] sm:$0xf]
    %v724 = vld [vmem:[%s1 + $0x378] sm:$0xf]
    %v725 = vld [vmem:[%s1 + $0x37c] sm:$0xf]
    %v726 = vld [vmem:[%s1 + $0x380] sm:$0xf]
    %v727 = vld [vmem:[%s1 + $0x384] sm:$0xf]
    %v728 = vld [vmem:[%s1 + $0x388] sm:$0xf]
    %v729 = vld [vmem:[%s1 + $0x38c] sm:$0xf]
    %v730 = vld [vmem:[%s1 + $0x390] sm:$0xf]
    %v731 = vld [vmem:[%s1 + $0x394] sm:$0xf]
    %v732 = vld [vmem:[%s1 + $0x398] sm:$0xf]
    %v733 = vld [vmem:[%s1 + $0x39c] sm:$0xf]
    %v734 = vld [vmem:[%s1 + $0x3a0] sm:$0xf]
    %v735 = vld [vmem:[%s1 + $0x3a4] sm:$0xf]
    %v736 = vld [vmem:[%s1 + $0x3a8] sm:$0xf]
    %v737 = vld [vmem:[%s1 + $0x3ac] sm:$0xf]
    %v738 = vld [vmem:[%s1 + $0x3b0] sm:$0xf]
    %v739 = vld [vmem:[%s1 + $0x3b4] sm:$0xf]
    %v740 = vld [vmem:[%s1 + $0x3b8] sm:$0xf]
    %v741 = vld [vmem:[%s1 + $0x3bc] sm:$0xf]
    %v742 = vld [vmem:[%s1 + $0x3c0] sm:$0xf]
    %v743 = vld [vmem:[%s1 + $0x3c4] sm:$0xf]
    %v744 = vld [vmem:[%s1 + $0x3c8] sm:$0xf]
    %v745 = vld [vmem:[%s1 + $0x3cc] sm:$0xf]
    %v746 = vld [vmem:[%s1 + $0x3d0] sm:$0xf]
    %v747 = vld [vmem:[%s1 + $0x3d4] sm:$0xf]
    %v748 = vld [vmem:[%s1 + $0x3d8] sm:$0xf]
    %v749 = vld [vmem:[%s1 + $0x3dc] sm:$0xf]
    %v750 = vld [vmem:[%s1 + $0x3e0] sm:$0xf]
    %v751 = vld [vmem:[%s1 + $0x3e4] sm:$0xf]
    %v752 = vld [vmem:[%s1 + $0x3e8] sm:$0xf]
    %v753 = vld [vmem:[%s1 + $0x3ec] sm:$0xf]
    %v754 = vld [vmem:[%s1 + $0x3f0] sm:$0xf]
    %v755 = vld [vmem:[%s1 + $0x3f4] sm:$0xf]
    %v756 = vld [vmem:[%s1 + $0x3f8] sm:$0xf]
    %v757 = vld [vmem:[%s1 + $0x3fc] sm:$0xf]
    %v758 = vld [vmem:[%s1 + $0x400] sm:$0xf]
    %v759 = vld [vmem:[%s1 + $0x404] sm:$0xf]
    %v760 = vld [vmem:[%s1 + $0x408] sm:$0xf]
    %v761 = vld [vmem:[%s1 + $0x40c] sm:$0xf]
    %v762 = vld [vmem:[%s1 + $0x410] sm:$0xf]
    %v763 = vld [vmem:[%s1 + $0x414] sm:$0xf]
    %v764 = vld [vmem:[%s1 + $0x418] sm:$0xf]
    %v765 = vld [vmem:[%s1 + $0x41c] sm:$0xf]
    %v766 = vld [vmem:[%s1 + $0x420] sm:$0xf]
    %v767 = vld [vmem:[%s1 + $0x424] sm:$0xf]
    %v768 = vld [vmem:[%s1 + $0x428] sm:$0xf]
    %v769 = vld [vmem:[%s1 + $0x42c] sm:$0xf]
    %v770 = vld [vmem:[%s1 + $0x430] sm:$0xf]
    %v771 = vld [vmem:[%s1 + $0x434] sm:$0xf]
    %v772 = vld [vmem:[%s1 + $0x438] sm:$0xf]
    %v773 = vld [vmem:[%s1 + $0x43c] sm:$0xf]
    %v774 = vld [vmem:[%s1 + $0x440] sm:$0xf]
    %v775 = vld [vmem:[%s1 + $0x444] sm:$0xf]
    %v776 = vld [vmem:[%s1 + $0x448] sm:$0xf]
    %v777 = vld [vmem:[%s1 + $0x44c] sm:$0xf]
    %v778 = vld [vmem:[%s1 + $0x450] sm:$0xf]
    %v779 = vld [vmem:[%s1 + $0x454] sm:$0xf]
    %v780 = vld [vmem:[%s1 + $0x458] sm:$0xf]
    %v781 = vld [vmem:[%s1 + $0x45c] sm:$0xf]
    %v782 = vld [vmem:[%s1 + $0x460] sm:$0xf]
    %v783 = vld [vmem:[%s1 + $0x464] sm:$0xf]
    %v784 = vld [vmem:[%s1 + $0x468] sm:$0xf]
    %v785 = vld [vmem:[%s1 + $0x46c] sm:$0xf]
    %v786 = vld [vmem:[%s1 + $0x470] sm:$0xf]
    %v787 = vld [vmem:[%s1 + $0x474] sm:$0xf]
    %v788 = vld [vmem:[%s1 + $0x478] sm:$0xf]
    %v789 = vld [vmem:[%s1 + $0x47c] sm:$0xf]
    %v790 = vld [vmem:[%s1 + $0x480] sm:$0xf]
    %v791 = vld [vmem:[%s1 + $0x484] sm:$0xf]
    %v792 = vld [vmem:[%s1 + $0x488] sm:$0xf]
    %v793 = vld [vmem:[%s1 + $0x48c] sm:$0xf]
    %v794 = vld [vmem:[%s1 + $0x490] sm:$0xf]
    %v795 = vld [vmem:[%s1 + $0x494] sm:$0xf]
    %v796 = vld [vmem:[%s1 + $0x498] sm:$0xf]
    %v797 = vld [vmem:[%s1 + $0x49c] sm:$0xf]
    %v798 = vld [vmem:[%s1 + $0x4a0] sm:$0xf]
    %v799 = vld [vmem:[%s1 + $0x4a4] sm:$0xf]
    %v800 = vld [vmem:[%s1 + $0x4a8] sm:$0xf]
    %v801 = vld [vmem:[%s1 + $0x4ac] sm:$0xf]
    %v802 = vld [vmem:[%s1 + $0x4b0] sm:$0xf]
    %v803 = vld [vmem:[%s1 + $0x4b4] sm:$0xf]
    %v804 = vld [vmem:[%s1 + $0x4b8] sm:$0xf]
    %v805 = vld [vmem:[%s1 + $0x4bc] sm:$0xf]
    %v806 = vld [vmem:[%s1 + $0x4c0] sm:$0xf]
    %v807 = vld [vmem:[%s1 + $0x4c4] sm:$0xf]
    %v808 = vld [vmem:[%s1 + $0x4c8] sm:$0xf]
    %v809 = vld [vmem:[%s1 + $0x4cc] sm:$0xf]
    %v810 = vld [vmem:[%s1 + $0x4d0] sm:$0xf]
    %v811 = vld [vmem:[%s1 + $0x4d4] sm:$0xf]
    %v812 = vld [vmem:[%s1 + $0x4d8] sm:$0xf]
    %v813 = vld [vmem:[%s1 + $0x4dc] sm:$0xf]
    %v814 = vld [vmem:[%s1 + $0x4e0] sm:$0xf]
    %v815 = vld [vmem:[%s1 + $0x4e4] sm:$0xf]
    %v816 = vld [vmem:[%s1 + $0x4e8] sm:$0xf]
    %v817 = vld [vmem:[%s1 + $0x4ec] sm:$0xf]
    %v818 = vld [vmem:[%s1 + $0x4f0] sm:$0xf]
    %v819 = vld [vmem:[%s1 + $0x4f4] sm:$0xf]
    %v820 = vld [vmem:[%s1 + $0x4f8] sm:$0xf]
    %v821 = vld [vmem:[%s1 + $0x4fc] sm:$0xf]
    %v822 = vld [vmem:[%s1 + $0x500] sm:$0xf]
    %v823 = vld [vmem:[%s1 + $0x504] sm:$0xf]
    %v824 = vld [vmem:[%s1 + $0x508] sm:$0xf]
    %v825 = vld [vmem:[%s1 + $0x50c] sm:$0xf]
    %v826 = vld [vmem:[%s1 + $0x510] sm:$0xf]
    %v827 = vld [vmem:[%s1 + $0x514] sm:$0xf]
    %v828 = vld [vmem:[%s1 + $0x518] sm:$0xf]
    %v829 = vld [vmem:[%s1 + $0x51c] sm:$0xf]
    %v830 = vld [vmem:[%s1 + $0x520] sm:$0xf]
    %v831 = vld [vmem:[%s1 + $0x524] sm:$0xf]
    %v832 = vld [vmem:[%s1 + $0x528] sm:$0xf]
    %v833 = vld [vmem:[%s1 + $0x52c] sm:$0xf]
    %v834 = vld [vmem:[%s1 + $0x530] sm:$0xf]
    %v835 = vld [vmem:[%s1 + $0x534] sm:$0xf]
    %v836 = vld [vmem:[%s1 + $0x538] sm:$0xf]
    %v837 = vld [vmem:[%s1 + $0x53c] sm:$0xf]
    %v838 = vld [vmem:[%s1 + $0x540] sm:$0xf]
    %v839 = vld [vmem:[%s1 + $0x544] sm:$0xf]
    %v840 = vld [vmem:[%s1 + $0x548] sm:$0xf]
    %v841 = vld [vmem:[%s1 + $0x54c] sm:$0xf]
    %v842 = vld [vmem:[%s1 + $0x550] sm:$0xf]
    %v843 = vld [vmem:[%s1 + $0x554] sm:$0xf]
    %v844 = vld [vmem:[%s1 + $0x558] sm:$0xf]
    %v845 = vld [vmem:[%s1 + $0x55c] sm:$0xf]
    %v846 = vld [vmem:[%s1 + $0x560] sm:$0xf]
    %v847 = vld [vmem:[%s1 + $0x564] sm:$0xf]
    %v848 = vld [vmem:[%s1 + $0x568] sm:$0xf]
    %v849 = vld [vmem:[%s1 + $0x56c] sm:$0xf]
    %v850 = vld [vmem:[%s1 + $0x570] sm:$0xf]
    %v851 = vld [vmem:[%s1 + $0x574] sm:$0xf]
    %v852 = vld [vmem:[%s1 + $0x578] sm:$0xf]
    %v853 = vld [vmem:[%s1 + $0x57c] sm:$0xf]
    %v854 = vld [vmem:[%s1 + $0x580] sm:$0xf]
    %v855 = vld [vmem:[%s1 + $0x584] sm:$0xf]
    %v856 = vld [vmem:[%s1 + $0x588] sm:$0xf]
    %v857 = vld [vmem:[%s1 + $0x58c] sm:$0xf]
    %v858 = vld [vmem:[%s1 + $0x590] sm:$0xf]
    %v859 = vld [vmem:[%s1 + $0x594] sm:$0xf]
    %v860 = vld [vmem:[%s1 + $0x598] sm:$0xf]
    %v861 = vld [vmem:[%s1 + $0x59c] sm:$0xf]
    %v862 = vld [vmem:[%s1 + $0x5a0] sm:$0xf]
    %v863 = vld [vmem:[%s1 + $0x5a4] sm:$0xf]
    %v864 = vld [vmem:[%s1 + $0x5a8] sm:$0xf]
    %v865 = vld [vmem:[%s1 + $0x5ac] sm:$0xf]
    %v866 = vld [vmem:[%s1 + $0x5b0] sm:$0xf]
    %v867 = vld [vmem:[%s1 + $0x5b4] sm:$0xf]
    %v868 = vld [vmem:[%s1 + $0x5b8] sm:$0xf]
    %v869 = vld [vmem:[%s1 + $0x5bc] sm:$0xf]
    %v870 = vld [vmem:[%s1 + $0x5c0] sm:$0xf]
    %v871 = vld [vmem:[%s1 + $0x5c4] sm:$0xf]
    %v872 = vld [vmem:[%s1 + $0x5c8] sm:$0xf]
    %v873 = vld [vmem:[%s1 + $0x5cc] sm:$0xf]
    %v874 = vld [vmem:[%s1 + $0x5d0] sm:$0xf]
    %v875 = vld [vmem:[%s1 + $0x5d4] sm:$0xf]
    %v876 = vld [vmem:[%s1 + $0x5d8] sm:$0xf]
    %v877 = vld [vmem:[%s1 + $0x5dc] sm:$0xf]
    %v878 = vld [vmem:[%s1 + $0x5e0] sm:$0xf]
    %v879 = vld [vmem:[%s1 + $0x5e4] sm:$0xf]
    %v880 = vld [vmem:[%s1 + $0x5e8] sm:$0xf]
    %v881 = vld [vmem:[%s1 + $0x5ec] sm:$0xf]
    %v882 = vld [vmem:[%s1 + $0x5f0] sm:$0xf]
    %v883 = vld [vmem:[%s1 + $0x5f4] sm:$0xf]
    %v884 = vld [vmem:[%s1 + $0x5f8] sm:$0xf]
    %v885 = vld [vmem:[%s1 + $0x5fc] sm:$0xf]
    %v886 = vld [vmem:[%s1 + $0x600] sm:$0xf]
    %v887 = vld [vmem:[%s1 + $0x604] sm:$0xf]
    %v888 = vld [vmem:[%s1 + $0x608] sm:$0xf]
    %v889 = vld [vmem:[%s1 + $0x60c] sm:$0xf]
    %v890 = vld [vmem:[%s1 + $0x610] sm:$0xf]
    %v891 = vld [vmem:[%s1 + $0x614] sm:$0xf]
    %v892 = vld [vmem:[%s1 + $0x618] sm:$0xf]
    %v893 = vld [vmem:[%s1 + $0x61c] sm:$0xf]
    %v894 = vld [vmem:[%s1 + $0x620] sm:$0xf]
    %v895 = vld [vmem:[%s1 + $0x624] sm:$0xf]
    %v896 = vld [vmem:[%s1 + $0x628] sm:$0xf]
    %v897 = vld [vmem:[%s1 + $0x62c] sm:$0xf]
    %v898 = vld [vmem:[%s1 + $0x630] sm:$0xf]
    %v899 = vld [vmem:[%s1 + $0x634] sm:$0xf]
    %v900 = vld [vmem:[%s1 + $0x638] sm:$0xf]
    %v901 = vld [vmem:[%s1 + $0x63c] sm:$0xf]
    %v902 = vld [vmem:[%s1 + $0x640] sm:$0xf]
    %v903 = vld [vmem:[%s1 + $0x644] sm:$0xf]
    %v904 = vld [vmem:[%s1 + $0x648] sm:$0xf]
    %v905 = vld [vmem:[%s1 + $0x64c] sm:$0xf]
    %v906 = vld [vmem:[%s1 + $0x650] sm:$0xf]
    %v907 = vld [vmem:[%s1 + $0x654] sm:$0xf]
    %v908 = vld [vmem:[%s1 + $0x658] sm:$0xf]
    %v909 = vld [vmem:[%s1 + $0x65c] sm:$0xf]
    %v910 = vld [vmem:[%s1 + $0x660] sm:$0xf]
    %v911 = vld [vmem:[%s1 + $0x664] sm:$0xf]
    %v912 = vld [vmem:[%s1 + $0x668] sm:$0xf]
    %v913 = vld [vmem:[%s1 + $0x66c] sm:$0xf]
    %v914 = vld [vmem:[%s1 + $0x670] sm:$0xf]
    %v915 = vld [vmem:[%s1 + $0x674] sm:$0xf]
    %v916 = vld [vmem:[%s1 + $0x678] sm:$0xf]
    %v917 = vld [vmem:[%s1 + $0x67c] sm:$0xf]
    %v918 = vld [vmem:[%s1 + $0x680] sm:$0xf]
    %v919 = vld [vmem:[%s1 + $0x684] sm:$0xf]
    %v920 = vld [vmem:[%s1 + $0x688] sm:$0xf]
    %v921 = vld [vmem:[%s1 + $0x68c] sm:$0xf]
    %v922 = vld [vmem:[%s1 + $0x690] sm:$0xf]
    %v923 = vld [vmem:[%s1 + $0x694] sm:$0xf]
    %v924 = vld [vmem:[%s1 + $0x698] sm:$0xf]
    %v925 = vld [vmem:[%s1 + $0x69c] sm:$0xf]
    %v926 = vld [vmem:[%s1 + $0x6a0] sm:$0xf]
    %v927 = vld [vmem:[%s1 + $0x6a4] sm:$0xf]
    %v928 = vld [vmem:[%s1 + $0x6a8] sm:$0xf]
    %v929 = vld [vmem:[%s1 + $0x6ac] sm:$0xf]
    %v930 = vld [vmem:[%s1 + $0x6b0] sm:$0xf]
    %v931 = vld [vmem:[%s1 + $0x6b4] sm:$0xf]
    %v932 = vld [vmem:[%s1 + $0x6b8] sm:$0xf]
    %v933 = vld [vmem:[%s1 + $0x6bc] sm:$0xf]
    %v934 = vld [vmem:[%s1 + $0x6c0] sm:$0xf]
    %v935 = vld [vmem:[%s1 + $0x6c4] sm:$0xf]
    %v936 = vld [vmem:[%s1 + $0x6c8] sm:$0xf]
    %v937 = vld [vmem:[%s1 + $0x6cc] sm:$0xf]
    %v938 = vld [vmem:[%s1 + $0x6d0] sm:$0xf]
    %v939 = vld [vmem:[%s1 + $0x6d4] sm:$0xf]
    %v940 = vld [vmem:[%s1 + $0x6d8] sm:$0xf]
    %v941 = vld [vmem:[%s1 + $0x6dc] sm:$0xf]
    %v942 = vld [vmem:[%s1 + $0x6e0] sm:$0xf]
    %v943 = vld [vmem:[%s1 + $0x6e4] sm:$0xf]
    %v944 = vld [vmem:[%s1 + $0x6e8] sm:$0xf]
    %v945 = vld [vmem:[%s1 + $0x6ec] sm:$0xf]
    %v946 = vld [vmem:[%s1 + $0x6f0] sm:$0xf]
    %v947 = vld [vmem:[%s1 + $0x6f4] sm:$0xf]
    %v948 = vld [vmem:[%s1 + $0x6f8] sm:$0xf]
    %v949 = vld [vmem:[%s1 + $0x6fc] sm:$0xf]
    %v950 = vld [vmem:[%s1 + $0x700] sm:$0xf]
    %v951 = vld [vmem:[%s1 + $0x704] sm:$0xf]
    %v952 = vld [vmem:[%s1 + $0x708] sm:$0xf]
    %v953 = vld [vmem:[%s1 + $0x70c] sm:$0xf]
    %v954 = vld [vmem:[%s1 + $0x710] sm:$0xf]
    %v955 = vld [vmem:[%s1 + $0x714] sm:$0xf]
    %v956 = vld [vmem:[%s1 + $0x718] sm:$0xf]
    %v957 = vld [vmem:[%s1 + $0x71c] sm:$0xf]
    %v958 = vld [vmem:[%s1 + $0x720] sm:$0xf]
    %v959 = vld [vmem:[%s1 + $0x724] sm:$0xf]
    %v960 = vld [vmem:[%s1 + $0x728] sm:$0xf]
    %v961 = vld [vmem:[%s1 + $0x72c] sm:$0xf]
    %v962 = vld [vmem:[%s1 + $0x730] sm:$0xf]
    %v963 = vld [vmem:[%s1 + $0x734] sm:$0xf]
    %v964 = vld [vmem:[%s1 + $0x738] sm:$0xf]
    %v965 = vld [vmem:[%s1 + $0x73c] sm:$0xf]
    %v966 = vld [vmem:[%s1 + $0x740] sm:$0xf]
    %v967 = vld [vmem:[%s1 + $0x744] sm:$0xf]
    %v968 = vld [vmem:[%s1 + $0x748] sm:$0xf]
    %v969 = vld [vmem:[%s1 + $0x74c] sm:$0xf]
    %v970 = vld [vmem:[%s1 + $0x750] sm:$0xf]
    %v971 = vld [vmem:[%s1 + $0x754] sm:$0xf]
    %v972 = vld [vmem:[%s1 + $0x758] sm:$0xf]
    %v973 = vld [vmem:[%s1 + $0x75c] sm:$0xf]
    %v974 = vld [vmem:[%s1 + $0x760] sm:$0xf]
    %v975 = vld [vmem:[%s1 + $0x764] sm:$0xf]
    %v976 = vld [vmem:[%s1 + $0x768] sm:$0xf]
    %v977 = vld [vmem:[%s1 + $0x76c] sm:$0xf]
    %v978 = vld [vmem:[%s1 + $0x770] sm:$0xf]
    %v979 = vld [vmem:[%s1 + $0x774] sm:$0xf]
    %v980 = vld [vmem:[%s1 + $0x778] sm:$0xf]
    %v981 = vld [vmem:[%s1 + $0x77c] sm:$0xf]
    %v982 = vld [vmem:[%s1 + $0x780] sm:$0xf]
    %v983 = vld [vmem:[%s1 + $0x784] sm:$0xf]
    %v984 = vld [vmem:[%s1 + $0x788] sm:$0xf]
    %v985 = vld [vmem:[%s1 + $0x78c] sm:$0xf]
    %v986 = vld [vmem:[%s1 + $0x790] sm:$0xf]
    %v987 = vld [vmem:[%s1 + $0x794] sm:$0xf]
    %v988 = vld [vmem:[%s1 + $0x798] sm:$0xf]
    %v989 = vld [vmem:[%s1 + $0x79c] sm:$0xf]
    %v990 = vld [vmem:[%s1 + $0x7a0] sm:$0xf]
    %v991 = vld [vmem:[%s1 + $0x7a4] sm:$0xf]
    %v992 = vld [vmem:[%s1 + $0x7a8] sm:$0xf]
    %v993 = vld [vmem:[%s1 + $0x7ac] sm:$0xf]
    %v994 = vld [vmem:[%s1 + $0x7b0] sm:$0xf]
    %v995 = vld [vmem:[%s1 + $0x7b4] sm:$0xf]
    %v996 = vld [vmem:[%s1 + $0x7b8] sm:$0xf]
    %v997 = vld [vmem:[%s1 + $0x7bc] sm:$0xf]
    %v998 = vld [vmem:[%s1 + $0x7c0] sm:$0xf]
    %v999 = vld [vmem:[%s1 + $0x7c4] sm:$0xf]
    %v1000 = vld [vmem:[%s1 + $0x7c8] sm:$0xf]
    %v1001 = vld [vmem:[%s1 + $0x7cc] sm:$0xf]
    %v1002 = vld [vmem:[%s1 + $0x7d0] sm:$0xf]
    %v1003 = vld [vmem:[%s1 + $0x7d4] sm:$0xf]
    %v1004 = vld [vmem:[%s1 + $0x7d8] sm:$0xf]
    %v1005 = vld [vmem:[%s1 + $0x7dc] sm:$0xf]
    %v1006 = vld [vmem:[%s1 + $0x7e0] sm:$0xf]
    %v1007 = vld [vmem:[%s1 + $0x7e4] sm:$0xf]
    %v1008 = vld [vmem:[%s1 + $0x7e8] sm:$0xf]
    %v1009 = vld [vmem:[%s1 + $0x7ec] sm:$0xf]
    %v1010 = vld [vmem:[%s1 + $0x7f0] sm:$0xf]
    %v1011 = vld [vmem:[%s1 + $0x7f4] sm:$0xf]
    %v1012 = vld [vmem:[%s1 + $0x7f8] sm:$0xf]
    %v1013 = vld [vmem:[%s1 + $0x7fc] sm:$0xf]
    %v1014 = vld [vmem:[%s1 + $0x800] sm:$0xf]
    %v1015 = vld [vmem:[%s1 + $0x804] sm:$0xf]
    %v1016 = vld [vmem:[%s1 + $0x808] sm:$0xf]
    %v1017 = vld [vmem:[%s1 + $0x80c] sm:$0xf]
    %v1018 = vld [vmem:[%s1 + $0x810] sm:$0xf]
    %v1019 = vld [vmem:[%s1 + $0x814] sm:$0xf]
    %v1020 = vld [vmem:[%s1 + $0x818] sm:$0xf]
    %v1021 = vld [vmem:[%s1 + $0x81c] sm:$0xf]
    %v1022 = vld [vmem:[%s1 + $0x820] sm:$0xf]
    %v1023 = vld [vmem:[%s1 + $0x824] sm:$0xf]
    %v1024 = vld [vmem:[%s1 + $0x828] sm:$0xf]
    %v1025 = vld [vmem:[%s1 + $0x82c] sm:$0xf]
    %v1026 = vld [vmem:[%s1 + $0x830] sm:$0xf]
    %v1027 = vld [vmem:[%s1 + $0x834] sm:$0xf]
    %v1028 = vld [vmem:[%s1 + $0x838] sm:$0xf]
    %v1029 = vld [vmem:[%s1 + $0x83c] sm:$0xf]
    %v1030 = vld [vmem:[%s1 + $0x840] sm:$0xf]
    %v1031 = vld [vmem:[%s1 + $0x844] sm:$0xf]
    %v1032 = vld [vmem:[%s1 + $0x848] sm:$0xf]
    %v1033 = vld [vmem:[%s1 + $0x84c] sm:$0xf]
    %v1034 = vld [vmem:[%s1 + $0x850] sm:$0xf]
    %v1035 = vld [vmem:[%s1 + $0x854] sm:$0xf]
    %v1036 = vld [vmem:[%s1 + $0x858] sm:$0xf]
    %v1037 = vld [vmem:[%s1 + $0x85c] sm:$0xf]
    %v1038 = vld [vmem:[%s1 + $0x860] sm:$0xf]
    %v1039 = vld [vmem:[%s1 + $0x864] sm:$0xf]
    %v1040 = vld [vmem:[%s1 + $0x868] sm:$0xf]
    %v1041 = vld [vmem:[%s1 + $0x86c] sm:$0xf]
    %v1042 = vld [vmem:[%s1 + $0x870] sm:$0xf]
    %v1043 = vld [vmem:[%s1 + $0x874] sm:$0xf]
    %v1044 = vld [vmem:[%s1 + $0x878] sm:$0xf]
    %v1045 = vld [vmem:[%s1 + $0x87c] sm:$0xf]
    %v1046 = vld [vmem:[%s1 + $0x880] sm:$0xf]
    %v1047 = vld [vmem:[%s1 + $0x884] sm:$0xf]
    %v1048 = vld [vmem:[%s1 + $0x888] sm:$0xf]
    %v1049 = vld [vmem:[%s1 + $0x88c] sm:$0xf]
    %v1050 = vld [vmem:[%s1 + $0x890] sm:$0xf]
    %v1051 = vld [vmem:[%s1 + $0x894] sm:$0xf]
    %v1052 = vld [vmem:[%s1 + $0x898] sm:$0xf]
    %v1053 = vld [vmem:[%s1 + $0x89c] sm:$0xf]
    %v1054 = vld [vmem:[%s1 + $0x8a0] sm:$0xf]
    %v1055 = vld [vmem:[%s1 + $0x8a4] sm:$0xf]
    %v1056 = vld [vmem:[%s1 + $0x8a8] sm:$0xf]
    %v1057 = vld [vmem:[%s1 + $0x8ac] sm:$0xf]
    %v1058 = vld [vmem:[%s1 + $0x8b0] sm:$0xf]
    %v1059 = vld [vmem:[%s1 + $0x8b4] sm:$0xf]
    %v1060 = vld [vmem:[%s1 + $0x8b8] sm:$0xf]
    %v1061 = vld [vmem:[%s1 + $0x8bc] sm:$0xf]
    %v1062 = vld [vmem:[%s1 + $0x8c0] sm:$0xf]
    %v1063 = vld [vmem:[%s1 + $0x8c4] sm:$0xf]
    %v1064 = vld [vmem:[%s1 + $0x8c8] sm:$0xf]
    %v1065 = vld [vmem:[%s1 + $0x8cc] sm:$0xf]
    %v1066 = vld [vmem:[%s1 + $0x8d0] sm:$0xf]
    %v1067 = vld [vmem:[%s1 + $0x8d4] sm:$0xf]
    %v1068 = vld [vmem:[%s1 + $0x8d8] sm:$0xf]
    %v1069 = vld [vmem:[%s1 + $0x8dc] sm:$0xf]
    %v1070 = vld [vmem:[%s1 + $0x8e0] sm:$0xf]
    %v1071 = vld [vmem:[%s1 + $0x8e4] sm:$0xf]
    %v1072 = vld [vmem:[%s1 + $0x8e8] sm:$0xf]
    %v1073 = vld [vmem:[%s1 + $0x8ec] sm:$0xf]
    %v1074 = vld [vmem:[%s1 + $0x8f0] sm:$0xf]
    %v1075 = vld [vmem:[%s1 + $0x8f4] sm:$0xf]
    %v1076 = vld [vmem:[%s1 + $0x8f8] sm:$0xf]
    %v1077 = vld [vmem:[%s1 + $0x8fc] sm:$0xf]
    %v1078 = vld [vmem:[%s1 + $0x900] sm:$0xf]
    %v1079 = vld [vmem:[%s1 + $0x904] sm:$0xf]
    %v1080 = vld [vmem:[%s1 + $0x908] sm:$0xf]
    %v1081 = vld [vmem:[%s1 + $0x90c] sm:$0xf]
    %v1082 = vld [vmem:[%s1 + $0x910] sm:$0xf]
    %v1083 = vld [vmem:[%s1 + $0x914] sm:$0xf]
    %v1084 = vld [vmem:[%s1 + $0x918] sm:$0xf]
    %v1085 = vld [vmem:[%s1 + $0x91c] sm:$0xf]
    %v1086 = vld [vmem:[%s1 + $0x920] sm:$0xf]
    %v1087 = vld [vmem:[%s1 + $0x924] sm:$0xf]
    %v1088 = vld [vmem:[%s1 + $0x928] sm:$0xf]
    %v1089 = vld [vmem:[%s1 + $0x92c] sm:$0xf]
    %v1090 = vld [vmem:[%s1 + $0x930] sm:$0xf]
    %v1091 = vld [vmem:[%s1 + $0x934] sm:$0xf]
    %v1092 = vld [vmem:[%s1 + $0x938] sm:$0xf]
    %v1093 = vld [vmem:[%s1 + $0x93c] sm:$0xf]
    %v1094 = vld [vmem:[%s1 + $0x940] sm:$0xf]
    %v1095 = vld [vmem:[%s1 + $0x944] sm:$0xf]
    %v1096 = vld [vmem:[%s1 + $0x948] sm:$0xf]
    %v1097 = vld [vmem:[%s1 + $0x94c] sm:$0xf]
    %v1098 = vld [vmem:[%s1 + $0x950] sm:$0xf]
    %v1099 = vld [vmem:[%s1 + $0x954] sm:$0xf]
    %v1100 = vld [vmem:[%s1 + $0x958] sm:$0xf]
    %v1101 = vld [vmem:[%s1 + $0x95c] sm:$0xf]
    %v1102 = vld [vmem:[%s1 + $0x960] sm:$0xf]
    %v1103 = vld [vmem:[%s1 + $0x964] sm:$0xf]
    %v1104 = vld [vmem:[%s1 + $0x968] sm:$0xf]
    %v1105 = vld [vmem:[%s1 + $0x96c] sm:$0xf]
    %v1106 = vld [vmem:[%s1 + $0x970] sm:$0xf]
    %v1107 = vld [vmem:[%s1 + $0x974] sm:$0xf]
    %v1108 = vld [vmem:[%s1 + $0x978] sm:$0xf]
    %v1109 = vld [vmem:[%s1 + $0x97c] sm:$0xf]
    %v1110 = vld [vmem:[%s1 + $0x980] sm:$0xf]
    %v1111 = vld [vmem:[%s1 + $0x984] sm:$0xf]
    %v1112 = vld [vmem:[%s1 + $0x988] sm:$0xf]
    %v1113 = vld [vmem:[%s1 + $0x98c] sm:$0xf]
    %v1114 = vld [vmem:[%s1 + $0x990] sm:$0xf]
    %v1115 = vld [vmem:[%s1 + $0x994] sm:$0xf]
    %v1116 = vld [vmem:[%s1 + $0x998] sm:$0xf]
    %v1117 = vld [vmem:[%s1 + $0x99c] sm:$0xf]
    %v1118 = vld [vmem:[%s1 + $0x9a0] sm:$0xf]
    %v1119 = vld [vmem:[%s1 + $0x9a4] sm:$0xf]
    %v1120 = vld [vmem:[%s1 + $0x9a8] sm:$0xf]
    %v1121 = vld [vmem:[%s1 + $0x9ac] sm:$0xf]
    %v1122 = vld [vmem:[%s1 + $0x9b0] sm:$0xf]
    %v1123 = vld [vmem:[%s1 + $0x9b4] sm:$0xf]
    %v1124 = vld [vmem:[%s1 + $0x9b8] sm:$0xf]
    %v1125 = vld [vmem:[%s1 + $0x9bc] sm:$0xf]
    %v1126 = vld [vmem:[%s1 + $0x9c0] sm:$0xf]
    %v1127 = vld [vmem:[%s1 + $0x9c4] sm:$0xf]
    %v1128 = vld [vmem:[%s1 + $0x9c8] sm:$0xf]
    %v1129 = vld [vmem:[%s1 + $0x9cc] sm:$0xf]
    %v1130 = vld [vmem:[%s1 + $0x9d0] sm:$0xf]
    %v1131 = vld [vmem:[%s1 + $0x9d4] sm:$0xf]
    %v1132 = vld [vmem:[%s1 + $0x9d8] sm:$0xf]
    %v1133 = vld [vmem:[%s1 + $0x9dc] sm:$0xf]
    %v1134 = vld [vmem:[%s1 + $0x9e0] sm:$0xf]
    %v1135 = vld [vmem:[%s1 + $0x9e4] sm:$0xf]
    %v1136 = vld [vmem:[%s1 + $0x9e8] sm:$0xf]
    %v1137 = vld [vmem:[%s1 + $0x9ec] sm:$0xf]
    %v1138 = vld [vmem:[%s1 + $0x9f0] sm:$0xf]
    %v1139 = vld [vmem:[%s1 + $0x9f4] sm:$0xf]
    %v1140 = vld [vmem:[%s1 + $0x9f8] sm:$0xf]
    %v1141 = vld [vmem:[%s1 + $0x9fc] sm:$0xf]
    %v1142 = vld [vmem:[%s1 + $0xa00] sm:$0xf]
    %v1143 = vld [vmem:[%s1 + $0xa04] sm:$0xf]
    %v1144 = vld [vmem:[%s1 + $0xa08] sm:$0xf]
    %v1145 = vld [vmem:[%s1 + $0xa0c] sm:$0xf]
    %v1146 = vld [vmem:[%s1 + $0xa10] sm:$0xf]
    %v1147 = vld [vmem:[%s1 + $0xa14] sm:$0xf]
    %v1148 = vld [vmem:[%s1 + $0xa18] sm:$0xf]
    %v1149 = vld [vmem:[%s1 + $0xa1c] sm:$0xf]
    %v1150 = vld [vmem:[%s1 + $0xa20] sm:$0xf]
    %v1151 = vld [vmem:[%s1 + $0xa24] sm:$0xf]
    %v1152 = vld [vmem:[%s1 + $0xa28] sm:$0xf]
    %v1153 = vld [vmem:[%s1 + $0xa2c] sm:$0xf]
    %v1154 = vld [vmem:[%s1 + $0xa30] sm:$0xf]
    %v1155 = vld [vmem:[%s1 + $0xa34] sm:$0xf]
    %v1156 = vld [vmem:[%s1 + $0xa38] sm:$0xf]
    %v1157 = vld [vmem:[%s1 + $0xa3c] sm:$0xf]
    %v1158 = vld [vmem:[%s1 + $0xa40] sm:$0xf]
    %v1159 = vld [vmem:[%s1 + $0xa44] sm:$0xf]
    %v1160 = vld [vmem:[%s1 + $0xa48] sm:$0xf]
    %v1161 = vld [vmem:[%s1 + $0xa4c] sm:$0xf]
    %v1162 = vld [vmem:[%s1 + $0xa50] sm:$0xf]
    %v1163 = vld [vmem:[%s1 + $0xa54] sm:$0xf]
    %v1164 = vld [vmem:[%s1 + $0xa58] sm:$0xf]
    %v1165 = vld [vmem:[%s1 + $0xa5c] sm:$0xf]
    %v1166 = vld [vmem:[%s1 + $0xa60] sm:$0xf]
    %v1167 = vld [vmem:[%s1 + $0xa64] sm:$0xf]
    %v1168 = vld [vmem:[%s1 + $0xa68] sm:$0xf]
    %v1169 = vld [vmem:[%s1 + $0xa6c] sm:$0xf]
    %v1170 = vld [vmem:[%s1 + $0xa70] sm:$0xf]
    %v1171 = vld [vmem:[%s1 + $0xa74] sm:$0xf]
    %v1172 = vld [vmem:[%s1 + $0xa78] sm:$0xf]
    %v1173 = vld [vmem:[%s1 + $0xa7c] sm:$0xf]
    %v1174 = vld [vmem:[%s1 + $0xa80] sm:$0xf]
    %v1175 = vld [vmem:[%s1 + $0xa84] sm:$0xf]
    %v1176 = vld [vmem:[%s1 + $0xa88] sm:$0xf]
    %v1177 = vld [vmem:[%s1 + $0xa8c] sm:$0xf]
    %v1178 = vld [vmem:[%s1 + $0xa90] sm:$0xf]
    %v1179 = vld [vmem:[%s1 + $0xa94] sm:$0xf]
    %v1180 = vld [vmem:[%s1 + $0xa98] sm:$0xf]
    %v1181 = vld [vmem:[%s1 + $0xa9c] sm:$0xf]
    %v1182 = vld [vmem:[%s1 + $0xaa0] sm:$0xf]
    %v1183 = vld [vmem:[%s1 + $0xaa4] sm:$0xf]
    %v1184 = vld [vmem:[%s1 + $0xaa8] sm:$0xf]
    %v1185 = vld [vmem:[%s1 + $0xaac] sm:$0xf]
    %v1186 = vld [vmem:[%s1 + $0xab0] sm:$0xf]
    %v1187 = vld [vmem:[%s1 + $0xab4] sm:$0xf]
    %v1188 = vld [vmem:[%s1 + $0xab8] sm:$0xf]
    %v1189 = vld [vmem:[%s1 + $0xabc] sm:$0xf]
    %v1190 = vld [vmem:[%s1 + $0xac0] sm:$0xf]
    %v1191 = vld [vmem:[%s1 + $0xac4] sm:$0xf]
    %v1192 = vld [vmem:[%s1 + $0xac8] sm:$0xf]
    %v1193 = vld [vmem:[%s1 + $0xacc] sm:$0xf]
    %v1194 = vld [vmem:[%s1 + $0xad0] sm:$0xf]
    %v1195 = vld [vmem:[%s1 + $0xad4] sm:$0xf]
    %v1196 = vld [vmem:[%s1 + $0xad8] sm:$0xf]
    %v1197 = vld [vmem:[%s1 + $0xadc] sm:$0xf]
    %v1198 = vld [vmem:[%s1 + $0xae0] sm:$0xf]
    %v1199 = vld [vmem:[%s1 + $0xae4] sm:$0xf]
    %v1200 = vld [vmem:[%s1 + $0xae8] sm:$0xf]
    %v1201 = vld [vmem:[%s1 + $0xaec] sm:$0xf]
    %v1202 = vld [vmem:[%s1 + $0xaf0] sm:$0xf]
    %v1203 = vld [vmem:[%s1 + $0xaf4] sm:$0xf]
    %v1204 = vld [vmem:[%s1 + $0xaf8] sm:$0xf]
    %v1205 = vld [vmem:[%s1 + $0xafc] sm:$0xf]
    %v1206 = vld [vmem:[%s1 + $0xb00] sm:$0xf]
    %v1207 = vld [vmem:[%s1 + $0xb04] sm:$0xf]
    %v1208 = vld [vmem:[%s1 + $0xb08] sm:$0xf]
    %v1209 = vld [vmem:[%s1 + $0xb0c] sm:$0xf]
    %v1210 = vld [vmem:[%s1 + $0xb10] sm:$0xf]
    %v1211 = vld [vmem:[%s1 + $0xb14] sm:$0xf]
    %v1212 = vld [vmem:[%s1 + $0xb18] sm:$0xf]
    %v1213 = vld [vmem:[%s1 + $0xb1c] sm:$0xf]
    %v1214 = vld [vmem:[%s1 + $0xb20] sm:$0xf]
    %v1215 = vld [vmem:[%s1 + $0xb24] sm:$0xf]
    %v1216 = vld [vmem:[%s1 + $0xb28] sm:$0xf]
    %v1217 = vld [vmem:[%s1 + $0xb2c] sm:$0xf]
    %v1218 = vld [vmem:[%s1 + $0xb30] sm:$0xf]
    %v1219 = vld [vmem:[%s1 + $0xb34] sm:$0xf]
    %v1220 = vld [vmem:[%s1 + $0xb38] sm:$0xf]
    %v1221 = vld [vmem:[%s1 + $0xb3c] sm:$0xf]
    %v1222 = vld [vmem:[%s1 + $0xb40] sm:$0xf]
    %v1223 = vld [vmem:[%s1 + $0xb44] sm:$0xf]
    %v1224 = vld [vmem:[%s1 + $0xb48] sm:$0xf]
    %v1225 = vld [vmem:[%s1 + $0xb4c] sm:$0xf]
    %v1226 = vld [vmem:[%s1 + $0xb50] sm:$0xf]
    %v1227 = vld [vmem:[%s1 + $0xb54] sm:$0xf]
    %v1228 = vld [vmem:[%s1 + $0xb58] sm:$0xf]
    %v1229 = vld [vmem:[%s1 + $0xb5c] sm:$0xf]
    %v1230 = vld [vmem:[%s1 + $0xb60] sm:$0xf]
    %v1231 = vld [vmem:[%s1 + $0xb64] sm:$0xf]
    %v1232 = vld [vmem:[%s1 + $0xb68] sm:$0xf]
    %v1233 = vld [vmem:[%s1 + $0xb6c] sm:$0xf]
    %v1234 = vld [vmem:[%s1 + $0xb70] sm:$0xf]
    %v1235 = vld [vmem:[%s1 + $0xb74] sm:$0xf]
    %v1236 = vld [vmem:[%s1 + $0xb78] sm:$0xf]
    %v1237 = vld [vmem:[%s1 + $0xb7c] sm:$0xf]
    %v1238 = vld [vmem:[%s1 + $0xb80] sm:$0xf]
    %v1239 = vld [vmem:[%s1 + $0xb84] sm:$0xf]
    %v1240 = vld [vmem:[%s1 + $0xb88] sm:$0xf]
    %v1241 = vld [vmem:[%s1 + $0xb8c] sm:$0xf]
    %v1242 = vld [vmem:[%s1 + $0xb90] sm:$0xf]
    %v1243 = vld [vmem:[%s1 + $0xb94] sm:$0xf]
    %v1244 = vld [vmem:[%s1 + $0xb98] sm:$0xf]
    %v1245 = vld [vmem:[%s1 + $0xb9c] sm:$0xf]
    %v1246 = vld [vmem:[%s1 + $0xba0] sm:$0xf]
    %v1247 = vld [vmem:[%s1 + $0xba4] sm:$0xf]
    %v1248 = vld [vmem:[%s1 + $0xba8] sm:$0xf]
    %v1249 = vld [vmem:[%s1 + $0xbac] sm:$0xf]
    %v1250 = vld [vmem:[%s1 + $0xbb0] sm:$0xf]
    %v1251 = vld [vmem:[%s1 + $0xbb4] sm:$0xf]
    %v1252 = vld [vmem:[%s1 + $0xbb8] sm:$0xf]
    %v1253 = vld [vmem:[%s1 + $0xbbc] sm:$0xf]
    %v1254 = vld [vmem:[%s1 + $0xbc0] sm:$0xf]
    %v1255 = vld [vmem:[%s1 + $0xbc4] sm:$0xf]
    %v1256 = vld [vmem:[%s1 + $0xbc8] sm:$0xf]
    %v1257 = vld [vmem:[%s1 + $0xbcc] sm:$0xf]
    %v1258 = vld [vmem:[%s1 + $0xbd0] sm:$0xf]
    %v1259 = vld [vmem:[%s1 + $0xbd4] sm:$0xf]
    %v1260 = vld [vmem:[%s1 + $0xbd8] sm:$0xf]
    %v1261 = vld [vmem:[%s1 + $0xbdc] sm:$0xf]
    %v1262 = vld [vmem:[%s1 + $0xbe0] sm:$0xf]
    %v1263 = vld [vmem:[%s1 + $0xbe4] sm:$0xf]
    %v1264 = vld [vmem:[%s1 + $0xbe8] sm:$0xf]
    %v1265 = vld [vmem:[%s1 + $0xbec] sm:$0xf]
    %v1266 = vld [vmem:[%s1 + $0xbf0] sm:$0xf]
    %v1267 = vld [vmem:[%s1 + $0xbf4] sm:$0xf]
    %v1268 = vld [vmem:[%s1 + $0xbf8] sm:$0xf]
    %v1269 = vld [vmem:[%s1 + $0xbfc] sm:$0xf]
    %v1270 = vld [vmem:[%s1 + $0xc00] sm:$0xf]
    %v1271 = vld [vmem:[%s1 + $0xc04] sm:$0xf]
    %v1272 = vld [vmem:[%s1 + $0xc08] sm:$0xf]
    %v1273 = vld [vmem:[%s1 + $0xc0c] sm:$0xf]
    %v1274 = vld [vmem:[%s1 + $0xc10] sm:$0xf]
    %v1275 = vld [vmem:[%s1 + $0xc14] sm:$0xf]
    %v1276 = vld [vmem:[%s1 + $0xc18] sm:$0xf]
    %v1277 = vld [vmem:[%s1 + $0xc1c] sm:$0xf]
    %v1278 = vld [vmem:[%s1 + $0xc20] sm:$0xf]
    %v1279 = vld [vmem:[%s1 + $0xc24] sm:$0xf]
    %v1280 = vld [vmem:[%s1 + $0xc28] sm:$0xf]
    %v1281 = vld [vmem:[%s1 + $0xc2c] sm:$0xf]
    %v1282 = vld [vmem:[%s1 + $0xc30] sm:$0xf]
    %v1283 = vld [vmem:[%s1 + $0xc34] sm:$0xf]
    %v1284 = vld [vmem:[%s1 + $0xc38] sm:$0xf]
    %v1285 = vld [vmem:[%s1 + $0xc3c] sm:$0xf]
    %v1286 = vld [vmem:[%s1 + $0xc40] sm:$0xf]
    %v1287 = vld [vmem:[%s1 + $0xc44] sm:$0xf]
    %v1288 = vld [vmem:[%s1 + $0xc48] sm:$0xf]
    %v1289 = vld [vmem:[%s1 + $0xc4c] sm:$0xf]
    %v1290 = vld [vmem:[%s1 + $0xc50] sm:$0xf]
    %v1291 = vld [vmem:[%s1 + $0xc54] sm:$0xf]
    %v1292 = vld [vmem:[%s1 + $0xc58] sm:$0xf]
    %v1293 = vld [vmem:[%s1 + $0xc5c] sm:$0xf]
    %v1294 = vld [vmem:[%s1 + $0xc60] sm:$0xf]
    %v1295 = vld [vmem:[%s1 + $0xc64] sm:$0xf]
    %v1296 = vld [vmem:[%s1 + $0xc68] sm:$0xf]
    %v1297 = vld [vmem:[%s1 + $0xc6c] sm:$0xf]
    %v1298 = vld [vmem:[%s1 + $0xc70] sm:$0xf]
    %v1299 = vld [vmem:[%s1 + $0xc74] sm:$0xf]
    %v1300 = vld [vmem:[%s1 + $0xc78] sm:$0xf]
    %v1301 = vld [vmem:[%s1 + $0xc7c] sm:$0xf]
    %v1302 = vld [vmem:[%s1 + $0xc80] sm:$0xf]
    %v1303 = vld [vmem:[%s1 + $0xc84] sm:$0xf]
    %v1304 = vld [vmem:[%s1 + $0xc88] sm:$0xf]
    %v1305 = vld [vmem:[%s1 + $0xc8c] sm:$0xf]
    %v1306 = vld [vmem:[%s1 + $0xc90] sm:$0xf]
    %v1307 = vld [vmem:[%s1 + $0xc94] sm:$0xf]
    %v1308 = vld [vmem:[%s1 + $0xc98] sm:$0xf]
    %v1309 = vld [vmem:[%s1 + $0xc9c] sm:$0xf]
    %v1310 = vld [vmem:[%s1 + $0xca0] sm:$0xf]
    %v1311 = vld [vmem:[%s1 + $0xca4] sm:$0xf]
    %v1312 = vld [vmem:[%s1 + $0xca8] sm:$0xf]
    %v1313 = vld [vmem:[%s1 + $0xcac] sm:$0xf]
    %v1314 = vld [vmem:[%s1 + $0xcb0] sm:$0xf]
    %v1315 = vld [vmem:[%s1 + $0xcb4] sm:$0xf]
    %v1316 = vld [vmem:[%s1 + $0xcb8] sm:$0xf]
    %v1317 = vld [vmem:[%s1 + $0xcbc] sm:$0xf]
    %v1318 = vld [vmem:[%s1 + $0xcc0] sm:$0xf]
    %v1319 = vld [vmem:[%s1 + $0xcc4] sm:$0xf]
    %v1320 = vld [vmem:[%s1 + $0xcc8] sm:$0xf]
    %v1321 = vld [vmem:[%s1 + $0xccc] sm:$0xf]
    %v1322 = vld [vmem:[%s1 + $0xcd0] sm:$0xf]
    %v1323 = vld [vmem:[%s1 + $0xcd4] sm:$0xf]
    %v1324 = vld [vmem:[%s1 + $0xcd8] sm:$0xf]
    %v1325 = vld [vmem:[%s1 + $0xcdc] sm:$0xf]
    %v1326 = vld [vmem:[%s1 + $0xce0] sm:$0xf]
    %v1327 = vld [vmem:[%s1 + $0xce4] sm:$0xf]
    %v1328 = vld [vmem:[%s1 + $0xce8] sm:$0xf]
    %v1329 = vld [vmem:[%s1 + $0xcec] sm:$0xf]
    %v1330 = vld [vmem:[%s1 + $0xcf0] sm:$0xf]
    %v1331 = vld [vmem:[%s1 + $0xcf4] sm:$0xf]
    %v1332 = vld [vmem:[%s1 + $0xcf8] sm:$0xf]
    %v1333 = vld [vmem:[%s1 + $0xcfc] sm:$0xf]
    %v1334 = vld [vmem:[%s1 + $0xd00] sm:$0xf]
    %v1335 = vld [vmem:[%s1 + $0xd04] sm:$0xf]
    %v1336 = vld [vmem:[%s1 + $0xd08] sm:$0xf]
    %v1337 = vld [vmem:[%s1 + $0xd0c] sm:$0xf]
    %v1338 = vld [vmem:[%s1 + $0xd10] sm:$0xf]
    %v1339 = vld [vmem:[%s1 + $0xd14] sm:$0xf]
    %v1340 = vld [vmem:[%s1 + $0xd18] sm:$0xf]
    %v1341 = vld [vmem:[%s1 + $0xd1c] sm:$0xf]
    %v1342 = vld [vmem:[%s1 + $0xd20] sm:$0xf]
    %v1343 = vld [vmem:[%s1 + $0xd24] sm:$0xf]
    %v1344 = vld [vmem:[%s1 + $0xd28] sm:$0xf]
    %v1345 = vld [vmem:[%s1 + $0xd2c] sm:$0xf]
    %v1346 = vld [vmem:[%s1 + $0xd30] sm:$0xf]
    %v1347 = vld [vmem:[%s1 + $0xd34] sm:$0xf]
    %v1348 = vld [vmem:[%s1 + $0xd38] sm:$0xf]
    %v1349 = vld [vmem:[%s1 + $0xd3c] sm:$0xf]
    %v1350 = vld [vmem:[%s1 + $0xd40] sm:$0xf]
    %v1351 = vld [vmem:[%s1 + $0xd44] sm:$0xf]
    %v1352 = vld [vmem:[%s1 + $0xd48] sm:$0xf]
    %v1353 = vld [vmem:[%s1 + $0xd4c] sm:$0xf]
    %v1354 = vld [vmem:[%s1 + $0xd50] sm:$0xf]
    %v1355 = vld [vmem:[%s1 + $0xd54] sm:$0xf]
    %v1356 = vld [vmem:[%s1 + $0xd58] sm:$0xf]
    %v1357 = vld [vmem:[%s1 + $0xd5c] sm:$0xf]
    %v1358 = vld [vmem:[%s1 + $0xd60] sm:$0xf]
    %v1359 = vld [vmem:[%s1 + $0xd64] sm:$0xf]
    %v1360 = vld [vmem:[%s1 + $0xd68] sm:$0xf]
    %v1361 = vld [vmem:[%s1 + $0xd6c] sm:$0xf]
    %v1362 = vld [vmem:[%s1 + $0xd70] sm:$0xf]
    %v1363 = vld [vmem:[%s1 + $0xd74] sm:$0xf]
    %v1364 = vld [vmem:[%s1 + $0xd78] sm:$0xf]
    %v1365 = vld [vmem:[%s1 + $0xd7c] sm:$0xf]
    %v1366 = vld [vmem:[%s1 + $0xd80] sm:$0xf]
    %v1367 = vld [vmem:[%s1 + $0xd84] sm:$0xf]
    %v1368 = vld [vmem:[%s1 + $0xd88] sm:$0xf]
    %v1369 = vld [vmem:[%s1 + $0xd8c] sm:$0xf]
    %v1370 = vld [vmem:[%s1 + $0xd90] sm:$0xf]
    %v1371 = vld [vmem:[%s1 + $0xd94] sm:$0xf]
    %v1372 = vld [vmem:[%s1 + $0xd98] sm:$0xf]
    %v1373 = vld [vmem:[%s1 + $0xd9c] sm:$0xf]
    %v1374 = vld [vmem:[%s1 + $0xda0] sm:$0xf]
    %v1375 = vld [vmem:[%s1 + $0xda4] sm:$0xf]
    %v1376 = vld [vmem:[%s1 + $0xda8] sm:$0xf]
    %v1377 = vld [vmem:[%s1 + $0xdac] sm:$0xf]
    %v1378 = vld [vmem:[%s1 + $0xdb0] sm:$0xf]
    %v1379 = vld [vmem:[%s1 + $0xdb4] sm:$0xf]
    %v1380 = vld [vmem:[%s1 + $0xdb8] sm:$0xf]
    %v1381 = vld [vmem:[%s1 + $0xdbc] sm:$0xf]
    %v1382 = vld [vmem:[%s1 + $0xdc0] sm:$0xf]
    %v1383 = vld [vmem:[%s1 + $0xdc4] sm:$0xf]
    %v1384 = vld [vmem:[%s1 + $0xdc8] sm:$0xf]
    %v1385 = vld [vmem:[%s1 + $0xdcc] sm:$0xf]
    %v1386 = vld [vmem:[%s1 + $0xdd0] sm:$0xf]
    %v1387 = vld [vmem:[%s1 + $0xdd4] sm:$0xf]
    %v1388 = vld [vmem:[%s1 + $0xdd8] sm:$0xf]
    %v1389 = vld [vmem:[%s1 + $0xddc] sm:$0xf]
    %v1390 = vld [vmem:[%s1 + $0xde0] sm:$0xf]
    %v1391 = vld [vmem:[%s1 + $0xde4] sm:$0xf]
    %v1392 = vld [vmem:[%s1 + $0xde8] sm:$0xf]
    %v1393 = vld [vmem:[%s1 + $0xdec] sm:$0xf]
    %v1394 = vld [vmem:[%s1 + $0xdf0] sm:$0xf]
    %v1395 = vld [vmem:[%s1 + $0xdf4] sm:$0xf]
    %v1396 = vld [vmem:[%s1 + $0xdf8] sm:$0xf]
    %v1397 = vld [vmem:[%s1 + $0xdfc] sm:$0xf]
    %v1398 = vld [vmem:[%s1 + $0xe00] sm:$0xf]
    %v1399 = vld [vmem:[%s1 + $0xe04] sm:$0xf]
    %v1400 = vld [vmem:[%s1 + $0xe08] sm:$0xf]
    %v1401 = vld [vmem:[%s1 + $0xe0c] sm:$0xf]
    %v1402 = vld [vmem:[%s1 + $0xe10] sm:$0xf]
    %v1403 = vld [vmem:[%s1 + $0xe14] sm:$0xf]
    %v1404 = vld [vmem:[%s1 + $0xe18] sm:$0xf]
    %v1405 = vld [vmem:[%s1 + $0xe1c] sm:$0xf]
    %v1406 = vld [vmem:[%s1 + $0xe20] sm:$0xf]
    %v1407 = vld [vmem:[%s1 + $0xe24] sm:$0xf]
    %v1408 = vld [vmem:[%s1 + $0xe28] sm:$0xf]
    %v1409 = vld [vmem:[%s1 + $0xe2c] sm:$0xf]
    %v1410 = vld [vmem:[%s1 + $0xe30] sm:$0xf]
    %v1411 = vld [vmem:[%s1 + $0xe34] sm:$0xf]
    %v1412 = vld [vmem:[%s1 + $0xe38] sm:$0xf]
    %v1413 = vld [vmem:[%s1 + $0xe3c] sm:$0xf]
    %v1414 = vld [vmem:[%s1 + $0xe40] sm:$0xf]
    %v1415 = vld [vmem:[%s1 + $0xe44] sm:$0xf]
    %v1416 = vld [vmem:[%s1 + $0xe48] sm:$0xf]
    %v1417 = vld [vmem:[%s1 + $0xe4c] sm:$0xf]
    %v1418 = vld [vmem:[%s1 + $0xe50] sm:$0xf]
    %v1419 = vld [vmem:[%s1 + $0xe54] sm:$0xf]
    %v1420 = vld [vmem:[%s1 + $0xe58] sm:$0xf]
    %v1421 = vld [vmem:[%s1 + $0xe5c] sm:$0xf]
    %v1422 = vld [vmem:[%s1 + $0xe60] sm:$0xf]
    %v1423 = vld [vmem:[%s1 + $0xe64] sm:$0xf]
    %v1424 = vld [vmem:[%s1 + $0xe68] sm:$0xf]
    %v1425 = vld [vmem:[%s1 + $0xe6c] sm:$0xf]
    %v1426 = vld [vmem:[%s1 + $0xe70] sm:$0xf]
    %v1427 = vld [vmem:[%s1 + $0xe74] sm:$0xf]
    %v1428 = vld [vmem:[%s1 + $0xe78] sm:$0xf]
    %v1429 = vld [vmem:[%s1 + $0xe7c] sm:$0xf]
    %v1430 = vld [vmem:[%s1 + $0xe80] sm:$0xf]
    %v1431 = vld [vmem:[%s1 + $0xe84] sm:$0xf]
    %v1432 = vld [vmem:[%s1 + $0xe88] sm:$0xf]
    %v1433 = vld [vmem:[%s1 + $0xe8c] sm:$0xf]
    %v1434 = vld [vmem:[%s1 + $0xe90] sm:$0xf]
    %v1435 = vld [vmem:[%s1 + $0xe94] sm:$0xf]
    %v1436 = vld [vmem:[%s1 + $0xe98] sm:$0xf]
    %v1437 = vld [vmem:[%s1 + $0xe9c] sm:$0xf]
    %v1438 = vld [vmem:[%s1 + $0xea0] sm:$0xf]
    %v1439 = vld [vmem:[%s1 + $0xea4] sm:$0xf]
    %v1440 = vld [vmem:[%s1 + $0xea8] sm:$0xf]
    %v1441 = vld [vmem:[%s1 + $0xeac] sm:$0xf]
    %v1442 = vld [vmem:[%s1 + $0xeb0] sm:$0xf]
    %v1443 = vld [vmem:[%s1 + $0xeb4] sm:$0xf]
    %v1444 = vld [vmem:[%s1 + $0xeb8] sm:$0xf]
    %v1445 = vld [vmem:[%s1 + $0xebc] sm:$0xf]
    %v1446 = vld [vmem:[%s1 + $0xec0] sm:$0xf]
    %v1447 = vld [vmem:[%s1 + $0xec4] sm:$0xf]
    %v1448 = vld [vmem:[%s1 + $0xec8] sm:$0xf]
    %v1449 = vld [vmem:[%s1 + $0xecc] sm:$0xf]
    %v1450 = vld [vmem:[%s1 + $0xed0] sm:$0xf]
    %v1451 = vld [vmem:[%s1 + $0xed4] sm:$0xf]
    %v1452 = vld [vmem:[%s1 + $0xed8] sm:$0xf]
    %v1453 = vld [vmem:[%s1 + $0xedc] sm:$0xf]
    %v1454 = vld [vmem:[%s1 + $0xee0] sm:$0xf]
    %v1455 = vld [vmem:[%s1 + $0xee4] sm:$0xf]
    %v1456 = vld [vmem:[%s1 + $0xee8] sm:$0xf]
    %v1457 = vld [vmem:[%s1 + $0xeec] sm:$0xf]
    %v1458 = vld [vmem:[%s1 + $0xef0] sm:$0xf]
    %v1459 = vld [vmem:[%s1 + $0xef4] sm:$0xf]
    %v1460 = vld [vmem:[%s1 + $0xef8] sm:$0xf]
    %v1461 = vld [vmem:[%s1 + $0xefc] sm:$0xf]
    %v1462 = vld [vmem:[%s1 + $0xf00] sm:$0xf]
    %v1463 = vld [vmem:[%s1 + $0xf04] sm:$0xf]
    %v1464 = vld [vmem:[%s1 + $0xf08] sm:$0xf]
    %v1465 = vld [vmem:[%s1 + $0xf0c] sm:$0xf]
    %v1466 = vld [vmem:[%s1 + $0xf10] sm:$0xf]
    %v1467 = vld [vmem:[%s1 + $0xf14] sm:$0xf]
    %v1468 = vld [vmem:[%s1 + $0xf18] sm:$0xf]
    %v1469 = vld [vmem:[%s1 + $0xf1c] sm:$0xf]
    %v1470 = vld [vmem:[%s1 + $0xf20] sm:$0xf]
    %v1471 = vld [vmem:[%s1 + $0xf24] sm:$0xf]
    %v1472 = vld [vmem:[%s1 + $0xf28] sm:$0xf]
    %v1473 = vld [vmem:[%s1 + $0xf2c] sm:$0xf]
    %v1474 = vld [vmem:[%s1 + $0xf30] sm:$0xf]
    %v1475 = vld [vmem:[%s1 + $0xf34] sm:$0xf]
    %v1476 = vld [vmem:[%s1 + $0xf38] sm:$0xf]
    %v1477 = vld [vmem:[%s1 + $0xf3c] sm:$0xf]
    %v1478 = vld [vmem:[%s1 + $0xf40] sm:$0xf]
    %v1479 = vld [vmem:[%s1 + $0xf44] sm:$0xf]
    %v1480 = vld [vmem:[%s1 + $0xf48] sm:$0xf]
    %v1481 = vld [vmem:[%s1 + $0xf4c] sm:$0xf]
    %v1482 = vld [vmem:[%s1 + $0xf50] sm:$0xf]
    %v1483 = vld [vmem:[%s1 + $0xf54] sm:$0xf]
    %v1484 = vld [vmem:[%s1 + $0xf58] sm:$0xf]
    %v1485 = vld [vmem:[%s1 + $0xf5c] sm:$0xf]
    %v1486 = vld [vmem:[%s1 + $0xf60] sm:$0xf]
    %v1487 = vld [vmem:[%s1 + $0xf64] sm:$0xf]
    %v1488 = vld [vmem:[%s1 + $0xf68] sm:$0xf]
    %v1489 = vld [vmem:[%s1 + $0xf6c] sm:$0xf]
    %v1490 = vld [vmem:[%s1 + $0xf70] sm:$0xf]
    %v1491 = vld [vmem:[%s1 + $0xf74] sm:$0xf]
    %v1492 = vld [vmem:[%s1 + $0xf78] sm:$0xf]
    %v1493 = vld [vmem:[%s1 + $0xf7c] sm:$0xf]
    %v1494 = vld [vmem:[%s1 + $0xf80] sm:$0xf]
    %v1495 = vld [vmem:[%s1 + $0xf84] sm:$0xf]
    %v1496 = vld [vmem:[%s1 + $0xf88] sm:$0xf]
    %v1497 = vld [vmem:[%s1 + $0xf8c] sm:$0xf]
    %v1498 = vld [vmem:[%s1 + $0xf90] sm:$0xf]
    %v1499 = vld [vmem:[%s1 + $0xf94] sm:$0xf]
    %v1500 = vld [vmem:[%s1 + $0xf98] sm:$0xf]
    %v1501 = vld [vmem:[%s1 + $0xf9c] sm:$0xf]
    %v1502 = vld [vmem:[%s1 + $0xfa0] sm:$0xf]
    %v1503 = vld [vmem:[%s1 + $0xfa4] sm:$0xf]
    %v1504 = vld [vmem:[%s1 + $0xfa8] sm:$0xf]
    %v1505 = vld [vmem:[%s1 + $0xfac] sm:$0xf]
    %v1506 = vld [vmem:[%s1 + $0xfb0] sm:$0xf]
    %v1507 = vld [vmem:[%s1 + $0xfb4] sm:$0xf]
    %v1508 = vld [vmem:[%s1 + $0xfb8] sm:$0xf]
    %v1509 = vld [vmem:[%s1 + $0xfbc] sm:$0xf]
    %v1510 = vld [vmem:[%s1 + $0xfc0] sm:$0xf]
    %v1511 = vld [vmem:[%s1 + $0xfc4] sm:$0xf]
    %v1512 = vld [vmem:[%s1 + $0xfc8] sm:$0xf]
    %v1513 = vld [vmem:[%s1 + $0xfcc] sm:$0xf]
    %v1514 = vld [vmem:[%s1 + $0xfd0] sm:$0xf]
    %v1515 = vld [vmem:[%s1 + $0xfd4] sm:$0xf]
    %v1516 = vld [vmem:[%s1 + $0xfd8] sm:$0xf]
    %v1517 = vld [vmem:[%s1 + $0xfdc] sm:$0xf]
    %v1518 = vld [vmem:[%s1 + $0xfe0] sm:$0xf]
    %v1519 = vld [vmem:[%s1 + $0xfe4] sm:$0xf]
    %v1520 = vld [vmem:[%s1 + $0xfe8] sm:$0xf]
    %v1521 = vld [vmem:[%s1 + $0xfec] sm:$0xf]
    %v1522 = vld [vmem:[%s1 + $0xff0] sm:$0xf]
    %v1523 = vld [vmem:[%s1 + $0xff4] sm:$0xf]
    %v1524 = vld [vmem:[%s1 + $0xff8] sm:$0xf]
    %v1525 = vld [vmem:[%s1 + $0xffc] sm:$0xf]
    %v1526 = vld [vmem:[%s1 + $0x1000] sm:$0xf]
    %v1527 = vld [vmem:[%s1 + $0x1004] sm:$0xf]
    %v1528 = vld [vmem:[%s1 + $0x1008] sm:$0xf]
    %v1529 = vld [vmem:[%s1 + $0x100c] sm:$0xf]
    %v1530 = vld [vmem:[%s1 + $0x1010] sm:$0xf]
    %v1531 = vld [vmem:[%s1 + $0x1014] sm:$0xf]
    %v1532 = vld [vmem:[%s1 + $0x1018] sm:$0xf]
    %v1533 = vld [vmem:[%s1 + $0x101c] sm:$0xf]
    %v1534 = vld [vmem:[%s1 + $0x1020] sm:$0xf]
    %v1535 = vld [vmem:[%s1 + $0x1024] sm:$0xf]
    %v1536 = vld [vmem:[%s1 + $0x1028] sm:$0xf]
    %v1537 = vld [vmem:[%s1 + $0x102c] sm:$0xf]
    %v1538 = vld [vmem:[%s1 + $0x1030] sm:$0xf]
    %v1539 = vld [vmem:[%s1 + $0x1034] sm:$0xf]
    %v1540 = vld [vmem:[%s1 + $0x1038] sm:$0xf]
    %v1541 = vld [vmem:[%s1 + $0x103c] sm:$0xf]
    %v1542 = vld [vmem:[%s1 + $0x1040] sm:$0xf]
    %v1543 = vld [vmem:[%s1 + $0x1044] sm:$0xf]
    %v1544 = vld [vmem:[%s1 + $0x1048] sm:$0xf]
    %v1545 = vld [vmem:[%s1 + $0x104c] sm:$0xf]
    %v1546 = vld [vmem:[%s1 + $0x1050] sm:$0xf]
    %v1547 = vld [vmem:[%s1 + $0x1054] sm:$0xf]
    %v1548 = vld [vmem:[%s1 + $0x1058] sm:$0xf]
    %v1549 = vld [vmem:[%s1 + $0x105c] sm:$0xf]
    %v1550 = vld [vmem:[%s1 + $0x1060] sm:$0xf]
    %v1551 = vld [vmem:[%s1 + $0x1064] sm:$0xf]
    %v1552 = vld [vmem:[%s1 + $0x1068] sm:$0xf]
    %v1553 = vld [vmem:[%s1 + $0x106c] sm:$0xf]
    %v1554 = vld [vmem:[%s1 + $0x1070] sm:$0xf]
    %v1555 = vld [vmem:[%s1 + $0x1074] sm:$0xf]
    %v1556 = vld [vmem:[%s1 + $0x1078] sm:$0xf]
    %v1557 = vld [vmem:[%s1 + $0x107c] sm:$0xf]
    %v1558 = vld [vmem:[%s1 + $0x1080] sm:$0xf]
    %v1559 = vld [vmem:[%s1 + $0x1084] sm:$0xf]
    %v1560 = vld [vmem:[%s1 + $0x1088] sm:$0xf]
    %v1561 = vld [vmem:[%s1 + $0x108c] sm:$0xf]
    %v1562 = vld [vmem:[%s1 + $0x1090] sm:$0xf]
    %v1563 = vld [vmem:[%s1 + $0x1094] sm:$0xf]
    %v1564 = vld [vmem:[%s1 + $0x1098] sm:$0xf]
    %v1565 = vld [vmem:[%s1 + $0x109c] sm:$0xf]
    %v1566 = vld [vmem:[%s1 + $0x10a0] sm:$0xf]
    %v1567 = vld [vmem:[%s1 + $0x10a4] sm:$0xf]
    %v1568 = vld [vmem:[%s1 + $0x10a8] sm:$0xf]
    %v1569 = vld [vmem:[%s1 + $0x10ac] sm:$0xf]
    %v1570 = vld [vmem:[%s1 + $0x10b0] sm:$0xf]
    %v1571 = vld [vmem:[%s1 + $0x10b4] sm:$0xf]
    %v1572 = vld [vmem:[%s1 + $0x10b8] sm:$0xf]
    %v1573 = vld [vmem:[%s1 + $0x10bc] sm:$0xf]
    %v1574 = vld [vmem:[%s1 + $0x10c0] sm:$0xf]
    %v1575 = vld [vmem:[%s1 + $0x10c4] sm:$0xf]
    %v1576 = vld [vmem:[%s1 + $0x10c8] sm:$0xf]
    %v1577 = vld [vmem:[%s1 + $0x10cc] sm:$0xf]
    %v1578 = vld [vmem:[%s1 + $0x10d0] sm:$0xf]
    %v1579 = vld [vmem:[%s1 + $0x10d4] sm:$0xf]
    %v1580 = vld [vmem:[%s1 + $0x10d8] sm:$0xf]
    %v1581 = vld [vmem:[%s1 + $0x10dc] sm:$0xf]
    %v1582 = vld [vmem:[%s1 + $0x10e0] sm:$0xf]
    %v1583 = vld [vmem:[%s1 + $0x10e4] sm:$0xf]
    %v1584 = vld [vmem:[%s1 + $0x10e8] sm:$0xf]
    %v1585 = vld [vmem:[%s1 + $0x10ec] sm:$0xf]
    %v1586 = vld [vmem:[%s1 + $0x10f0] sm:$0xf]
    %v1587 = vld [vmem:[%s1 + $0x10f4] sm:$0xf]
    %v1588 = vld [vmem:[%s1 + $0x10f8] sm:$0xf]
    %v1589 = vld [vmem:[%s1 + $0x10fc] sm:$0xf]
    %v1590 = vld [vmem:[%s1 + $0x1100] sm:$0xf]
    %v1591 = vld [vmem:[%s1 + $0x1104] sm:$0xf]
    %v1592 = vld [vmem:[%s1 + $0x1108] sm:$0xf]
    %v1593 = vld [vmem:[%s1 + $0x110c] sm:$0xf]
    %v1594 = vld [vmem:[%s1 + $0x1110] sm:$0xf]
    %v1595 = vld [vmem:[%s1 + $0x1114] sm:$0xf]
    %v1596 = vld [vmem:[%s1 + $0x1118] sm:$0xf]
    %v1597 = vld [vmem:[%s1 + $0x111c] sm:$0xf]
    %v1598 = vld [vmem:[%s1 + $0x1120] sm:$0xf]
    %v1599 = vld [vmem:[%s1 + $0x1124] sm:$0xf]
    %v1600 = vld [vmem:[%s1 + $0x1128] sm:$0xf]
    %v1601 = vld [vmem:[%s1 + $0x112c] sm:$0xf]
    %v1602 = vld [vmem:[%s1 + $0x1130] sm:$0xf]
    %v1603 = vld [vmem:[%s1 + $0x1134] sm:$0xf]
    %v1604 = vld [vmem:[%s1 + $0x1138] sm:$0xf]
    %v1605 = vld [vmem:[%s1 + $0x113c] sm:$0xf]
    %v1606 = vld [vmem:[%s1 + $0x1140] sm:$0xf]
    %v1607 = vld [vmem:[%s1 + $0x1144] sm:$0xf]
    %v1608 = vld [vmem:[%s1 + $0x1148] sm:$0xf]
    %v1609 = vld [vmem:[%s1 + $0x114c] sm:$0xf]
    %v1610 = vld [vmem:[%s1 + $0x1150] sm:$0xf]
    %v1611 = vld [vmem:[%s1 + $0x1154] sm:$0xf]
    %v1612 = vld [vmem:[%s1 + $0x1158] sm:$0xf]
    %v1613 = vld [vmem:[%s1 + $0x115c] sm:$0xf]
    %v1614 = vld [vmem:[%s1 + $0x1160] sm:$0xf]
    %v1615 = vld [vmem:[%s1 + $0x1164] sm:$0xf]
    %v1616 = vld [vmem:[%s1 + $0x1168] sm:$0xf]
    %v1617 = vld [vmem:[%s1 + $0x116c] sm:$0xf]
    %v1618 = vld [vmem:[%s1 + $0x1170] sm:$0xf]
    %v1619 = vld [vmem:[%s1 + $0x1174] sm:$0xf]
    %v1620 = vld [vmem:[%s1 + $0x1178] sm:$0xf]
    %v1621 = vld [vmem:[%s1 + $0x117c] sm:$0xf]
    %v1622 = vld [vmem:[%s1 + $0x1180] sm:$0xf]
    %v1623 = vld [vmem:[%s1 + $0x1184] sm:$0xf]
    %v1624 = vld [vmem:[%s1 + $0x1188] sm:$0xf]
    %v1625 = vld [vmem:[%s1 + $0x118c] sm:$0xf]
    %v1626 = vld [vmem:[%s1 + $0x1190] sm:$0xf]
    %v1627 = vld [vmem:[%s1 + $0x1194] sm:$0xf]
    %v1628 = vld [vmem:[%s1 + $0x1198] sm:$0xf]
    %v1629 = vld [vmem:[%s1 + $0x119c] sm:$0xf]
    %v1630 = vld [vmem:[%s1 + $0x11a0] sm:$0xf]
    %v1631 = vld [vmem:[%s1 + $0x11a4] sm:$0xf]
    %v1632 = vld [vmem:[%s1 + $0x11a8] sm:$0xf]
    %v1633 = vld [vmem:[%s1 + $0x11ac] sm:$0xf]
    %v1634 = vld [vmem:[%s1 + $0x11b0] sm:$0xf]
    %v1635 = vld [vmem:[%s1 + $0x11b4] sm:$0xf]
    %v1636 = vld [vmem:[%s1 + $0x11b8] sm:$0xf]
    %v1637 = vld [vmem:[%s1 + $0x11bc] sm:$0xf]
    %v1638 = vld [vmem:[%s1 + $0x11c0] sm:$0xf]
    %v1639 = vld [vmem:[%s1 + $0x11c4] sm:$0xf]
    %v1640 = vld [vmem:[%s1 + $0x11c8] sm:$0xf]
    %v1641 = vld [vmem:[%s1 + $0x11cc] sm:$0xf]
    %v1642 = vld [vmem:[%s1 + $0x11d0] sm:$0xf]
    %v1643 = vld [vmem:[%s1 + $0x11d4] sm:$0xf]
    %v1644 = vld [vmem:[%s1 + $0x11d8] sm:$0xf]
    %v1645 = vld [vmem:[%s1 + $0x11dc] sm:$0xf]
    %v1646 = vld [vmem:[%s1 + $0x11e0] sm:$0xf]
    %v1647 = vld [vmem:[%s1 + $0x11e4] sm:$0xf]
    %v1648 = vld [vmem:[%s1 + $0x11e8] sm:$0xf]
    %v1649 = vld [vmem:[%s1 + $0x11ec] sm:$0xf]
    %v1650 = vld [vmem:[%s1 + $0x11f0] sm:$0xf]
    %v1651 = vld [vmem:[%s1 + $0x11f4] sm:$0xf]
    %v1652 = vld [vmem:[%s1 + $0x11f8] sm:$0xf]
    %v1653 = vld [vmem:[%s1 + $0x11fc] sm:$0xf]
    %v1654 = vld [vmem:[%s1 + $0x1200] sm:$0xf]
    %v1655 = vld [vmem:[%s1 + $0x1204] sm:$0xf]
    %v1656 = vld [vmem:[%s1 + $0x1208] sm:$0xf]
    %v1657 = vld [vmem:[%s1 + $0x120c] sm:$0xf]
    %v1658 = vld [vmem:[%s1 + $0x1210] sm:$0xf]
    %v1659 = vld [vmem:[%s1 + $0x1214] sm:$0xf]
    %v1660 = vld [vmem:[%s1 + $0x1218] sm:$0xf]
    %v1661 = vld [vmem:[%s1 + $0x121c] sm:$0xf]
    %v1662 = vld [vmem:[%s1 + $0x1220] sm:$0xf]
    %v1663 = vld [vmem:[%s1 + $0x1224] sm:$0xf]
    %v1664 = vld [vmem:[%s1 + $0x1228] sm:$0xf]
    %v1665 = vld [vmem:[%s1 + $0x122c] sm:$0xf]
    %v1666 = vld [vmem:[%s1 + $0x1230] sm:$0xf]
    %v1667 = vld [vmem:[%s1 + $0x1234] sm:$0xf]
    %v1668 = vld [vmem:[%s1 + $0x1238] sm:$0xf]
    %v1669 = vld [vmem:[%s1 + $0x123c] sm:$0xf]
    %v1670 = vld [vmem:[%s1 + $0x1240] sm:$0xf]
    %v1671 = vld [vmem:[%s1 + $0x1244] sm:$0xf]
    %v1672 = vld [vmem:[%s1 + $0x1248] sm:$0xf]
    %v1673 = vld [vmem:[%s1 + $0x124c] sm:$0xf]
    %v1674 = vld [vmem:[%s1 + $0x1250] sm:$0xf]
    %v1675 = vld [vmem:[%s1 + $0x1254] sm:$0xf]
    %v1676 = vld [vmem:[%s1 + $0x1258] sm:$0xf]
    %v1677 = vld [vmem:[%s1 + $0x125c] sm:$0xf]
    %v1678 = vld [vmem:[%s1 + $0x1260] sm:$0xf]
    %v1679 = vld [vmem:[%s1 + $0x1264] sm:$0xf]
    %v1680 = vld [vmem:[%s1 + $0x1268] sm:$0xf]
    %v1681 = vld [vmem:[%s1 + $0x126c] sm:$0xf]
    %v1682 = vld [vmem:[%s1 + $0x1270] sm:$0xf]
    %v1683 = vld [vmem:[%s1 + $0x1274] sm:$0xf]
    %v1684 = vld [vmem:[%s1 + $0x1278] sm:$0xf]
    %v1685 = vld [vmem:[%s1 + $0x127c] sm:$0xf]
    %v1686 = vld [vmem:[%s1 + $0x1280] sm:$0xf]
    %v1687 = vld [vmem:[%s1 + $0x1284] sm:$0xf]
    %v1688 = vld [vmem:[%s1 + $0x1288] sm:$0xf]
    %v1689 = vld [vmem:[%s1 + $0x128c] sm:$0xf]
    %v1690 = vld [vmem:[%s1 + $0x1290] sm:$0xf]
    %v1691 = vld [vmem:[%s1 + $0x1294] sm:$0xf]
    %v1692 = vld [vmem:[%s1 + $0x1298] sm:$0xf]
    %v1693 = vld [vmem:[%s1 + $0x129c] sm:$0xf]
    %v1694 = vld [vmem:[%s1 + $0x12a0] sm:$0xf]
    %v1695 = vld [vmem:[%s1 + $0x12a4] sm:$0xf]
    %v1696 = vld [vmem:[%s1 + $0x12a8] sm:$0xf]
    %v1697 = vld [vmem:[%s1 + $0x12ac] sm:$0xf]
    %v1698 = vld [vmem:[%s1 + $0x12b0] sm:$0xf]
    %v1699 = vld [vmem:[%s1 + $0x12b4] sm:$0xf]
    %v1700 = vld [vmem:[%s1 + $0x12b8] sm:$0xf]
    %v1701 = vld [vmem:[%s1 + $0x12bc] sm:$0xf]
    %v1702 = vld [vmem:[%s1 + $0x12c0] sm:$0xf]
    %v1703 = vld [vmem:[%s1 + $0x12c4] sm:$0xf]
    %v1704 = vld [vmem:[%s1 + $0x12c8] sm:$0xf]
    %v1705 = vld [vmem:[%s1 + $0x12cc] sm:$0xf]
    %v1706 = vld [vmem:[%s1 + $0x12d0] sm:$0xf]
    %v1707 = vld [vmem:[%s1 + $0x12d4] sm:$0xf]
    %v1708 = vld [vmem:[%s1 + $0x12d8] sm:$0xf]
    %v1709 = vld [vmem:[%s1 + $0x12dc] sm:$0xf]
    %v1710 = vld [vmem:[%s1 + $0x12e0] sm:$0xf]
    %v1711 = vld [vmem:[%s1 + $0x12e4] sm:$0xf]
    %v1712 = vld [vmem:[%s1 + $0x12e8] sm:$0xf]
    %v1713 = vld [vmem:[%s1 + $0x12ec] sm:$0xf]
    %v1714 = vld [vmem:[%s1 + $0x12f0] sm:$0xf]
    %v1715 = vld [vmem:[%s1 + $0x12f4] sm:$0xf]
    %v1716 = vld [vmem:[%s1 + $0x12f8] sm:$0xf]
    %v1717 = vld [vmem:[%s1 + $0x12fc] sm:$0xf]
    %v1718 = vld [vmem:[%s1 + $0x1300] sm:$0xf]
    %v1719 = vld [vmem:[%s1 + $0x1304] sm:$0xf]
    %v1720 = vld [vmem:[%s1 + $0x1308] sm:$0xf]
    %v1721 = vld [vmem:[%s1 + $0x130c] sm:$0xf]
    %v1722 = vld [vmem:[%s1 + $0x1310] sm:$0xf]
    %v1723 = vld [vmem:[%s1 + $0x1314] sm:$0xf]
    %v1724 = vld [vmem:[%s1 + $0x1318] sm:$0xf]
    %v1725 = vld [vmem:[%s1 + $0x131c] sm:$0xf]
    %v1726 = vld [vmem:[%s1 + $0x1320] sm:$0xf]
    %v1727 = vld [vmem:[%s1 + $0x1324] sm:$0xf]
    %v1728 = vld [vmem:[%s1 + $0x1328] sm:$0xf]
    %v1729 = vld [vmem:[%s1 + $0x132c] sm:$0xf]
    %v1730 = vld [vmem:[%s1 + $0x1330] sm:$0xf]
    %v1731 = vld [vmem:[%s1 + $0x1334] sm:$0xf]
    %v1732 = vld [vmem:[%s1 + $0x1338] sm:$0xf]
    %v1733 = vld [vmem:[%s1 + $0x133c] sm:$0xf]
    %v1734 = vld [vmem:[%s1 + $0x1340] sm:$0xf]
    %v1735 = vld [vmem:[%s1 + $0x1344] sm:$0xf]
    %v1736 = vld [vmem:[%s1 + $0x1348] sm:$0xf]
    %v1737 = vld [vmem:[%s1 + $0x134c] sm:$0xf]
    %v1738 = vld [vmem:[%s1 + $0x1350] sm:$0xf]
    %v1739 = vld [vmem:[%s1 + $0x1354] sm:$0xf]
    %v1740 = vld [vmem:[%s1 + $0x1358] sm:$0xf]
    %v1741 = vld [vmem:[%s1 + $0x135c] sm:$0xf]
    %v1742 = vld [vmem:[%s1 + $0x1360] sm:$0xf]
    %v1743 = vld [vmem:[%s1 + $0x1364] sm:$0xf]
    %v1744 = vld [vmem:[%s1 + $0x1368] sm:$0xf]
    %v1745 = vld [vmem:[%s1 + $0x136c] sm:$0xf]
    %v1746 = vld [vmem:[%s1 + $0x1370] sm:$0xf]
    %v1747 = vld [vmem:[%s1 + $0x1374] sm:$0xf]
    %v1748 = vld [vmem:[%s1 + $0x1378] sm:$0xf]
    %v1749 = vld [vmem:[%s1 + $0x137c] sm:$0xf]
    %v1750 = vld [vmem:[%s1 + $0x1380] sm:$0xf]
    %v1751 = vld [vmem:[%s1 + $0x1384] sm:$0xf]
    %v1752 = vld [vmem:[%s1 + $0x1388] sm:$0xf]
    %v1753 = vld [vmem:[%s1 + $0x138c] sm:$0xf]
    %v1754 = vld [vmem:[%s1 + $0x1390] sm:$0xf]
    %v1755 = vld [vmem:[%s1 + $0x1394] sm:$0xf]
    %v1756 = vld [vmem:[%s1 + $0x1398] sm:$0xf]
    %v1757 = vld [vmem:[%s1 + $0x139c] sm:$0xf]
    %v1758 = vld [vmem:[%s1 + $0x13a0] sm:$0xf]
    %v1759 = vld [vmem:[%s1 + $0x13a4] sm:$0xf]
    %v1760 = vld [vmem:[%s1 + $0x13a8] sm:$0xf]
    %v1761 = vld [vmem:[%s1 + $0x13ac] sm:$0xf]
    %v1762 = vld [vmem:[%s1 + $0x13b0] sm:$0xf]
    %v1763 = vld [vmem:[%s1 + $0x13b4] sm:$0xf]
    %v1764 = vld [vmem:[%s1 + $0x13b8] sm:$0xf]
    %v1765 = vld [vmem:[%s1 + $0x13bc] sm:$0xf]
    %v1766 = vld [vmem:[%s1 + $0x13c0] sm:$0xf]
    %v1767 = vld [vmem:[%s1 + $0x13c4] sm:$0xf]
    %v1768 = vld [vmem:[%s1 + $0x13c8] sm:$0xf]
    %v1769 = vld [vmem:[%s1 + $0x13cc] sm:$0xf]
    %v1770 = vld [vmem:[%s1 + $0x13d0] sm:$0xf]
    %v1771 = vld [vmem:[%s1 + $0x13d4] sm:$0xf]
    %v1772 = vld [vmem:[%s1 + $0x13d8] sm:$0xf]
    %v1773 = vld [vmem:[%s1 + $0x13dc] sm:$0xf]
    %v1774 = vld [vmem:[%s1 + $0x13e0] sm:$0xf]
    %v1775 = vld [vmem:[%s1 + $0x13e4] sm:$0xf]
    %v1776 = vld [vmem:[%s1 + $0x13e8] sm:$0xf]
    %v1777 = vld [vmem:[%s1 + $0x13ec] sm:$0xf]
    %v1778 = vld [vmem:[%s1 + $0x13f0] sm:$0xf]
    %v1779 = vld [vmem:[%s1 + $0x13f4] sm:$0xf]
    %v1780 = vld [vmem:[%s1 + $0x13f8] sm:$0xf]
    %v1781 = vld [vmem:[%s1 + $0x13fc] sm:$0xf]
    %v1782 = vld [vmem:[%s1 + $0x1400] sm:$0xf]
    %v1783 = vld [vmem:[%s1 + $0x1404] sm:$0xf]
    %v1784 = vld [vmem:[%s1 + $0x1408] sm:$0xf]
    %v1785 = vld [vmem:[%s1 + $0x140c] sm:$0xf]
    %v1786 = vld [vmem:[%s1 + $0x1410] sm:$0xf]
    %v1787 = vld [vmem:[%s1 + $0x1414] sm:$0xf]
    %v1788 = vld [vmem:[%s1 + $0x1418] sm:$0xf]
    %v1789 = vld [vmem:[%s1 + $0x141c] sm:$0xf]
    %v1790 = vld [vmem:[%s1 + $0x1420] sm:$0xf]
    %v1791 = vld [vmem:[%s1 + $0x1424] sm:$0xf]
    %v1792 = vld [vmem:[%s1 + $0x1428] sm:$0xf]
    %v1793 = vld [vmem:[%s1 + $0x142c] sm:$0xf]
    %v1794 = vld [vmem:[%s1 + $0x1430] sm:$0xf]
    %v1795 = vld [vmem:[%s1 + $0x1434] sm:$0xf]
    %v1796 = vld [vmem:[%s1 + $0x1438] sm:$0xf]
    %v1797 = vld [vmem:[%s1 + $0x143c] sm:$0xf]
    %v1798 = vld [vmem:[%s1 + $0x1440] sm:$0xf]
    %v1799 = vld [vmem:[%s1 + $0x1444] sm:$0xf]
    %v1800 = vld [vmem:[%s1 + $0x1448] sm:$0xf]
    %v1801 = vld [vmem:[%s1 + $0x144c] sm:$0xf]
    %v1802 = vld [vmem:[%s1 + $0x1450] sm:$0xf]
    %v1803 = vld [vmem:[%s1 + $0x1454] sm:$0xf]
    %v1804 = vld [vmem:[%s1 + $0x1458] sm:$0xf]
    %v1805 = vld [vmem:[%s1 + $0x145c] sm:$0xf]
    %v1806 = vld [vmem:[%s1 + $0x1460] sm:$0xf]
    %v1807 = vld [vmem:[%s1 + $0x1464] sm:$0xf]
    %v1808 = vld [vmem:[%s1 + $0x1468] sm:$0xf]
    %v1809 = vld [vmem:[%s1 + $0x146c] sm:$0xf]
    %v1810 = vld [vmem:[%s1 + $0x1470] sm:$0xf]
    %v1811 = vld [vmem:[%s1 + $0x1474] sm:$0xf]
    %v1812 = vld [vmem:[%s1 + $0x1478] sm:$0xf]
    %v1813 = vld [vmem:[%s1 + $0x147c] sm:$0xf]
    %v1814 = vld [vmem:[%s1 + $0x1480] sm:$0xf]
    %v1815 = vld [vmem:[%s1 + $0x1484] sm:$0xf]
    %v1816 = vld [vmem:[%s1 + $0x1488] sm:$0xf]
    %v1817 = vld [vmem:[%s1 + $0x148c] sm:$0xf]
    %v1818 = vld [vmem:[%s1 + $0x1490] sm:$0xf]
    %v1819 = vld [vmem:[%s1 + $0x1494] sm:$0xf]
    %v1820 = vld [vmem:[%s1 + $0x1498] sm:$0xf]
    %v1821 = vld [vmem:[%s1 + $0x149c] sm:$0xf]
    %v1822 = vld [vmem:[%s1 + $0x14a0] sm:$0xf]
    %v1823 = vld [vmem:[%s1 + $0x14a4] sm:$0xf]
    %v1824 = vld [vmem:[%s1 + $0x14a8] sm:$0xf]
    %v1825 = vld [vmem:[%s1 + $0x14ac] sm:$0xf]
    %v1826 = vld [vmem:[%s1 + $0x14b0] sm:$0xf]
    %v1827 = vld [vmem:[%s1 + $0x14b4] sm:$0xf]
    %v1828 = vld [vmem:[%s1 + $0x14b8] sm:$0xf]
    %v1829 = vld [vmem:[%s1 + $0x14bc] sm:$0xf]
    %v1830 = vld [vmem:[%s1 + $0x14c0] sm:$0xf]
    %v1831 = vld [vmem:[%s1 + $0x14c4] sm:$0xf]
    %v1832 = vld [vmem:[%s1 + $0x14c8] sm:$0xf]
    %v1833 = vld [vmem:[%s1 + $0x14cc] sm:$0xf]
    %v1834 = vld [vmem:[%s1 + $0x14d0] sm:$0xf]
    %v1835 = vld [vmem:[%s1 + $0x14d4] sm:$0xf]
    %v1836 = vld [vmem:[%s1 + $0x14d8] sm:$0xf]
    %v1837 = vld [vmem:[%s1 + $0x14dc] sm:$0xf]
    %v1838 = vld [vmem:[%s1 + $0x14e0] sm:$0xf]
    %v1839 = vld [vmem:[%s1 + $0x14e4] sm:$0xf]
    %v1840 = vld [vmem:[%s1 + $0x14e8] sm:$0xf]
    %v1841 = vld [vmem:[%s1 + $0x14ec] sm:$0xf]
    %v1842 = vld [vmem:[%s1 + $0x14f0] sm:$0xf]
    %v1843 = vld [vmem:[%s1 + $0x14f4] sm:$0xf]
    %v1844 = vld [vmem:[%s1 + $0x14f8] sm:$0xf]
    %v1845 = vld [vmem:[%s1 + $0x14fc] sm:$0xf]
    %v1846 = vld [vmem:[%s1 + $0x1500] sm:$0xf]
    %v1847 = vld [vmem:[%s1 + $0x1504] sm:$0xf]
    %v1848 = vld [vmem:[%s1 + $0x1508] sm:$0xf]
    %v1849 = vld [vmem:[%s1 + $0x150c] sm:$0xf]
    %v1850 = vld [vmem:[%s1 + $0x1510] sm:$0xf]
    %v1851 = vld [vmem:[%s1 + $0x1514] sm:$0xf]
    %v1852 = vld [vmem:[%s1 + $0x1518] sm:$0xf]
    %v1853 = vld [vmem:[%s1 + $0x151c] sm:$0xf]
    %v1854 = vld [vmem:[%s1 + $0x1520] sm:$0xf]
    %v1855 = vld [vmem:[%s1 + $0x1524] sm:$0xf]
    %v1856 = vld [vmem:[%s1 + $0x1528] sm:$0xf]
    %v1857 = vld [vmem:[%s1 + $0x152c] sm:$0xf]
    %v1858 = vld [vmem:[%s1 + $0x1530] sm:$0xf]
    %v1859 = vld [vmem:[%s1 + $0x1534] sm:$0xf]
    %v1860 = vld [vmem:[%s1 + $0x1538] sm:$0xf]
    %v1861 = vld [vmem:[%s1 + $0x153c] sm:$0xf]
    %v1862 = vld [vmem:[%s1 + $0x1540] sm:$0xf]
    %v1863 = vld [vmem:[%s1 + $0x1544] sm:$0xf]
    %v1864 = vld [vmem:[%s1 + $0x1548] sm:$0xf]
    %v1865 = vld [vmem:[%s1 + $0x154c] sm:$0xf]
    %v1866 = vld [vmem:[%s1 + $0x1550] sm:$0xf]
    %v1867 = vld [vmem:[%s1 + $0x1554] sm:$0xf]
    %v1868 = vld [vmem:[%s1 + $0x1558] sm:$0xf]
    %v1869 = vld [vmem:[%s1 + $0x155c] sm:$0xf]
    %v1870 = vld [vmem:[%s1 + $0x1560] sm:$0xf]
    %v1871 = vld [vmem:[%s1 + $0x1564] sm:$0xf]
    %v1872 = vld [vmem:[%s1 + $0x1568] sm:$0xf]
    %v1873 = vld [vmem:[%s1 + $0x156c] sm:$0xf]
    %v1874 = vld [vmem:[%s1 + $0x1570] sm:$0xf]
    %v1875 = vld [vmem:[%s1 + $0x1574] sm:$0xf]
    %v1876 = vld [vmem:[%s1 + $0x1578] sm:$0xf]
    %v1877 = vld [vmem:[%s1 + $0x157c] sm:$0xf]
    %v1878 = vld [vmem:[%s1 + $0x1580] sm:$0xf]
    %v1879 = vld [vmem:[%s1 + $0x1584] sm:$0xf]
    %v1880 = vld [vmem:[%s1 + $0x1588] sm:$0xf]
    %v1881 = vld [vmem:[%s1 + $0x158c] sm:$0xf]
    %v1882 = vld [vmem:[%s1 + $0x1590] sm:$0xf]
    %v1883 = vld [vmem:[%s1 + $0x1594] sm:$0xf]
    %v1884 = vld [vmem:[%s1 + $0x1598] sm:$0xf]
    %v1885 = vld [vmem:[%s1 + $0x159c] sm:$0xf]
    %v1886 = vld [vmem:[%s1 + $0x15a0] sm:$0xf]
    %v1887 = vld [vmem:[%s1 + $0x15a4] sm:$0xf]
    %v1888 = vld [vmem:[%s1 + $0x15a8] sm:$0xf]
    %v1889 = vld [vmem:[%s1 + $0x15ac] sm:$0xf]
    %v1890 = vld [vmem:[%s1 + $0x15b0] sm:$0xf]
    %v1891 = vld [vmem:[%s1 + $0x15b4] sm:$0xf]
    %v1892 = vld [vmem:[%s1 + $0x15b8] sm:$0xf]
    %v1893 = vld [vmem:[%s1 + $0x15bc] sm:$0xf]
    %v1894 = vld [vmem:[%s1 + $0x15c0] sm:$0xf]
    %v1895 = vld [vmem:[%s1 + $0x15c4] sm:$0xf]
    %v1896 = vld [vmem:[%s1 + $0x15c8] sm:$0xf]
    %v1897 = vld [vmem:[%s1 + $0x15cc] sm:$0xf]
    %v1898 = vld [vmem:[%s1 + $0x15d0] sm:$0xf]
    %v1899 = vld [vmem:[%s1 + $0x15d4] sm:$0xf]
    %v1900 = vld [vmem:[%s1 + $0x15d8] sm:$0xf]
    %v1901 = vld [vmem:[%s1 + $0x15dc] sm:$0xf]
    %v1902 = vld [vmem:[%s1 + $0x15e0] sm:$0xf]
    %v1903 = vld [vmem:[%s1 + $0x15e4] sm:$0xf]
    %v1904 = vld [vmem:[%s1 + $0x15e8] sm:$0xf]
    %v1905 = vld [vmem:[%s1 + $0x15ec] sm:$0xf]
    %v1906 = vld [vmem:[%s1 + $0x15f0] sm:$0xf]
    %v1907 = vld [vmem:[%s1 + $0x15f4] sm:$0xf]
    %v1908 = vld [vmem:[%s1 + $0x15f8] sm:$0xf]
    %v1909 = vld [vmem:[%s1 + $0x15fc] sm:$0xf]
    %v1910 = vld [vmem:[%s1 + $0x1600] sm:$0xf]
    %v1911 = vld [vmem:[%s1 + $0x1604] sm:$0xf]
    %v1912 = vld [vmem:[%s1 + $0x1608] sm:$0xf]
    %v1913 = vld [vmem:[%s1 + $0x160c] sm:$0xf]
    %v1914 = vld [vmem:[%s1 + $0x1610] sm:$0xf]
    %v1915 = vld [vmem:[%s1 + $0x1614] sm:$0xf]
    %v1916 = vld [vmem:[%s1 + $0x1618] sm:$0xf]
    %v1917 = vld [vmem:[%s1 + $0x161c] sm:$0xf]
    %v1918 = vld [vmem:[%s1 + $0x1620] sm:$0xf]
    %v1919 = vld [vmem:[%s1 + $0x1624] sm:$0xf]
    %v1920 = vld [vmem:[%s1 + $0x1628] sm:$0xf]
    %v1921 = vld [vmem:[%s1 + $0x162c] sm:$0xf]
    %v1922 = vld [vmem:[%s1 + $0x1630] sm:$0xf]
    %v1923 = vld [vmem:[%s1 + $0x1634] sm:$0xf]
    %v1924 = vld [vmem:[%s1 + $0x1638] sm:$0xf]
    %v1925 = vld [vmem:[%s1 + $0x163c] sm:$0xf]
    %v1926 = vld [vmem:[%s1 + $0x1640] sm:$0xf]
    %v1927 = vld [vmem:[%s1 + $0x1644] sm:$0xf]
    %v1928 = vld [vmem:[%s1 + $0x1648] sm:$0xf]
    %v1929 = vld [vmem:[%s1 + $0x164c] sm:$0xf]
    %v1930 = vld [vmem:[%s1 + $0x1650] sm:$0xf]
    %v1931 = vld [vmem:[%s1 + $0x1654] sm:$0xf]
    %v1932 = vld [vmem:[%s1 + $0x1658] sm:$0xf]
    %v1933 = vld [vmem:[%s1 + $0x165c] sm:$0xf]
    %v1934 = vld [vmem:[%s1 + $0x1660] sm:$0xf]
    %v1935 = vld [vmem:[%s1 + $0x1664] sm:$0xf]
    %v1936 = vld [vmem:[%s1 + $0x1668] sm:$0xf]
    %v1937 = vld [vmem:[%s1 + $0x166c] sm:$0xf]
    %v1938 = vld [vmem:[%s1 + $0x1670] sm:$0xf]
    %v1939 = vld [vmem:[%s1 + $0x1674] sm:$0xf]
    %v1940 = vld [vmem:[%s1 + $0x1678] sm:$0xf]
    %v1941 = vld [vmem:[%s1 + $0x167c] sm:$0xf]
    %v1942 = vld [vmem:[%s1 + $0x1680] sm:$0xf]
    %v1943 = vld [vmem:[%s1 + $0x1684] sm:$0xf]
    %v1944 = vld [vmem:[%s1 + $0x1688] sm:$0xf]
    %v1945 = vld [vmem:[%s1 + $0x168c] sm:$0xf]
    %v1946 = vld [vmem:[%s1 + $0x1690] sm:$0xf]
    %v1947 = vld [vmem:[%s1 + $0x1694] sm:$0xf]
    %v1948 = vld [vmem:[%s1 + $0x1698] sm:$0xf]
    %v1949 = vld [vmem:[%s1 + $0x169c] sm:$0xf]
    %v1950 = vld [vmem:[%s1 + $0x16a0] sm:$0xf]
    %v1951 = vld [vmem:[%s1 + $0x16a4] sm:$0xf]
    %v1952 = vld [vmem:[%s1 + $0x16a8] sm:$0xf]
    %v1953 = vld [vmem:[%s1 + $0x16ac] sm:$0xf]
    %v1954 = vld [vmem:[%s1 + $0x16b0] sm:$0xf]
    %v1955 = vld [vmem:[%s1 + $0x16b4] sm:$0xf]
    %v1956 = vld [vmem:[%s1 + $0x16b8] sm:$0xf]
    %v1957 = vld [vmem:[%s1 + $0x16bc] sm:$0xf]
    %v1958 = vld [vmem:[%s1 + $0x16c0] sm:$0xf]
    %v1959 = vld [vmem:[%s1 + $0x16c4] sm:$0xf]
    %v1960 = vld [vmem:[%s1 + $0x16c8] sm:$0xf]
    %v1961 = vld [vmem:[%s1 + $0x16cc] sm:$0xf]
    %v1962 = vld [vmem:[%s1 + $0x16d0] sm:$0xf]
    %v1963 = vld [vmem:[%s1 + $0x16d4] sm:$0xf]
    %v1964 = vld [vmem:[%s1 + $0x16d8] sm:$0xf]
    %v1965 = vld [vmem:[%s1 + $0x16dc] sm:$0xf]
    %v1966 = vld [vmem:[%s1 + $0x16e0] sm:$0xf]
    %v1967 = vld [vmem:[%s1 + $0x16e4] sm:$0xf]
    %v1968 = vld [vmem:[%s1 + $0x16e8] sm:$0xf]
    %v1969 = vld [vmem:[%s1 + $0x16ec] sm:$0xf]
    %v1970 = vld [vmem:[%s1 + $0x16f0] sm:$0xf]
    %v1971 = vld [vmem:[%s1 + $0x16f4] sm:$0xf]
    %v1972 = vld [vmem:[%s1 + $0x16f8] sm:$0xf]
    %v1973 = vld [vmem:[%s1 + $0x16fc] sm:$0xf]
    %v1974 = vld [vmem:[%s1 + $0x1700] sm:$0xf]
    %v1975 = vld [vmem:[%s1 + $0x1704] sm:$0xf]
    %v1976 = vld [vmem:[%s1 + $0x1708] sm:$0xf]
    %v1977 = vld [vmem:[%s1 + $0x170c] sm:$0xf]
    %v1978 = vld [vmem:[%s1 + $0x1710] sm:$0xf]
    %v1979 = vld [vmem:[%s1 + $0x1714] sm:$0xf]
    %v1980 = vld [vmem:[%s1 + $0x1718] sm:$0xf]
    %v1981 = vld [vmem:[%s1 + $0x171c] sm:$0xf]
    %v1982 = vld [vmem:[%s1 + $0x1720] sm:$0xf]
    %v1983 = vld [vmem:[%s1 + $0x1724] sm:$0xf]
    %v1984 = vld [vmem:[%s1 + $0x1728] sm:$0xf]
    %v1985 = vld [vmem:[%s1 + $0x172c] sm:$0xf]
    %v1986 = vld [vmem:[%s1 + $0x1730] sm:$0xf]
    %v1987 = vld [vmem:[%s1 + $0x1734] sm:$0xf]
    %v1988 = vld [vmem:[%s1 + $0x1738] sm:$0xf]
    %v1989 = vld [vmem:[%s1 + $0x173c] sm:$0xf]
    %v1990 = vld [vmem:[%s1 + $0x1740] sm:$0xf]
    %v1991 = vld [vmem:[%s1 + $0x1744] sm:$0xf]
    %v1992 = vld [vmem:[%s1 + $0x1748] sm:$0xf]
    %v1993 = vld [vmem:[%s1 + $0x174c] sm:$0xf]
    %v1994 = vld [vmem:[%s1 + $0x1750] sm:$0xf]
    %v1995 = vld [vmem:[%s1 + $0x1754] sm:$0xf]
    %v1996 = vld [vmem:[%s1 + $0x1758] sm:$0xf]
    %v1997 = vld [vmem:[%s1 + $0x175c] sm:$0xf]
    %v1998 = vld [vmem:[%s1 + $0x1760] sm:$0xf]
    %v1999 = vld [vmem:[%s1 + $0x1764] sm:$0xf]
    %v2000 = vld [vmem:[%s1 + $0x1768] sm:$0xf]
    %v2001 = vld [vmem:[%s1 + $0x176c] sm:$0xf]
    %v2002 = vld [vmem:[%s1 + $0x1770] sm:$0xf]
    %v2003 = vld [vmem:[%s1 + $0x1774] sm:$0xf]
    %v2004 = vld [vmem:[%s1 + $0x1778] sm:$0xf]
    %v2005 = vld [vmem:[%s1 + $0x177c] sm:$0xf]
    %v2006 = vld [vmem:[%s1 + $0x1780] sm:$0xf]
    %v2007 = vld [vmem:[%s1 + $0x1784] sm:$0xf]
    %v2008 = vld [vmem:[%s1 + $0x1788] sm:$0xf]
    %v2009 = vld [vmem:[%s1 + $0x178c] sm:$0xf]
    %v2010 = vld [vmem:[%s1 + $0x1790] sm:$0xf]
    %v2011 = vld [vmem:[%s1 + $0x1794] sm:$0xf]
    %v2012 = vld [vmem:[%s1 + $0x1798] sm:$0xf]
    %v2013 = vld [vmem:[%s1 + $0x179c] sm:$0xf]
    %v2014 = vld [vmem:[%s1 + $0x17a0] sm:$0xf]
    %v2015 = vld [vmem:[%s1 + $0x17a4] sm:$0xf]
    %v2016 = vld [vmem:[%s1 + $0x17a8] sm:$0xf]
    %v2017 = vld [vmem:[%s1 + $0x17ac] sm:$0xf]
    %v2018 = vld [vmem:[%s1 + $0x17b0] sm:$0xf]
    %v2019 = vld [vmem:[%s1 + $0x17b4] sm:$0xf]
    %v2020 = vld [vmem:[%s1 + $0x17b8] sm:$0xf]
    %v2021 = vld [vmem:[%s1 + $0x17bc] sm:$0xf]
    %v2022 = vld [vmem:[%s1 + $0x17c0] sm:$0xf]
    %v2023 = vld [vmem:[%s1 + $0x17c4] sm:$0xf]
    %v2024 = vld [vmem:[%s1 + $0x17c8] sm:$0xf]
    %v2025 = vld [vmem:[%s1 + $0x17cc] sm:$0xf]
    %v2026 = vld [vmem:[%s1 + $0x17d0] sm:$0xf]
    %v2027 = vld [vmem:[%s1 + $0x17d4] sm:$0xf]
    %v2028 = vld [vmem:[%s1 + $0x17d8] sm:$0xf]
    %v2029 = vld [vmem:[%s1 + $0x17dc] sm:$0xf]
    %v2030 = vld [vmem:[%s1 + $0x17e0] sm:$0xf]
    %v2031 = vld [vmem:[%s1 + $0x17e4] sm:$0xf]
    %v2032 = vld [vmem:[%s1 + $0x17e8] sm:$0xf]
    %v2033 = vld [vmem:[%s1 + $0x17ec] sm:$0xf]
    %v2034 = vld [vmem:[%s1 + $0x17f0] sm:$0xf]
    %v2035 = vld [vmem:[%s1 + $0x17f4] sm:$0xf]
    %v2036 = vld [vmem:[%s1 + $0x17f8] sm:$0xf]
    %v2037 = vld [vmem:[%s1 + $0x17fc] sm:$0xf]
    %v2038 = vld [vmem:[%s1 + $0x1800] sm:$0xf]
    %v2039 = vld [vmem:[%s1 + $0x1804] sm:$0xf]
    %v2040 = vld [vmem:[%s1 + $0x1808] sm:$0xf]
    %v2041 = vld [vmem:[%s1 + $0x180c] sm:$0xf]
    %v2042 = vld [vmem:[%s1 + $0x1810] sm:$0xf]
    %v2043 = vld [vmem:[%s1 + $0x1814] sm:$0xf]
    %v2044 = vld [vmem:[%s1 + $0x1818] sm:$0xf]
    %v2045 = vld [vmem:[%s1 + $0x181c] sm:$0xf]
    %v2046 = vld [vmem:[%s1 + $0x1820] sm:$0xf]
    %v2047 = vld [vmem:[%s1 + $0x1824] sm:$0xf]
    %v2048 = vld [vmem:[%s1 + $0x1828] sm:$0xf]
    %v2049 = vld [vmem:[%s1 + $0x182c] sm:$0xf]
    %v2050 = vld [vmem:[%s1 + $0x1830] sm:$0xf]
    %v2051 = vld [vmem:[%s1 + $0x1834] sm:$0xf]
    %v2052 = vld [vmem:[%s1 + $0x1838] sm:$0xf]
    %v2053 = vld [vmem:[%s1 + $0x183c] sm:$0xf]
    %v2054 = vld [vmem:[%s1 + $0x1840] sm:$0xf]
    %v2055 = vld [vmem:[%s1 + $0x1844] sm:$0xf]
    %v2056 = vld [vmem:[%s1 + $0x1848] sm:$0xf]
    %v2057 = vld [vmem:[%s1 + $0x184c] sm:$0xf]
    %v2058 = vld [vmem:[%s1 + $0x1850] sm:$0xf]
    %v2059 = vld [vmem:[%s1 + $0x1854] sm:$0xf]
    %v2060 = vld [vmem:[%s1 + $0x1858] sm:$0xf]
    %v2061 = vld [vmem:[%s1 + $0x185c] sm:$0xf]
    %v2062 = vld [vmem:[%s1 + $0x1860] sm:$0xf]
    %v2063 = vld [vmem:[%s1 + $0x1864] sm:$0xf]
    %v2064 = vld [vmem:[%s1 + $0x1868] sm:$0xf]
    %v2065 = vld [vmem:[%s1 + $0x186c] sm:$0xf]
    %v2066 = vld [vmem:[%s1 + $0x1870] sm:$0xf]
    %v2067 = vld [vmem:[%s1 + $0x1874] sm:$0xf]
    %v2068 = vld [vmem:[%s1 + $0x1878] sm:$0xf]
    %v2069 = vld [vmem:[%s1 + $0x187c] sm:$0xf]
    %v2070 = vld [vmem:[%s1 + $0x1880] sm:$0xf]
    %v2071 = vld [vmem:[%s1 + $0x1884] sm:$0xf]
    %v2072 = vld [vmem:[%s1 + $0x1888] sm:$0xf]
    %v2073 = vld [vmem:[%s1 + $0x188c] sm:$0xf]
    %v2074 = vld [vmem:[%s1 + $0x1890] sm:$0xf]
    %v2075 = vld [vmem:[%s1 + $0x1894] sm:$0xf]
    %v2076 = vld [vmem:[%s1 + $0x1898] sm:$0xf]
    %v2077 = vld [vmem:[%s1 + $0x189c] sm:$0xf]
    %v2078 = vld [vmem:[%s1 + $0x18a0] sm:$0xf]
    %v2079 = vld [vmem:[%s1 + $0x18a4] sm:$0xf]
    %v2080 = vld [vmem:[%s1 + $0x18a8] sm:$0xf]
    %v2081 = vld [vmem:[%s1 + $0x18ac] sm:$0xf]
    %v2082 = vld [vmem:[%s1 + $0x18b0] sm:$0xf]
    %v2083 = vld [vmem:[%s1 + $0x18b4] sm:$0xf]
    %v2084 = vld [vmem:[%s1 + $0x18b8] sm:$0xf]
    %v2085 = vld [vmem:[%s1 + $0x18bc] sm:$0xf]
    %v2086 = vld [vmem:[%s1 + $0x18c0] sm:$0xf]
    %v2087 = vld [vmem:[%s1 + $0x18c4] sm:$0xf]
    %v2088 = vld [vmem:[%s1 + $0x18c8] sm:$0xf]
    %v2089 = vld [vmem:[%s1 + $0x18cc] sm:$0xf]
    %v2090 = vld [vmem:[%s1 + $0x18d0] sm:$0xf]
    %v2091 = vld [vmem:[%s1 + $0x18d4] sm:$0xf]
    %v2092 = vld [vmem:[%s1 + $0x18d8] sm:$0xf]
    %v2093 = vld [vmem:[%s1 + $0x18dc] sm:$0xf]
    %v2094 = vld [vmem:[%s1 + $0x18e0] sm:$0xf]
    %v2095 = vld [vmem:[%s1 + $0x18e4] sm:$0xf]
    %v2096 = vld [vmem:[%s1 + $0x18e8] sm:$0xf]
    %v2097 = vld [vmem:[%s1 + $0x18ec] sm:$0xf]
    %v2098 = vld [vmem:[%s1 + $0x18f0] sm:$0xf]
    %v2099 = vld [vmem:[%s1 + $0x18f4] sm:$0xf]
    %v2100 = vld [vmem:[%s1 + $0x18f8] sm:$0xf]
    %v2101 = vld [vmem:[%s1 + $0x18fc] sm:$0xf]
    %v2102 = vld [vmem:[%s1 + $0x1900] sm:$0xf]
    %v2103 = vld [vmem:[%s1 + $0x1904] sm:$0xf]
    %v2104 = vld [vmem:[%s1 + $0x1908] sm:$0xf]
    %v2105 = vld [vmem:[%s1 + $0x190c] sm:$0xf]
    %v2106 = vld [vmem:[%s1 + $0x1910] sm:$0xf]
    %v2107 = vld [vmem:[%s1 + $0x1914] sm:$0xf]
    %v2108 = vld [vmem:[%s1 + $0x1918] sm:$0xf]
    %v2109 = vld [vmem:[%s1 + $0x191c] sm:$0xf]
    %v2110 = vld [vmem:[%s1 + $0x1920] sm:$0xf]
    %v2111 = vld [vmem:[%s1 + $0x1924] sm:$0xf]
    %v2112 = vld [vmem:[%s1 + $0x1928] sm:$0xf]
    %v2113 = vld [vmem:[%s1 + $0x192c] sm:$0xf]
    %v2114 = vld [vmem:[%s1 + $0x1930] sm:$0xf]
    %v2115 = vld [vmem:[%s1 + $0x1934] sm:$0xf]
    %v2116 = vld [vmem:[%s1 + $0x1938] sm:$0xf]
    %v2117 = vld [vmem:[%s1 + $0x193c] sm:$0xf]
    %v2118 = vld [vmem:[%s1 + $0x1940] sm:$0xf]
    %v2119 = vld [vmem:[%s1 + $0x1944] sm:$0xf]
    %v2120 = vld [vmem:[%s1 + $0x1948] sm:$0xf]
    %v2121 = vld [vmem:[%s1 + $0x194c] sm:$0xf]
    %v2122 = vld [vmem:[%s1 + $0x1950] sm:$0xf]
    %v2123 = vld [vmem:[%s1 + $0x1954] sm:$0xf]
    %v2124 = vld [vmem:[%s1 + $0x1958] sm:$0xf]
    %v2125 = vld [vmem:[%s1 + $0x195c] sm:$0xf]
    %v2126 = vld [vmem:[%s1 + $0x1960] sm:$0xf]
    %v2127 = vld [vmem:[%s1 + $0x1964] sm:$0xf]
    %v2128 = vld [vmem:[%s1 + $0x1968] sm:$0xf]
    %v2129 = vld [vmem:[%s1 + $0x196c] sm:$0xf]
    %v2130 = vld [vmem:[%s1 + $0x1970] sm:$0xf]
    %v2131 = vld [vmem:[%s1 + $0x1974] sm:$0xf]
    %v2132 = vld [vmem:[%s1 + $0x1978] sm:$0xf]
    %v2133 = vld [vmem:[%s1 + $0x197c] sm:$0xf]
    %v2134 = vld [vmem:[%s1 + $0x1980] sm:$0xf]
    %v2135 = vld [vmem:[%s1 + $0x1984] sm:$0xf]
    %v2136 = vld [vmem:[%s1 + $0x1988] sm:$0xf]
    %v2137 = vld [vmem:[%s1 + $0x198c] sm:$0xf]
    %v2138 = vld [vmem:[%s1 + $0x1990] sm:$0xf]
    %v2139 = vld [vmem:[%s1 + $0x1994] sm:$0xf]
    %v2140 = vld [vmem:[%s1 + $0x1998] sm:$0xf]
    %v2141 = vld [vmem:[%s1 + $0x199c] sm:$0xf]
    %v2142 = vld [vmem:[%s1 + $0x19a0] sm:$0xf]
    %v2143 = vld [vmem:[%s1 + $0x19a4] sm:$0xf]
    %v2144 = vld [vmem:[%s1 + $0x19a8] sm:$0xf]
    %v2145 = vld [vmem:[%s1 + $0x19ac] sm:$0xf]
    %v2146 = vld [vmem:[%s1 + $0x19b0] sm:$0xf]
    %v2147 = vld [vmem:[%s1 + $0x19b4] sm:$0xf]
    %v2148 = vld [vmem:[%s1 + $0x19b8] sm:$0xf]
    %v2149 = vld [vmem:[%s1 + $0x19bc] sm:$0xf]
    %v2150 = vld [vmem:[%s1 + $0x19c0] sm:$0xf]
    %v2151 = vld [vmem:[%s1 + $0x19c4] sm:$0xf]
    %v2152 = vld [vmem:[%s1 + $0x19c8] sm:$0xf]
    %v2153 = vld [vmem:[%s1 + $0x19cc] sm:$0xf]
    %v2154 = vld [vmem:[%s1 + $0x19d0] sm:$0xf]
    %v2155 = vld [vmem:[%s1 + $0x19d4] sm:$0xf]
    %v2156 = vld [vmem:[%s1 + $0x19d8] sm:$0xf]
    %v2157 = vld [vmem:[%s1 + $0x19dc] sm:$0xf]
    %v2158 = vld [vmem:[%s1 + $0x19e0] sm:$0xf]
    %v2159 = vld [vmem:[%s1 + $0x19e4] sm:$0xf]
    %v2160 = vld [vmem:[%s1 + $0x19e8] sm:$0xf]
    %v2161 = vld [vmem:[%s1 + $0x19ec] sm:$0xf]
    %v2162 = vld [vmem:[%s1 + $0x19f0] sm:$0xf]
    %v2163 = vld [vmem:[%s1 + $0x19f4] sm:$0xf]
    %v2164 = vld [vmem:[%s1 + $0x19f8] sm:$0xf]
    %v2165 = vld [vmem:[%s1 + $0x19fc] sm:$0xf]
    %v2166 = vld [vmem:[%s1 + $0x1a00] sm:$0xf]
    %v2167 = vld [vmem:[%s1 + $0x1a04] sm:$0xf]
    %v2168 = vld [vmem:[%s1 + $0x1a08] sm:$0xf]
    %v2169 = vld [vmem:[%s1 + $0x1a0c] sm:$0xf]
    %v2170 = vld [vmem:[%s1 + $0x1a10] sm:$0xf]
    %v2171 = vld [vmem:[%s1 + $0x1a14] sm:$0xf]
    %v2172 = vld [vmem:[%s1 + $0x1a18] sm:$0xf]
    %v2173 = vld [vmem:[%s1 + $0x1a1c] sm:$0xf]
    %v2174 = vld [vmem:[%s1 + $0x1a20] sm:$0xf]
    %v2175 = vld [vmem:[%s1 + $0x1a24] sm:$0xf]
    %v2176 = vld [vmem:[%s1 + $0x1a28] sm:$0xf]
    %v2177 = vld [vmem:[%s1 + $0x1a2c] sm:$0xf]
    %v2178 = vld [vmem:[%s1 + $0x1a30] sm:$0xf]
    %v2179 = vld [vmem:[%s1 + $0x1a34] sm:$0xf]
    %v2180 = vld [vmem:[%s1 + $0x1a38] sm:$0xf]
    %v2181 = vld [vmem:[%s1 + $0x1a3c] sm:$0xf]
    %v2182 = vld [vmem:[%s1 + $0x1a40] sm:$0xf]
    %v2183 = vld [vmem:[%s1 + $0x1a44] sm:$0xf]
    %v2184 = vld [vmem:[%s1 + $0x1a48] sm:$0xf]
    %v2185 = vld [vmem:[%s1 + $0x1a4c] sm:$0xf]
    %v2186 = vld [vmem:[%s1 + $0x1a50] sm:$0xf]
    %v2187 = vld [vmem:[%s1 + $0x1a54] sm:$0xf]
    %v2188 = vld [vmem:[%s1 + $0x1a58] sm:$0xf]
    %v2189 = vld [vmem:[%s1 + $0x1a5c] sm:$0xf]
    %v2190 = vld [vmem:[%s1 + $0x1a60] sm:$0xf]
    %v2191 = vld [vmem:[%s1 + $0x1a64] sm:$0xf]
    %v2192 = vld [vmem:[%s1 + $0x1a68] sm:$0xf]
    %v2193 = vld [vmem:[%s1 + $0x1a6c] sm:$0xf]
    %v2194 = vld [vmem:[%s1 + $0x1a70] sm:$0xf]
    %v2195 = vld [vmem:[%s1 + $0x1a74] sm:$0xf]
    %v2196 = vld [vmem:[%s1 + $0x1a78] sm:$0xf]
    %v2197 = vld [vmem:[%s1 + $0x1a7c] sm:$0xf]
    %v2198 = vld [vmem:[%s1 + $0x1a80] sm:$0xf]
    %v2199 = vld [vmem:[%s1 + $0x1a84] sm:$0xf]
    %v2200 = vld [vmem:[%s1 + $0x1a88] sm:$0xf]
    %v2201 = vld [vmem:[%s1 + $0x1a8c] sm:$0xf]
    %v2202 = vld [vmem:[%s1 + $0x1a90] sm:$0xf]
    %v2203 = vld [vmem:[%s1 + $0x1a94] sm:$0xf]
    %v2204 = vld [vmem:[%s1 + $0x1a98] sm:$0xf]
    %v2205 = vld [vmem:[%s1 + $0x1a9c] sm:$0xf]
    %v2206 = vld [vmem:[%s1 + $0x1aa0] sm:$0xf]
    %v2207 = vld [vmem:[%s1 + $0x1aa4] sm:$0xf]
    %v2208 = vld [vmem:[%s1 + $0x1aa8] sm:$0xf]
    %v2209 = vld [vmem:[%s1 + $0x1aac] sm:$0xf]
    %v2210 = vld [vmem:[%s1 + $0x1ab0] sm:$0xf]
    %v2211 = vld [vmem:[%s1 + $0x1ab4] sm:$0xf]
    %v2212 = vld [vmem:[%s1 + $0x1ab8] sm:$0xf]
    %v2213 = vld [vmem:[%s1 + $0x1abc] sm:$0xf]
    %v2214 = vld [vmem:[%s1 + $0x1ac0] sm:$0xf]
    %v2215 = vld [vmem:[%s1 + $0x1ac4] sm:$0xf]
    %v2216 = vld [vmem:[%s1 + $0x1ac8] sm:$0xf]
    %v2217 = vld [vmem:[%s1 + $0x1acc] sm:$0xf]
    %v2218 = vld [vmem:[%s1 + $0x1ad0] sm:$0xf]
    %v2219 = vld [vmem:[%s1 + $0x1ad4] sm:$0xf]
    %v2220 = vld [vmem:[%s1 + $0x1ad8] sm:$0xf]
    %v2221 = vld [vmem:[%s1 + $0x1adc] sm:$0xf]
    %v2222 = vld [vmem:[%s1 + $0x1ae0] sm:$0xf]
    %v2223 = vld [vmem:[%s1 + $0x1ae4] sm:$0xf]
    %v2224 = vld [vmem:[%s1 + $0x1ae8] sm:$0xf]
    %v2225 = vld [vmem:[%s1 + $0x1aec] sm:$0xf]
    %v2226 = vld [vmem:[%s1 + $0x1af0] sm:$0xf]
    %v2227 = vld [vmem:[%s1 + $0x1af4] sm:$0xf]
    %v2228 = vld [vmem:[%s1 + $0x1af8] sm:$0xf]
    %v2229 = vld [vmem:[%s1 + $0x1afc] sm:$0xf]
    %v2230 = vld [vmem:[%s1 + $0x1b00] sm:$0xf]
    %v2231 = vld [vmem:[%s1 + $0x1b04] sm:$0xf]
    %v2232 = vld [vmem:[%s1 + $0x1b08] sm:$0xf]
    %v2233 = vld [vmem:[%s1 + $0x1b0c] sm:$0xf]
    %v2234 = vld [vmem:[%s1 + $0x1b10] sm:$0xf]
    %v2235 = vld [vmem:[%s1 + $0x1b14] sm:$0xf]
    %v2236 = vld [vmem:[%s1 + $0x1b18] sm:$0xf]
    %v2237 = vld [vmem:[%s1 + $0x1b1c] sm:$0xf]
    %v2238 = vld [vmem:[%s1 + $0x1b20] sm:$0xf]
    %v2239 = vld [vmem:[%s1 + $0x1b24] sm:$0xf]
    %v2240 = vld [vmem:[%s1 + $0x1b28] sm:$0xf]
    %v2241 = vld [vmem:[%s1 + $0x1b2c] sm:$0xf]
    %v2242 = vld [vmem:[%s1 + $0x1b30] sm:$0xf]
    %v2243 = vld [vmem:[%s1 + $0x1b34] sm:$0xf]
    %v2244 = vld [vmem:[%s1 + $0x1b38] sm:$0xf]
    %v2245 = vld [vmem:[%s1 + $0x1b3c] sm:$0xf]
    %v2246 = vld [vmem:[%s1 + $0x1b40] sm:$0xf]
    %v2247 = vld [vmem:[%s1 + $0x1b44] sm:$0xf]
    %v2248 = vld [vmem:[%s1 + $0x1b48] sm:$0xf]
    %v2249 = vld [vmem:[%s1 + $0x1b4c] sm:$0xf]
    %v2250 = vld [vmem:[%s1 + $0x1b50] sm:$0xf]
    %v2251 = vld [vmem:[%s1 + $0x1b54] sm:$0xf]
    %v2252 = vld [vmem:[%s1 + $0x1b58] sm:$0xf]
    %v2253 = vld [vmem:[%s1 + $0x1b5c] sm:$0xf]
    %v2254 = vld [vmem:[%s1 + $0x1b60] sm:$0xf]
    %v2255 = vld [vmem:[%s1 + $0x1b64] sm:$0xf]
    %v2256 = vld [vmem:[%s1 + $0x1b68] sm:$0xf]
    %v2257 = vld [vmem:[%s1 + $0x1b6c] sm:$0xf]
    %v2258 = vld [vmem:[%s1 + $0x1b70] sm:$0xf]
    %v2259 = vld [vmem:[%s1 + $0x1b74] sm:$0xf]
    %v2260 = vld [vmem:[%s1 + $0x1b78] sm:$0xf]
    %v2261 = vld [vmem:[%s1 + $0x1b7c] sm:$0xf]
    %v2262 = vld [vmem:[%s1 + $0x1b80] sm:$0xf]
    %v2263 = vld [vmem:[%s1 + $0x1b84] sm:$0xf]
    %v2264 = vld [vmem:[%s1 + $0x1b88] sm:$0xf]
    %v2265 = vld [vmem:[%s1 + $0x1b8c] sm:$0xf]
    %v2266 = vld [vmem:[%s1 + $0x1b90] sm:$0xf]
    %v2267 = vld [vmem:[%s1 + $0x1b94] sm:$0xf]
    %v2268 = vld [vmem:[%s1 + $0x1b98] sm:$0xf]
    %v2269 = vld [vmem:[%s1 + $0x1b9c] sm:$0xf]
    %v2270 = vld [vmem:[%s1 + $0x1ba0] sm:$0xf]
    %v2271 = vld [vmem:[%s1 + $0x1ba4] sm:$0xf]
    %v2272 = vld [vmem:[%s1 + $0x1ba8] sm:$0xf]
    %v2273 = vld [vmem:[%s1 + $0x1bac] sm:$0xf]
    %v2274 = vld [vmem:[%s1 + $0x1bb0] sm:$0xf]
    %v2275 = vld [vmem:[%s1 + $0x1bb4] sm:$0xf]
    %v2276 = vld [vmem:[%s1 + $0x1bb8] sm:$0xf]
    %v2277 = vld [vmem:[%s1 + $0x1bbc] sm:$0xf]
    %v2278 = vld [vmem:[%s1 + $0x1bc0] sm:$0xf]
    %v2279 = vld [vmem:[%s1 + $0x1bc4] sm:$0xf]
    %v2280 = vld [vmem:[%s1 + $0x1bc8] sm:$0xf]
    %v2281 = vld [vmem:[%s1 + $0x1bcc] sm:$0xf]
    %v2282 = vld [vmem:[%s1 + $0x1bd0] sm:$0xf]
    %v2283 = vld [vmem:[%s1 + $0x1bd4] sm:$0xf]
    %v2284 = vld [vmem:[%s1 + $0x1bd8] sm:$0xf]
    %v2285 = vld [vmem:[%s1 + $0x1bdc] sm:$0xf]
    %v2286 = vld [vmem:[%s1 + $0x1be0] sm:$0xf]
    %v2287 = vld [vmem:[%s1 + $0x1be4] sm:$0xf]
    %v2288 = vld [vmem:[%s1 + $0x1be8] sm:$0xf]
    %v2289 = vld [vmem:[%s1 + $0x1bec] sm:$0xf]
    %v2290 = vld [vmem:[%s1 + $0x1bf0] sm:$0xf]
    %v2291 = vld [vmem:[%s1 + $0x1bf4] sm:$0xf]
    %v2292 = vld [vmem:[%s1 + $0x1bf8] sm:$0xf]
    %v2293 = vld [vmem:[%s1 + $0x1bfc] sm:$0xf]
    %v2294 = vld [vmem:[%s1 + $0x1c00] sm:$0xf]
    %v2295 = vld [vmem:[%s1 + $0x1c04] sm:$0xf]
    %v2296 = vld [vmem:[%s1 + $0x1c08] sm:$0xf]
    %v2297 = vld [vmem:[%s1 + $0x1c0c] sm:$0xf]
    %v2298 = vld [vmem:[%s1 + $0x1c10] sm:$0xf]
    %v2299 = vld [vmem:[%s1 + $0x1c14] sm:$0xf]
    %v2300 = vld [vmem:[%s1 + $0x1c18] sm:$0xf]
    %v2301 = vld [vmem:[%s1 + $0x1c1c] sm:$0xf]
    %v2302 = vld [vmem:[%s1 + $0x1c20] sm:$0xf]
    %v2303 = vld [vmem:[%s1 + $0x1c24] sm:$0xf]
    %v2304 = vld [vmem:[%s1 + $0x1c28] sm:$0xf]
    %v2305 = vld [vmem:[%s1 + $0x1c2c] sm:$0xf]
    %v2306 = vld [vmem:[%s1 + $0x1c30] sm:$0xf]
    %v2307 = vld [vmem:[%s1 + $0x1c34] sm:$0xf]
    %v2308 = vld [vmem:[%s1 + $0x1c38] sm:$0xf]
    %v2309 = vld [vmem:[%s1 + $0x1c3c] sm:$0xf]
    %v2310 = vld [vmem:[%s1 + $0x1c40] sm:$0xf]
    %v2311 = vld [vmem:[%s1 + $0x1c44] sm:$0xf]
    %v2312 = vld [vmem:[%s1 + $0x1c48] sm:$0xf]
    %v2313 = vld [vmem:[%s1 + $0x1c4c] sm:$0xf]
    %v2314 = vld [vmem:[%s1 + $0x1c50] sm:$0xf]
    %v2315 = vld [vmem:[%s1 + $0x1c54] sm:$0xf]
    %v2316 = vld [vmem:[%s1 + $0x1c58] sm:$0xf]
    %v2317 = vld [vmem:[%s1 + $0x1c5c] sm:$0xf]
    %v2318 = vld [vmem:[%s1 + $0x1c60] sm:$0xf]
    %v2319 = vld [vmem:[%s1 + $0x1c64] sm:$0xf]
    %v2320 = vld [vmem:[%s1 + $0x1c68] sm:$0xf]
    %v2321 = vld [vmem:[%s1 + $0x1c6c] sm:$0xf]
    %v2322 = vld [vmem:[%s1 + $0x1c70] sm:$0xf]
    %v2323 = vld [vmem:[%s1 + $0x1c74] sm:$0xf]
    %v2324 = vld [vmem:[%s1 + $0x1c78] sm:$0xf]
    %v2325 = vld [vmem:[%s1 + $0x1c7c] sm:$0xf]
    %v2326 = vld [vmem:[%s1 + $0x1c80] sm:$0xf]
    %v2327 = vld [vmem:[%s1 + $0x1c84] sm:$0xf]
    %v2328 = vld [vmem:[%s1 + $0x1c88] sm:$0xf]
    %v2329 = vld [vmem:[%s1 + $0x1c8c] sm:$0xf]
    %v2330 = vld [vmem:[%s1 + $0x1c90] sm:$0xf]
    %v2331 = vld [vmem:[%s1 + $0x1c94] sm:$0xf]
    %v2332 = vld [vmem:[%s1 + $0x1c98] sm:$0xf]
    %v2333 = vld [vmem:[%s1 + $0x1c9c] sm:$0xf]
    %v2334 = vld [vmem:[%s1 + $0x1ca0] sm:$0xf]
    %v2335 = vld [vmem:[%s1 + $0x1ca4] sm:$0xf]
    %v2336 = vld [vmem:[%s1 + $0x1ca8] sm:$0xf]
    %v2337 = vld [vmem:[%s1 + $0x1cac] sm:$0xf]
    %v2338 = vld [vmem:[%s1 + $0x1cb0] sm:$0xf]
    %v2339 = vld [vmem:[%s1 + $0x1cb4] sm:$0xf]
    %v2340 = vld [vmem:[%s1 + $0x1cb8] sm:$0xf]
    %v2341 = vld [vmem:[%s1 + $0x1cbc] sm:$0xf]
    %v2342 = vld [vmem:[%s1 + $0x1cc0] sm:$0xf]
    %v2343 = vld [vmem:[%s1 + $0x1cc4] sm:$0xf]
    %v2344 = vld [vmem:[%s1 + $0x1cc8] sm:$0xf]
    %v2345 = vld [vmem:[%s1 + $0x1ccc] sm:$0xf]
    %v2346 = vld [vmem:[%s1 + $0x1cd0] sm:$0xf]
    %v2347 = vld [vmem:[%s1 + $0x1cd4] sm:$0xf]
    %v2348 = vld [vmem:[%s1 + $0x1cd8] sm:$0xf]
    %v2349 = vld [vmem:[%s1 + $0x1cdc] sm:$0xf]
    %v2350 = vld [vmem:[%s1 + $0x1ce0] sm:$0xf]
    %v2351 = vld [vmem:[%s1 + $0x1ce4] sm:$0xf]
    %v2352 = vld [vmem:[%s1 + $0x1ce8] sm:$0xf]
    %v2353 = vld [vmem:[%s1 + $0x1cec] sm:$0xf]
    %v2354 = vld [vmem:[%s1 + $0x1cf0] sm:$0xf]
    %v2355 = vld [vmem:[%s1 + $0x1cf4] sm:$0xf]
    %v2356 = vld [vmem:[%s1 + $0x1cf8] sm:$0xf]
    %v2357 = vld [vmem:[%s1 + $0x1cfc] sm:$0xf]
    %v2358 = vld [vmem:[%s1 + $0x1d00] sm:$0xf]
    %v2359 = vld [vmem:[%s1 + $0x1d04] sm:$0xf]
    %v2360 = vld [vmem:[%s1 + $0x1d08] sm:$0xf]
    %v2361 = vld [vmem:[%s1 + $0x1d0c] sm:$0xf]
    %v2362 = vld [vmem:[%s1 + $0x1d10] sm:$0xf]
    %v2363 = vld [vmem:[%s1 + $0x1d14] sm:$0xf]
    %v2364 = vld [vmem:[%s1 + $0x1d18] sm:$0xf]
    %v2365 = vld [vmem:[%s1 + $0x1d1c] sm:$0xf]
    %v2366 = vld [vmem:[%s1 + $0x1d20] sm:$0xf]
    %v2367 = vld [vmem:[%s1 + $0x1d24] sm:$0xf]
    %v2368 = vld [vmem:[%s1 + $0x1d28] sm:$0xf]
    %v2369 = vld [vmem:[%s1 + $0x1d2c] sm:$0xf]
    %v2370 = vld [vmem:[%s1 + $0x1d30] sm:$0xf]
    %v2371 = vld [vmem:[%s1 + $0x1d34] sm:$0xf]
    %v2372 = vld [vmem:[%s1 + $0x1d38] sm:$0xf]
    %v2373 = vld [vmem:[%s1 + $0x1d3c] sm:$0xf]
    %v2374 = vld [vmem:[%s1 + $0x1d40] sm:$0xf]
    %v2375 = vld [vmem:[%s1 + $0x1d44] sm:$0xf]
    %v2376 = vld [vmem:[%s1 + $0x1d48] sm:$0xf]
    %v2377 = vld [vmem:[%s1 + $0x1d4c] sm:$0xf]
    %v2378 = vld [vmem:[%s1 + $0x1d50] sm:$0xf]
    %v2379 = vld [vmem:[%s1 + $0x1d54] sm:$0xf]
    %v2380 = vld [vmem:[%s1 + $0x1d58] sm:$0xf]
    %v2381 = vld [vmem:[%s1 + $0x1d5c] sm:$0xf]
    %v2382 = vld [vmem:[%s1 + $0x1d60] sm:$0xf]
    %v2383 = vld [vmem:[%s1 + $0x1d64] sm:$0xf]
    %v2384 = vld [vmem:[%s1 + $0x1d68] sm:$0xf]
    %v2385 = vld [vmem:[%s1 + $0x1d6c] sm:$0xf]
    %v2386 = vld [vmem:[%s1 + $0x1d70] sm:$0xf]
    %v2387 = vld [vmem:[%s1 + $0x1d74] sm:$0xf]
    %v2388 = vld [vmem:[%s1 + $0x1d78] sm:$0xf]
    %v2389 = vld [vmem:[%s1 + $0x1d7c] sm:$0xf]
    %v2390 = vld [vmem:[%s1 + $0x1d80] sm:$0xf]
    %v2391 = vld [vmem:[%s1 + $0x1d84] sm:$0xf]
    %v2392 = vld [vmem:[%s1 + $0x1d88] sm:$0xf]
    %v2393 = vld [vmem:[%s1 + $0x1d8c] sm:$0xf]
    %v2394 = vld [vmem:[%s1 + $0x1d90] sm:$0xf]
    %v2395 = vld [vmem:[%s1 + $0x1d94] sm:$0xf]
    %v2396 = vld [vmem:[%s1 + $0x1d98] sm:$0xf]
    %v2397 = vld [vmem:[%s1 + $0x1d9c] sm:$0xf]
    %v2398 = vld [vmem:[%s1 + $0x1da0] sm:$0xf]
    %v2399 = vld [vmem:[%s1 + $0x1da4] sm:$0xf]
    %v2400 = vld [vmem:[%s1 + $0x1da8] sm:$0xf]
    %v2401 = vld [vmem:[%s1 + $0x1dac] sm:$0xf]
    %v2402 = vld [vmem:[%s1 + $0x1db0] sm:$0xf]
    %v2403 = vld [vmem:[%s1 + $0x1db4] sm:$0xf]
    %v2404 = vld [vmem:[%s1 + $0x1db8] sm:$0xf]
    %v2405 = vld [vmem:[%s1 + $0x1dbc] sm:$0xf]
    %v2406 = vld [vmem:[%s1 + $0x1dc0] sm:$0xf]
    %v2407 = vld [vmem:[%s1 + $0x1dc4] sm:$0xf]
    %v2408 = vld [vmem:[%s1 + $0x1dc8] sm:$0xf]
    %v2409 = vld [vmem:[%s1 + $0x1dcc] sm:$0xf]
    %v2410 = vld [vmem:[%s1 + $0x1dd0] sm:$0xf]
    %v2411 = vld [vmem:[%s1 + $0x1dd4] sm:$0xf]
    %v2412 = vld [vmem:[%s1 + $0x1dd8] sm:$0xf]
    %v2413 = vld [vmem:[%s1 + $0x1ddc] sm:$0xf]
    %v2414 = vld [vmem:[%s1 + $0x1de0] sm:$0xf]
    %v2415 = vld [vmem:[%s1 + $0x1de4] sm:$0xf]
    %v2416 = vld [vmem:[%s1 + $0x1de8] sm:$0xf]
    %v2417 = vld [vmem:[%s1 + $0x1dec] sm:$0xf]
    %v2418 = vld [vmem:[%s1 + $0x1df0] sm:$0xf]
    %v2419 = vld [vmem:[%s1 + $0x1df4] sm:$0xf]
    %v2420 = vld [vmem:[%s1 + $0x1df8] sm:$0xf]
    %v2421 = vld [vmem:[%s1 + $0x1dfc] sm:$0xf]
    %v2422 = vld [vmem:[%s1 + $0x1e00] sm:$0xf]
    %v2423 = vld [vmem:[%s1 + $0x1e04] sm:$0xf]
    %v2424 = vld [vmem:[%s1 + $0x1e08] sm:$0xf]
    %v2425 = vld [vmem:[%s1 + $0x1e0c] sm:$0xf]
    %v2426 = vld [vmem:[%s1 + $0x1e10] sm:$0xf]
    %v2427 = vld [vmem:[%s1 + $0x1e14] sm:$0xf]
    %v2428 = vld [vmem:[%s1 + $0x1e18] sm:$0xf]
    %v2429 = vld [vmem:[%s1 + $0x1e1c] sm:$0xf]
    %v2430 = vld [vmem:[%s1 + $0x1e20] sm:$0xf]
    %v2431 = vld [vmem:[%s1 + $0x1e24] sm:$0xf]
    %v2432 = vld [vmem:[%s1 + $0x1e28] sm:$0xf]
    %v2433 = vld [vmem:[%s1 + $0x1e2c] sm:$0xf]
    %v2434 = vld [vmem:[%s1 + $0x1e30] sm:$0xf]
    %v2435 = vld [vmem:[%s1 + $0x1e34] sm:$0xf]
    %v2436 = vld [vmem:[%s1 + $0x1e38] sm:$0xf]
    %v2437 = vld [vmem:[%s1 + $0x1e3c] sm:$0xf]
    %v2438 = vld [vmem:[%s1 + $0x1e40] sm:$0xf]
    %v2439 = vld [vmem:[%s1 + $0x1e44] sm:$0xf]
    %v2440 = vld [vmem:[%s1 + $0x1e48] sm:$0xf]
    %v2441 = vld [vmem:[%s1 + $0x1e4c] sm:$0xf]
    %v2442 = vld [vmem:[%s1 + $0x1e50] sm:$0xf]
    %v2443 = vld [vmem:[%s1 + $0x1e54] sm:$0xf]
    %v2444 = vld [vmem:[%s1 + $0x1e58] sm:$0xf]
    %v2445 = vld [vmem:[%s1 + $0x1e5c] sm:$0xf]
    %v2446 = vld [vmem:[%s1 + $0x1e60] sm:$0xf]
    %v2447 = vld [vmem:[%s1 + $0x1e64] sm:$0xf]
    %v2448 = vld [vmem:[%s1 + $0x1e68] sm:$0xf]
    %v2449 = vld [vmem:[%s1 + $0x1e6c] sm:$0xf]
    %v2450 = vld [vmem:[%s1 + $0x1e70] sm:$0xf]
    %v2451 = vld [vmem:[%s1 + $0x1e74] sm:$0xf]
    %v2452 = vld [vmem:[%s1 + $0x1e78] sm:$0xf]
    %v2453 = vld [vmem:[%s1 + $0x1e7c] sm:$0xf]
    %v2454 = vld [vmem:[%s1 + $0x1e80] sm:$0xf]
    %v2455 = vld [vmem:[%s1 + $0x1e84] sm:$0xf]
    %v2456 = vld [vmem:[%s1 + $0x1e88] sm:$0xf]
    %v2457 = vld [vmem:[%s1 + $0x1e8c] sm:$0xf]
    %v2458 = vld [vmem:[%s1 + $0x1e90] sm:$0xf]
    %v2459 = vld [vmem:[%s1 + $0x1e94] sm:$0xf]
    %v2460 = vld [vmem:[%s1 + $0x1e98] sm:$0xf]
    %v2461 = vld [vmem:[%s1 + $0x1e9c] sm:$0xf]
    %v2462 = vld [vmem:[%s1 + $0x1ea0] sm:$0xf]
    %v2463 = vld [vmem:[%s1 + $0x1ea4] sm:$0xf]
    %v2464 = vld [vmem:[%s1 + $0x1ea8] sm:$0xf]
    %v2465 = vld [vmem:[%s1 + $0x1eac] sm:$0xf]
    %v2466 = vld [vmem:[%s1 + $0x1eb0] sm:$0xf]
    %v2467 = vld [vmem:[%s1 + $0x1eb4] sm:$0xf]
    %v2468 = vld [vmem:[%s1 + $0x1eb8] sm:$0xf]
    %v2469 = vld [vmem:[%s1 + $0x1ebc] sm:$0xf]
    %v2470 = vld [vmem:[%s1 + $0x1ec0] sm:$0xf]
    %v2471 = vld [vmem:[%s1 + $0x1ec4] sm:$0xf]
    %v2472 = vld [vmem:[%s1 + $0x1ec8] sm:$0xf]
    %v2473 = vld [vmem:[%s1 + $0x1ecc] sm:$0xf]
    %v2474 = vld [vmem:[%s1 + $0x1ed0] sm:$0xf]
    %v2475 = vld [vmem:[%s1 + $0x1ed4] sm:$0xf]
    %v2476 = vld [vmem:[%s1 + $0x1ed8] sm:$0xf]
    %v2477 = vld [vmem:[%s1 + $0x1edc] sm:$0xf]
    %v2478 = vld [vmem:[%s1 + $0x1ee0] sm:$0xf]
    %v2479 = vld [vmem:[%s1 + $0x1ee4] sm:$0xf]
    %v2480 = vld [vmem:[%s1 + $0x1ee8] sm:$0xf]
    %v2481 = vld [vmem:[%s1 + $0x1eec] sm:$0xf]
    %v2482 = vld [vmem:[%s1 + $0x1ef0] sm:$0xf]
    %v2483 = vld [vmem:[%s1 + $0x1ef4] sm:$0xf]
    %v2484 = vld [vmem:[%s1 + $0x1ef8] sm:$0xf]
    %v2485 = vld [vmem:[%s1 + $0x1efc] sm:$0xf]
    %v2486 = vld [vmem:[%s1 + $0x1f00] sm:$0xf]
    %v2487 = vld [vmem:[%s1 + $0x1f04] sm:$0xf]
    %v2488 = vld [vmem:[%s1 + $0x1f08] sm:$0xf]
    %v2489 = vld [vmem:[%s1 + $0x1f0c] sm:$0xf]
    %v2490 = vld [vmem:[%s1 + $0x1f10] sm:$0xf]
    %v2491 = vld [vmem:[%s1 + $0x1f14] sm:$0xf]
    %v2492 = vld [vmem:[%s1 + $0x1f18] sm:$0xf]
    %v2493 = vld [vmem:[%s1 + $0x1f1c] sm:$0xf]
    %v2494 = vld [vmem:[%s1 + $0x1f20] sm:$0xf]
    %v2495 = vld [vmem:[%s1 + $0x1f24] sm:$0xf]
    %v2496 = vld [vmem:[%s1 + $0x1f28] sm:$0xf]
    %v2497 = vld [vmem:[%s1 + $0x1f2c] sm:$0xf]
    %v2498 = vld [vmem:[%s1 + $0x1f30] sm:$0xf]
    %v2499 = vld [vmem:[%s1 + $0x1f34] sm:$0xf]
    %v2500 = vld [vmem:[%s1 + $0x1f38] sm:$0xf]
    %v2501 = vld [vmem:[%s1 + $0x1f3c] sm:$0xf]
    %v2502 = vld [vmem:[%s1 + $0x1f40] sm:$0xf]
    %v2503 = vld [vmem:[%s1 + $0x1f44] sm:$0xf]
    %v2504 = vld [vmem:[%s1 + $0x1f48] sm:$0xf]
    %v2505 = vld [vmem:[%s1 + $0x1f4c] sm:$0xf]
    %v2506 = vld [vmem:[%s1 + $0x1f50] sm:$0xf]
    %v2507 = vld [vmem:[%s1 + $0x1f54] sm:$0xf]
    %v2508 = vld [vmem:[%s1 + $0x1f58] sm:$0xf]
    %v2509 = vld [vmem:[%s1 + $0x1f5c] sm:$0xf]
    %v2510 = vld [vmem:[%s1 + $0x1f60] sm:$0xf]
    %v2511 = vld [vmem:[%s1 + $0x1f64] sm:$0xf]
    %v2512 = vld [vmem:[%s1 + $0x1f68] sm:$0xf]
    %v2513 = vld [vmem:[%s1 + $0x1f6c] sm:$0xf]
    %v2514 = vld [vmem:[%s1 + $0x1f70] sm:$0xf]
    %v2515 = vld [vmem:[%s1 + $0x1f74] sm:$0xf]
    %v2516 = vld [vmem:[%s1 + $0x1f78] sm:$0xf]
    %v2517 = vld [vmem:[%s1 + $0x1f7c] sm:$0xf]
    %v2518 = vld [vmem:[%s1 + $0x1f80] sm:$0xf]
    %v2519 = vld [vmem:[%s1 + $0x1f84] sm:$0xf]
    %v2520 = vld [vmem:[%s1 + $0x1f88] sm:$0xf]
    %v2521 = vld [vmem:[%s1 + $0x1f8c] sm:$0xf]
    %v2522 = vld [vmem:[%s1 + $0x1f90] sm:$0xf]
    %v2523 = vld [vmem:[%s1 + $0x1f94] sm:$0xf]
    %v2524 = vld [vmem:[%s1 + $0x1f98] sm:$0xf]
    %v2525 = vld [vmem:[%s1 + $0x1f9c] sm:$0xf]
    %v2526 = vld [vmem:[%s1 + $0x1fa0] sm:$0xf]
    %v2527 = vld [vmem:[%s1 + $0x1fa4] sm:$0xf]
    %v2528 = vld [vmem:[%s1 + $0x1fa8] sm:$0xf]
    %v2529 = vld [vmem:[%s1 + $0x1fac] sm:$0xf]
    %v2530 = vld [vmem:[%s1 + $0x1fb0] sm:$0xf]
    %v2531 = vld [vmem:[%s1 + $0x1fb4] sm:$0xf]
    %v2532 = vld [vmem:[%s1 + $0x1fb8] sm:$0xf]
    %v2533 = vld [vmem:[%s1 + $0x1fbc] sm:$0xf]
    %v2534 = vld [vmem:[%s1 + $0x1fc0] sm:$0xf]
    %v2535 = vld [vmem:[%s1 + $0x1fc4] sm:$0xf]
    %v2536 = vld [vmem:[%s1 + $0x1fc8] sm:$0xf]
    %v2537 = vld [vmem:[%s1 + $0x1fcc] sm:$0xf]
    %v2538 = vld [vmem:[%s1 + $0x1fd0] sm:$0xf]
    %v2539 = vld [vmem:[%s1 + $0x1fd4] sm:$0xf]
    %v2540 = vld [vmem:[%s1 + $0x1fd8] sm:$0xf]
    %v2541 = vld [vmem:[%s1 + $0x1fdc] sm:$0xf]
    %v2542 = vld [vmem:[%s1 + $0x1fe0] sm:$0xf]
    %v2543 = vld [vmem:[%s1 + $0x1fe4] sm:$0xf]
    %v2544 = vld [vmem:[%s1 + $0x1fe8] sm:$0xf]
    %v2545 = vld [vmem:[%s1 + $0x1fec] sm:$0xf]
    %v2546 = vld [vmem:[%s1 + $0x1ff0] sm:$0xf]
    %v2547 = vld [vmem:[%s1 + $0x1ff4] sm:$0xf]
    %v2548 = vld [vmem:[%s1 + $0x1ff8] sm:$0xf]
    %v2549 = vld [vmem:[%s1 + $0x1ffc] sm:$0xf]
    %v2550 = vld [vmem:[%s2] sm:$0x1]
    %v2552 = vperm.slane %v2550, 0
    %v4602 = vunpack.c.l.b16 %v502
    %v4603 = vunpack.c.l.b16 %v503
    %v4604 = vunpack.c.l.b16 %v504
    %v4605 = vunpack.c.l.b16 %v505
    %v4606 = vunpack.c.l.b16 %v506
    %v4607 = vunpack.c.l.b16 %v507
    %v4608 = vunpack.c.l.b16 %v508
    %v4609 = vunpack.c.l.b16 %v509
    %v4610 = vunpack.c.l.b16 %v510
    %v4611 = vunpack.c.l.b16 %v511
    %v4612 = vunpack.c.l.b16 %v512
    %v4613 = vunpack.c.l.b16 %v513
    %v4614 = vunpack.c.l.b16 %v514
    %v4615 = vunpack.c.l.b16 %v515
    %v4616 = vunpack.c.l.b16 %v516
    %v4617 = vunpack.c.l.b16 %v517
    %v4618 = vunpack.c.l.b16 %v518
    %v4619 = vunpack.c.l.b16 %v519
    %v4620 = vunpack.c.l.b16 %v520
    %v4621 = vunpack.c.l.b16 %v521
    %v4622 = vunpack.c.l.b16 %v522
    %v4623 = vunpack.c.l.b16 %v523
    %v4624 = vunpack.c.l.b16 %v524
    %v4625 = vunpack.c.l.b16 %v525
    %v4626 = vunpack.c.l.b16 %v526
    %v4627 = vunpack.c.l.b16 %v527
    %v4628 = vunpack.c.l.b16 %v528
    %v4629 = vunpack.c.l.b16 %v529
    %v4630 = vunpack.c.l.b16 %v530
    %v4631 = vunpack.c.l.b16 %v531
    %v4632 = vunpack.c.l.b16 %v532
    %v4633 = vunpack.c.l.b16 %v533
    %v4634 = vunpack.c.l.b16 %v534
    %v4635 = vunpack.c.l.b16 %v535
    %v4636 = vunpack.c.l.b16 %v536
    %v4637 = vunpack.c.l.b16 %v537
    %v4638 = vunpack.c.l.b16 %v538
    %v4639 = vunpack.c.l.b16 %v539
    %v4640 = vunpack.c.l.b16 %v540
    %v4641 = vunpack.c.l.b16 %v541
    %v4642 = vunpack.c.l.b16 %v542
    %v4643 = vunpack.c.l.b16 %v543
    %v4644 = vunpack.c.l.b16 %v544
    %v4645 = vunpack.c.l.b16 %v545
    %v4646 = vunpack.c.l.b16 %v546
    %v4647 = vunpack.c.l.b16 %v547
    %v4648 = vunpack.c.l.b16 %v548
    %v4649 = vunpack.c.l.b16 %v549
    %v4650 = vunpack.c.l.b16 %v550
    %v4651 = vunpack.c.l.b16 %v551
    %v4652 = vunpack.c.l.b16 %v552
    %v4653 = vunpack.c.l.b16 %v553
    %v4654 = vunpack.c.l.b16 %v554
    %v4655 = vunpack.c.l.b16 %v555
    %v4656 = vunpack.c.l.b16 %v556
    %v4657 = vunpack.c.l.b16 %v557
    %v4658 = vunpack.c.l.b16 %v558
    %v4659 = vunpack.c.l.b16 %v559
    %v4660 = vunpack.c.l.b16 %v560
    %v4661 = vunpack.c.l.b16 %v561
    %v4662 = vunpack.c.l.b16 %v562
    %v4663 = vunpack.c.l.b16 %v563
    %v4664 = vunpack.c.l.b16 %v564
    %v4665 = vunpack.c.l.b16 %v565
    %v4666 = vunpack.c.l.b16 %v566
    %v4667 = vunpack.c.l.b16 %v567
    %v4668 = vunpack.c.l.b16 %v568
    %v4669 = vunpack.c.l.b16 %v569
    %v4670 = vunpack.c.l.b16 %v570
    %v4671 = vunpack.c.l.b16 %v571
    %v4672 = vunpack.c.l.b16 %v572
    %v4673 = vunpack.c.l.b16 %v573
    %v4674 = vunpack.c.l.b16 %v574
    %v4675 = vunpack.c.l.b16 %v575
    %v4676 = vunpack.c.l.b16 %v576
    %v4677 = vunpack.c.l.b16 %v577
    %v4678 = vunpack.c.l.b16 %v578
    %v4679 = vunpack.c.l.b16 %v579
    %v4680 = vunpack.c.l.b16 %v580
    %v4681 = vunpack.c.l.b16 %v581
    %v4682 = vunpack.c.l.b16 %v582
    %v4683 = vunpack.c.l.b16 %v583
    %v4684 = vunpack.c.l.b16 %v584
    %v4685 = vunpack.c.l.b16 %v585
    %v4686 = vunpack.c.l.b16 %v586
    %v4687 = vunpack.c.l.b16 %v587
    %v4688 = vunpack.c.l.b16 %v588
    %v4689 = vunpack.c.l.b16 %v589
    %v4690 = vunpack.c.l.b16 %v590
    %v4691 = vunpack.c.l.b16 %v591
    %v4692 = vunpack.c.l.b16 %v592
    %v4693 = vunpack.c.l.b16 %v593
    %v4694 = vunpack.c.l.b16 %v594
    %v4695 = vunpack.c.l.b16 %v595
    %v4696 = vunpack.c.l.b16 %v596
    %v4697 = vunpack.c.l.b16 %v597
    %v4698 = vunpack.c.l.b16 %v598
    %v4699 = vunpack.c.l.b16 %v599
    %v4700 = vunpack.c.l.b16 %v600
    %v4701 = vunpack.c.l.b16 %v601
    %v4702 = vunpack.c.l.b16 %v602
    %v4703 = vunpack.c.l.b16 %v603
    %v4704 = vunpack.c.l.b16 %v604
    %v4705 = vunpack.c.l.b16 %v605
    %v4706 = vunpack.c.l.b16 %v606
    %v4707 = vunpack.c.l.b16 %v607
    %v4708 = vunpack.c.l.b16 %v608
    %v4709 = vunpack.c.l.b16 %v609
    %v4710 = vunpack.c.l.b16 %v610
    %v4711 = vunpack.c.l.b16 %v611
    %v4712 = vunpack.c.l.b16 %v612
    %v4713 = vunpack.c.l.b16 %v613
    %v4714 = vunpack.c.l.b16 %v614
    %v4715 = vunpack.c.l.b16 %v615
    %v4716 = vunpack.c.l.b16 %v616
    %v4717 = vunpack.c.l.b16 %v617
    %v4718 = vunpack.c.l.b16 %v618
    %v4719 = vunpack.c.l.b16 %v619
    %v4720 = vunpack.c.l.b16 %v620
    %v4721 = vunpack.c.l.b16 %v621
    %v4722 = vunpack.c.l.b16 %v622
    %v4723 = vunpack.c.l.b16 %v623
    %v4724 = vunpack.c.l.b16 %v624
    %v4725 = vunpack.c.l.b16 %v625
    %v4726 = vunpack.c.l.b16 %v626
    %v4727 = vunpack.c.l.b16 %v627
    %v4728 = vunpack.c.l.b16 %v628
    %v4729 = vunpack.c.l.b16 %v629
    %v4730 = vunpack.c.l.b16 %v630
    %v4731 = vunpack.c.l.b16 %v631
    %v4732 = vunpack.c.l.b16 %v632
    %v4733 = vunpack.c.l.b16 %v633
    %v4734 = vunpack.c.l.b16 %v634
    %v4735 = vunpack.c.l.b16 %v635
    %v4736 = vunpack.c.l.b16 %v636
    %v4737 = vunpack.c.l.b16 %v637
    %v4738 = vunpack.c.l.b16 %v638
    %v4739 = vunpack.c.l.b16 %v639
    %v4740 = vunpack.c.l.b16 %v640
    %v4741 = vunpack.c.l.b16 %v641
    %v4742 = vunpack.c.l.b16 %v642
    %v4743 = vunpack.c.l.b16 %v643
    %v4744 = vunpack.c.l.b16 %v644
    %v4745 = vunpack.c.l.b16 %v645
    %v4746 = vunpack.c.l.b16 %v646
    %v4747 = vunpack.c.l.b16 %v647
    %v4748 = vunpack.c.l.b16 %v648
    %v4749 = vunpack.c.l.b16 %v649
    %v4750 = vunpack.c.l.b16 %v650
    %v4751 = vunpack.c.l.b16 %v651
    %v4752 = vunpack.c.l.b16 %v652
    %v4753 = vunpack.c.l.b16 %v653
    %v4754 = vunpack.c.l.b16 %v654
    %v4755 = vunpack.c.l.b16 %v655
    %v4756 = vunpack.c.l.b16 %v656
    %v4757 = vunpack.c.l.b16 %v657
    %v4758 = vunpack.c.l.b16 %v658
    %v4759 = vunpack.c.l.b16 %v659
    %v4760 = vunpack.c.l.b16 %v660
    %v4761 = vunpack.c.l.b16 %v661
    %v4762 = vunpack.c.l.b16 %v662
    %v4763 = vunpack.c.l.b16 %v663
    %v4764 = vunpack.c.l.b16 %v664
    %v4765 = vunpack.c.l.b16 %v665
    %v4766 = vunpack.c.l.b16 %v666
    %v4767 = vunpack.c.l.b16 %v667
    %v4768 = vunpack.c.l.b16 %v668
    %v4769 = vunpack.c.l.b16 %v669
    %v4770 = vunpack.c.l.b16 %v670
    %v4771 = vunpack.c.l.b16 %v671
    %v4772 = vunpack.c.l.b16 %v672
    %v4773 = vunpack.c.l.b16 %v673
    %v4774 = vunpack.c.l.b16 %v674
    %v4775 = vunpack.c.l.b16 %v675
    %v4776 = vunpack.c.l.b16 %v676
    %v4777 = vunpack.c.l.b16 %v677
    %v4778 = vunpack.c.l.b16 %v678
    %v4779 = vunpack.c.l.b16 %v679
    %v4780 = vunpack.c.l.b16 %v680
    %v4781 = vunpack.c.l.b16 %v681
    %v4782 = vunpack.c.l.b16 %v682
    %v4783 = vunpack.c.l.b16 %v683
    %v4784 = vunpack.c.l.b16 %v684
    %v4785 = vunpack.c.l.b16 %v685
    %v4786 = vunpack.c.l.b16 %v686
    %v4787 = vunpack.c.l.b16 %v687
    %v4788 = vunpack.c.l.b16 %v688
    %v4789 = vunpack.c.l.b16 %v689
    %v4790 = vunpack.c.l.b16 %v690
    %v4791 = vunpack.c.l.b16 %v691
    %v4792 = vunpack.c.l.b16 %v692
    %v4793 = vunpack.c.l.b16 %v693
    %v4794 = vunpack.c.l.b16 %v694
    %v4795 = vunpack.c.l.b16 %v695
    %v4796 = vunpack.c.l.b16 %v696
    %v4797 = vunpack.c.l.b16 %v697
    %v4798 = vunpack.c.l.b16 %v698
    %v4799 = vunpack.c.l.b16 %v699
    %v4800 = vunpack.c.l.b16 %v700
    %v4801 = vunpack.c.l.b16 %v701
    %v4802 = vunpack.c.l.b16 %v702
    %v4803 = vunpack.c.l.b16 %v703
    %v4804 = vunpack.c.l.b16 %v704
    %v4805 = vunpack.c.l.b16 %v705
    %v4806 = vunpack.c.l.b16 %v706
    %v4807 = vunpack.c.l.b16 %v707
    %v4808 = vunpack.c.l.b16 %v708
    %v4809 = vunpack.c.l.b16 %v709
    %v4810 = vunpack.c.l.b16 %v710
    %v4811 = vunpack.c.l.b16 %v711
    %v4812 = vunpack.c.l.b16 %v712
    %v4813 = vunpack.c.l.b16 %v713
    %v4814 = vunpack.c.l.b16 %v714
    %v4815 = vunpack.c.l.b16 %v715
    %v4816 = vunpack.c.l.b16 %v716
    %v4817 = vunpack.c.l.b16 %v717
    %v4818 = vunpack.c.l.b16 %v718
    %v4819 = vunpack.c.l.b16 %v719
    %v4820 = vunpack.c.l.b16 %v720
    %v4821 = vunpack.c.l.b16 %v721
    %v4822 = vunpack.c.l.b16 %v722
    %v4823 = vunpack.c.l.b16 %v723
    %v4824 = vunpack.c.l.b16 %v724
    %v4825 = vunpack.c.l.b16 %v725
    %v4826 = vunpack.c.l.b16 %v726
    %v4827 = vunpack.c.l.b16 %v727
    %v4828 = vunpack.c.l.b16 %v728
    %v4829 = vunpack.c.l.b16 %v729
    %v4830 = vunpack.c.l.b16 %v730
    %v4831 = vunpack.c.l.b16 %v731
    %v4832 = vunpack.c.l.b16 %v732
    %v4833 = vunpack.c.l.b16 %v733
    %v4834 = vunpack.c.l.b16 %v734
    %v4835 = vunpack.c.l.b16 %v735
    %v4836 = vunpack.c.l.b16 %v736
    %v4837 = vunpack.c.l.b16 %v737
    %v4838 = vunpack.c.l.b16 %v738
    %v4839 = vunpack.c.l.b16 %v739
    %v4840 = vunpack.c.l.b16 %v740
    %v4841 = vunpack.c.l.b16 %v741
    %v4842 = vunpack.c.l.b16 %v742
    %v4843 = vunpack.c.l.b16 %v743
    %v4844 = vunpack.c.l.b16 %v744
    %v4845 = vunpack.c.l.b16 %v745
    %v4846 = vunpack.c.l.b16 %v746
    %v4847 = vunpack.c.l.b16 %v747
    %v4848 = vunpack.c.l.b16 %v748
    %v4849 = vunpack.c.l.b16 %v749
    %v4850 = vunpack.c.l.b16 %v750
    %v4851 = vunpack.c.l.b16 %v751
    %v4852 = vunpack.c.l.b16 %v752
    %v4853 = vunpack.c.l.b16 %v753
    %v4854 = vunpack.c.l.b16 %v754
    %v4855 = vunpack.c.l.b16 %v755
    %v4856 = vunpack.c.l.b16 %v756
    %v4857 = vunpack.c.l.b16 %v757
    %v4858 = vunpack.c.l.b16 %v758
    %v4859 = vunpack.c.l.b16 %v759
    %v4860 = vunpack.c.l.b16 %v760
    %v4861 = vunpack.c.l.b16 %v761
    %v4862 = vunpack.c.l.b16 %v762
    %v4863 = vunpack.c.l.b16 %v763
    %v4864 = vunpack.c.l.b16 %v764
    %v4865 = vunpack.c.l.b16 %v765
    %v4866 = vunpack.c.l.b16 %v766
    %v4867 = vunpack.c.l.b16 %v767
    %v4868 = vunpack.c.l.b16 %v768
    %v4869 = vunpack.c.l.b16 %v769
    %v4870 = vunpack.c.l.b16 %v770
    %v4871 = vunpack.c.l.b16 %v771
    %v4872 = vunpack.c.l.b16 %v772
    %v4873 = vunpack.c.l.b16 %v773
    %v4874 = vunpack.c.l.b16 %v774
    %v4875 = vunpack.c.l.b16 %v775
    %v4876 = vunpack.c.l.b16 %v776
    %v4877 = vunpack.c.l.b16 %v777
    %v4878 = vunpack.c.l.b16 %v778
    %v4879 = vunpack.c.l.b16 %v779
    %v4880 = vunpack.c.l.b16 %v780
    %v4881 = vunpack.c.l.b16 %v781
    %v4882 = vunpack.c.l.b16 %v782
    %v4883 = vunpack.c.l.b16 %v783
    %v4884 = vunpack.c.l.b16 %v784
    %v4885 = vunpack.c.l.b16 %v785
    %v4886 = vunpack.c.l.b16 %v786
    %v4887 = vunpack.c.l.b16 %v787
    %v4888 = vunpack.c.l.b16 %v788
    %v4889 = vunpack.c.l.b16 %v789
    %v4890 = vunpack.c.l.b16 %v790
    %v4891 = vunpack.c.l.b16 %v791
    %v4892 = vunpack.c.l.b16 %v792
    %v4893 = vunpack.c.l.b16 %v793
    %v4894 = vunpack.c.l.b16 %v794
    %v4895 = vunpack.c.l.b16 %v795
    %v4896 = vunpack.c.l.b16 %v796
    %v4897 = vunpack.c.l.b16 %v797
    %v4898 = vunpack.c.l.b16 %v798
    %v4899 = vunpack.c.l.b16 %v799
    %v4900 = vunpack.c.l.b16 %v800
    %v4901 = vunpack.c.l.b16 %v801
    %v4902 = vunpack.c.l.b16 %v802
    %v4903 = vunpack.c.l.b16 %v803
    %v4904 = vunpack.c.l.b16 %v804
    %v4905 = vunpack.c.l.b16 %v805
    %v4906 = vunpack.c.l.b16 %v806
    %v4907 = vunpack.c.l.b16 %v807
    %v4908 = vunpack.c.l.b16 %v808
    %v4909 = vunpack.c.l.b16 %v809
    %v4910 = vunpack.c.l.b16 %v810
    %v4911 = vunpack.c.l.b16 %v811
    %v4912 = vunpack.c.l.b16 %v812
    %v4913 = vunpack.c.l.b16 %v813
    %v4914 = vunpack.c.l.b16 %v814
    %v4915 = vunpack.c.l.b16 %v815
    %v4916 = vunpack.c.l.b16 %v816
    %v4917 = vunpack.c.l.b16 %v817
    %v4918 = vunpack.c.l.b16 %v818
    %v4919 = vunpack.c.l.b16 %v819
    %v4920 = vunpack.c.l.b16 %v820
    %v4921 = vunpack.c.l.b16 %v821
    %v4922 = vunpack.c.l.b16 %v822
    %v4923 = vunpack.c.l.b16 %v823
    %v4924 = vunpack.c.l.b16 %v824
    %v4925 = vunpack.c.l.b16 %v825
    %v4926 = vunpack.c.l.b16 %v826
    %v4927 = vunpack.c.l.b16 %v827
    %v4928 = vunpack.c.l.b16 %v828
    %v4929 = vunpack.c.l.b16 %v829
    %v4930 = vunpack.c.l.b16 %v830
    %v4931 = vunpack.c.l.b16 %v831
    %v4932 = vunpack.c.l.b16 %v832
    %v4933 = vunpack.c.l.b16 %v833
    %v4934 = vunpack.c.l.b16 %v834
    %v4935 = vunpack.c.l.b16 %v835
    %v4936 = vunpack.c.l.b16 %v836
    %v4937 = vunpack.c.l.b16 %v837
    %v4938 = vunpack.c.l.b16 %v838
    %v4939 = vunpack.c.l.b16 %v839
    %v4940 = vunpack.c.l.b16 %v840
    %v4941 = vunpack.c.l.b16 %v841
    %v4942 = vunpack.c.l.b16 %v842
    %v4943 = vunpack.c.l.b16 %v843
    %v4944 = vunpack.c.l.b16 %v844
    %v4945 = vunpack.c.l.b16 %v845
    %v4946 = vunpack.c.l.b16 %v846
    %v4947 = vunpack.c.l.b16 %v847
    %v4948 = vunpack.c.l.b16 %v848
    %v4949 = vunpack.c.l.b16 %v849
    %v4950 = vunpack.c.l.b16 %v850
    %v4951 = vunpack.c.l.b16 %v851
    %v4952 = vunpack.c.l.b16 %v852
    %v4953 = vunpack.c.l.b16 %v853
    %v4954 = vunpack.c.l.b16 %v854
    %v4955 = vunpack.c.l.b16 %v855
    %v4956 = vunpack.c.l.b16 %v856
    %v4957 = vunpack.c.l.b16 %v857
    %v4958 = vunpack.c.l.b16 %v858
    %v4959 = vunpack.c.l.b16 %v859
    %v4960 = vunpack.c.l.b16 %v860
    %v4961 = vunpack.c.l.b16 %v861
    %v4962 = vunpack.c.l.b16 %v862
    %v4963 = vunpack.c.l.b16 %v863
    %v4964 = vunpack.c.l.b16 %v864
    %v4965 = vunpack.c.l.b16 %v865
    %v4966 = vunpack.c.l.b16 %v866
    %v4967 = vunpack.c.l.b16 %v867
    %v4968 = vunpack.c.l.b16 %v868
    %v4969 = vunpack.c.l.b16 %v869
    %v4970 = vunpack.c.l.b16 %v870
    %v4971 = vunpack.c.l.b16 %v871
    %v4972 = vunpack.c.l.b16 %v872
    %v4973 = vunpack.c.l.b16 %v873
    %v4974 = vunpack.c.l.b16 %v874
    %v4975 = vunpack.c.l.b16 %v875
    %v4976 = vunpack.c.l.b16 %v876
    %v4977 = vunpack.c.l.b16 %v877
    %v4978 = vunpack.c.l.b16 %v878
    %v4979 = vunpack.c.l.b16 %v879
    %v4980 = vunpack.c.l.b16 %v880
    %v4981 = vunpack.c.l.b16 %v881
    %v4982 = vunpack.c.l.b16 %v882
    %v4983 = vunpack.c.l.b16 %v883
    %v4984 = vunpack.c.l.b16 %v884
    %v4985 = vunpack.c.l.b16 %v885
    %v4986 = vunpack.c.l.b16 %v886
    %v4987 = vunpack.c.l.b16 %v887
    %v4988 = vunpack.c.l.b16 %v888
    %v4989 = vunpack.c.l.b16 %v889
    %v4990 = vunpack.c.l.b16 %v890
    %v4991 = vunpack.c.l.b16 %v891
    %v4992 = vunpack.c.l.b16 %v892
    %v4993 = vunpack.c.l.b16 %v893
    %v4994 = vunpack.c.l.b16 %v894
    %v4995 = vunpack.c.l.b16 %v895
    %v4996 = vunpack.c.l.b16 %v896
    %v4997 = vunpack.c.l.b16 %v897
    %v4998 = vunpack.c.l.b16 %v898
    %v4999 = vunpack.c.l.b16 %v899
    %v5000 = vunpack.c.l.b16 %v900
    %v5001 = vunpack.c.l.b16 %v901
    %v5002 = vunpack.c.l.b16 %v902
    %v5003 = vunpack.c.l.b16 %v903
    %v5004 = vunpack.c.l.b16 %v904
    %v5005 = vunpack.c.l.b16 %v905
    %v5006 = vunpack.c.l.b16 %v906
    %v5007 = vunpack.c.l.b16 %v907
    %v5008 = vunpack.c.l.b16 %v908
    %v5009 = vunpack.c.l.b16 %v909
    %v5010 = vunpack.c.l.b16 %v910
    %v5011 = vunpack.c.l.b16 %v911
    %v5012 = vunpack.c.l.b16 %v912
    %v5013 = vunpack.c.l.b16 %v913
    %v5014 = vunpack.c.l.b16 %v914
    %v5015 = vunpack.c.l.b16 %v915
    %v5016 = vunpack.c.l.b16 %v916
    %v5017 = vunpack.c.l.b16 %v917
    %v5018 = vunpack.c.l.b16 %v918
    %v5019 = vunpack.c.l.b16 %v919
    %v5020 = vunpack.c.l.b16 %v920
    %v5021 = vunpack.c.l.b16 %v921
    %v5022 = vunpack.c.l.b16 %v922
    %v5023 = vunpack.c.l.b16 %v923
    %v5024 = vunpack.c.l.b16 %v924
    %v5025 = vunpack.c.l.b16 %v925
    %v5026 = vunpack.c.l.b16 %v926
    %v5027 = vunpack.c.l.b16 %v927
    %v5028 = vunpack.c.l.b16 %v928
    %v5029 = vunpack.c.l.b16 %v929
    %v5030 = vunpack.c.l.b16 %v930
    %v5031 = vunpack.c.l.b16 %v931
    %v5032 = vunpack.c.l.b16 %v932
    %v5033 = vunpack.c.l.b16 %v933
    %v5034 = vunpack.c.l.b16 %v934
    %v5035 = vunpack.c.l.b16 %v935
    %v5036 = vunpack.c.l.b16 %v936
    %v5037 = vunpack.c.l.b16 %v937
    %v5038 = vunpack.c.l.b16 %v938
    %v5039 = vunpack.c.l.b16 %v939
    %v5040 = vunpack.c.l.b16 %v940
    %v5041 = vunpack.c.l.b16 %v941
    %v5042 = vunpack.c.l.b16 %v942
    %v5043 = vunpack.c.l.b16 %v943
    %v5044 = vunpack.c.l.b16 %v944
    %v5045 = vunpack.c.l.b16 %v945
    %v5046 = vunpack.c.l.b16 %v946
    %v5047 = vunpack.c.l.b16 %v947
    %v5048 = vunpack.c.l.b16 %v948
    %v5049 = vunpack.c.l.b16 %v949
    %v5050 = vunpack.c.l.b16 %v950
    %v5051 = vunpack.c.l.b16 %v951
    %v5052 = vunpack.c.l.b16 %v952
    %v5053 = vunpack.c.l.b16 %v953
    %v5054 = vunpack.c.l.b16 %v954
    %v5055 = vunpack.c.l.b16 %v955
    %v5056 = vunpack.c.l.b16 %v956
    %v5057 = vunpack.c.l.b16 %v957
    %v5058 = vunpack.c.l.b16 %v958
    %v5059 = vunpack.c.l.b16 %v959
    %v5060 = vunpack.c.l.b16 %v960
    %v5061 = vunpack.c.l.b16 %v961
    %v5062 = vunpack.c.l.b16 %v962
    %v5063 = vunpack.c.l.b16 %v963
    %v5064 = vunpack.c.l.b16 %v964
    %v5065 = vunpack.c.l.b16 %v965
    %v5066 = vunpack.c.l.b16 %v966
    %v5067 = vunpack.c.l.b16 %v967
    %v5068 = vunpack.c.l.b16 %v968
    %v5069 = vunpack.c.l.b16 %v969
    %v5070 = vunpack.c.l.b16 %v970
    %v5071 = vunpack.c.l.b16 %v971
    %v5072 = vunpack.c.l.b16 %v972
    %v5073 = vunpack.c.l.b16 %v973
    %v5074 = vunpack.c.l.b16 %v974
    %v5075 = vunpack.c.l.b16 %v975
    %v5076 = vunpack.c.l.b16 %v976
    %v5077 = vunpack.c.l.b16 %v977
    %v5078 = vunpack.c.l.b16 %v978
    %v5079 = vunpack.c.l.b16 %v979
    %v5080 = vunpack.c.l.b16 %v980
    %v5081 = vunpack.c.l.b16 %v981
    %v5082 = vunpack.c.l.b16 %v982
    %v5083 = vunpack.c.l.b16 %v983
    %v5084 = vunpack.c.l.b16 %v984
    %v5085 = vunpack.c.l.b16 %v985
    %v5086 = vunpack.c.l.b16 %v986
    %v5087 = vunpack.c.l.b16 %v987
    %v5088 = vunpack.c.l.b16 %v988
    %v5089 = vunpack.c.l.b16 %v989
    %v5090 = vunpack.c.l.b16 %v990
    %v5091 = vunpack.c.l.b16 %v991
    %v5092 = vunpack.c.l.b16 %v992
    %v5093 = vunpack.c.l.b16 %v993
    %v5094 = vunpack.c.l.b16 %v994
    %v5095 = vunpack.c.l.b16 %v995
    %v5096 = vunpack.c.l.b16 %v996
    %v5097 = vunpack.c.l.b16 %v997
    %v5098 = vunpack.c.l.b16 %v998
    %v5099 = vunpack.c.l.b16 %v999
    %v5100 = vunpack.c.l.b16 %v1000
    %v5101 = vunpack.c.l.b16 %v1001
    %v5102 = vunpack.c.l.b16 %v1002
    %v5103 = vunpack.c.l.b16 %v1003
    %v5104 = vunpack.c.l.b16 %v1004
    %v5105 = vunpack.c.l.b16 %v1005
    %v5106 = vunpack.c.l.b16 %v1006
    %v5107 = vunpack.c.l.b16 %v1007
    %v5108 = vunpack.c.l.b16 %v1008
    %v5109 = vunpack.c.l.b16 %v1009
    %v5110 = vunpack.c.l.b16 %v1010
    %v5111 = vunpack.c.l.b16 %v1011
    %v5112 = vunpack.c.l.b16 %v1012
    %v5113 = vunpack.c.l.b16 %v1013
    %v5114 = vunpack.c.l.b16 %v1014
    %v5115 = vunpack.c.l.b16 %v1015
    %v5116 = vunpack.c.l.b16 %v1016
    %v5117 = vunpack.c.l.b16 %v1017
    %v5118 = vunpack.c.l.b16 %v1018
    %v5119 = vunpack.c.l.b16 %v1019
    %v5120 = vunpack.c.l.b16 %v1020
    %v5121 = vunpack.c.l.b16 %v1021
    %v5122 = vunpack.c.l.b16 %v1022
    %v5123 = vunpack.c.l.b16 %v1023
    %v5124 = vunpack.c.l.b16 %v1024
    %v5125 = vunpack.c.l.b16 %v1025
    %v5126 = vunpack.c.l.b16 %v1026
    %v5127 = vunpack.c.l.b16 %v1027
    %v5128 = vunpack.c.l.b16 %v1028
    %v5129 = vunpack.c.l.b16 %v1029
    %v5130 = vunpack.c.l.b16 %v1030
    %v5131 = vunpack.c.l.b16 %v1031
    %v5132 = vunpack.c.l.b16 %v1032
    %v5133 = vunpack.c.l.b16 %v1033
    %v5134 = vunpack.c.l.b16 %v1034
    %v5135 = vunpack.c.l.b16 %v1035
    %v5136 = vunpack.c.l.b16 %v1036
    %v5137 = vunpack.c.l.b16 %v1037
    %v5138 = vunpack.c.l.b16 %v1038
    %v5139 = vunpack.c.l.b16 %v1039
    %v5140 = vunpack.c.l.b16 %v1040
    %v5141 = vunpack.c.l.b16 %v1041
    %v5142 = vunpack.c.l.b16 %v1042
    %v5143 = vunpack.c.l.b16 %v1043
    %v5144 = vunpack.c.l.b16 %v1044
    %v5145 = vunpack.c.l.b16 %v1045
    %v5146 = vunpack.c.l.b16 %v1046
    %v5147 = vunpack.c.l.b16 %v1047
    %v5148 = vunpack.c.l.b16 %v1048
    %v5149 = vunpack.c.l.b16 %v1049
    %v5150 = vunpack.c.l.b16 %v1050
    %v5151 = vunpack.c.l.b16 %v1051
    %v5152 = vunpack.c.l.b16 %v1052
    %v5153 = vunpack.c.l.b16 %v1053
    %v5154 = vunpack.c.l.b16 %v1054
    %v5155 = vunpack.c.l.b16 %v1055
    %v5156 = vunpack.c.l.b16 %v1056
    %v5157 = vunpack.c.l.b16 %v1057
    %v5158 = vunpack.c.l.b16 %v1058
    %v5159 = vunpack.c.l.b16 %v1059
    %v5160 = vunpack.c.l.b16 %v1060
    %v5161 = vunpack.c.l.b16 %v1061
    %v5162 = vunpack.c.l.b16 %v1062
    %v5163 = vunpack.c.l.b16 %v1063
    %v5164 = vunpack.c.l.b16 %v1064
    %v5165 = vunpack.c.l.b16 %v1065
    %v5166 = vunpack.c.l.b16 %v1066
    %v5167 = vunpack.c.l.b16 %v1067
    %v5168 = vunpack.c.l.b16 %v1068
    %v5169 = vunpack.c.l.b16 %v1069
    %v5170 = vunpack.c.l.b16 %v1070
    %v5171 = vunpack.c.l.b16 %v1071
    %v5172 = vunpack.c.l.b16 %v1072
    %v5173 = vunpack.c.l.b16 %v1073
    %v5174 = vunpack.c.l.b16 %v1074
    %v5175 = vunpack.c.l.b16 %v1075
    %v5176 = vunpack.c.l.b16 %v1076
    %v5177 = vunpack.c.l.b16 %v1077
    %v5178 = vunpack.c.l.b16 %v1078
    %v5179 = vunpack.c.l.b16 %v1079
    %v5180 = vunpack.c.l.b16 %v1080
    %v5181 = vunpack.c.l.b16 %v1081
    %v5182 = vunpack.c.l.b16 %v1082
    %v5183 = vunpack.c.l.b16 %v1083
    %v5184 = vunpack.c.l.b16 %v1084
    %v5185 = vunpack.c.l.b16 %v1085
    %v5186 = vunpack.c.l.b16 %v1086
    %v5187 = vunpack.c.l.b16 %v1087
    %v5188 = vunpack.c.l.b16 %v1088
    %v5189 = vunpack.c.l.b16 %v1089
    %v5190 = vunpack.c.l.b16 %v1090
    %v5191 = vunpack.c.l.b16 %v1091
    %v5192 = vunpack.c.l.b16 %v1092
    %v5193 = vunpack.c.l.b16 %v1093
    %v5194 = vunpack.c.l.b16 %v1094
    %v5195 = vunpack.c.l.b16 %v1095
    %v5196 = vunpack.c.l.b16 %v1096
    %v5197 = vunpack.c.l.b16 %v1097
    %v5198 = vunpack.c.l.b16 %v1098
    %v5199 = vunpack.c.l.b16 %v1099
    %v5200 = vunpack.c.l.b16 %v1100
    %v5201 = vunpack.c.l.b16 %v1101
    %v5202 = vunpack.c.l.b16 %v1102
    %v5203 = vunpack.c.l.b16 %v1103
    %v5204 = vunpack.c.l.b16 %v1104
    %v5205 = vunpack.c.l.b16 %v1105
    %v5206 = vunpack.c.l.b16 %v1106
    %v5207 = vunpack.c.l.b16 %v1107
    %v5208 = vunpack.c.l.b16 %v1108
    %v5209 = vunpack.c.l.b16 %v1109
    %v5210 = vunpack.c.l.b16 %v1110
    %v5211 = vunpack.c.l.b16 %v1111
    %v5212 = vunpack.c.l.b16 %v1112
    %v5213 = vunpack.c.l.b16 %v1113
    %v5214 = vunpack.c.l.b16 %v1114
    %v5215 = vunpack.c.l.b16 %v1115
    %v5216 = vunpack.c.l.b16 %v1116
    %v5217 = vunpack.c.l.b16 %v1117
    %v5218 = vunpack.c.l.b16 %v1118
    %v5219 = vunpack.c.l.b16 %v1119
    %v5220 = vunpack.c.l.b16 %v1120
    %v5221 = vunpack.c.l.b16 %v1121
    %v5222 = vunpack.c.l.b16 %v1122
    %v5223 = vunpack.c.l.b16 %v1123
    %v5224 = vunpack.c.l.b16 %v1124
    %v5225 = vunpack.c.l.b16 %v1125
    %v5226 = vunpack.c.l.b16 %v1126
    %v5227 = vunpack.c.l.b16 %v1127
    %v5228 = vunpack.c.l.b16 %v1128
    %v5229 = vunpack.c.l.b16 %v1129
    %v5230 = vunpack.c.l.b16 %v1130
    %v5231 = vunpack.c.l.b16 %v1131
    %v5232 = vunpack.c.l.b16 %v1132
    %v5233 = vunpack.c.l.b16 %v1133
    %v5234 = vunpack.c.l.b16 %v1134
    %v5235 = vunpack.c.l.b16 %v1135
    %v5236 = vunpack.c.l.b16 %v1136
    %v5237 = vunpack.c.l.b16 %v1137
    %v5238 = vunpack.c.l.b16 %v1138
    %v5239 = vunpack.c.l.b16 %v1139
    %v5240 = vunpack.c.l.b16 %v1140
    %v5241 = vunpack.c.l.b16 %v1141
    %v5242 = vunpack.c.l.b16 %v1142
    %v5243 = vunpack.c.l.b16 %v1143
    %v5244 = vunpack.c.l.b16 %v1144
    %v5245 = vunpack.c.l.b16 %v1145
    %v5246 = vunpack.c.l.b16 %v1146
    %v5247 = vunpack.c.l.b16 %v1147
    %v5248 = vunpack.c.l.b16 %v1148
    %v5249 = vunpack.c.l.b16 %v1149
    %v5250 = vunpack.c.l.b16 %v1150
    %v5251 = vunpack.c.l.b16 %v1151
    %v5252 = vunpack.c.l.b16 %v1152
    %v5253 = vunpack.c.l.b16 %v1153
    %v5254 = vunpack.c.l.b16 %v1154
    %v5255 = vunpack.c.l.b16 %v1155
    %v5256 = vunpack.c.l.b16 %v1156
    %v5257 = vunpack.c.l.b16 %v1157
    %v5258 = vunpack.c.l.b16 %v1158
    %v5259 = vunpack.c.l.b16 %v1159
    %v5260 = vunpack.c.l.b16 %v1160
    %v5261 = vunpack.c.l.b16 %v1161
    %v5262 = vunpack.c.l.b16 %v1162
    %v5263 = vunpack.c.l.b16 %v1163
    %v5264 = vunpack.c.l.b16 %v1164
    %v5265 = vunpack.c.l.b16 %v1165
    %v5266 = vunpack.c.l.b16 %v1166
    %v5267 = vunpack.c.l.b16 %v1167
    %v5268 = vunpack.c.l.b16 %v1168
    %v5269 = vunpack.c.l.b16 %v1169
    %v5270 = vunpack.c.l.b16 %v1170
    %v5271 = vunpack.c.l.b16 %v1171
    %v5272 = vunpack.c.l.b16 %v1172
    %v5273 = vunpack.c.l.b16 %v1173
    %v5274 = vunpack.c.l.b16 %v1174
    %v5275 = vunpack.c.l.b16 %v1175
    %v5276 = vunpack.c.l.b16 %v1176
    %v5277 = vunpack.c.l.b16 %v1177
    %v5278 = vunpack.c.l.b16 %v1178
    %v5279 = vunpack.c.l.b16 %v1179
    %v5280 = vunpack.c.l.b16 %v1180
    %v5281 = vunpack.c.l.b16 %v1181
    %v5282 = vunpack.c.l.b16 %v1182
    %v5283 = vunpack.c.l.b16 %v1183
    %v5284 = vunpack.c.l.b16 %v1184
    %v5285 = vunpack.c.l.b16 %v1185
    %v5286 = vunpack.c.l.b16 %v1186
    %v5287 = vunpack.c.l.b16 %v1187
    %v5288 = vunpack.c.l.b16 %v1188
    %v5289 = vunpack.c.l.b16 %v1189
    %v5290 = vunpack.c.l.b16 %v1190
    %v5291 = vunpack.c.l.b16 %v1191
    %v5292 = vunpack.c.l.b16 %v1192
    %v5293 = vunpack.c.l.b16 %v1193
    %v5294 = vunpack.c.l.b16 %v1194
    %v5295 = vunpack.c.l.b16 %v1195
    %v5296 = vunpack.c.l.b16 %v1196
    %v5297 = vunpack.c.l.b16 %v1197
    %v5298 = vunpack.c.l.b16 %v1198
    %v5299 = vunpack.c.l.b16 %v1199
    %v5300 = vunpack.c.l.b16 %v1200
    %v5301 = vunpack.c.l.b16 %v1201
    %v5302 = vunpack.c.l.b16 %v1202
    %v5303 = vunpack.c.l.b16 %v1203
    %v5304 = vunpack.c.l.b16 %v1204
    %v5305 = vunpack.c.l.b16 %v1205
    %v5306 = vunpack.c.l.b16 %v1206
    %v5307 = vunpack.c.l.b16 %v1207
    %v5308 = vunpack.c.l.b16 %v1208
    %v5309 = vunpack.c.l.b16 %v1209
    %v5310 = vunpack.c.l.b16 %v1210
    %v5311 = vunpack.c.l.b16 %v1211
    %v5312 = vunpack.c.l.b16 %v1212
    %v5313 = vunpack.c.l.b16 %v1213
    %v5314 = vunpack.c.l.b16 %v1214
    %v5315 = vunpack.c.l.b16 %v1215
    %v5316 = vunpack.c.l.b16 %v1216
    %v5317 = vunpack.c.l.b16 %v1217
    %v5318 = vunpack.c.l.b16 %v1218
    %v5319 = vunpack.c.l.b16 %v1219
    %v5320 = vunpack.c.l.b16 %v1220
    %v5321 = vunpack.c.l.b16 %v1221
    %v5322 = vunpack.c.l.b16 %v1222
    %v5323 = vunpack.c.l.b16 %v1223
    %v5324 = vunpack.c.l.b16 %v1224
    %v5325 = vunpack.c.l.b16 %v1225
    %v5326 = vunpack.c.l.b16 %v1226
    %v5327 = vunpack.c.l.b16 %v1227
    %v5328 = vunpack.c.l.b16 %v1228
    %v5329 = vunpack.c.l.b16 %v1229
    %v5330 = vunpack.c.l.b16 %v1230
    %v5331 = vunpack.c.l.b16 %v1231
    %v5332 = vunpack.c.l.b16 %v1232
    %v5333 = vunpack.c.l.b16 %v1233
    %v5334 = vunpack.c.l.b16 %v1234
    %v5335 = vunpack.c.l.b16 %v1235
    %v5336 = vunpack.c.l.b16 %v1236
    %v5337 = vunpack.c.l.b16 %v1237
    %v5338 = vunpack.c.l.b16 %v1238
    %v5339 = vunpack.c.l.b16 %v1239
    %v5340 = vunpack.c.l.b16 %v1240
    %v5341 = vunpack.c.l.b16 %v1241
    %v5342 = vunpack.c.l.b16 %v1242
    %v5343 = vunpack.c.l.b16 %v1243
    %v5344 = vunpack.c.l.b16 %v1244
    %v5345 = vunpack.c.l.b16 %v1245
    %v5346 = vunpack.c.l.b16 %v1246
    %v5347 = vunpack.c.l.b16 %v1247
    %v5348 = vunpack.c.l.b16 %v1248
    %v5349 = vunpack.c.l.b16 %v1249
    %v5350 = vunpack.c.l.b16 %v1250
    %v5351 = vunpack.c.l.b16 %v1251
    %v5352 = vunpack.c.l.b16 %v1252
    %v5353 = vunpack.c.l.b16 %v1253
    %v5354 = vunpack.c.l.b16 %v1254
    %v5355 = vunpack.c.l.b16 %v1255
    %v5356 = vunpack.c.l.b16 %v1256
    %v5357 = vunpack.c.l.b16 %v1257
    %v5358 = vunpack.c.l.b16 %v1258
    %v5359 = vunpack.c.l.b16 %v1259
    %v5360 = vunpack.c.l.b16 %v1260
    %v5361 = vunpack.c.l.b16 %v1261
    %v5362 = vunpack.c.l.b16 %v1262
    %v5363 = vunpack.c.l.b16 %v1263
    %v5364 = vunpack.c.l.b16 %v1264
    %v5365 = vunpack.c.l.b16 %v1265
    %v5366 = vunpack.c.l.b16 %v1266
    %v5367 = vunpack.c.l.b16 %v1267
    %v5368 = vunpack.c.l.b16 %v1268
    %v5369 = vunpack.c.l.b16 %v1269
    %v5370 = vunpack.c.l.b16 %v1270
    %v5371 = vunpack.c.l.b16 %v1271
    %v5372 = vunpack.c.l.b16 %v1272
    %v5373 = vunpack.c.l.b16 %v1273
    %v5374 = vunpack.c.l.b16 %v1274
    %v5375 = vunpack.c.l.b16 %v1275
    %v5376 = vunpack.c.l.b16 %v1276
    %v5377 = vunpack.c.l.b16 %v1277
    %v5378 = vunpack.c.l.b16 %v1278
    %v5379 = vunpack.c.l.b16 %v1279
    %v5380 = vunpack.c.l.b16 %v1280
    %v5381 = vunpack.c.l.b16 %v1281
    %v5382 = vunpack.c.l.b16 %v1282
    %v5383 = vunpack.c.l.b16 %v1283
    %v5384 = vunpack.c.l.b16 %v1284
    %v5385 = vunpack.c.l.b16 %v1285
    %v5386 = vunpack.c.l.b16 %v1286
    %v5387 = vunpack.c.l.b16 %v1287
    %v5388 = vunpack.c.l.b16 %v1288
    %v5389 = vunpack.c.l.b16 %v1289
    %v5390 = vunpack.c.l.b16 %v1290
    %v5391 = vunpack.c.l.b16 %v1291
    %v5392 = vunpack.c.l.b16 %v1292
    %v5393 = vunpack.c.l.b16 %v1293
    %v5394 = vunpack.c.l.b16 %v1294
    %v5395 = vunpack.c.l.b16 %v1295
    %v5396 = vunpack.c.l.b16 %v1296
    %v5397 = vunpack.c.l.b16 %v1297
    %v5398 = vunpack.c.l.b16 %v1298
    %v5399 = vunpack.c.l.b16 %v1299
    %v5400 = vunpack.c.l.b16 %v1300
    %v5401 = vunpack.c.l.b16 %v1301
    %v5402 = vunpack.c.l.b16 %v1302
    %v5403 = vunpack.c.l.b16 %v1303
    %v5404 = vunpack.c.l.b16 %v1304
    %v5405 = vunpack.c.l.b16 %v1305
    %v5406 = vunpack.c.l.b16 %v1306
    %v5407 = vunpack.c.l.b16 %v1307
    %v5408 = vunpack.c.l.b16 %v1308
    %v5409 = vunpack.c.l.b16 %v1309
    %v5410 = vunpack.c.l.b16 %v1310
    %v5411 = vunpack.c.l.b16 %v1311
    %v5412 = vunpack.c.l.b16 %v1312
    %v5413 = vunpack.c.l.b16 %v1313
    %v5414 = vunpack.c.l.b16 %v1314
    %v5415 = vunpack.c.l.b16 %v1315
    %v5416 = vunpack.c.l.b16 %v1316
    %v5417 = vunpack.c.l.b16 %v1317
    %v5418 = vunpack.c.l.b16 %v1318
    %v5419 = vunpack.c.l.b16 %v1319
    %v5420 = vunpack.c.l.b16 %v1320
    %v5421 = vunpack.c.l.b16 %v1321
    %v5422 = vunpack.c.l.b16 %v1322
    %v5423 = vunpack.c.l.b16 %v1323
    %v5424 = vunpack.c.l.b16 %v1324
    %v5425 = vunpack.c.l.b16 %v1325
    %v5426 = vunpack.c.l.b16 %v1326
    %v5427 = vunpack.c.l.b16 %v1327
    %v5428 = vunpack.c.l.b16 %v1328
    %v5429 = vunpack.c.l.b16 %v1329
    %v5430 = vunpack.c.l.b16 %v1330
    %v5431 = vunpack.c.l.b16 %v1331
    %v5432 = vunpack.c.l.b16 %v1332
    %v5433 = vunpack.c.l.b16 %v1333
    %v5434 = vunpack.c.l.b16 %v1334
    %v5435 = vunpack.c.l.b16 %v1335
    %v5436 = vunpack.c.l.b16 %v1336
    %v5437 = vunpack.c.l.b16 %v1337
    %v5438 = vunpack.c.l.b16 %v1338
    %v5439 = vunpack.c.l.b16 %v1339
    %v5440 = vunpack.c.l.b16 %v1340
    %v5441 = vunpack.c.l.b16 %v1341
    %v5442 = vunpack.c.l.b16 %v1342
    %v5443 = vunpack.c.l.b16 %v1343
    %v5444 = vunpack.c.l.b16 %v1344
    %v5445 = vunpack.c.l.b16 %v1345
    %v5446 = vunpack.c.l.b16 %v1346
    %v5447 = vunpack.c.l.b16 %v1347
    %v5448 = vunpack.c.l.b16 %v1348
    %v5449 = vunpack.c.l.b16 %v1349
    %v5450 = vunpack.c.l.b16 %v1350
    %v5451 = vunpack.c.l.b16 %v1351
    %v5452 = vunpack.c.l.b16 %v1352
    %v5453 = vunpack.c.l.b16 %v1353
    %v5454 = vunpack.c.l.b16 %v1354
    %v5455 = vunpack.c.l.b16 %v1355
    %v5456 = vunpack.c.l.b16 %v1356
    %v5457 = vunpack.c.l.b16 %v1357
    %v5458 = vunpack.c.l.b16 %v1358
    %v5459 = vunpack.c.l.b16 %v1359
    %v5460 = vunpack.c.l.b16 %v1360
    %v5461 = vunpack.c.l.b16 %v1361
    %v5462 = vunpack.c.l.b16 %v1362
    %v5463 = vunpack.c.l.b16 %v1363
    %v5464 = vunpack.c.l.b16 %v1364
    %v5465 = vunpack.c.l.b16 %v1365
    %v5466 = vunpack.c.l.b16 %v1366
    %v5467 = vunpack.c.l.b16 %v1367
    %v5468 = vunpack.c.l.b16 %v1368
    %v5469 = vunpack.c.l.b16 %v1369
    %v5470 = vunpack.c.l.b16 %v1370
    %v5471 = vunpack.c.l.b16 %v1371
    %v5472 = vunpack.c.l.b16 %v1372
    %v5473 = vunpack.c.l.b16 %v1373
    %v5474 = vunpack.c.l.b16 %v1374
    %v5475 = vunpack.c.l.b16 %v1375
    %v5476 = vunpack.c.l.b16 %v1376
    %v5477 = vunpack.c.l.b16 %v1377
    %v5478 = vunpack.c.l.b16 %v1378
    %v5479 = vunpack.c.l.b16 %v1379
    %v5480 = vunpack.c.l.b16 %v1380
    %v5481 = vunpack.c.l.b16 %v1381
    %v5482 = vunpack.c.l.b16 %v1382
    %v5483 = vunpack.c.l.b16 %v1383
    %v5484 = vunpack.c.l.b16 %v1384
    %v5485 = vunpack.c.l.b16 %v1385
    %v5486 = vunpack.c.l.b16 %v1386
    %v5487 = vunpack.c.l.b16 %v1387
    %v5488 = vunpack.c.l.b16 %v1388
    %v5489 = vunpack.c.l.b16 %v1389
    %v5490 = vunpack.c.l.b16 %v1390
    %v5491 = vunpack.c.l.b16 %v1391
    %v5492 = vunpack.c.l.b16 %v1392
    %v5493 = vunpack.c.l.b16 %v1393
    %v5494 = vunpack.c.l.b16 %v1394
    %v5495 = vunpack.c.l.b16 %v1395
    %v5496 = vunpack.c.l.b16 %v1396
    %v5497 = vunpack.c.l.b16 %v1397
    %v5498 = vunpack.c.l.b16 %v1398
    %v5499 = vunpack.c.l.b16 %v1399
    %v5500 = vunpack.c.l.b16 %v1400
    %v5501 = vunpack.c.l.b16 %v1401
    %v5502 = vunpack.c.l.b16 %v1402
    %v5503 = vunpack.c.l.b16 %v1403
    %v5504 = vunpack.c.l.b16 %v1404
    %v5505 = vunpack.c.l.b16 %v1405
    %v5506 = vunpack.c.l.b16 %v1406
    %v5507 = vunpack.c.l.b16 %v1407
    %v5508 = vunpack.c.l.b16 %v1408
    %v5509 = vunpack.c.l.b16 %v1409
    %v5510 = vunpack.c.l.b16 %v1410
    %v5511 = vunpack.c.l.b16 %v1411
    %v5512 = vunpack.c.l.b16 %v1412
    %v5513 = vunpack.c.l.b16 %v1413
    %v5514 = vunpack.c.l.b16 %v1414
    %v5515 = vunpack.c.l.b16 %v1415
    %v5516 = vunpack.c.l.b16 %v1416
    %v5517 = vunpack.c.l.b16 %v1417
    %v5518 = vunpack.c.l.b16 %v1418
    %v5519 = vunpack.c.l.b16 %v1419
    %v5520 = vunpack.c.l.b16 %v1420
    %v5521 = vunpack.c.l.b16 %v1421
    %v5522 = vunpack.c.l.b16 %v1422
    %v5523 = vunpack.c.l.b16 %v1423
    %v5524 = vunpack.c.l.b16 %v1424
    %v5525 = vunpack.c.l.b16 %v1425
    %v5526 = vunpack.c.l.b16 %v1426
    %v5527 = vunpack.c.l.b16 %v1427
    %v5528 = vunpack.c.l.b16 %v1428
    %v5529 = vunpack.c.l.b16 %v1429
    %v5530 = vunpack.c.l.b16 %v1430
    %v5531 = vunpack.c.l.b16 %v1431
    %v5532 = vunpack.c.l.b16 %v1432
    %v5533 = vunpack.c.l.b16 %v1433
    %v5534 = vunpack.c.l.b16 %v1434
    %v5535 = vunpack.c.l.b16 %v1435
    %v5536 = vunpack.c.l.b16 %v1436
    %v5537 = vunpack.c.l.b16 %v1437
    %v5538 = vunpack.c.l.b16 %v1438
    %v5539 = vunpack.c.l.b16 %v1439
    %v5540 = vunpack.c.l.b16 %v1440
    %v5541 = vunpack.c.l.b16 %v1441
    %v5542 = vunpack.c.l.b16 %v1442
    %v5543 = vunpack.c.l.b16 %v1443
    %v5544 = vunpack.c.l.b16 %v1444
    %v5545 = vunpack.c.l.b16 %v1445
    %v5546 = vunpack.c.l.b16 %v1446
    %v5547 = vunpack.c.l.b16 %v1447
    %v5548 = vunpack.c.l.b16 %v1448
    %v5549 = vunpack.c.l.b16 %v1449
    %v5550 = vunpack.c.l.b16 %v1450
    %v5551 = vunpack.c.l.b16 %v1451
    %v5552 = vunpack.c.l.b16 %v1452
    %v5553 = vunpack.c.l.b16 %v1453
    %v5554 = vunpack.c.l.b16 %v1454
    %v5555 = vunpack.c.l.b16 %v1455
    %v5556 = vunpack.c.l.b16 %v1456
    %v5557 = vunpack.c.l.b16 %v1457
    %v5558 = vunpack.c.l.b16 %v1458
    %v5559 = vunpack.c.l.b16 %v1459
    %v5560 = vunpack.c.l.b16 %v1460
    %v5561 = vunpack.c.l.b16 %v1461
    %v5562 = vunpack.c.l.b16 %v1462
    %v5563 = vunpack.c.l.b16 %v1463
    %v5564 = vunpack.c.l.b16 %v1464
    %v5565 = vunpack.c.l.b16 %v1465
    %v5566 = vunpack.c.l.b16 %v1466
    %v5567 = vunpack.c.l.b16 %v1467
    %v5568 = vunpack.c.l.b16 %v1468
    %v5569 = vunpack.c.l.b16 %v1469
    %v5570 = vunpack.c.l.b16 %v1470
    %v5571 = vunpack.c.l.b16 %v1471
    %v5572 = vunpack.c.l.b16 %v1472
    %v5573 = vunpack.c.l.b16 %v1473
    %v5574 = vunpack.c.l.b16 %v1474
    %v5575 = vunpack.c.l.b16 %v1475
    %v5576 = vunpack.c.l.b16 %v1476
    %v5577 = vunpack.c.l.b16 %v1477
    %v5578 = vunpack.c.l.b16 %v1478
    %v5579 = vunpack.c.l.b16 %v1479
    %v5580 = vunpack.c.l.b16 %v1480
    %v5581 = vunpack.c.l.b16 %v1481
    %v5582 = vunpack.c.l.b16 %v1482
    %v5583 = vunpack.c.l.b16 %v1483
    %v5584 = vunpack.c.l.b16 %v1484
    %v5585 = vunpack.c.l.b16 %v1485
    %v5586 = vunpack.c.l.b16 %v1486
    %v5587 = vunpack.c.l.b16 %v1487
    %v5588 = vunpack.c.l.b16 %v1488
    %v5589 = vunpack.c.l.b16 %v1489
    %v5590 = vunpack.c.l.b16 %v1490
    %v5591 = vunpack.c.l.b16 %v1491
    %v5592 = vunpack.c.l.b16 %v1492
    %v5593 = vunpack.c.l.b16 %v1493
    %v5594 = vunpack.c.l.b16 %v1494
    %v5595 = vunpack.c.l.b16 %v1495
    %v5596 = vunpack.c.l.b16 %v1496
    %v5597 = vunpack.c.l.b16 %v1497
    %v5598 = vunpack.c.l.b16 %v1498
    %v5599 = vunpack.c.l.b16 %v1499
    %v5600 = vunpack.c.l.b16 %v1500
    %v5601 = vunpack.c.l.b16 %v1501
    %v5602 = vunpack.c.l.b16 %v1502
    %v5603 = vunpack.c.l.b16 %v1503
    %v5604 = vunpack.c.l.b16 %v1504
    %v5605 = vunpack.c.l.b16 %v1505
    %v5606 = vunpack.c.l.b16 %v1506
    %v5607 = vunpack.c.l.b16 %v1507
    %v5608 = vunpack.c.l.b16 %v1508
    %v5609 = vunpack.c.l.b16 %v1509
    %v5610 = vunpack.c.l.b16 %v1510
    %v5611 = vunpack.c.l.b16 %v1511
    %v5612 = vunpack.c.l.b16 %v1512
    %v5613 = vunpack.c.l.b16 %v1513
    %v5614 = vunpack.c.l.b16 %v1514
    %v5615 = vunpack.c.l.b16 %v1515
    %v5616 = vunpack.c.l.b16 %v1516
    %v5617 = vunpack.c.l.b16 %v1517
    %v5618 = vunpack.c.l.b16 %v1518
    %v5619 = vunpack.c.l.b16 %v1519
    %v5620 = vunpack.c.l.b16 %v1520
    %v5621 = vunpack.c.l.b16 %v1521
    %v5622 = vunpack.c.l.b16 %v1522
    %v5623 = vunpack.c.l.b16 %v1523
    %v5624 = vunpack.c.l.b16 %v1524
    %v5625 = vunpack.c.l.b16 %v1525
    %v5626 = vunpack.c.l.b16 %v1526
    %v5627 = vunpack.c.l.b16 %v1527
    %v5628 = vunpack.c.l.b16 %v1528
    %v5629 = vunpack.c.l.b16 %v1529
    %v5630 = vunpack.c.l.b16 %v1530
    %v5631 = vunpack.c.l.b16 %v1531
    %v5632 = vunpack.c.l.b16 %v1532
    %v5633 = vunpack.c.l.b16 %v1533
    %v5634 = vunpack.c.l.b16 %v1534
    %v5635 = vunpack.c.l.b16 %v1535
    %v5636 = vunpack.c.l.b16 %v1536
    %v5637 = vunpack.c.l.b16 %v1537
    %v5638 = vunpack.c.l.b16 %v1538
    %v5639 = vunpack.c.l.b16 %v1539
    %v5640 = vunpack.c.l.b16 %v1540
    %v5641 = vunpack.c.l.b16 %v1541
    %v5642 = vunpack.c.l.b16 %v1542
    %v5643 = vunpack.c.l.b16 %v1543
    %v5644 = vunpack.c.l.b16 %v1544
    %v5645 = vunpack.c.l.b16 %v1545
    %v5646 = vunpack.c.l.b16 %v1546
    %v5647 = vunpack.c.l.b16 %v1547
    %v5648 = vunpack.c.l.b16 %v1548
    %v5649 = vunpack.c.l.b16 %v1549
    %v5650 = vunpack.c.l.b16 %v1550
    %v5651 = vunpack.c.l.b16 %v1551
    %v5652 = vunpack.c.l.b16 %v1552
    %v5653 = vunpack.c.l.b16 %v1553
    %v5654 = vunpack.c.l.b16 %v1554
    %v5655 = vunpack.c.l.b16 %v1555
    %v5656 = vunpack.c.l.b16 %v1556
    %v5657 = vunpack.c.l.b16 %v1557
    %v5658 = vunpack.c.l.b16 %v1558
    %v5659 = vunpack.c.l.b16 %v1559
    %v5660 = vunpack.c.l.b16 %v1560
    %v5661 = vunpack.c.l.b16 %v1561
    %v5662 = vunpack.c.l.b16 %v1562
    %v5663 = vunpack.c.l.b16 %v1563
    %v5664 = vunpack.c.l.b16 %v1564
    %v5665 = vunpack.c.l.b16 %v1565
    %v5666 = vunpack.c.l.b16 %v1566
    %v5667 = vunpack.c.l.b16 %v1567
    %v5668 = vunpack.c.l.b16 %v1568
    %v5669 = vunpack.c.l.b16 %v1569
    %v5670 = vunpack.c.l.b16 %v1570
    %v5671 = vunpack.c.l.b16 %v1571
    %v5672 = vunpack.c.l.b16 %v1572
    %v5673 = vunpack.c.l.b16 %v1573
    %v5674 = vunpack.c.l.b16 %v1574
    %v5675 = vunpack.c.l.b16 %v1575
    %v5676 = vunpack.c.l.b16 %v1576
    %v5677 = vunpack.c.l.b16 %v1577
    %v5678 = vunpack.c.l.b16 %v1578
    %v5679 = vunpack.c.l.b16 %v1579
    %v5680 = vunpack.c.l.b16 %v1580
    %v5681 = vunpack.c.l.b16 %v1581
    %v5682 = vunpack.c.l.b16 %v1582
    %v5683 = vunpack.c.l.b16 %v1583
    %v5684 = vunpack.c.l.b16 %v1584
    %v5685 = vunpack.c.l.b16 %v1585
    %v5686 = vunpack.c.l.b16 %v1586
    %v5687 = vunpack.c.l.b16 %v1587
    %v5688 = vunpack.c.l.b16 %v1588
    %v5689 = vunpack.c.l.b16 %v1589
    %v5690 = vunpack.c.l.b16 %v1590
    %v5691 = vunpack.c.l.b16 %v1591
    %v5692 = vunpack.c.l.b16 %v1592
    %v5693 = vunpack.c.l.b16 %v1593
    %v5694 = vunpack.c.l.b16 %v1594
    %v5695 = vunpack.c.l.b16 %v1595
    %v5696 = vunpack.c.l.b16 %v1596
    %v5697 = vunpack.c.l.b16 %v1597
    %v5698 = vunpack.c.l.b16 %v1598
    %v5699 = vunpack.c.l.b16 %v1599
    %v5700 = vunpack.c.l.b16 %v1600
    %v5701 = vunpack.c.l.b16 %v1601
    %v5702 = vunpack.c.l.b16 %v1602
    %v5703 = vunpack.c.l.b16 %v1603
    %v5704 = vunpack.c.l.b16 %v1604
    %v5705 = vunpack.c.l.b16 %v1605
    %v5706 = vunpack.c.l.b16 %v1606
    %v5707 = vunpack.c.l.b16 %v1607
    %v5708 = vunpack.c.l.b16 %v1608
    %v5709 = vunpack.c.l.b16 %v1609
    %v5710 = vunpack.c.l.b16 %v1610
    %v5711 = vunpack.c.l.b16 %v1611
    %v5712 = vunpack.c.l.b16 %v1612
    %v5713 = vunpack.c.l.b16 %v1613
    %v5714 = vunpack.c.l.b16 %v1614
    %v5715 = vunpack.c.l.b16 %v1615
    %v5716 = vunpack.c.l.b16 %v1616
    %v5717 = vunpack.c.l.b16 %v1617
    %v5718 = vunpack.c.l.b16 %v1618
    %v5719 = vunpack.c.l.b16 %v1619
    %v5720 = vunpack.c.l.b16 %v1620
    %v5721 = vunpack.c.l.b16 %v1621
    %v5722 = vunpack.c.l.b16 %v1622
    %v5723 = vunpack.c.l.b16 %v1623
    %v5724 = vunpack.c.l.b16 %v1624
    %v5725 = vunpack.c.l.b16 %v1625
    %v5726 = vunpack.c.l.b16 %v1626
    %v5727 = vunpack.c.l.b16 %v1627
    %v5728 = vunpack.c.l.b16 %v1628
    %v5729 = vunpack.c.l.b16 %v1629
    %v5730 = vunpack.c.l.b16 %v1630
    %v5731 = vunpack.c.l.b16 %v1631
    %v5732 = vunpack.c.l.b16 %v1632
    %v5733 = vunpack.c.l.b16 %v1633
    %v5734 = vunpack.c.l.b16 %v1634
    %v5735 = vunpack.c.l.b16 %v1635
    %v5736 = vunpack.c.l.b16 %v1636
    %v5737 = vunpack.c.l.b16 %v1637
    %v5738 = vunpack.c.l.b16 %v1638
    %v5739 = vunpack.c.l.b16 %v1639
    %v5740 = vunpack.c.l.b16 %v1640
    %v5741 = vunpack.c.l.b16 %v1641
    %v5742 = vunpack.c.l.b16 %v1642
    %v5743 = vunpack.c.l.b16 %v1643
    %v5744 = vunpack.c.l.b16 %v1644
    %v5745 = vunpack.c.l.b16 %v1645
    %v5746 = vunpack.c.l.b16 %v1646
    %v5747 = vunpack.c.l.b16 %v1647
    %v5748 = vunpack.c.l.b16 %v1648
    %v5749 = vunpack.c.l.b16 %v1649
    %v5750 = vunpack.c.l.b16 %v1650
    %v5751 = vunpack.c.l.b16 %v1651
    %v5752 = vunpack.c.l.b16 %v1652
    %v5753 = vunpack.c.l.b16 %v1653
    %v5754 = vunpack.c.l.b16 %v1654
    %v5755 = vunpack.c.l.b16 %v1655
    %v5756 = vunpack.c.l.b16 %v1656
    %v5757 = vunpack.c.l.b16 %v1657
    %v5758 = vunpack.c.l.b16 %v1658
    %v5759 = vunpack.c.l.b16 %v1659
    %v5760 = vunpack.c.l.b16 %v1660
    %v5761 = vunpack.c.l.b16 %v1661
    %v5762 = vunpack.c.l.b16 %v1662
    %v5763 = vunpack.c.l.b16 %v1663
    %v5764 = vunpack.c.l.b16 %v1664
    %v5765 = vunpack.c.l.b16 %v1665
    %v5766 = vunpack.c.l.b16 %v1666
    %v5767 = vunpack.c.l.b16 %v1667
    %v5768 = vunpack.c.l.b16 %v1668
    %v5769 = vunpack.c.l.b16 %v1669
    %v5770 = vunpack.c.l.b16 %v1670
    %v5771 = vunpack.c.l.b16 %v1671
    %v5772 = vunpack.c.l.b16 %v1672
    %v5773 = vunpack.c.l.b16 %v1673
    %v5774 = vunpack.c.l.b16 %v1674
    %v5775 = vunpack.c.l.b16 %v1675
    %v5776 = vunpack.c.l.b16 %v1676
    %v5777 = vunpack.c.l.b16 %v1677
    %v5778 = vunpack.c.l.b16 %v1678
    %v5779 = vunpack.c.l.b16 %v1679
    %v5780 = vunpack.c.l.b16 %v1680
    %v5781 = vunpack.c.l.b16 %v1681
    %v5782 = vunpack.c.l.b16 %v1682
    %v5783 = vunpack.c.l.b16 %v1683
    %v5784 = vunpack.c.l.b16 %v1684
    %v5785 = vunpack.c.l.b16 %v1685
    %v5786 = vunpack.c.l.b16 %v1686
    %v5787 = vunpack.c.l.b16 %v1687
    %v5788 = vunpack.c.l.b16 %v1688
    %v5789 = vunpack.c.l.b16 %v1689
    %v5790 = vunpack.c.l.b16 %v1690
    %v5791 = vunpack.c.l.b16 %v1691
    %v5792 = vunpack.c.l.b16 %v1692
    %v5793 = vunpack.c.l.b16 %v1693
    %v5794 = vunpack.c.l.b16 %v1694
    %v5795 = vunpack.c.l.b16 %v1695
    %v5796 = vunpack.c.l.b16 %v1696
    %v5797 = vunpack.c.l.b16 %v1697
    %v5798 = vunpack.c.l.b16 %v1698
    %v5799 = vunpack.c.l.b16 %v1699
    %v5800 = vunpack.c.l.b16 %v1700
    %v5801 = vunpack.c.l.b16 %v1701
    %v5802 = vunpack.c.l.b16 %v1702
    %v5803 = vunpack.c.l.b16 %v1703
    %v5804 = vunpack.c.l.b16 %v1704
    %v5805 = vunpack.c.l.b16 %v1705
    %v5806 = vunpack.c.l.b16 %v1706
    %v5807 = vunpack.c.l.b16 %v1707
    %v5808 = vunpack.c.l.b16 %v1708
    %v5809 = vunpack.c.l.b16 %v1709
    %v5810 = vunpack.c.l.b16 %v1710
    %v5811 = vunpack.c.l.b16 %v1711
    %v5812 = vunpack.c.l.b16 %v1712
    %v5813 = vunpack.c.l.b16 %v1713
    %v5814 = vunpack.c.l.b16 %v1714
    %v5815 = vunpack.c.l.b16 %v1715
    %v5816 = vunpack.c.l.b16 %v1716
    %v5817 = vunpack.c.l.b16 %v1717
    %v5818 = vunpack.c.l.b16 %v1718
    %v5819 = vunpack.c.l.b16 %v1719
    %v5820 = vunpack.c.l.b16 %v1720
    %v5821 = vunpack.c.l.b16 %v1721
    %v5822 = vunpack.c.l.b16 %v1722
    %v5823 = vunpack.c.l.b16 %v1723
    %v5824 = vunpack.c.l.b16 %v1724
    %v5825 = vunpack.c.l.b16 %v1725
    %v5826 = vunpack.c.l.b16 %v1726
    %v5827 = vunpack.c.l.b16 %v1727
    %v5828 = vunpack.c.l.b16 %v1728
    %v5829 = vunpack.c.l.b16 %v1729
    %v5830 = vunpack.c.l.b16 %v1730
    %v5831 = vunpack.c.l.b16 %v1731
    %v5832 = vunpack.c.l.b16 %v1732
    %v5833 = vunpack.c.l.b16 %v1733
    %v5834 = vunpack.c.l.b16 %v1734
    %v5835 = vunpack.c.l.b16 %v1735
    %v5836 = vunpack.c.l.b16 %v1736
    %v5837 = vunpack.c.l.b16 %v1737
    %v5838 = vunpack.c.l.b16 %v1738
    %v5839 = vunpack.c.l.b16 %v1739
    %v5840 = vunpack.c.l.b16 %v1740
    %v5841 = vunpack.c.l.b16 %v1741
    %v5842 = vunpack.c.l.b16 %v1742
    %v5843 = vunpack.c.l.b16 %v1743
    %v5844 = vunpack.c.l.b16 %v1744
    %v5845 = vunpack.c.l.b16 %v1745
    %v5846 = vunpack.c.l.b16 %v1746
    %v5847 = vunpack.c.l.b16 %v1747
    %v5848 = vunpack.c.l.b16 %v1748
    %v5849 = vunpack.c.l.b16 %v1749
    %v5850 = vunpack.c.l.b16 %v1750
    %v5851 = vunpack.c.l.b16 %v1751
    %v5852 = vunpack.c.l.b16 %v1752
    %v5853 = vunpack.c.l.b16 %v1753
    %v5854 = vunpack.c.l.b16 %v1754
    %v5855 = vunpack.c.l.b16 %v1755
    %v5856 = vunpack.c.l.b16 %v1756
    %v5857 = vunpack.c.l.b16 %v1757
    %v5858 = vunpack.c.l.b16 %v1758
    %v5859 = vunpack.c.l.b16 %v1759
    %v5860 = vunpack.c.l.b16 %v1760
    %v5861 = vunpack.c.l.b16 %v1761
    %v5862 = vunpack.c.l.b16 %v1762
    %v5863 = vunpack.c.l.b16 %v1763
    %v5864 = vunpack.c.l.b16 %v1764
    %v5865 = vunpack.c.l.b16 %v1765
    %v5866 = vunpack.c.l.b16 %v1766
    %v5867 = vunpack.c.l.b16 %v1767
    %v5868 = vunpack.c.l.b16 %v1768
    %v5869 = vunpack.c.l.b16 %v1769
    %v5870 = vunpack.c.l.b16 %v1770
    %v5871 = vunpack.c.l.b16 %v1771
    %v5872 = vunpack.c.l.b16 %v1772
    %v5873 = vunpack.c.l.b16 %v1773
    %v5874 = vunpack.c.l.b16 %v1774
    %v5875 = vunpack.c.l.b16 %v1775
    %v5876 = vunpack.c.l.b16 %v1776
    %v5877 = vunpack.c.l.b16 %v1777
    %v5878 = vunpack.c.l.b16 %v1778
    %v5879 = vunpack.c.l.b16 %v1779
    %v5880 = vunpack.c.l.b16 %v1780
    %v5881 = vunpack.c.l.b16 %v1781
    %v5882 = vunpack.c.l.b16 %v1782
    %v5883 = vunpack.c.l.b16 %v1783
    %v5884 = vunpack.c.l.b16 %v1784
    %v5885 = vunpack.c.l.b16 %v1785
    %v5886 = vunpack.c.l.b16 %v1786
    %v5887 = vunpack.c.l.b16 %v1787
    %v5888 = vunpack.c.l.b16 %v1788
    %v5889 = vunpack.c.l.b16 %v1789
    %v5890 = vunpack.c.l.b16 %v1790
    %v5891 = vunpack.c.l.b16 %v1791
    %v5892 = vunpack.c.l.b16 %v1792
    %v5893 = vunpack.c.l.b16 %v1793
    %v5894 = vunpack.c.l.b16 %v1794
    %v5895 = vunpack.c.l.b16 %v1795
    %v5896 = vunpack.c.l.b16 %v1796
    %v5897 = vunpack.c.l.b16 %v1797
    %v5898 = vunpack.c.l.b16 %v1798
    %v5899 = vunpack.c.l.b16 %v1799
    %v5900 = vunpack.c.l.b16 %v1800
    %v5901 = vunpack.c.l.b16 %v1801
    %v5902 = vunpack.c.l.b16 %v1802
    %v5903 = vunpack.c.l.b16 %v1803
    %v5904 = vunpack.c.l.b16 %v1804
    %v5905 = vunpack.c.l.b16 %v1805
    %v5906 = vunpack.c.l.b16 %v1806
    %v5907 = vunpack.c.l.b16 %v1807
    %v5908 = vunpack.c.l.b16 %v1808
    %v5909 = vunpack.c.l.b16 %v1809
    %v5910 = vunpack.c.l.b16 %v1810
    %v5911 = vunpack.c.l.b16 %v1811
    %v5912 = vunpack.c.l.b16 %v1812
    %v5913 = vunpack.c.l.b16 %v1813
    %v5914 = vunpack.c.l.b16 %v1814
    %v5915 = vunpack.c.l.b16 %v1815
    %v5916 = vunpack.c.l.b16 %v1816
    %v5917 = vunpack.c.l.b16 %v1817
    %v5918 = vunpack.c.l.b16 %v1818
    %v5919 = vunpack.c.l.b16 %v1819
    %v5920 = vunpack.c.l.b16 %v1820
    %v5921 = vunpack.c.l.b16 %v1821
    %v5922 = vunpack.c.l.b16 %v1822
    %v5923 = vunpack.c.l.b16 %v1823
    %v5924 = vunpack.c.l.b16 %v1824
    %v5925 = vunpack.c.l.b16 %v1825
    %v5926 = vunpack.c.l.b16 %v1826
    %v5927 = vunpack.c.l.b16 %v1827
    %v5928 = vunpack.c.l.b16 %v1828
    %v5929 = vunpack.c.l.b16 %v1829
    %v5930 = vunpack.c.l.b16 %v1830
    %v5931 = vunpack.c.l.b16 %v1831
    %v5932 = vunpack.c.l.b16 %v1832
    %v5933 = vunpack.c.l.b16 %v1833
    %v5934 = vunpack.c.l.b16 %v1834
    %v5935 = vunpack.c.l.b16 %v1835
    %v5936 = vunpack.c.l.b16 %v1836
    %v5937 = vunpack.c.l.b16 %v1837
    %v5938 = vunpack.c.l.b16 %v1838
    %v5939 = vunpack.c.l.b16 %v1839
    %v5940 = vunpack.c.l.b16 %v1840
    %v5941 = vunpack.c.l.b16 %v1841
    %v5942 = vunpack.c.l.b16 %v1842
    %v5943 = vunpack.c.l.b16 %v1843
    %v5944 = vunpack.c.l.b16 %v1844
    %v5945 = vunpack.c.l.b16 %v1845
    %v5946 = vunpack.c.l.b16 %v1846
    %v5947 = vunpack.c.l.b16 %v1847
    %v5948 = vunpack.c.l.b16 %v1848
    %v5949 = vunpack.c.l.b16 %v1849
    %v5950 = vunpack.c.l.b16 %v1850
    %v5951 = vunpack.c.l.b16 %v1851
    %v5952 = vunpack.c.l.b16 %v1852
    %v5953 = vunpack.c.l.b16 %v1853
    %v5954 = vunpack.c.l.b16 %v1854
    %v5955 = vunpack.c.l.b16 %v1855
    %v5956 = vunpack.c.l.b16 %v1856
    %v5957 = vunpack.c.l.b16 %v1857
    %v5958 = vunpack.c.l.b16 %v1858
    %v5959 = vunpack.c.l.b16 %v1859
    %v5960 = vunpack.c.l.b16 %v1860
    %v5961 = vunpack.c.l.b16 %v1861
    %v5962 = vunpack.c.l.b16 %v1862
    %v5963 = vunpack.c.l.b16 %v1863
    %v5964 = vunpack.c.l.b16 %v1864
    %v5965 = vunpack.c.l.b16 %v1865
    %v5966 = vunpack.c.l.b16 %v1866
    %v5967 = vunpack.c.l.b16 %v1867
    %v5968 = vunpack.c.l.b16 %v1868
    %v5969 = vunpack.c.l.b16 %v1869
    %v5970 = vunpack.c.l.b16 %v1870
    %v5971 = vunpack.c.l.b16 %v1871
    %v5972 = vunpack.c.l.b16 %v1872
    %v5973 = vunpack.c.l.b16 %v1873
    %v5974 = vunpack.c.l.b16 %v1874
    %v5975 = vunpack.c.l.b16 %v1875
    %v5976 = vunpack.c.l.b16 %v1876
    %v5977 = vunpack.c.l.b16 %v1877
    %v5978 = vunpack.c.l.b16 %v1878
    %v5979 = vunpack.c.l.b16 %v1879
    %v5980 = vunpack.c.l.b16 %v1880
    %v5981 = vunpack.c.l.b16 %v1881
    %v5982 = vunpack.c.l.b16 %v1882
    %v5983 = vunpack.c.l.b16 %v1883
    %v5984 = vunpack.c.l.b16 %v1884
    %v5985 = vunpack.c.l.b16 %v1885
    %v5986 = vunpack.c.l.b16 %v1886
    %v5987 = vunpack.c.l.b16 %v1887
    %v5988 = vunpack.c.l.b16 %v1888
    %v5989 = vunpack.c.l.b16 %v1889
    %v5990 = vunpack.c.l.b16 %v1890
    %v5991 = vunpack.c.l.b16 %v1891
    %v5992 = vunpack.c.l.b16 %v1892
    %v5993 = vunpack.c.l.b16 %v1893
    %v5994 = vunpack.c.l.b16 %v1894
    %v5995 = vunpack.c.l.b16 %v1895
    %v5996 = vunpack.c.l.b16 %v1896
    %v5997 = vunpack.c.l.b16 %v1897
    %v5998 = vunpack.c.l.b16 %v1898
    %v5999 = vunpack.c.l.b16 %v1899
    %v6000 = vunpack.c.l.b16 %v1900
    %v6001 = vunpack.c.l.b16 %v1901
    %v6002 = vunpack.c.l.b16 %v1902
    %v6003 = vunpack.c.l.b16 %v1903
    %v6004 = vunpack.c.l.b16 %v1904
    %v6005 = vunpack.c.l.b16 %v1905
    %v6006 = vunpack.c.l.b16 %v1906
    %v6007 = vunpack.c.l.b16 %v1907
    %v6008 = vunpack.c.l.b16 %v1908
    %v6009 = vunpack.c.l.b16 %v1909
    %v6010 = vunpack.c.l.b16 %v1910
    %v6011 = vunpack.c.l.b16 %v1911
    %v6012 = vunpack.c.l.b16 %v1912
    %v6013 = vunpack.c.l.b16 %v1913
    %v6014 = vunpack.c.l.b16 %v1914
    %v6015 = vunpack.c.l.b16 %v1915
    %v6016 = vunpack.c.l.b16 %v1916
    %v6017 = vunpack.c.l.b16 %v1917
    %v6018 = vunpack.c.l.b16 %v1918
    %v6019 = vunpack.c.l.b16 %v1919
    %v6020 = vunpack.c.l.b16 %v1920
    %v6021 = vunpack.c.l.b16 %v1921
    %v6022 = vunpack.c.l.b16 %v1922
    %v6023 = vunpack.c.l.b16 %v1923
    %v6024 = vunpack.c.l.b16 %v1924
    %v6025 = vunpack.c.l.b16 %v1925
    %v6026 = vunpack.c.l.b16 %v1926
    %v6027 = vunpack.c.l.b16 %v1927
    %v6028 = vunpack.c.l.b16 %v1928
    %v6029 = vunpack.c.l.b16 %v1929
    %v6030 = vunpack.c.l.b16 %v1930
    %v6031 = vunpack.c.l.b16 %v1931
    %v6032 = vunpack.c.l.b16 %v1932
    %v6033 = vunpack.c.l.b16 %v1933
    %v6034 = vunpack.c.l.b16 %v1934
    %v6035 = vunpack.c.l.b16 %v1935
    %v6036 = vunpack.c.l.b16 %v1936
    %v6037 = vunpack.c.l.b16 %v1937
    %v6038 = vunpack.c.l.b16 %v1938
    %v6039 = vunpack.c.l.b16 %v1939
    %v6040 = vunpack.c.l.b16 %v1940
    %v6041 = vunpack.c.l.b16 %v1941
    %v6042 = vunpack.c.l.b16 %v1942
    %v6043 = vunpack.c.l.b16 %v1943
    %v6044 = vunpack.c.l.b16 %v1944
    %v6045 = vunpack.c.l.b16 %v1945
    %v6046 = vunpack.c.l.b16 %v1946
    %v6047 = vunpack.c.l.b16 %v1947
    %v6048 = vunpack.c.l.b16 %v1948
    %v6049 = vunpack.c.l.b16 %v1949
    %v6050 = vunpack.c.l.b16 %v1950
    %v6051 = vunpack.c.l.b16 %v1951
    %v6052 = vunpack.c.l.b16 %v1952
    %v6053 = vunpack.c.l.b16 %v1953
    %v6054 = vunpack.c.l.b16 %v1954
    %v6055 = vunpack.c.l.b16 %v1955
    %v6056 = vunpack.c.l.b16 %v1956
    %v6057 = vunpack.c.l.b16 %v1957
    %v6058 = vunpack.c.l.b16 %v1958
    %v6059 = vunpack.c.l.b16 %v1959
    %v6060 = vunpack.c.l.b16 %v1960
    %v6061 = vunpack.c.l.b16 %v1961
    %v6062 = vunpack.c.l.b16 %v1962
    %v6063 = vunpack.c.l.b16 %v1963
    %v6064 = vunpack.c.l.b16 %v1964
    %v6065 = vunpack.c.l.b16 %v1965
    %v6066 = vunpack.c.l.b16 %v1966
    %v6067 = vunpack.c.l.b16 %v1967
    %v6068 = vunpack.c.l.b16 %v1968
    %v6069 = vunpack.c.l.b16 %v1969
    %v6070 = vunpack.c.l.b16 %v1970
    %v6071 = vunpack.c.l.b16 %v1971
    %v6072 = vunpack.c.l.b16 %v1972
    %v6073 = vunpack.c.l.b16 %v1973
    %v6074 = vunpack.c.l.b16 %v1974
    %v6075 = vunpack.c.l.b16 %v1975
    %v6076 = vunpack.c.l.b16 %v1976
    %v6077 = vunpack.c.l.b16 %v1977
    %v6078 = vunpack.c.l.b16 %v1978
    %v6079 = vunpack.c.l.b16 %v1979
    %v6080 = vunpack.c.l.b16 %v1980
    %v6081 = vunpack.c.l.b16 %v1981
    %v6082 = vunpack.c.l.b16 %v1982
    %v6083 = vunpack.c.l.b16 %v1983
    %v6084 = vunpack.c.l.b16 %v1984
    %v6085 = vunpack.c.l.b16 %v1985
    %v6086 = vunpack.c.l.b16 %v1986
    %v6087 = vunpack.c.l.b16 %v1987
    %v6088 = vunpack.c.l.b16 %v1988
    %v6089 = vunpack.c.l.b16 %v1989
    %v6090 = vunpack.c.l.b16 %v1990
    %v6091 = vunpack.c.l.b16 %v1991
    %v6092 = vunpack.c.l.b16 %v1992
    %v6093 = vunpack.c.l.b16 %v1993
    %v6094 = vunpack.c.l.b16 %v1994
    %v6095 = vunpack.c.l.b16 %v1995
    %v6096 = vunpack.c.l.b16 %v1996
    %v6097 = vunpack.c.l.b16 %v1997
    %v6098 = vunpack.c.l.b16 %v1998
    %v6099 = vunpack.c.l.b16 %v1999
    %v6100 = vunpack.c.l.b16 %v2000
    %v6101 = vunpack.c.l.b16 %v2001
    %v6102 = vunpack.c.l.b16 %v2002
    %v6103 = vunpack.c.l.b16 %v2003
    %v6104 = vunpack.c.l.b16 %v2004
    %v6105 = vunpack.c.l.b16 %v2005
    %v6106 = vunpack.c.l.b16 %v2006
    %v6107 = vunpack.c.l.b16 %v2007
    %v6108 = vunpack.c.l.b16 %v2008
    %v6109 = vunpack.c.l.b16 %v2009
    %v6110 = vunpack.c.l.b16 %v2010
    %v6111 = vunpack.c.l.b16 %v2011
    %v6112 = vunpack.c.l.b16 %v2012
    %v6113 = vunpack.c.l.b16 %v2013
    %v6114 = vunpack.c.l.b16 %v2014
    %v6115 = vunpack.c.l.b16 %v2015
    %v6116 = vunpack.c.l.b16 %v2016
    %v6117 = vunpack.c.l.b16 %v2017
    %v6118 = vunpack.c.l.b16 %v2018
    %v6119 = vunpack.c.l.b16 %v2019
    %v6120 = vunpack.c.l.b16 %v2020
    %v6121 = vunpack.c.l.b16 %v2021
    %v6122 = vunpack.c.l.b16 %v2022
    %v6123 = vunpack.c.l.b16 %v2023
    %v6124 = vunpack.c.l.b16 %v2024
    %v6125 = vunpack.c.l.b16 %v2025
    %v6126 = vunpack.c.l.b16 %v2026
    %v6127 = vunpack.c.l.b16 %v2027
    %v6128 = vunpack.c.l.b16 %v2028
    %v6129 = vunpack.c.l.b16 %v2029
    %v6130 = vunpack.c.l.b16 %v2030
    %v6131 = vunpack.c.l.b16 %v2031
    %v6132 = vunpack.c.l.b16 %v2032
    %v6133 = vunpack.c.l.b16 %v2033
    %v6134 = vunpack.c.l.b16 %v2034
    %v6135 = vunpack.c.l.b16 %v2035
    %v6136 = vunpack.c.l.b16 %v2036
    %v6137 = vunpack.c.l.b16 %v2037
    %v6138 = vunpack.c.l.b16 %v2038
    %v6139 = vunpack.c.l.b16 %v2039
    %v6140 = vunpack.c.l.b16 %v2040
    %v6141 = vunpack.c.l.b16 %v2041
    %v6142 = vunpack.c.l.b16 %v2042
    %v6143 = vunpack.c.l.b16 %v2043
    %v6144 = vunpack.c.l.b16 %v2044
    %v6145 = vunpack.c.l.b16 %v2045
    %v6146 = vunpack.c.l.b16 %v2046
    %v6147 = vunpack.c.l.b16 %v2047
    %v6148 = vunpack.c.l.b16 %v2048
    %v6149 = vunpack.c.l.b16 %v2049
    %v6150 = vunpack.c.l.b16 %v2050
    %v6151 = vunpack.c.l.b16 %v2051
    %v6152 = vunpack.c.l.b16 %v2052
    %v6153 = vunpack.c.l.b16 %v2053
    %v6154 = vunpack.c.l.b16 %v2054
    %v6155 = vunpack.c.l.b16 %v2055
    %v6156 = vunpack.c.l.b16 %v2056
    %v6157 = vunpack.c.l.b16 %v2057
    %v6158 = vunpack.c.l.b16 %v2058
    %v6159 = vunpack.c.l.b16 %v2059
    %v6160 = vunpack.c.l.b16 %v2060
    %v6161 = vunpack.c.l.b16 %v2061
    %v6162 = vunpack.c.l.b16 %v2062
    %v6163 = vunpack.c.l.b16 %v2063
    %v6164 = vunpack.c.l.b16 %v2064
    %v6165 = vunpack.c.l.b16 %v2065
    %v6166 = vunpack.c.l.b16 %v2066
    %v6167 = vunpack.c.l.b16 %v2067
    %v6168 = vunpack.c.l.b16 %v2068
    %v6169 = vunpack.c.l.b16 %v2069
    %v6170 = vunpack.c.l.b16 %v2070
    %v6171 = vunpack.c.l.b16 %v2071
    %v6172 = vunpack.c.l.b16 %v2072
    %v6173 = vunpack.c.l.b16 %v2073
    %v6174 = vunpack.c.l.b16 %v2074
    %v6175 = vunpack.c.l.b16 %v2075
    %v6176 = vunpack.c.l.b16 %v2076
    %v6177 = vunpack.c.l.b16 %v2077
    %v6178 = vunpack.c.l.b16 %v2078
    %v6179 = vunpack.c.l.b16 %v2079
    %v6180 = vunpack.c.l.b16 %v2080
    %v6181 = vunpack.c.l.b16 %v2081
    %v6182 = vunpack.c.l.b16 %v2082
    %v6183 = vunpack.c.l.b16 %v2083
    %v6184 = vunpack.c.l.b16 %v2084
    %v6185 = vunpack.c.l.b16 %v2085
    %v6186 = vunpack.c.l.b16 %v2086
    %v6187 = vunpack.c.l.b16 %v2087
    %v6188 = vunpack.c.l.b16 %v2088
    %v6189 = vunpack.c.l.b16 %v2089
    %v6190 = vunpack.c.l.b16 %v2090
    %v6191 = vunpack.c.l.b16 %v2091
    %v6192 = vunpack.c.l.b16 %v2092
    %v6193 = vunpack.c.l.b16 %v2093
    %v6194 = vunpack.c.l.b16 %v2094
    %v6195 = vunpack.c.l.b16 %v2095
    %v6196 = vunpack.c.l.b16 %v2096
    %v6197 = vunpack.c.l.b16 %v2097
    %v6198 = vunpack.c.l.b16 %v2098
    %v6199 = vunpack.c.l.b16 %v2099
    %v6200 = vunpack.c.l.b16 %v2100
    %v6201 = vunpack.c.l.b16 %v2101
    %v6202 = vunpack.c.l.b16 %v2102
    %v6203 = vunpack.c.l.b16 %v2103
    %v6204 = vunpack.c.l.b16 %v2104
    %v6205 = vunpack.c.l.b16 %v2105
    %v6206 = vunpack.c.l.b16 %v2106
    %v6207 = vunpack.c.l.b16 %v2107
    %v6208 = vunpack.c.l.b16 %v2108
    %v6209 = vunpack.c.l.b16 %v2109
    %v6210 = vunpack.c.l.b16 %v2110
    %v6211 = vunpack.c.l.b16 %v2111
    %v6212 = vunpack.c.l.b16 %v2112
    %v6213 = vunpack.c.l.b16 %v2113
    %v6214 = vunpack.c.l.b16 %v2114
    %v6215 = vunpack.c.l.b16 %v2115
    %v6216 = vunpack.c.l.b16 %v2116
    %v6217 = vunpack.c.l.b16 %v2117
    %v6218 = vunpack.c.l.b16 %v2118
    %v6219 = vunpack.c.l.b16 %v2119
    %v6220 = vunpack.c.l.b16 %v2120
    %v6221 = vunpack.c.l.b16 %v2121
    %v6222 = vunpack.c.l.b16 %v2122
    %v6223 = vunpack.c.l.b16 %v2123
    %v6224 = vunpack.c.l.b16 %v2124
    %v6225 = vunpack.c.l.b16 %v2125
    %v6226 = vunpack.c.l.b16 %v2126
    %v6227 = vunpack.c.l.b16 %v2127
    %v6228 = vunpack.c.l.b16 %v2128
    %v6229 = vunpack.c.l.b16 %v2129
    %v6230 = vunpack.c.l.b16 %v2130
    %v6231 = vunpack.c.l.b16 %v2131
    %v6232 = vunpack.c.l.b16 %v2132
    %v6233 = vunpack.c.l.b16 %v2133
    %v6234 = vunpack.c.l.b16 %v2134
    %v6235 = vunpack.c.l.b16 %v2135
    %v6236 = vunpack.c.l.b16 %v2136
    %v6237 = vunpack.c.l.b16 %v2137
    %v6238 = vunpack.c.l.b16 %v2138
    %v6239 = vunpack.c.l.b16 %v2139
    %v6240 = vunpack.c.l.b16 %v2140
    %v6241 = vunpack.c.l.b16 %v2141
    %v6242 = vunpack.c.l.b16 %v2142
    %v6243 = vunpack.c.l.b16 %v2143
    %v6244 = vunpack.c.l.b16 %v2144
    %v6245 = vunpack.c.l.b16 %v2145
    %v6246 = vunpack.c.l.b16 %v2146
    %v6247 = vunpack.c.l.b16 %v2147
    %v6248 = vunpack.c.l.b16 %v2148
    %v6249 = vunpack.c.l.b16 %v2149
    %v6250 = vunpack.c.l.b16 %v2150
    %v6251 = vunpack.c.l.b16 %v2151
    %v6252 = vunpack.c.l.b16 %v2152
    %v6253 = vunpack.c.l.b16 %v2153
    %v6254 = vunpack.c.l.b16 %v2154
    %v6255 = vunpack.c.l.b16 %v2155
    %v6256 = vunpack.c.l.b16 %v2156
    %v6257 = vunpack.c.l.b16 %v2157
    %v6258 = vunpack.c.l.b16 %v2158
    %v6259 = vunpack.c.l.b16 %v2159
    %v6260 = vunpack.c.l.b16 %v2160
    %v6261 = vunpack.c.l.b16 %v2161
    %v6262 = vunpack.c.l.b16 %v2162
    %v6263 = vunpack.c.l.b16 %v2163
    %v6264 = vunpack.c.l.b16 %v2164
    %v6265 = vunpack.c.l.b16 %v2165
    %v6266 = vunpack.c.l.b16 %v2166
    %v6267 = vunpack.c.l.b16 %v2167
    %v6268 = vunpack.c.l.b16 %v2168
    %v6269 = vunpack.c.l.b16 %v2169
    %v6270 = vunpack.c.l.b16 %v2170
    %v6271 = vunpack.c.l.b16 %v2171
    %v6272 = vunpack.c.l.b16 %v2172
    %v6273 = vunpack.c.l.b16 %v2173
    %v6274 = vunpack.c.l.b16 %v2174
    %v6275 = vunpack.c.l.b16 %v2175
    %v6276 = vunpack.c.l.b16 %v2176
    %v6277 = vunpack.c.l.b16 %v2177
    %v6278 = vunpack.c.l.b16 %v2178
    %v6279 = vunpack.c.l.b16 %v2179
    %v6280 = vunpack.c.l.b16 %v2180
    %v6281 = vunpack.c.l.b16 %v2181
    %v6282 = vunpack.c.l.b16 %v2182
    %v6283 = vunpack.c.l.b16 %v2183
    %v6284 = vunpack.c.l.b16 %v2184
    %v6285 = vunpack.c.l.b16 %v2185
    %v6286 = vunpack.c.l.b16 %v2186
    %v6287 = vunpack.c.l.b16 %v2187
    %v6288 = vunpack.c.l.b16 %v2188
    %v6289 = vunpack.c.l.b16 %v2189
    %v6290 = vunpack.c.l.b16 %v2190
    %v6291 = vunpack.c.l.b16 %v2191
    %v6292 = vunpack.c.l.b16 %v2192
    %v6293 = vunpack.c.l.b16 %v2193
    %v6294 = vunpack.c.l.b16 %v2194
    %v6295 = vunpack.c.l.b16 %v2195
    %v6296 = vunpack.c.l.b16 %v2196
    %v6297 = vunpack.c.l.b16 %v2197
    %v6298 = vunpack.c.l.b16 %v2198
    %v6299 = vunpack.c.l.b16 %v2199
    %v6300 = vunpack.c.l.b16 %v2200
    %v6301 = vunpack.c.l.b16 %v2201
    %v6302 = vunpack.c.l.b16 %v2202
    %v6303 = vunpack.c.l.b16 %v2203
    %v6304 = vunpack.c.l.b16 %v2204
    %v6305 = vunpack.c.l.b16 %v2205
    %v6306 = vunpack.c.l.b16 %v2206
    %v6307 = vunpack.c.l.b16 %v2207
    %v6308 = vunpack.c.l.b16 %v2208
    %v6309 = vunpack.c.l.b16 %v2209
    %v6310 = vunpack.c.l.b16 %v2210
    %v6311 = vunpack.c.l.b16 %v2211
    %v6312 = vunpack.c.l.b16 %v2212
    %v6313 = vunpack.c.l.b16 %v2213
    %v6314 = vunpack.c.l.b16 %v2214
    %v6315 = vunpack.c.l.b16 %v2215
    %v6316 = vunpack.c.l.b16 %v2216
    %v6317 = vunpack.c.l.b16 %v2217
    %v6318 = vunpack.c.l.b16 %v2218
    %v6319 = vunpack.c.l.b16 %v2219
    %v6320 = vunpack.c.l.b16 %v2220
    %v6321 = vunpack.c.l.b16 %v2221
    %v6322 = vunpack.c.l.b16 %v2222
    %v6323 = vunpack.c.l.b16 %v2223
    %v6324 = vunpack.c.l.b16 %v2224
    %v6325 = vunpack.c.l.b16 %v2225
    %v6326 = vunpack.c.l.b16 %v2226
    %v6327 = vunpack.c.l.b16 %v2227
    %v6328 = vunpack.c.l.b16 %v2228
    %v6329 = vunpack.c.l.b16 %v2229
    %v6330 = vunpack.c.l.b16 %v2230
    %v6331 = vunpack.c.l.b16 %v2231
    %v6332 = vunpack.c.l.b16 %v2232
    %v6333 = vunpack.c.l.b16 %v2233
    %v6334 = vunpack.c.l.b16 %v2234
    %v6335 = vunpack.c.l.b16 %v2235
    %v6336 = vunpack.c.l.b16 %v2236
    %v6337 = vunpack.c.l.b16 %v2237
    %v6338 = vunpack.c.l.b16 %v2238
    %v6339 = vunpack.c.l.b16 %v2239
    %v6340 = vunpack.c.l.b16 %v2240
    %v6341 = vunpack.c.l.b16 %v2241
    %v6342 = vunpack.c.l.b16 %v2242
    %v6343 = vunpack.c.l.b16 %v2243
    %v6344 = vunpack.c.l.b16 %v2244
    %v6345 = vunpack.c.l.b16 %v2245
    %v6346 = vunpack.c.l.b16 %v2246
    %v6347 = vunpack.c.l.b16 %v2247
    %v6348 = vunpack.c.l.b16 %v2248
    %v6349 = vunpack.c.l.b16 %v2249
    %v6350 = vunpack.c.l.b16 %v2250
    %v6351 = vunpack.c.l.b16 %v2251
    %v6352 = vunpack.c.l.b16 %v2252
    %v6353 = vunpack.c.l.b16 %v2253
    %v6354 = vunpack.c.l.b16 %v2254
    %v6355 = vunpack.c.l.b16 %v2255
    %v6356 = vunpack.c.l.b16 %v2256
    %v6357 = vunpack.c.l.b16 %v2257
    %v6358 = vunpack.c.l.b16 %v2258
    %v6359 = vunpack.c.l.b16 %v2259
    %v6360 = vunpack.c.l.b16 %v2260
    %v6361 = vunpack.c.l.b16 %v2261
    %v6362 = vunpack.c.l.b16 %v2262
    %v6363 = vunpack.c.l.b16 %v2263
    %v6364 = vunpack.c.l.b16 %v2264
    %v6365 = vunpack.c.l.b16 %v2265
    %v6366 = vunpack.c.l.b16 %v2266
    %v6367 = vunpack.c.l.b16 %v2267
    %v6368 = vunpack.c.l.b16 %v2268
    %v6369 = vunpack.c.l.b16 %v2269
    %v6370 = vunpack.c.l.b16 %v2270
    %v6371 = vunpack.c.l.b16 %v2271
    %v6372 = vunpack.c.l.b16 %v2272
    %v6373 = vunpack.c.l.b16 %v2273
    %v6374 = vunpack.c.l.b16 %v2274
    %v6375 = vunpack.c.l.b16 %v2275
    %v6376 = vunpack.c.l.b16 %v2276
    %v6377 = vunpack.c.l.b16 %v2277
    %v6378 = vunpack.c.l.b16 %v2278
    %v6379 = vunpack.c.l.b16 %v2279
    %v6380 = vunpack.c.l.b16 %v2280
    %v6381 = vunpack.c.l.b16 %v2281
    %v6382 = vunpack.c.l.b16 %v2282
    %v6383 = vunpack.c.l.b16 %v2283
    %v6384 = vunpack.c.l.b16 %v2284
    %v6385 = vunpack.c.l.b16 %v2285
    %v6386 = vunpack.c.l.b16 %v2286
    %v6387 = vunpack.c.l.b16 %v2287
    %v6388 = vunpack.c.l.b16 %v2288
    %v6389 = vunpack.c.l.b16 %v2289
    %v6390 = vunpack.c.l.b16 %v2290
    %v6391 = vunpack.c.l.b16 %v2291
    %v6392 = vunpack.c.l.b16 %v2292
    %v6393 = vunpack.c.l.b16 %v2293
    %v6394 = vunpack.c.l.b16 %v2294
    %v6395 = vunpack.c.l.b16 %v2295
    %v6396 = vunpack.c.l.b16 %v2296
    %v6397 = vunpack.c.l.b16 %v2297
    %v6398 = vunpack.c.l.b16 %v2298
    %v6399 = vunpack.c.l.b16 %v2299
    %v6400 = vunpack.c.l.b16 %v2300
    %v6401 = vunpack.c.l.b16 %v2301
    %v6402 = vunpack.c.l.b16 %v2302
    %v6403 = vunpack.c.l.b16 %v2303
    %v6404 = vunpack.c.l.b16 %v2304
    %v6405 = vunpack.c.l.b16 %v2305
    %v6406 = vunpack.c.l.b16 %v2306
    %v6407 = vunpack.c.l.b16 %v2307
    %v6408 = vunpack.c.l.b16 %v2308
    %v6409 = vunpack.c.l.b16 %v2309
    %v6410 = vunpack.c.l.b16 %v2310
    %v6411 = vunpack.c.l.b16 %v2311
    %v6412 = vunpack.c.l.b16 %v2312
    %v6413 = vunpack.c.l.b16 %v2313
    %v6414 = vunpack.c.l.b16 %v2314
    %v6415 = vunpack.c.l.b16 %v2315
    %v6416 = vunpack.c.l.b16 %v2316
    %v6417 = vunpack.c.l.b16 %v2317
    %v6418 = vunpack.c.l.b16 %v2318
    %v6419 = vunpack.c.l.b16 %v2319
    %v6420 = vunpack.c.l.b16 %v2320
    %v6421 = vunpack.c.l.b16 %v2321
    %v6422 = vunpack.c.l.b16 %v2322
    %v6423 = vunpack.c.l.b16 %v2323
    %v6424 = vunpack.c.l.b16 %v2324
    %v6425 = vunpack.c.l.b16 %v2325
    %v6426 = vunpack.c.l.b16 %v2326
    %v6427 = vunpack.c.l.b16 %v2327
    %v6428 = vunpack.c.l.b16 %v2328
    %v6429 = vunpack.c.l.b16 %v2329
    %v6430 = vunpack.c.l.b16 %v2330
    %v6431 = vunpack.c.l.b16 %v2331
    %v6432 = vunpack.c.l.b16 %v2332
    %v6433 = vunpack.c.l.b16 %v2333
    %v6434 = vunpack.c.l.b16 %v2334
    %v6435 = vunpack.c.l.b16 %v2335
    %v6436 = vunpack.c.l.b16 %v2336
    %v6437 = vunpack.c.l.b16 %v2337
    %v6438 = vunpack.c.l.b16 %v2338
    %v6439 = vunpack.c.l.b16 %v2339
    %v6440 = vunpack.c.l.b16 %v2340
    %v6441 = vunpack.c.l.b16 %v2341
    %v6442 = vunpack.c.l.b16 %v2342
    %v6443 = vunpack.c.l.b16 %v2343
    %v6444 = vunpack.c.l.b16 %v2344
    %v6445 = vunpack.c.l.b16 %v2345
    %v6446 = vunpack.c.l.b16 %v2346
    %v6447 = vunpack.c.l.b16 %v2347
    %v6448 = vunpack.c.l.b16 %v2348
    %v6449 = vunpack.c.l.b16 %v2349
    %v6450 = vunpack.c.l.b16 %v2350
    %v6451 = vunpack.c.l.b16 %v2351
    %v6452 = vunpack.c.l.b16 %v2352
    %v6453 = vunpack.c.l.b16 %v2353
    %v6454 = vunpack.c.l.b16 %v2354
    %v6455 = vunpack.c.l.b16 %v2355
    %v6456 = vunpack.c.l.b16 %v2356
    %v6457 = vunpack.c.l.b16 %v2357
    %v6458 = vunpack.c.l.b16 %v2358
    %v6459 = vunpack.c.l.b16 %v2359
    %v6460 = vunpack.c.l.b16 %v2360
    %v6461 = vunpack.c.l.b16 %v2361
    %v6462 = vunpack.c.l.b16 %v2362
    %v6463 = vunpack.c.l.b16 %v2363
    %v6464 = vunpack.c.l.b16 %v2364
    %v6465 = vunpack.c.l.b16 %v2365
    %v6466 = vunpack.c.l.b16 %v2366
    %v6467 = vunpack.c.l.b16 %v2367
    %v6468 = vunpack.c.l.b16 %v2368
    %v6469 = vunpack.c.l.b16 %v2369
    %v6470 = vunpack.c.l.b16 %v2370
    %v6471 = vunpack.c.l.b16 %v2371
    %v6472 = vunpack.c.l.b16 %v2372
    %v6473 = vunpack.c.l.b16 %v2373
    %v6474 = vunpack.c.l.b16 %v2374
    %v6475 = vunpack.c.l.b16 %v2375
    %v6476 = vunpack.c.l.b16 %v2376
    %v6477 = vunpack.c.l.b16 %v2377
    %v6478 = vunpack.c.l.b16 %v2378
    %v6479 = vunpack.c.l.b16 %v2379
    %v6480 = vunpack.c.l.b16 %v2380
    %v6481 = vunpack.c.l.b16 %v2381
    %v6482 = vunpack.c.l.b16 %v2382
    %v6483 = vunpack.c.l.b16 %v2383
    %v6484 = vunpack.c.l.b16 %v2384
    %v6485 = vunpack.c.l.b16 %v2385
    %v6486 = vunpack.c.l.b16 %v2386
    %v6487 = vunpack.c.l.b16 %v2387
    %v6488 = vunpack.c.l.b16 %v2388
    %v6489 = vunpack.c.l.b16 %v2389
    %v6490 = vunpack.c.l.b16 %v2390
    %v6491 = vunpack.c.l.b16 %v2391
    %v6492 = vunpack.c.l.b16 %v2392
    %v6493 = vunpack.c.l.b16 %v2393
    %v6494 = vunpack.c.l.b16 %v2394
    %v6495 = vunpack.c.l.b16 %v2395
    %v6496 = vunpack.c.l.b16 %v2396
    %v6497 = vunpack.c.l.b16 %v2397
    %v6498 = vunpack.c.l.b16 %v2398
    %v6499 = vunpack.c.l.b16 %v2399
    %v6500 = vunpack.c.l.b16 %v2400
    %v6501 = vunpack.c.l.b16 %v2401
    %v6502 = vunpack.c.l.b16 %v2402
    %v6503 = vunpack.c.l.b16 %v2403
    %v6504 = vunpack.c.l.b16 %v2404
    %v6505 = vunpack.c.l.b16 %v2405
    %v6506 = vunpack.c.l.b16 %v2406
    %v6507 = vunpack.c.l.b16 %v2407
    %v6508 = vunpack.c.l.b16 %v2408
    %v6509 = vunpack.c.l.b16 %v2409
    %v6510 = vunpack.c.l.b16 %v2410
    %v6511 = vunpack.c.l.b16 %v2411
    %v6512 = vunpack.c.l.b16 %v2412
    %v6513 = vunpack.c.l.b16 %v2413
    %v6514 = vunpack.c.l.b16 %v2414
    %v6515 = vunpack.c.l.b16 %v2415
    %v6516 = vunpack.c.l.b16 %v2416
    %v6517 = vunpack.c.l.b16 %v2417
    %v6518 = vunpack.c.l.b16 %v2418
    %v6519 = vunpack.c.l.b16 %v2419
    %v6520 = vunpack.c.l.b16 %v2420
    %v6521 = vunpack.c.l.b16 %v2421
    %v6522 = vunpack.c.l.b16 %v2422
    %v6523 = vunpack.c.l.b16 %v2423
    %v6524 = vunpack.c.l.b16 %v2424
    %v6525 = vunpack.c.l.b16 %v2425
    %v6526 = vunpack.c.l.b16 %v2426
    %v6527 = vunpack.c.l.b16 %v2427
    %v6528 = vunpack.c.l.b16 %v2428
    %v6529 = vunpack.c.l.b16 %v2429
    %v6530 = vunpack.c.l.b16 %v2430
    %v6531 = vunpack.c.l.b16 %v2431
    %v6532 = vunpack.c.l.b16 %v2432
    %v6533 = vunpack.c.l.b16 %v2433
    %v6534 = vunpack.c.l.b16 %v2434
    %v6535 = vunpack.c.l.b16 %v2435
    %v6536 = vunpack.c.l.b16 %v2436
    %v6537 = vunpack.c.l.b16 %v2437
    %v6538 = vunpack.c.l.b16 %v2438
    %v6539 = vunpack.c.l.b16 %v2439
    %v6540 = vunpack.c.l.b16 %v2440
    %v6541 = vunpack.c.l.b16 %v2441
    %v6542 = vunpack.c.l.b16 %v2442
    %v6543 = vunpack.c.l.b16 %v2443
    %v6544 = vunpack.c.l.b16 %v2444
    %v6545 = vunpack.c.l.b16 %v2445
    %v6546 = vunpack.c.l.b16 %v2446
    %v6547 = vunpack.c.l.b16 %v2447
    %v6548 = vunpack.c.l.b16 %v2448
    %v6549 = vunpack.c.l.b16 %v2449
    %v6550 = vunpack.c.l.b16 %v2450
    %v6551 = vunpack.c.l.b16 %v2451
    %v6552 = vunpack.c.l.b16 %v2452
    %v6553 = vunpack.c.l.b16 %v2453
    %v6554 = vunpack.c.l.b16 %v2454
    %v6555 = vunpack.c.l.b16 %v2455
    %v6556 = vunpack.c.l.b16 %v2456
    %v6557 = vunpack.c.l.b16 %v2457
    %v6558 = vunpack.c.l.b16 %v2458
    %v6559 = vunpack.c.l.b16 %v2459
    %v6560 = vunpack.c.l.b16 %v2460
    %v6561 = vunpack.c.l.b16 %v2461
    %v6562 = vunpack.c.l.b16 %v2462
    %v6563 = vunpack.c.l.b16 %v2463
    %v6564 = vunpack.c.l.b16 %v2464
    %v6565 = vunpack.c.l.b16 %v2465
    %v6566 = vunpack.c.l.b16 %v2466
    %v6567 = vunpack.c.l.b16 %v2467
    %v6568 = vunpack.c.l.b16 %v2468
    %v6569 = vunpack.c.l.b16 %v2469
    %v6570 = vunpack.c.l.b16 %v2470
    %v6571 = vunpack.c.l.b16 %v2471
    %v6572 = vunpack.c.l.b16 %v2472
    %v6573 = vunpack.c.l.b16 %v2473
    %v6574 = vunpack.c.l.b16 %v2474
    %v6575 = vunpack.c.l.b16 %v2475
    %v6576 = vunpack.c.l.b16 %v2476
    %v6577 = vunpack.c.l.b16 %v2477
    %v6578 = vunpack.c.l.b16 %v2478
    %v6579 = vunpack.c.l.b16 %v2479
    %v6580 = vunpack.c.l.b16 %v2480
    %v6581 = vunpack.c.l.b16 %v2481
    %v6582 = vunpack.c.l.b16 %v2482
    %v6583 = vunpack.c.l.b16 %v2483
    %v6584 = vunpack.c.l.b16 %v2484
    %v6585 = vunpack.c.l.b16 %v2485
    %v6586 = vunpack.c.l.b16 %v2486
    %v6587 = vunpack.c.l.b16 %v2487
    %v6588 = vunpack.c.l.b16 %v2488
    %v6589 = vunpack.c.l.b16 %v2489
    %v6590 = vunpack.c.l.b16 %v2490
    %v6591 = vunpack.c.l.b16 %v2491
    %v6592 = vunpack.c.l.b16 %v2492
    %v6593 = vunpack.c.l.b16 %v2493
    %v6594 = vunpack.c.l.b16 %v2494
    %v6595 = vunpack.c.l.b16 %v2495
    %v6596 = vunpack.c.l.b16 %v2496
    %v6597 = vunpack.c.l.b16 %v2497
    %v6598 = vunpack.c.l.b16 %v2498
    %v6599 = vunpack.c.l.b16 %v2499
    %v6600 = vunpack.c.l.b16 %v2500
    %v6601 = vunpack.c.l.b16 %v2501
    %v6602 = vunpack.c.l.b16 %v2502
    %v6603 = vunpack.c.l.b16 %v2503
    %v6604 = vunpack.c.l.b16 %v2504
    %v6605 = vunpack.c.l.b16 %v2505
    %v6606 = vunpack.c.l.b16 %v2506
    %v6607 = vunpack.c.l.b16 %v2507
    %v6608 = vunpack.c.l.b16 %v2508
    %v6609 = vunpack.c.l.b16 %v2509
    %v6610 = vunpack.c.l.b16 %v2510
    %v6611 = vunpack.c.l.b16 %v2511
    %v6612 = vunpack.c.l.b16 %v2512
    %v6613 = vunpack.c.l.b16 %v2513
    %v6614 = vunpack.c.l.b16 %v2514
    %v6615 = vunpack.c.l.b16 %v2515
    %v6616 = vunpack.c.l.b16 %v2516
    %v6617 = vunpack.c.l.b16 %v2517
    %v6618 = vunpack.c.l.b16 %v2518
    %v6619 = vunpack.c.l.b16 %v2519
    %v6620 = vunpack.c.l.b16 %v2520
    %v6621 = vunpack.c.l.b16 %v2521
    %v6622 = vunpack.c.l.b16 %v2522
    %v6623 = vunpack.c.l.b16 %v2523
    %v6624 = vunpack.c.l.b16 %v2524
    %v6625 = vunpack.c.l.b16 %v2525
    %v6626 = vunpack.c.l.b16 %v2526
    %v6627 = vunpack.c.l.b16 %v2527
    %v6628 = vunpack.c.l.b16 %v2528
    %v6629 = vunpack.c.l.b16 %v2529
    %v6630 = vunpack.c.l.b16 %v2530
    %v6631 = vunpack.c.l.b16 %v2531
    %v6632 = vunpack.c.l.b16 %v2532
    %v6633 = vunpack.c.l.b16 %v2533
    %v6634 = vunpack.c.l.b16 %v2534
    %v6635 = vunpack.c.l.b16 %v2535
    %v6636 = vunpack.c.l.b16 %v2536
    %v6637 = vunpack.c.l.b16 %v2537
    %v6638 = vunpack.c.l.b16 %v2538
    %v6639 = vunpack.c.l.b16 %v2539
    %v6640 = vunpack.c.l.b16 %v2540
    %v6641 = vunpack.c.l.b16 %v2541
    %v6642 = vunpack.c.l.b16 %v2542
    %v6643 = vunpack.c.l.b16 %v2543
    %v6644 = vunpack.c.l.b16 %v2544
    %v6645 = vunpack.c.l.b16 %v2545
    %v6646 = vunpack.c.l.b16 %v2546
    %v6647 = vunpack.c.l.b16 %v2547
    %v6648 = vunpack.c.l.b16 %v2548
    %v6649 = vunpack.c.l.b16 %v2549
    %v6650 = vpack.c.b16 %v4603, %v4602
    %v6651 = vpack.c.b16 %v4605, %v4604
    %v6652 = vpack.c.b16 %v4607, %v4606
    %v6653 = vpack.c.b16 %v4609, %v4608
    %v6654 = vpack.c.b16 %v4611, %v4610
    %v6655 = vpack.c.b16 %v4613, %v4612
    %v6656 = vpack.c.b16 %v4615, %v4614
    %v6657 = vpack.c.b16 %v4617, %v4616
    %v6658 = vpack.c.b16 %v4619, %v4618
    %v6659 = vpack.c.b16 %v4621, %v4620
    %v6660 = vpack.c.b16 %v4623, %v4622
    %v6661 = vpack.c.b16 %v4625, %v4624
    %v6662 = vpack.c.b16 %v4627, %v4626
    %v6663 = vpack.c.b16 %v4629, %v4628
    %v6664 = vpack.c.b16 %v4631, %v4630
    %v6665 = vpack.c.b16 %v4633, %v4632
    %v6666 = vpack.c.b16 %v4635, %v4634
    %v6667 = vpack.c.b16 %v4637, %v4636
    %v6668 = vpack.c.b16 %v4639, %v4638
    %v6669 = vpack.c.b16 %v4641, %v4640
    %v6670 = vpack.c.b16 %v4643, %v4642
    %v6671 = vpack.c.b16 %v4645, %v4644
    %v6672 = vpack.c.b16 %v4647, %v4646
    %v6673 = vpack.c.b16 %v4649, %v4648
    %v6674 = vpack.c.b16 %v4651, %v4650
    %v6675 = vpack.c.b16 %v4653, %v4652
    %v6676 = vpack.c.b16 %v4655, %v4654
    %v6677 = vpack.c.b16 %v4657, %v4656
    %v6678 = vpack.c.b16 %v4659, %v4658
    %v6679 = vpack.c.b16 %v4661, %v4660
    %v6680 = vpack.c.b16 %v4663, %v4662
    %v6681 = vpack.c.b16 %v4665, %v4664
    %v6682 = vpack.c.b16 %v4667, %v4666
    %v6683 = vpack.c.b16 %v4669, %v4668
    %v6684 = vpack.c.b16 %v4671, %v4670
    %v6685 = vpack.c.b16 %v4673, %v4672
    %v6686 = vpack.c.b16 %v4675, %v4674
    %v6687 = vpack.c.b16 %v4677, %v4676
    %v6688 = vpack.c.b16 %v4679, %v4678
    %v6689 = vpack.c.b16 %v4681, %v4680
    %v6690 = vpack.c.b16 %v4683, %v4682
    %v6691 = vpack.c.b16 %v4685, %v4684
    %v6692 = vpack.c.b16 %v4687, %v4686
    %v6693 = vpack.c.b16 %v4689, %v4688
    %v6694 = vpack.c.b16 %v4691, %v4690
    %v6695 = vpack.c.b16 %v4693, %v4692
    %v6696 = vpack.c.b16 %v4695, %v4694
    %v6697 = vpack.c.b16 %v4697, %v4696
    %v6698 = vpack.c.b16 %v4699, %v4698
    %v6699 = vpack.c.b16 %v4701, %v4700
    %v6700 = vpack.c.b16 %v4703, %v4702
    %v6701 = vpack.c.b16 %v4705, %v4704
    %v6702 = vpack.c.b16 %v4707, %v4706
    %v6703 = vpack.c.b16 %v4709, %v4708
    %v6704 = vpack.c.b16 %v4711, %v4710
    %v6705 = vpack.c.b16 %v4713, %v4712
    %v6706 = vpack.c.b16 %v4715, %v4714
    %v6707 = vpack.c.b16 %v4717, %v4716
    %v6708 = vpack.c.b16 %v4719, %v4718
    %v6709 = vpack.c.b16 %v4721, %v4720
    %v6710 = vpack.c.b16 %v4723, %v4722
    %v6711 = vpack.c.b16 %v4725, %v4724
    %v6712 = vpack.c.b16 %v4727, %v4726
    %v6713 = vpack.c.b16 %v4729, %v4728
    %v6714 = vpack.c.b16 %v4731, %v4730
    %v6715 = vpack.c.b16 %v4733, %v4732
    %v6716 = vpack.c.b16 %v4735, %v4734
    %v6717 = vpack.c.b16 %v4737, %v4736
    %v6718 = vpack.c.b16 %v4739, %v4738
    %v6719 = vpack.c.b16 %v4741, %v4740
    %v6720 = vpack.c.b16 %v4743, %v4742
    %v6721 = vpack.c.b16 %v4745, %v4744
    %v6722 = vpack.c.b16 %v4747, %v4746
    %v6723 = vpack.c.b16 %v4749, %v4748
    %v6724 = vpack.c.b16 %v4751, %v4750
    %v6725 = vpack.c.b16 %v4753, %v4752
    %v6726 = vpack.c.b16 %v4755, %v4754
    %v6727 = vpack.c.b16 %v4757, %v4756
    %v6728 = vpack.c.b16 %v4759, %v4758
    %v6729 = vpack.c.b16 %v4761, %v4760
    %v6730 = vpack.c.b16 %v4763, %v4762
    %v6731 = vpack.c.b16 %v4765, %v4764
    %v6732 = vpack.c.b16 %v4767, %v4766
    %v6733 = vpack.c.b16 %v4769, %v4768
    %v6734 = vpack.c.b16 %v4771, %v4770
    %v6735 = vpack.c.b16 %v4773, %v4772
    %v6736 = vpack.c.b16 %v4775, %v4774
    %v6737 = vpack.c.b16 %v4777, %v4776
    %v6738 = vpack.c.b16 %v4779, %v4778
    %v6739 = vpack.c.b16 %v4781, %v4780
    %v6740 = vpack.c.b16 %v4783, %v4782
    %v6741 = vpack.c.b16 %v4785, %v4784
    %v6742 = vpack.c.b16 %v4787, %v4786
    %v6743 = vpack.c.b16 %v4789, %v4788
    %v6744 = vpack.c.b16 %v4791, %v4790
    %v6745 = vpack.c.b16 %v4793, %v4792
    %v6746 = vpack.c.b16 %v4795, %v4794
    %v6747 = vpack.c.b16 %v4797, %v4796
    %v6748 = vpack.c.b16 %v4799, %v4798
    %v6749 = vpack.c.b16 %v4801, %v4800
    %v6750 = vpack.c.b16 %v4803, %v4802
    %v6751 = vpack.c.b16 %v4805, %v4804
    %v6752 = vpack.c.b16 %v4807, %v4806
    %v6753 = vpack.c.b16 %v4809, %v4808
    %v6754 = vpack.c.b16 %v4811, %v4810
    %v6755 = vpack.c.b16 %v4813, %v4812
    %v6756 = vpack.c.b16 %v4815, %v4814
    %v6757 = vpack.c.b16 %v4817, %v4816
    %v6758 = vpack.c.b16 %v4819, %v4818
    %v6759 = vpack.c.b16 %v4821, %v4820
    %v6760 = vpack.c.b16 %v4823, %v4822
    %v6761 = vpack.c.b16 %v4825, %v4824
    %v6762 = vpack.c.b16 %v4827, %v4826
    %v6763 = vpack.c.b16 %v4829, %v4828
    %v6764 = vpack.c.b16 %v4831, %v4830
    %v6765 = vpack.c.b16 %v4833, %v4832
    %v6766 = vpack.c.b16 %v4835, %v4834
    %v6767 = vpack.c.b16 %v4837, %v4836
    %v6768 = vpack.c.b16 %v4839, %v4838
    %v6769 = vpack.c.b16 %v4841, %v4840
    %v6770 = vpack.c.b16 %v4843, %v4842
    %v6771 = vpack.c.b16 %v4845, %v4844
    %v6772 = vpack.c.b16 %v4847, %v4846
    %v6773 = vpack.c.b16 %v4849, %v4848
    %v6774 = vpack.c.b16 %v4851, %v4850
    %v6775 = vpack.c.b16 %v4853, %v4852
    %v6776 = vpack.c.b16 %v4855, %v4854
    %v6777 = vpack.c.b16 %v4857, %v4856
    %v6778 = vpack.c.b16 %v4859, %v4858
    %v6779 = vpack.c.b16 %v4861, %v4860
    %v6780 = vpack.c.b16 %v4863, %v4862
    %v6781 = vpack.c.b16 %v4865, %v4864
    %v6782 = vpack.c.b16 %v4867, %v4866
    %v6783 = vpack.c.b16 %v4869, %v4868
    %v6784 = vpack.c.b16 %v4871, %v4870
    %v6785 = vpack.c.b16 %v4873, %v4872
    %v6786 = vpack.c.b16 %v4875, %v4874
    %v6787 = vpack.c.b16 %v4877, %v4876
    %v6788 = vpack.c.b16 %v4879, %v4878
    %v6789 = vpack.c.b16 %v4881, %v4880
    %v6790 = vpack.c.b16 %v4883, %v4882
    %v6791 = vpack.c.b16 %v4885, %v4884
    %v6792 = vpack.c.b16 %v4887, %v4886
    %v6793 = vpack.c.b16 %v4889, %v4888
    %v6794 = vpack.c.b16 %v4891, %v4890
    %v6795 = vpack.c.b16 %v4893, %v4892
    %v6796 = vpack.c.b16 %v4895, %v4894
    %v6797 = vpack.c.b16 %v4897, %v4896
    %v6798 = vpack.c.b16 %v4899, %v4898
    %v6799 = vpack.c.b16 %v4901, %v4900
    %v6800 = vpack.c.b16 %v4903, %v4902
    %v6801 = vpack.c.b16 %v4905, %v4904
    %v6802 = vpack.c.b16 %v4907, %v4906
    %v6803 = vpack.c.b16 %v4909, %v4908
    %v6804 = vpack.c.b16 %v4911, %v4910
    %v6805 = vpack.c.b16 %v4913, %v4912
    %v6806 = vpack.c.b16 %v4915, %v4914
    %v6807 = vpack.c.b16 %v4917, %v4916
    %v6808 = vpack.c.b16 %v4919, %v4918
    %v6809 = vpack.c.b16 %v4921, %v4920
    %v6810 = vpack.c.b16 %v4923, %v4922
    %v6811 = vpack.c.b16 %v4925, %v4924
    %v6812 = vpack.c.b16 %v4927, %v4926
    %v6813 = vpack.c.b16 %v4929, %v4928
    %v6814 = vpack.c.b16 %v4931, %v4930
    %v6815 = vpack.c.b16 %v4933, %v4932
    %v6816 = vpack.c.b16 %v4935, %v4934
    %v6817 = vpack.c.b16 %v4937, %v4936
    %v6818 = vpack.c.b16 %v4939, %v4938
    %v6819 = vpack.c.b16 %v4941, %v4940
    %v6820 = vpack.c.b16 %v4943, %v4942
    %v6821 = vpack.c.b16 %v4945, %v4944
    %v6822 = vpack.c.b16 %v4947, %v4946
    %v6823 = vpack.c.b16 %v4949, %v4948
    %v6824 = vpack.c.b16 %v4951, %v4950
    %v6825 = vpack.c.b16 %v4953, %v4952
    %v6826 = vpack.c.b16 %v4955, %v4954
    %v6827 = vpack.c.b16 %v4957, %v4956
    %v6828 = vpack.c.b16 %v4959, %v4958
    %v6829 = vpack.c.b16 %v4961, %v4960
    %v6830 = vpack.c.b16 %v4963, %v4962
    %v6831 = vpack.c.b16 %v4965, %v4964
    %v6832 = vpack.c.b16 %v4967, %v4966
    %v6833 = vpack.c.b16 %v4969, %v4968
    %v6834 = vpack.c.b16 %v4971, %v4970
    %v6835 = vpack.c.b16 %v4973, %v4972
    %v6836 = vpack.c.b16 %v4975, %v4974
    %v6837 = vpack.c.b16 %v4977, %v4976
    %v6838 = vpack.c.b16 %v4979, %v4978
    %v6839 = vpack.c.b16 %v4981, %v4980
    %v6840 = vpack.c.b16 %v4983, %v4982
    %v6841 = vpack.c.b16 %v4985, %v4984
    %v6842 = vpack.c.b16 %v4987, %v4986
    %v6843 = vpack.c.b16 %v4989, %v4988
    %v6844 = vpack.c.b16 %v4991, %v4990
    %v6845 = vpack.c.b16 %v4993, %v4992
    %v6846 = vpack.c.b16 %v4995, %v4994
    %v6847 = vpack.c.b16 %v4997, %v4996
    %v6848 = vpack.c.b16 %v4999, %v4998
    %v6849 = vpack.c.b16 %v5001, %v5000
    %v6850 = vpack.c.b16 %v5003, %v5002
    %v6851 = vpack.c.b16 %v5005, %v5004
    %v6852 = vpack.c.b16 %v5007, %v5006
    %v6853 = vpack.c.b16 %v5009, %v5008
    %v6854 = vpack.c.b16 %v5011, %v5010
    %v6855 = vpack.c.b16 %v5013, %v5012
    %v6856 = vpack.c.b16 %v5015, %v5014
    %v6857 = vpack.c.b16 %v5017, %v5016
    %v6858 = vpack.c.b16 %v5019, %v5018
    %v6859 = vpack.c.b16 %v5021, %v5020
    %v6860 = vpack.c.b16 %v5023, %v5022
    %v6861 = vpack.c.b16 %v5025, %v5024
    %v6862 = vpack.c.b16 %v5027, %v5026
    %v6863 = vpack.c.b16 %v5029, %v5028
    %v6864 = vpack.c.b16 %v5031, %v5030
    %v6865 = vpack.c.b16 %v5033, %v5032
    %v6866 = vpack.c.b16 %v5035, %v5034
    %v6867 = vpack.c.b16 %v5037, %v5036
    %v6868 = vpack.c.b16 %v5039, %v5038
    %v6869 = vpack.c.b16 %v5041, %v5040
    %v6870 = vpack.c.b16 %v5043, %v5042
    %v6871 = vpack.c.b16 %v5045, %v5044
    %v6872 = vpack.c.b16 %v5047, %v5046
    %v6873 = vpack.c.b16 %v5049, %v5048
    %v6874 = vpack.c.b16 %v5051, %v5050
    %v6875 = vpack.c.b16 %v5053, %v5052
    %v6876 = vpack.c.b16 %v5055, %v5054
    %v6877 = vpack.c.b16 %v5057, %v5056
    %v6878 = vpack.c.b16 %v5059, %v5058
    %v6879 = vpack.c.b16 %v5061, %v5060
    %v6880 = vpack.c.b16 %v5063, %v5062
    %v6881 = vpack.c.b16 %v5065, %v5064
    %v6882 = vpack.c.b16 %v5067, %v5066
    %v6883 = vpack.c.b16 %v5069, %v5068
    %v6884 = vpack.c.b16 %v5071, %v5070
    %v6885 = vpack.c.b16 %v5073, %v5072
    %v6886 = vpack.c.b16 %v5075, %v5074
    %v6887 = vpack.c.b16 %v5077, %v5076
    %v6888 = vpack.c.b16 %v5079, %v5078
    %v6889 = vpack.c.b16 %v5081, %v5080
    %v6890 = vpack.c.b16 %v5083, %v5082
    %v6891 = vpack.c.b16 %v5085, %v5084
    %v6892 = vpack.c.b16 %v5087, %v5086
    %v6893 = vpack.c.b16 %v5089, %v5088
    %v6894 = vpack.c.b16 %v5091, %v5090
    %v6895 = vpack.c.b16 %v5093, %v5092
    %v6896 = vpack.c.b16 %v5095, %v5094
    %v6897 = vpack.c.b16 %v5097, %v5096
    %v6898 = vpack.c.b16 %v5099, %v5098
    %v6899 = vpack.c.b16 %v5101, %v5100
    %v6900 = vpack.c.b16 %v5103, %v5102
    %v6901 = vpack.c.b16 %v5105, %v5104
    %v6902 = vpack.c.b16 %v5107, %v5106
    %v6903 = vpack.c.b16 %v5109, %v5108
    %v6904 = vpack.c.b16 %v5111, %v5110
    %v6905 = vpack.c.b16 %v5113, %v5112
    %v6906 = vpack.c.b16 %v5115, %v5114
    %v6907 = vpack.c.b16 %v5117, %v5116
    %v6908 = vpack.c.b16 %v5119, %v5118
    %v6909 = vpack.c.b16 %v5121, %v5120
    %v6910 = vpack.c.b16 %v5123, %v5122
    %v6911 = vpack.c.b16 %v5125, %v5124
    %v6912 = vpack.c.b16 %v5127, %v5126
    %v6913 = vpack.c.b16 %v5129, %v5128
    %v6914 = vpack.c.b16 %v5131, %v5130
    %v6915 = vpack.c.b16 %v5133, %v5132
    %v6916 = vpack.c.b16 %v5135, %v5134
    %v6917 = vpack.c.b16 %v5137, %v5136
    %v6918 = vpack.c.b16 %v5139, %v5138
    %v6919 = vpack.c.b16 %v5141, %v5140
    %v6920 = vpack.c.b16 %v5143, %v5142
    %v6921 = vpack.c.b16 %v5145, %v5144
    %v6922 = vpack.c.b16 %v5147, %v5146
    %v6923 = vpack.c.b16 %v5149, %v5148
    %v6924 = vpack.c.b16 %v5151, %v5150
    %v6925 = vpack.c.b16 %v5153, %v5152
    %v6926 = vpack.c.b16 %v5155, %v5154
    %v6927 = vpack.c.b16 %v5157, %v5156
    %v6928 = vpack.c.b16 %v5159, %v5158
    %v6929 = vpack.c.b16 %v5161, %v5160
    %v6930 = vpack.c.b16 %v5163, %v5162
    %v6931 = vpack.c.b16 %v5165, %v5164
    %v6932 = vpack.c.b16 %v5167, %v5166
    %v6933 = vpack.c.b16 %v5169, %v5168
    %v6934 = vpack.c.b16 %v5171, %v5170
    %v6935 = vpack.c.b16 %v5173, %v5172
    %v6936 = vpack.c.b16 %v5175, %v5174
    %v6937 = vpack.c.b16 %v5177, %v5176
    %v6938 = vpack.c.b16 %v5179, %v5178
    %v6939 = vpack.c.b16 %v5181, %v5180
    %v6940 = vpack.c.b16 %v5183, %v5182
    %v6941 = vpack.c.b16 %v5185, %v5184
    %v6942 = vpack.c.b16 %v5187, %v5186
    %v6943 = vpack.c.b16 %v5189, %v5188
    %v6944 = vpack.c.b16 %v5191, %v5190
    %v6945 = vpack.c.b16 %v5193, %v5192
    %v6946 = vpack.c.b16 %v5195, %v5194
    %v6947 = vpack.c.b16 %v5197, %v5196
    %v6948 = vpack.c.b16 %v5199, %v5198
    %v6949 = vpack.c.b16 %v5201, %v5200
    %v6950 = vpack.c.b16 %v5203, %v5202
    %v6951 = vpack.c.b16 %v5205, %v5204
    %v6952 = vpack.c.b16 %v5207, %v5206
    %v6953 = vpack.c.b16 %v5209, %v5208
    %v6954 = vpack.c.b16 %v5211, %v5210
    %v6955 = vpack.c.b16 %v5213, %v5212
    %v6956 = vpack.c.b16 %v5215, %v5214
    %v6957 = vpack.c.b16 %v5217, %v5216
    %v6958 = vpack.c.b16 %v5219, %v5218
    %v6959 = vpack.c.b16 %v5221, %v5220
    %v6960 = vpack.c.b16 %v5223, %v5222
    %v6961 = vpack.c.b16 %v5225, %v5224
    %v6962 = vpack.c.b16 %v5227, %v5226
    %v6963 = vpack.c.b16 %v5229, %v5228
    %v6964 = vpack.c.b16 %v5231, %v5230
    %v6965 = vpack.c.b16 %v5233, %v5232
    %v6966 = vpack.c.b16 %v5235, %v5234
    %v6967 = vpack.c.b16 %v5237, %v5236
    %v6968 = vpack.c.b16 %v5239, %v5238
    %v6969 = vpack.c.b16 %v5241, %v5240
    %v6970 = vpack.c.b16 %v5243, %v5242
    %v6971 = vpack.c.b16 %v5245, %v5244
    %v6972 = vpack.c.b16 %v5247, %v5246
    %v6973 = vpack.c.b16 %v5249, %v5248
    %v6974 = vpack.c.b16 %v5251, %v5250
    %v6975 = vpack.c.b16 %v5253, %v5252
    %v6976 = vpack.c.b16 %v5255, %v5254
    %v6977 = vpack.c.b16 %v5257, %v5256
    %v6978 = vpack.c.b16 %v5259, %v5258
    %v6979 = vpack.c.b16 %v5261, %v5260
    %v6980 = vpack.c.b16 %v5263, %v5262
    %v6981 = vpack.c.b16 %v5265, %v5264
    %v6982 = vpack.c.b16 %v5267, %v5266
    %v6983 = vpack.c.b16 %v5269, %v5268
    %v6984 = vpack.c.b16 %v5271, %v5270
    %v6985 = vpack.c.b16 %v5273, %v5272
    %v6986 = vpack.c.b16 %v5275, %v5274
    %v6987 = vpack.c.b16 %v5277, %v5276
    %v6988 = vpack.c.b16 %v5279, %v5278
    %v6989 = vpack.c.b16 %v5281, %v5280
    %v6990 = vpack.c.b16 %v5283, %v5282
    %v6991 = vpack.c.b16 %v5285, %v5284
    %v6992 = vpack.c.b16 %v5287, %v5286
    %v6993 = vpack.c.b16 %v5289, %v5288
    %v6994 = vpack.c.b16 %v5291, %v5290
    %v6995 = vpack.c.b16 %v5293, %v5292
    %v6996 = vpack.c.b16 %v5295, %v5294
    %v6997 = vpack.c.b16 %v5297, %v5296
    %v6998 = vpack.c.b16 %v5299, %v5298
    %v6999 = vpack.c.b16 %v5301, %v5300
    %v7000 = vpack.c.b16 %v5303, %v5302
    %v7001 = vpack.c.b16 %v5305, %v5304
    %v7002 = vpack.c.b16 %v5307, %v5306
    %v7003 = vpack.c.b16 %v5309, %v5308
    %v7004 = vpack.c.b16 %v5311, %v5310
    %v7005 = vpack.c.b16 %v5313, %v5312
    %v7006 = vpack.c.b16 %v5315, %v5314
    %v7007 = vpack.c.b16 %v5317, %v5316
    %v7008 = vpack.c.b16 %v5319, %v5318
    %v7009 = vpack.c.b16 %v5321, %v5320
    %v7010 = vpack.c.b16 %v5323, %v5322
    %v7011 = vpack.c.b16 %v5325, %v5324
    %v7012 = vpack.c.b16 %v5327, %v5326
    %v7013 = vpack.c.b16 %v5329, %v5328
    %v7014 = vpack.c.b16 %v5331, %v5330
    %v7015 = vpack.c.b16 %v5333, %v5332
    %v7016 = vpack.c.b16 %v5335, %v5334
    %v7017 = vpack.c.b16 %v5337, %v5336
    %v7018 = vpack.c.b16 %v5339, %v5338
    %v7019 = vpack.c.b16 %v5341, %v5340
    %v7020 = vpack.c.b16 %v5343, %v5342
    %v7021 = vpack.c.b16 %v5345, %v5344
    %v7022 = vpack.c.b16 %v5347, %v5346
    %v7023 = vpack.c.b16 %v5349, %v5348
    %v7024 = vpack.c.b16 %v5351, %v5350
    %v7025 = vpack.c.b16 %v5353, %v5352
    %v7026 = vpack.c.b16 %v5355, %v5354
    %v7027 = vpack.c.b16 %v5357, %v5356
    %v7028 = vpack.c.b16 %v5359, %v5358
    %v7029 = vpack.c.b16 %v5361, %v5360
    %v7030 = vpack.c.b16 %v5363, %v5362
    %v7031 = vpack.c.b16 %v5365, %v5364
    %v7032 = vpack.c.b16 %v5367, %v5366
    %v7033 = vpack.c.b16 %v5369, %v5368
    %v7034 = vpack.c.b16 %v5371, %v5370
    %v7035 = vpack.c.b16 %v5373, %v5372
    %v7036 = vpack.c.b16 %v5375, %v5374
    %v7037 = vpack.c.b16 %v5377, %v5376
    %v7038 = vpack.c.b16 %v5379, %v5378
    %v7039 = vpack.c.b16 %v5381, %v5380
    %v7040 = vpack.c.b16 %v5383, %v5382
    %v7041 = vpack.c.b16 %v5385, %v5384
    %v7042 = vpack.c.b16 %v5387, %v5386
    %v7043 = vpack.c.b16 %v5389, %v5388
    %v7044 = vpack.c.b16 %v5391, %v5390
    %v7045 = vpack.c.b16 %v5393, %v5392
    %v7046 = vpack.c.b16 %v5395, %v5394
    %v7047 = vpack.c.b16 %v5397, %v5396
    %v7048 = vpack.c.b16 %v5399, %v5398
    %v7049 = vpack.c.b16 %v5401, %v5400
    %v7050 = vpack.c.b16 %v5403, %v5402
    %v7051 = vpack.c.b16 %v5405, %v5404
    %v7052 = vpack.c.b16 %v5407, %v5406
    %v7053 = vpack.c.b16 %v5409, %v5408
    %v7054 = vpack.c.b16 %v5411, %v5410
    %v7055 = vpack.c.b16 %v5413, %v5412
    %v7056 = vpack.c.b16 %v5415, %v5414
    %v7057 = vpack.c.b16 %v5417, %v5416
    %v7058 = vpack.c.b16 %v5419, %v5418
    %v7059 = vpack.c.b16 %v5421, %v5420
    %v7060 = vpack.c.b16 %v5423, %v5422
    %v7061 = vpack.c.b16 %v5425, %v5424
    %v7062 = vpack.c.b16 %v5427, %v5426
    %v7063 = vpack.c.b16 %v5429, %v5428
    %v7064 = vpack.c.b16 %v5431, %v5430
    %v7065 = vpack.c.b16 %v5433, %v5432
    %v7066 = vpack.c.b16 %v5435, %v5434
    %v7067 = vpack.c.b16 %v5437, %v5436
    %v7068 = vpack.c.b16 %v5439, %v5438
    %v7069 = vpack.c.b16 %v5441, %v5440
    %v7070 = vpack.c.b16 %v5443, %v5442
    %v7071 = vpack.c.b16 %v5445, %v5444
    %v7072 = vpack.c.b16 %v5447, %v5446
    %v7073 = vpack.c.b16 %v5449, %v5448
    %v7074 = vpack.c.b16 %v5451, %v5450
    %v7075 = vpack.c.b16 %v5453, %v5452
    %v7076 = vpack.c.b16 %v5455, %v5454
    %v7077 = vpack.c.b16 %v5457, %v5456
    %v7078 = vpack.c.b16 %v5459, %v5458
    %v7079 = vpack.c.b16 %v5461, %v5460
    %v7080 = vpack.c.b16 %v5463, %v5462
    %v7081 = vpack.c.b16 %v5465, %v5464
    %v7082 = vpack.c.b16 %v5467, %v5466
    %v7083 = vpack.c.b16 %v5469, %v5468
    %v7084 = vpack.c.b16 %v5471, %v5470
    %v7085 = vpack.c.b16 %v5473, %v5472
    %v7086 = vpack.c.b16 %v5475, %v5474
    %v7087 = vpack.c.b16 %v5477, %v5476
    %v7088 = vpack.c.b16 %v5479, %v5478
    %v7089 = vpack.c.b16 %v5481, %v5480
    %v7090 = vpack.c.b16 %v5483, %v5482
    %v7091 = vpack.c.b16 %v5485, %v5484
    %v7092 = vpack.c.b16 %v5487, %v5486
    %v7093 = vpack.c.b16 %v5489, %v5488
    %v7094 = vpack.c.b16 %v5491, %v5490
    %v7095 = vpack.c.b16 %v5493, %v5492
    %v7096 = vpack.c.b16 %v5495, %v5494
    %v7097 = vpack.c.b16 %v5497, %v5496
    %v7098 = vpack.c.b16 %v5499, %v5498
    %v7099 = vpack.c.b16 %v5501, %v5500
    %v7100 = vpack.c.b16 %v5503, %v5502
    %v7101 = vpack.c.b16 %v5505, %v5504
    %v7102 = vpack.c.b16 %v5507, %v5506
    %v7103 = vpack.c.b16 %v5509, %v5508
    %v7104 = vpack.c.b16 %v5511, %v5510
    %v7105 = vpack.c.b16 %v5513, %v5512
    %v7106 = vpack.c.b16 %v5515, %v5514
    %v7107 = vpack.c.b16 %v5517, %v5516
    %v7108 = vpack.c.b16 %v5519, %v5518
    %v7109 = vpack.c.b16 %v5521, %v5520
    %v7110 = vpack.c.b16 %v5523, %v5522
    %v7111 = vpack.c.b16 %v5525, %v5524
    %v7112 = vpack.c.b16 %v5527, %v5526
    %v7113 = vpack.c.b16 %v5529, %v5528
    %v7114 = vpack.c.b16 %v5531, %v5530
    %v7115 = vpack.c.b16 %v5533, %v5532
    %v7116 = vpack.c.b16 %v5535, %v5534
    %v7117 = vpack.c.b16 %v5537, %v5536
    %v7118 = vpack.c.b16 %v5539, %v5538
    %v7119 = vpack.c.b16 %v5541, %v5540
    %v7120 = vpack.c.b16 %v5543, %v5542
    %v7121 = vpack.c.b16 %v5545, %v5544
    %v7122 = vpack.c.b16 %v5547, %v5546
    %v7123 = vpack.c.b16 %v5549, %v5548
    %v7124 = vpack.c.b16 %v5551, %v5550
    %v7125 = vpack.c.b16 %v5553, %v5552
    %v7126 = vpack.c.b16 %v5555, %v5554
    %v7127 = vpack.c.b16 %v5557, %v5556
    %v7128 = vpack.c.b16 %v5559, %v5558
    %v7129 = vpack.c.b16 %v5561, %v5560
    %v7130 = vpack.c.b16 %v5563, %v5562
    %v7131 = vpack.c.b16 %v5565, %v5564
    %v7132 = vpack.c.b16 %v5567, %v5566
    %v7133 = vpack.c.b16 %v5569, %v5568
    %v7134 = vpack.c.b16 %v5571, %v5570
    %v7135 = vpack.c.b16 %v5573, %v5572
    %v7136 = vpack.c.b16 %v5575, %v5574
    %v7137 = vpack.c.b16 %v5577, %v5576
    %v7138 = vpack.c.b16 %v5579, %v5578
    %v7139 = vpack.c.b16 %v5581, %v5580
    %v7140 = vpack.c.b16 %v5583, %v5582
    %v7141 = vpack.c.b16 %v5585, %v5584
    %v7142 = vpack.c.b16 %v5587, %v5586
    %v7143 = vpack.c.b16 %v5589, %v5588
    %v7144 = vpack.c.b16 %v5591, %v5590
    %v7145 = vpack.c.b16 %v5593, %v5592
    %v7146 = vpack.c.b16 %v5595, %v5594
    %v7147 = vpack.c.b16 %v5597, %v5596
    %v7148 = vpack.c.b16 %v5599, %v5598
    %v7149 = vpack.c.b16 %v5601, %v5600
    %v7150 = vpack.c.b16 %v5603, %v5602
    %v7151 = vpack.c.b16 %v5605, %v5604
    %v7152 = vpack.c.b16 %v5607, %v5606
    %v7153 = vpack.c.b16 %v5609, %v5608
    %v7154 = vpack.c.b16 %v5611, %v5610
    %v7155 = vpack.c.b16 %v5613, %v5612
    %v7156 = vpack.c.b16 %v5615, %v5614
    %v7157 = vpack.c.b16 %v5617, %v5616
    %v7158 = vpack.c.b16 %v5619, %v5618
    %v7159 = vpack.c.b16 %v5621, %v5620
    %v7160 = vpack.c.b16 %v5623, %v5622
    %v7161 = vpack.c.b16 %v5625, %v5624
    %v7162 = vpack.c.b16 %v5627, %v5626
    %v7163 = vpack.c.b16 %v5629, %v5628
    %v7164 = vpack.c.b16 %v5631, %v5630
    %v7165 = vpack.c.b16 %v5633, %v5632
    %v7166 = vpack.c.b16 %v5635, %v5634
    %v7167 = vpack.c.b16 %v5637, %v5636
    %v7168 = vpack.c.b16 %v5639, %v5638
    %v7169 = vpack.c.b16 %v5641, %v5640
    %v7170 = vpack.c.b16 %v5643, %v5642
    %v7171 = vpack.c.b16 %v5645, %v5644
    %v7172 = vpack.c.b16 %v5647, %v5646
    %v7173 = vpack.c.b16 %v5649, %v5648
    %v7174 = vpack.c.b16 %v5651, %v5650
    %v7175 = vpack.c.b16 %v5653, %v5652
    %v7176 = vpack.c.b16 %v5655, %v5654
    %v7177 = vpack.c.b16 %v5657, %v5656
    %v7178 = vpack.c.b16 %v5659, %v5658
    %v7179 = vpack.c.b16 %v5661, %v5660
    %v7180 = vpack.c.b16 %v5663, %v5662
    %v7181 = vpack.c.b16 %v5665, %v5664
    %v7182 = vpack.c.b16 %v5667, %v5666
    %v7183 = vpack.c.b16 %v5669, %v5668
    %v7184 = vpack.c.b16 %v5671, %v5670
    %v7185 = vpack.c.b16 %v5673, %v5672
    %v7186 = vpack.c.b16 %v5675, %v5674
    %v7187 = vpack.c.b16 %v5677, %v5676
    %v7188 = vpack.c.b16 %v5679, %v5678
    %v7189 = vpack.c.b16 %v5681, %v5680
    %v7190 = vpack.c.b16 %v5683, %v5682
    %v7191 = vpack.c.b16 %v5685, %v5684
    %v7192 = vpack.c.b16 %v5687, %v5686
    %v7193 = vpack.c.b16 %v5689, %v5688
    %v7194 = vpack.c.b16 %v5691, %v5690
    %v7195 = vpack.c.b16 %v5693, %v5692
    %v7196 = vpack.c.b16 %v5695, %v5694
    %v7197 = vpack.c.b16 %v5697, %v5696
    %v7198 = vpack.c.b16 %v5699, %v5698
    %v7199 = vpack.c.b16 %v5701, %v5700
    %v7200 = vpack.c.b16 %v5703, %v5702
    %v7201 = vpack.c.b16 %v5705, %v5704
    %v7202 = vpack.c.b16 %v5707, %v5706
    %v7203 = vpack.c.b16 %v5709, %v5708
    %v7204 = vpack.c.b16 %v5711, %v5710
    %v7205 = vpack.c.b16 %v5713, %v5712
    %v7206 = vpack.c.b16 %v5715, %v5714
    %v7207 = vpack.c.b16 %v5717, %v5716
    %v7208 = vpack.c.b16 %v5719, %v5718
    %v7209 = vpack.c.b16 %v5721, %v5720
    %v7210 = vpack.c.b16 %v5723, %v5722
    %v7211 = vpack.c.b16 %v5725, %v5724
    %v7212 = vpack.c.b16 %v5727, %v5726
    %v7213 = vpack.c.b16 %v5729, %v5728
    %v7214 = vpack.c.b16 %v5731, %v5730
    %v7215 = vpack.c.b16 %v5733, %v5732
    %v7216 = vpack.c.b16 %v5735, %v5734
    %v7217 = vpack.c.b16 %v5737, %v5736
    %v7218 = vpack.c.b16 %v5739, %v5738
    %v7219 = vpack.c.b16 %v5741, %v5740
    %v7220 = vpack.c.b16 %v5743, %v5742
    %v7221 = vpack.c.b16 %v5745, %v5744
    %v7222 = vpack.c.b16 %v5747, %v5746
    %v7223 = vpack.c.b16 %v5749, %v5748
    %v7224 = vpack.c.b16 %v5751, %v5750
    %v7225 = vpack.c.b16 %v5753, %v5752
    %v7226 = vpack.c.b16 %v5755, %v5754
    %v7227 = vpack.c.b16 %v5757, %v5756
    %v7228 = vpack.c.b16 %v5759, %v5758
    %v7229 = vpack.c.b16 %v5761, %v5760
    %v7230 = vpack.c.b16 %v5763, %v5762
    %v7231 = vpack.c.b16 %v5765, %v5764
    %v7232 = vpack.c.b16 %v5767, %v5766
    %v7233 = vpack.c.b16 %v5769, %v5768
    %v7234 = vpack.c.b16 %v5771, %v5770
    %v7235 = vpack.c.b16 %v5773, %v5772
    %v7236 = vpack.c.b16 %v5775, %v5774
    %v7237 = vpack.c.b16 %v5777, %v5776
    %v7238 = vpack.c.b16 %v5779, %v5778
    %v7239 = vpack.c.b16 %v5781, %v5780
    %v7240 = vpack.c.b16 %v5783, %v5782
    %v7241 = vpack.c.b16 %v5785, %v5784
    %v7242 = vpack.c.b16 %v5787, %v5786
    %v7243 = vpack.c.b16 %v5789, %v5788
    %v7244 = vpack.c.b16 %v5791, %v5790
    %v7245 = vpack.c.b16 %v5793, %v5792
    %v7246 = vpack.c.b16 %v5795, %v5794
    %v7247 = vpack.c.b16 %v5797, %v5796
    %v7248 = vpack.c.b16 %v5799, %v5798
    %v7249 = vpack.c.b16 %v5801, %v5800
    %v7250 = vpack.c.b16 %v5803, %v5802
    %v7251 = vpack.c.b16 %v5805, %v5804
    %v7252 = vpack.c.b16 %v5807, %v5806
    %v7253 = vpack.c.b16 %v5809, %v5808
    %v7254 = vpack.c.b16 %v5811, %v5810
    %v7255 = vpack.c.b16 %v5813, %v5812
    %v7256 = vpack.c.b16 %v5815, %v5814
    %v7257 = vpack.c.b16 %v5817, %v5816
    %v7258 = vpack.c.b16 %v5819, %v5818
    %v7259 = vpack.c.b16 %v5821, %v5820
    %v7260 = vpack.c.b16 %v5823, %v5822
    %v7261 = vpack.c.b16 %v5825, %v5824
    %v7262 = vpack.c.b16 %v5827, %v5826
    %v7263 = vpack.c.b16 %v5829, %v5828
    %v7264 = vpack.c.b16 %v5831, %v5830
    %v7265 = vpack.c.b16 %v5833, %v5832
    %v7266 = vpack.c.b16 %v5835, %v5834
    %v7267 = vpack.c.b16 %v5837, %v5836
    %v7268 = vpack.c.b16 %v5839, %v5838
    %v7269 = vpack.c.b16 %v5841, %v5840
    %v7270 = vpack.c.b16 %v5843, %v5842
    %v7271 = vpack.c.b16 %v5845, %v5844
    %v7272 = vpack.c.b16 %v5847, %v5846
    %v7273 = vpack.c.b16 %v5849, %v5848
    %v7274 = vpack.c.b16 %v5851, %v5850
    %v7275 = vpack.c.b16 %v5853, %v5852
    %v7276 = vpack.c.b16 %v5855, %v5854
    %v7277 = vpack.c.b16 %v5857, %v5856
    %v7278 = vpack.c.b16 %v5859, %v5858
    %v7279 = vpack.c.b16 %v5861, %v5860
    %v7280 = vpack.c.b16 %v5863, %v5862
    %v7281 = vpack.c.b16 %v5865, %v5864
    %v7282 = vpack.c.b16 %v5867, %v5866
    %v7283 = vpack.c.b16 %v5869, %v5868
    %v7284 = vpack.c.b16 %v5871, %v5870
    %v7285 = vpack.c.b16 %v5873, %v5872
    %v7286 = vpack.c.b16 %v5875, %v5874
    %v7287 = vpack.c.b16 %v5877, %v5876
    %v7288 = vpack.c.b16 %v5879, %v5878
    %v7289 = vpack.c.b16 %v5881, %v5880
    %v7290 = vpack.c.b16 %v5883, %v5882
    %v7291 = vpack.c.b16 %v5885, %v5884
    %v7292 = vpack.c.b16 %v5887, %v5886
    %v7293 = vpack.c.b16 %v5889, %v5888
    %v7294 = vpack.c.b16 %v5891, %v5890
    %v7295 = vpack.c.b16 %v5893, %v5892
    %v7296 = vpack.c.b16 %v5895, %v5894
    %v7297 = vpack.c.b16 %v5897, %v5896
    %v7298 = vpack.c.b16 %v5899, %v5898
    %v7299 = vpack.c.b16 %v5901, %v5900
    %v7300 = vpack.c.b16 %v5903, %v5902
    %v7301 = vpack.c.b16 %v5905, %v5904
    %v7302 = vpack.c.b16 %v5907, %v5906
    %v7303 = vpack.c.b16 %v5909, %v5908
    %v7304 = vpack.c.b16 %v5911, %v5910
    %v7305 = vpack.c.b16 %v5913, %v5912
    %v7306 = vpack.c.b16 %v5915, %v5914
    %v7307 = vpack.c.b16 %v5917, %v5916
    %v7308 = vpack.c.b16 %v5919, %v5918
    %v7309 = vpack.c.b16 %v5921, %v5920
    %v7310 = vpack.c.b16 %v5923, %v5922
    %v7311 = vpack.c.b16 %v5925, %v5924
    %v7312 = vpack.c.b16 %v5927, %v5926
    %v7313 = vpack.c.b16 %v5929, %v5928
    %v7314 = vpack.c.b16 %v5931, %v5930
    %v7315 = vpack.c.b16 %v5933, %v5932
    %v7316 = vpack.c.b16 %v5935, %v5934
    %v7317 = vpack.c.b16 %v5937, %v5936
    %v7318 = vpack.c.b16 %v5939, %v5938
    %v7319 = vpack.c.b16 %v5941, %v5940
    %v7320 = vpack.c.b16 %v5943, %v5942
    %v7321 = vpack.c.b16 %v5945, %v5944
    %v7322 = vpack.c.b16 %v5947, %v5946
    %v7323 = vpack.c.b16 %v5949, %v5948
    %v7324 = vpack.c.b16 %v5951, %v5950
    %v7325 = vpack.c.b16 %v5953, %v5952
    %v7326 = vpack.c.b16 %v5955, %v5954
    %v7327 = vpack.c.b16 %v5957, %v5956
    %v7328 = vpack.c.b16 %v5959, %v5958
    %v7329 = vpack.c.b16 %v5961, %v5960
    %v7330 = vpack.c.b16 %v5963, %v5962
    %v7331 = vpack.c.b16 %v5965, %v5964
    %v7332 = vpack.c.b16 %v5967, %v5966
    %v7333 = vpack.c.b16 %v5969, %v5968
    %v7334 = vpack.c.b16 %v5971, %v5970
    %v7335 = vpack.c.b16 %v5973, %v5972
    %v7336 = vpack.c.b16 %v5975, %v5974
    %v7337 = vpack.c.b16 %v5977, %v5976
    %v7338 = vpack.c.b16 %v5979, %v5978
    %v7339 = vpack.c.b16 %v5981, %v5980
    %v7340 = vpack.c.b16 %v5983, %v5982
    %v7341 = vpack.c.b16 %v5985, %v5984
    %v7342 = vpack.c.b16 %v5987, %v5986
    %v7343 = vpack.c.b16 %v5989, %v5988
    %v7344 = vpack.c.b16 %v5991, %v5990
    %v7345 = vpack.c.b16 %v5993, %v5992
    %v7346 = vpack.c.b16 %v5995, %v5994
    %v7347 = vpack.c.b16 %v5997, %v5996
    %v7348 = vpack.c.b16 %v5999, %v5998
    %v7349 = vpack.c.b16 %v6001, %v6000
    %v7350 = vpack.c.b16 %v6003, %v6002
    %v7351 = vpack.c.b16 %v6005, %v6004
    %v7352 = vpack.c.b16 %v6007, %v6006
    %v7353 = vpack.c.b16 %v6009, %v6008
    %v7354 = vpack.c.b16 %v6011, %v6010
    %v7355 = vpack.c.b16 %v6013, %v6012
    %v7356 = vpack.c.b16 %v6015, %v6014
    %v7357 = vpack.c.b16 %v6017, %v6016
    %v7358 = vpack.c.b16 %v6019, %v6018
    %v7359 = vpack.c.b16 %v6021, %v6020
    %v7360 = vpack.c.b16 %v6023, %v6022
    %v7361 = vpack.c.b16 %v6025, %v6024
    %v7362 = vpack.c.b16 %v6027, %v6026
    %v7363 = vpack.c.b16 %v6029, %v6028
    %v7364 = vpack.c.b16 %v6031, %v6030
    %v7365 = vpack.c.b16 %v6033, %v6032
    %v7366 = vpack.c.b16 %v6035, %v6034
    %v7367 = vpack.c.b16 %v6037, %v6036
    %v7368 = vpack.c.b16 %v6039, %v6038
    %v7369 = vpack.c.b16 %v6041, %v6040
    %v7370 = vpack.c.b16 %v6043, %v6042
    %v7371 = vpack.c.b16 %v6045, %v6044
    %v7372 = vpack.c.b16 %v6047, %v6046
    %v7373 = vpack.c.b16 %v6049, %v6048
    %v7374 = vpack.c.b16 %v6051, %v6050
    %v7375 = vpack.c.b16 %v6053, %v6052
    %v7376 = vpack.c.b16 %v6055, %v6054
    %v7377 = vpack.c.b16 %v6057, %v6056
    %v7378 = vpack.c.b16 %v6059, %v6058
    %v7379 = vpack.c.b16 %v6061, %v6060
    %v7380 = vpack.c.b16 %v6063, %v6062
    %v7381 = vpack.c.b16 %v6065, %v6064
    %v7382 = vpack.c.b16 %v6067, %v6066
    %v7383 = vpack.c.b16 %v6069, %v6068
    %v7384 = vpack.c.b16 %v6071, %v6070
    %v7385 = vpack.c.b16 %v6073, %v6072
    %v7386 = vpack.c.b16 %v6075, %v6074
    %v7387 = vpack.c.b16 %v6077, %v6076
    %v7388 = vpack.c.b16 %v6079, %v6078
    %v7389 = vpack.c.b16 %v6081, %v6080
    %v7390 = vpack.c.b16 %v6083, %v6082
    %v7391 = vpack.c.b16 %v6085, %v6084
    %v7392 = vpack.c.b16 %v6087, %v6086
    %v7393 = vpack.c.b16 %v6089, %v6088
    %v7394 = vpack.c.b16 %v6091, %v6090
    %v7395 = vpack.c.b16 %v6093, %v6092
    %v7396 = vpack.c.b16 %v6095, %v6094
    %v7397 = vpack.c.b16 %v6097, %v6096
    %v7398 = vpack.c.b16 %v6099, %v6098
    %v7399 = vpack.c.b16 %v6101, %v6100
    %v7400 = vpack.c.b16 %v6103, %v6102
    %v7401 = vpack.c.b16 %v6105, %v6104
    %v7402 = vpack.c.b16 %v6107, %v6106
    %v7403 = vpack.c.b16 %v6109, %v6108
    %v7404 = vpack.c.b16 %v6111, %v6110
    %v7405 = vpack.c.b16 %v6113, %v6112
    %v7406 = vpack.c.b16 %v6115, %v6114
    %v7407 = vpack.c.b16 %v6117, %v6116
    %v7408 = vpack.c.b16 %v6119, %v6118
    %v7409 = vpack.c.b16 %v6121, %v6120
    %v7410 = vpack.c.b16 %v6123, %v6122
    %v7411 = vpack.c.b16 %v6125, %v6124
    %v7412 = vpack.c.b16 %v6127, %v6126
    %v7413 = vpack.c.b16 %v6129, %v6128
    %v7414 = vpack.c.b16 %v6131, %v6130
    %v7415 = vpack.c.b16 %v6133, %v6132
    %v7416 = vpack.c.b16 %v6135, %v6134
    %v7417 = vpack.c.b16 %v6137, %v6136
    %v7418 = vpack.c.b16 %v6139, %v6138
    %v7419 = vpack.c.b16 %v6141, %v6140
    %v7420 = vpack.c.b16 %v6143, %v6142
    %v7421 = vpack.c.b16 %v6145, %v6144
    %v7422 = vpack.c.b16 %v6147, %v6146
    %v7423 = vpack.c.b16 %v6149, %v6148
    %v7424 = vpack.c.b16 %v6151, %v6150
    %v7425 = vpack.c.b16 %v6153, %v6152
    %v7426 = vpack.c.b16 %v6155, %v6154
    %v7427 = vpack.c.b16 %v6157, %v6156
    %v7428 = vpack.c.b16 %v6159, %v6158
    %v7429 = vpack.c.b16 %v6161, %v6160
    %v7430 = vpack.c.b16 %v6163, %v6162
    %v7431 = vpack.c.b16 %v6165, %v6164
    %v7432 = vpack.c.b16 %v6167, %v6166
    %v7433 = vpack.c.b16 %v6169, %v6168
    %v7434 = vpack.c.b16 %v6171, %v6170
    %v7435 = vpack.c.b16 %v6173, %v6172
    %v7436 = vpack.c.b16 %v6175, %v6174
    %v7437 = vpack.c.b16 %v6177, %v6176
    %v7438 = vpack.c.b16 %v6179, %v6178
    %v7439 = vpack.c.b16 %v6181, %v6180
    %v7440 = vpack.c.b16 %v6183, %v6182
    %v7441 = vpack.c.b16 %v6185, %v6184
    %v7442 = vpack.c.b16 %v6187, %v6186
    %v7443 = vpack.c.b16 %v6189, %v6188
    %v7444 = vpack.c.b16 %v6191, %v6190
    %v7445 = vpack.c.b16 %v6193, %v6192
    %v7446 = vpack.c.b16 %v6195, %v6194
    %v7447 = vpack.c.b16 %v6197, %v6196
    %v7448 = vpack.c.b16 %v6199, %v6198
    %v7449 = vpack.c.b16 %v6201, %v6200
    %v7450 = vpack.c.b16 %v6203, %v6202
    %v7451 = vpack.c.b16 %v6205, %v6204
    %v7452 = vpack.c.b16 %v6207, %v6206
    %v7453 = vpack.c.b16 %v6209, %v6208
    %v7454 = vpack.c.b16 %v6211, %v6210
    %v7455 = vpack.c.b16 %v6213, %v6212
    %v7456 = vpack.c.b16 %v6215, %v6214
    %v7457 = vpack.c.b16 %v6217, %v6216
    %v7458 = vpack.c.b16 %v6219, %v6218
    %v7459 = vpack.c.b16 %v6221, %v6220
    %v7460 = vpack.c.b16 %v6223, %v6222
    %v7461 = vpack.c.b16 %v6225, %v6224
    %v7462 = vpack.c.b16 %v6227, %v6226
    %v7463 = vpack.c.b16 %v6229, %v6228
    %v7464 = vpack.c.b16 %v6231, %v6230
    %v7465 = vpack.c.b16 %v6233, %v6232
    %v7466 = vpack.c.b16 %v6235, %v6234
    %v7467 = vpack.c.b16 %v6237, %v6236
    %v7468 = vpack.c.b16 %v6239, %v6238
    %v7469 = vpack.c.b16 %v6241, %v6240
    %v7470 = vpack.c.b16 %v6243, %v6242
    %v7471 = vpack.c.b16 %v6245, %v6244
    %v7472 = vpack.c.b16 %v6247, %v6246
    %v7473 = vpack.c.b16 %v6249, %v6248
    %v7474 = vpack.c.b16 %v6251, %v6250
    %v7475 = vpack.c.b16 %v6253, %v6252
    %v7476 = vpack.c.b16 %v6255, %v6254
    %v7477 = vpack.c.b16 %v6257, %v6256
    %v7478 = vpack.c.b16 %v6259, %v6258
    %v7479 = vpack.c.b16 %v6261, %v6260
    %v7480 = vpack.c.b16 %v6263, %v6262
    %v7481 = vpack.c.b16 %v6265, %v6264
    %v7482 = vpack.c.b16 %v6267, %v6266
    %v7483 = vpack.c.b16 %v6269, %v6268
    %v7484 = vpack.c.b16 %v6271, %v6270
    %v7485 = vpack.c.b16 %v6273, %v6272
    %v7486 = vpack.c.b16 %v6275, %v6274
    %v7487 = vpack.c.b16 %v6277, %v6276
    %v7488 = vpack.c.b16 %v6279, %v6278
    %v7489 = vpack.c.b16 %v6281, %v6280
    %v7490 = vpack.c.b16 %v6283, %v6282
    %v7491 = vpack.c.b16 %v6285, %v6284
    %v7492 = vpack.c.b16 %v6287, %v6286
    %v7493 = vpack.c.b16 %v6289, %v6288
    %v7494 = vpack.c.b16 %v6291, %v6290
    %v7495 = vpack.c.b16 %v6293, %v6292
    %v7496 = vpack.c.b16 %v6295, %v6294
    %v7497 = vpack.c.b16 %v6297, %v6296
    %v7498 = vpack.c.b16 %v6299, %v6298
    %v7499 = vpack.c.b16 %v6301, %v6300
    %v7500 = vpack.c.b16 %v6303, %v6302
    %v7501 = vpack.c.b16 %v6305, %v6304
    %v7502 = vpack.c.b16 %v6307, %v6306
    %v7503 = vpack.c.b16 %v6309, %v6308
    %v7504 = vpack.c.b16 %v6311, %v6310
    %v7505 = vpack.c.b16 %v6313, %v6312
    %v7506 = vpack.c.b16 %v6315, %v6314
    %v7507 = vpack.c.b16 %v6317, %v6316
    %v7508 = vpack.c.b16 %v6319, %v6318
    %v7509 = vpack.c.b16 %v6321, %v6320
    %v7510 = vpack.c.b16 %v6323, %v6322
    %v7511 = vpack.c.b16 %v6325, %v6324
    %v7512 = vpack.c.b16 %v6327, %v6326
    %v7513 = vpack.c.b16 %v6329, %v6328
    %v7514 = vpack.c.b16 %v6331, %v6330
    %v7515 = vpack.c.b16 %v6333, %v6332
    %v7516 = vpack.c.b16 %v6335, %v6334
    %v7517 = vpack.c.b16 %v6337, %v6336
    %v7518 = vpack.c.b16 %v6339, %v6338
    %v7519 = vpack.c.b16 %v6341, %v6340
    %v7520 = vpack.c.b16 %v6343, %v6342
    %v7521 = vpack.c.b16 %v6345, %v6344
    %v7522 = vpack.c.b16 %v6347, %v6346
    %v7523 = vpack.c.b16 %v6349, %v6348
    %v7524 = vpack.c.b16 %v6351, %v6350
    %v7525 = vpack.c.b16 %v6353, %v6352
    %v7526 = vpack.c.b16 %v6355, %v6354
    %v7527 = vpack.c.b16 %v6357, %v6356
    %v7528 = vpack.c.b16 %v6359, %v6358
    %v7529 = vpack.c.b16 %v6361, %v6360
    %v7530 = vpack.c.b16 %v6363, %v6362
    %v7531 = vpack.c.b16 %v6365, %v6364
    %v7532 = vpack.c.b16 %v6367, %v6366
    %v7533 = vpack.c.b16 %v6369, %v6368
    %v7534 = vpack.c.b16 %v6371, %v6370
    %v7535 = vpack.c.b16 %v6373, %v6372
    %v7536 = vpack.c.b16 %v6375, %v6374
    %v7537 = vpack.c.b16 %v6377, %v6376
    %v7538 = vpack.c.b16 %v6379, %v6378
    %v7539 = vpack.c.b16 %v6381, %v6380
    %v7540 = vpack.c.b16 %v6383, %v6382
    %v7541 = vpack.c.b16 %v6385, %v6384
    %v7542 = vpack.c.b16 %v6387, %v6386
    %v7543 = vpack.c.b16 %v6389, %v6388
    %v7544 = vpack.c.b16 %v6391, %v6390
    %v7545 = vpack.c.b16 %v6393, %v6392
    %v7546 = vpack.c.b16 %v6395, %v6394
    %v7547 = vpack.c.b16 %v6397, %v6396
    %v7548 = vpack.c.b16 %v6399, %v6398
    %v7549 = vpack.c.b16 %v6401, %v6400
    %v7550 = vpack.c.b16 %v6403, %v6402
    %v7551 = vpack.c.b16 %v6405, %v6404
    %v7552 = vpack.c.b16 %v6407, %v6406
    %v7553 = vpack.c.b16 %v6409, %v6408
    %v7554 = vpack.c.b16 %v6411, %v6410
    %v7555 = vpack.c.b16 %v6413, %v6412
    %v7556 = vpack.c.b16 %v6415, %v6414
    %v7557 = vpack.c.b16 %v6417, %v6416
    %v7558 = vpack.c.b16 %v6419, %v6418
    %v7559 = vpack.c.b16 %v6421, %v6420
    %v7560 = vpack.c.b16 %v6423, %v6422
    %v7561 = vpack.c.b16 %v6425, %v6424
    %v7562 = vpack.c.b16 %v6427, %v6426
    %v7563 = vpack.c.b16 %v6429, %v6428
    %v7564 = vpack.c.b16 %v6431, %v6430
    %v7565 = vpack.c.b16 %v6433, %v6432
    %v7566 = vpack.c.b16 %v6435, %v6434
    %v7567 = vpack.c.b16 %v6437, %v6436
    %v7568 = vpack.c.b16 %v6439, %v6438
    %v7569 = vpack.c.b16 %v6441, %v6440
    %v7570 = vpack.c.b16 %v6443, %v6442
    %v7571 = vpack.c.b16 %v6445, %v6444
    %v7572 = vpack.c.b16 %v6447, %v6446
    %v7573 = vpack.c.b16 %v6449, %v6448
    %v7574 = vpack.c.b16 %v6451, %v6450
    %v7575 = vpack.c.b16 %v6453, %v6452
    %v7576 = vpack.c.b16 %v6455, %v6454
    %v7577 = vpack.c.b16 %v6457, %v6456
    %v7578 = vpack.c.b16 %v6459, %v6458
    %v7579 = vpack.c.b16 %v6461, %v6460
    %v7580 = vpack.c.b16 %v6463, %v6462
    %v7581 = vpack.c.b16 %v6465, %v6464
    %v7582 = vpack.c.b16 %v6467, %v6466
    %v7583 = vpack.c.b16 %v6469, %v6468
    %v7584 = vpack.c.b16 %v6471, %v6470
    %v7585 = vpack.c.b16 %v6473, %v6472
    %v7586 = vpack.c.b16 %v6475, %v6474
    %v7587 = vpack.c.b16 %v6477, %v6476
    %v7588 = vpack.c.b16 %v6479, %v6478
    %v7589 = vpack.c.b16 %v6481, %v6480
    %v7590 = vpack.c.b16 %v6483, %v6482
    %v7591 = vpack.c.b16 %v6485, %v6484
    %v7592 = vpack.c.b16 %v6487, %v6486
    %v7593 = vpack.c.b16 %v6489, %v6488
    %v7594 = vpack.c.b16 %v6491, %v6490
    %v7595 = vpack.c.b16 %v6493, %v6492
    %v7596 = vpack.c.b16 %v6495, %v6494
    %v7597 = vpack.c.b16 %v6497, %v6496
    %v7598 = vpack.c.b16 %v6499, %v6498
    %v7599 = vpack.c.b16 %v6501, %v6500
    %v7600 = vpack.c.b16 %v6503, %v6502
    %v7601 = vpack.c.b16 %v6505, %v6504
    %v7602 = vpack.c.b16 %v6507, %v6506
    %v7603 = vpack.c.b16 %v6509, %v6508
    %v7604 = vpack.c.b16 %v6511, %v6510
    %v7605 = vpack.c.b16 %v6513, %v6512
    %v7606 = vpack.c.b16 %v6515, %v6514
    %v7607 = vpack.c.b16 %v6517, %v6516
    %v7608 = vpack.c.b16 %v6519, %v6518
    %v7609 = vpack.c.b16 %v6521, %v6520
    %v7610 = vpack.c.b16 %v6523, %v6522
    %v7611 = vpack.c.b16 %v6525, %v6524
    %v7612 = vpack.c.b16 %v6527, %v6526
    %v7613 = vpack.c.b16 %v6529, %v6528
    %v7614 = vpack.c.b16 %v6531, %v6530
    %v7615 = vpack.c.b16 %v6533, %v6532
    %v7616 = vpack.c.b16 %v6535, %v6534
    %v7617 = vpack.c.b16 %v6537, %v6536
    %v7618 = vpack.c.b16 %v6539, %v6538
    %v7619 = vpack.c.b16 %v6541, %v6540
    %v7620 = vpack.c.b16 %v6543, %v6542
    %v7621 = vpack.c.b16 %v6545, %v6544
    %v7622 = vpack.c.b16 %v6547, %v6546
    %v7623 = vpack.c.b16 %v6549, %v6548
    %v7624 = vpack.c.b16 %v6551, %v6550
    %v7625 = vpack.c.b16 %v6553, %v6552
    %v7626 = vpack.c.b16 %v6555, %v6554
    %v7627 = vpack.c.b16 %v6557, %v6556
    %v7628 = vpack.c.b16 %v6559, %v6558
    %v7629 = vpack.c.b16 %v6561, %v6560
    %v7630 = vpack.c.b16 %v6563, %v6562
    %v7631 = vpack.c.b16 %v6565, %v6564
    %v7632 = vpack.c.b16 %v6567, %v6566
    %v7633 = vpack.c.b16 %v6569, %v6568
    %v7634 = vpack.c.b16 %v6571, %v6570
    %v7635 = vpack.c.b16 %v6573, %v6572
    %v7636 = vpack.c.b16 %v6575, %v6574
    %v7637 = vpack.c.b16 %v6577, %v6576
    %v7638 = vpack.c.b16 %v6579, %v6578
    %v7639 = vpack.c.b16 %v6581, %v6580
    %v7640 = vpack.c.b16 %v6583, %v6582
    %v7641 = vpack.c.b16 %v6585, %v6584
    %v7642 = vpack.c.b16 %v6587, %v6586
    %v7643 = vpack.c.b16 %v6589, %v6588
    %v7644 = vpack.c.b16 %v6591, %v6590
    %v7645 = vpack.c.b16 %v6593, %v6592
    %v7646 = vpack.c.b16 %v6595, %v6594
    %v7647 = vpack.c.b16 %v6597, %v6596
    %v7648 = vpack.c.b16 %v6599, %v6598
    %v7649 = vpack.c.b16 %v6601, %v6600
    %v7650 = vpack.c.b16 %v6603, %v6602
    %v7651 = vpack.c.b16 %v6605, %v6604
    %v7652 = vpack.c.b16 %v6607, %v6606
    %v7653 = vpack.c.b16 %v6609, %v6608
    %v7654 = vpack.c.b16 %v6611, %v6610
    %v7655 = vpack.c.b16 %v6613, %v6612
    %v7656 = vpack.c.b16 %v6615, %v6614
    %v7657 = vpack.c.b16 %v6617, %v6616
    %v7658 = vpack.c.b16 %v6619, %v6618
    %v7659 = vpack.c.b16 %v6621, %v6620
    %v7660 = vpack.c.b16 %v6623, %v6622
    %v7661 = vpack.c.b16 %v6625, %v6624
    %v7662 = vpack.c.b16 %v6627, %v6626
    %v7663 = vpack.c.b16 %v6629, %v6628
    %v7664 = vpack.c.b16 %v6631, %v6630
    %v7665 = vpack.c.b16 %v6633, %v6632
    %v7666 = vpack.c.b16 %v6635, %v6634
    %v7667 = vpack.c.b16 %v6637, %v6636
    %v7668 = vpack.c.b16 %v6639, %v6638
    %v7669 = vpack.c.b16 %v6641, %v6640
    %v7670 = vpack.c.b16 %v6643, %v6642
    %v7671 = vpack.c.b16 %v6645, %v6644
    %v7672 = vpack.c.b16 %v6647, %v6646
    %v7673 = vpack.c.b16 %v6649, %v6648
    %8698 = vmatpush.bf16.msra.mxu0 %v6657
    %8699 = vmatpush.bf16.msra.mxu0 %v6656
    %8700 = vmatpush.bf16.msra.mxu0 %v6655
    %8701 = vmatpush.bf16.msra.mxu0 %v6654
    %8702 = vmatpush.bf16.msra.mxu0 %v6653
    %8703 = vmatpush.bf16.msra.mxu0 %v6652
    %8704 = vmatpush.bf16.msra.mxu0 %v6651
    %8705 = vmatpush.bf16.msra.mxu0 %v6650
    %8706 = vmatmul.bf16.gmra.mxu0 %v374
    %v8707 = vpop.f32.mrf.mxu0
    %v8708 = vadd.f32 %v2552, %v8707
    %v8709 = vpop.f32.mrf.mxu0
    %8710 = vdwg.mxu0
    %8711 = vmatpush.bf16.msra.mxu0 %v6665
    %8712 = vmatpush.bf16.msra.mxu0 %v6664
    %8713 = vmatpush.bf16.msra.mxu0 %v6663
    %8714 = vmatpush.bf16.msra.mxu0 %v6662
    %8715 = vmatpush.bf16.msra.mxu0 %v6661
    %8716 = vmatpush.bf16.msra.mxu0 %v6660
    %8717 = vmatpush.bf16.msra.mxu0 %v6659
    %8718 = vmatpush.bf16.msra.mxu0 %v6658
    %8719 = vmatmul.bf16.gmra.mxu0 %v375
    %v8720 = vpop.f32.mrf.mxu0
    %v8721 = vadd.f32 %v8708, %v8720
    %v8722 = vpop.f32.mrf.mxu0
    %8723 = vdwg.mxu0
    %8724 = vmatpush.bf16.msra.mxu0 %v6673
    %8725 = vmatpush.bf16.msra.mxu0 %v6672
    %8726 = vmatpush.bf16.msra.mxu0 %v6671
    %8727 = vmatpush.bf16.msra.mxu0 %v6670
    %8728 = vmatpush.bf16.msra.mxu0 %v6669
    %8729 = vmatpush.bf16.msra.mxu0 %v6668
    %8730 = vmatpush.bf16.msra.mxu0 %v6667
    %8731 = vmatpush.bf16.msra.mxu0 %v6666
    %8732 = vmatmul.bf16.gmra.mxu0 %v376
    %v8733 = vpop.f32.mrf.mxu0
    %v8734 = vadd.f32 %v8721, %v8733
    %v8735 = vpop.f32.mrf.mxu0
    %8736 = vdwg.mxu0
    %8737 = vmatpush.bf16.msra.mxu0 %v6681
    %8738 = vmatpush.bf16.msra.mxu0 %v6680
    %8739 = vmatpush.bf16.msra.mxu0 %v6679
    %8740 = vmatpush.bf16.msra.mxu0 %v6678
    %8741 = vmatpush.bf16.msra.mxu0 %v6677
    %8742 = vmatpush.bf16.msra.mxu0 %v6676
    %8743 = vmatpush.bf16.msra.mxu0 %v6675
    %8744 = vmatpush.bf16.msra.mxu0 %v6674
    %8745 = vmatmul.bf16.gmra.mxu0 %v377
    %v8746 = vpop.f32.mrf.mxu0
    %v8747 = vadd.f32 %v8734, %v8746
    %v8748 = vpop.f32.mrf.mxu0
    %8749 = vdwg.mxu0
    %8750 = vmatpush.bf16.msra.mxu0 %v6689
    %8751 = vmatpush.bf16.msra.mxu0 %v6688
    %8752 = vmatpush.bf16.msra.mxu0 %v6687
    %8753 = vmatpush.bf16.msra.mxu0 %v6686
    %8754 = vmatpush.bf16.msra.mxu0 %v6685
    %8755 = vmatpush.bf16.msra.mxu0 %v6684
    %8756 = vmatpush.bf16.msra.mxu0 %v6683
    %8757 = vmatpush.bf16.msra.mxu0 %v6682
    %8758 = vmatmul.bf16.gmra.mxu0 %v378
    %v8759 = vpop.f32.mrf.mxu0
    %v8760 = vadd.f32 %v8747, %v8759
    %v8761 = vpop.f32.mrf.mxu0
    %8762 = vdwg.mxu0
    %8763 = vmatpush.bf16.msra.mxu0 %v6697
    %8764 = vmatpush.bf16.msra.mxu0 %v6696
    %8765 = vmatpush.bf16.msra.mxu0 %v6695
    %8766 = vmatpush.bf16.msra.mxu0 %v6694
    %8767 = vmatpush.bf16.msra.mxu0 %v6693
    %8768 = vmatpush.bf16.msra.mxu0 %v6692
    %8769 = vmatpush.bf16.msra.mxu0 %v6691
    %8770 = vmatpush.bf16.msra.mxu0 %v6690
    %8771 = vmatmul.bf16.gmra.mxu0 %v379
    %v8772 = vpop.f32.mrf.mxu0
    %v8773 = vadd.f32 %v8760, %v8772
    %v8774 = vpop.f32.mrf.mxu0
    %8775 = vdwg.mxu0
    %8776 = vmatpush.bf16.msra.mxu0 %v6705
    %8777 = vmatpush.bf16.msra.mxu0 %v6704
    %8778 = vmatpush.bf16.msra.mxu0 %v6703
    %8779 = vmatpush.bf16.msra.mxu0 %v6702
    %8780 = vmatpush.bf16.msra.mxu0 %v6701
    %8781 = vmatpush.bf16.msra.mxu0 %v6700
    %8782 = vmatpush.bf16.msra.mxu0 %v6699
    %8783 = vmatpush.bf16.msra.mxu0 %v6698
    %8784 = vmatmul.bf16.gmra.mxu0 %v380
    %v8785 = vpop.f32.mrf.mxu0
    %v8786 = vadd.f32 %v8773, %v8785
    %v8787 = vpop.f32.mrf.mxu0
    %8788 = vdwg.mxu0
    %8789 = vmatpush.bf16.msra.mxu0 %v6713
    %8790 = vmatpush.bf16.msra.mxu0 %v6712
    %8791 = vmatpush.bf16.msra.mxu0 %v6711
    %8792 = vmatpush.bf16.msra.mxu0 %v6710
    %8793 = vmatpush.bf16.msra.mxu0 %v6709
    %8794 = vmatpush.bf16.msra.mxu0 %v6708
    %8795 = vmatpush.bf16.msra.mxu0 %v6707
    %8796 = vmatpush.bf16.msra.mxu0 %v6706
    %8797 = vmatmul.bf16.gmra.mxu0 %v381
    %v8798 = vpop.f32.mrf.mxu0
    %v8799 = vadd.f32 %v8786, %v8798
    %v8800 = vpop.f32.mrf.mxu0
    %8801 = vdwg.mxu0
    %8802 = vmatpush.bf16.msra.mxu0 %v6721
    %8803 = vmatpush.bf16.msra.mxu0 %v6720
    %8804 = vmatpush.bf16.msra.mxu0 %v6719
    %8805 = vmatpush.bf16.msra.mxu0 %v6718
    %8806 = vmatpush.bf16.msra.mxu0 %v6717
    %8807 = vmatpush.bf16.msra.mxu0 %v6716
    %8808 = vmatpush.bf16.msra.mxu0 %v6715
    %8809 = vmatpush.bf16.msra.mxu0 %v6714
    %8810 = vmatmul.bf16.gmra.mxu0 %v382
    %v8811 = vpop.f32.mrf.mxu0
    %v8812 = vadd.f32 %v8799, %v8811
    %v8813 = vpop.f32.mrf.mxu0
    %8814 = vdwg.mxu0
    %8815 = vmatpush.bf16.msra.mxu0 %v6729
    %8816 = vmatpush.bf16.msra.mxu0 %v6728
    %8817 = vmatpush.bf16.msra.mxu0 %v6727
    %8818 = vmatpush.bf16.msra.mxu0 %v6726
    %8819 = vmatpush.bf16.msra.mxu0 %v6725
    %8820 = vmatpush.bf16.msra.mxu0 %v6724
    %8821 = vmatpush.bf16.msra.mxu0 %v6723
    %8822 = vmatpush.bf16.msra.mxu0 %v6722
    %8823 = vmatmul.bf16.gmra.mxu0 %v383
    %v8824 = vpop.f32.mrf.mxu0
    %v8825 = vadd.f32 %v8812, %v8824
    %v8826 = vpop.f32.mrf.mxu0
    %8827 = vdwg.mxu0
    %8828 = vmatpush.bf16.msra.mxu0 %v6737
    %8829 = vmatpush.bf16.msra.mxu0 %v6736
    %8830 = vmatpush.bf16.msra.mxu0 %v6735
    %8831 = vmatpush.bf16.msra.mxu0 %v6734
    %8832 = vmatpush.bf16.msra.mxu0 %v6733
    %8833 = vmatpush.bf16.msra.mxu0 %v6732
    %8834 = vmatpush.bf16.msra.mxu0 %v6731
    %8835 = vmatpush.bf16.msra.mxu0 %v6730
    %8836 = vmatmul.bf16.gmra.mxu0 %v384
    %v8837 = vpop.f32.mrf.mxu0
    %v8838 = vadd.f32 %v8825, %v8837
    %v8839 = vpop.f32.mrf.mxu0
    %8840 = vdwg.mxu0
    %8841 = vmatpush.bf16.msra.mxu0 %v6745
    %8842 = vmatpush.bf16.msra.mxu0 %v6744
    %8843 = vmatpush.bf16.msra.mxu0 %v6743
    %8844 = vmatpush.bf16.msra.mxu0 %v6742
    %8845 = vmatpush.bf16.msra.mxu0 %v6741
    %8846 = vmatpush.bf16.msra.mxu0 %v6740
    %8847 = vmatpush.bf16.msra.mxu0 %v6739
    %8848 = vmatpush.bf16.msra.mxu0 %v6738
    %8849 = vmatmul.bf16.gmra.mxu0 %v385
    %v8850 = vpop.f32.mrf.mxu0
    %v8851 = vadd.f32 %v8838, %v8850
    %v8852 = vpop.f32.mrf.mxu0
    %8853 = vdwg.mxu0
    %8854 = vmatpush.bf16.msra.mxu0 %v6753
    %8855 = vmatpush.bf16.msra.mxu0 %v6752
    %8856 = vmatpush.bf16.msra.mxu0 %v6751
    %8857 = vmatpush.bf16.msra.mxu0 %v6750
    %8858 = vmatpush.bf16.msra.mxu0 %v6749
    %8859 = vmatpush.bf16.msra.mxu0 %v6748
    %8860 = vmatpush.bf16.msra.mxu0 %v6747
    %8861 = vmatpush.bf16.msra.mxu0 %v6746
    %8862 = vmatmul.bf16.gmra.mxu0 %v386
    %v8863 = vpop.f32.mrf.mxu0
    %v8864 = vadd.f32 %v8851, %v8863
    %v8865 = vpop.f32.mrf.mxu0
    %8866 = vdwg.mxu0
    %8867 = vmatpush.bf16.msra.mxu0 %v6761
    %8868 = vmatpush.bf16.msra.mxu0 %v6760
    %8869 = vmatpush.bf16.msra.mxu0 %v6759
    %8870 = vmatpush.bf16.msra.mxu0 %v6758
    %8871 = vmatpush.bf16.msra.mxu0 %v6757
    %8872 = vmatpush.bf16.msra.mxu0 %v6756
    %8873 = vmatpush.bf16.msra.mxu0 %v6755
    %8874 = vmatpush.bf16.msra.mxu0 %v6754
    %8875 = vmatmul.bf16.gmra.mxu0 %v387
    %v8876 = vpop.f32.mrf.mxu0
    %v8877 = vadd.f32 %v8864, %v8876
    %v8878 = vpop.f32.mrf.mxu0
    %8879 = vdwg.mxu0
    %8880 = vmatpush.bf16.msra.mxu0 %v6769
    %8881 = vmatpush.bf16.msra.mxu0 %v6768
    %8882 = vmatpush.bf16.msra.mxu0 %v6767
    %8883 = vmatpush.bf16.msra.mxu0 %v6766
    %8884 = vmatpush.bf16.msra.mxu0 %v6765
    %8885 = vmatpush.bf16.msra.mxu0 %v6764
    %8886 = vmatpush.bf16.msra.mxu0 %v6763
    %8887 = vmatpush.bf16.msra.mxu0 %v6762
    %8888 = vmatmul.bf16.gmra.mxu0 %v388
    %v8889 = vpop.f32.mrf.mxu0
    %v8890 = vadd.f32 %v8877, %v8889
    %v8891 = vpop.f32.mrf.mxu0
    %8892 = vdwg.mxu0
    %8893 = vmatpush.bf16.msra.mxu0 %v6777
    %8894 = vmatpush.bf16.msra.mxu0 %v6776
    %8895 = vmatpush.bf16.msra.mxu0 %v6775
    %8896 = vmatpush.bf16.msra.mxu0 %v6774
    %8897 = vmatpush.bf16.msra.mxu0 %v6773
    %8898 = vmatpush.bf16.msra.mxu0 %v6772
    %8899 = vmatpush.bf16.msra.mxu0 %v6771
    %8900 = vmatpush.bf16.msra.mxu0 %v6770
    %8901 = vmatmul.bf16.gmra.mxu0 %v389
    %v8902 = vpop.f32.mrf.mxu0
    %v8903 = vadd.f32 %v8890, %v8902
    %v8904 = vpop.f32.mrf.mxu0
    %8905 = vdwg.mxu0
    %8906 = vmatpush.bf16.msra.mxu0 %v6785
    %8907 = vmatpush.bf16.msra.mxu0 %v6784
    %8908 = vmatpush.bf16.msra.mxu0 %v6783
    %8909 = vmatpush.bf16.msra.mxu0 %v6782
    %8910 = vmatpush.bf16.msra.mxu0 %v6781
    %8911 = vmatpush.bf16.msra.mxu0 %v6780
    %8912 = vmatpush.bf16.msra.mxu0 %v6779
    %8913 = vmatpush.bf16.msra.mxu0 %v6778
    %8914 = vmatmul.bf16.gmra.mxu0 %v390
    %v8915 = vpop.f32.mrf.mxu0
    %v8916 = vadd.f32 %v8903, %v8915
    %v8917 = vpop.f32.mrf.mxu0
    %8918 = vdwg.mxu0
    %8919 = vmatpush.bf16.msra.mxu0 %v6793
    %8920 = vmatpush.bf16.msra.mxu0 %v6792
    %8921 = vmatpush.bf16.msra.mxu0 %v6791
    %8922 = vmatpush.bf16.msra.mxu0 %v6790
    %8923 = vmatpush.bf16.msra.mxu0 %v6789
    %8924 = vmatpush.bf16.msra.mxu0 %v6788
    %8925 = vmatpush.bf16.msra.mxu0 %v6787
    %8926 = vmatpush.bf16.msra.mxu0 %v6786
    %8927 = vmatmul.bf16.gmra.mxu0 %v391
    %v8928 = vpop.f32.mrf.mxu0
    %v8929 = vadd.f32 %v8916, %v8928
    %v8930 = vpop.f32.mrf.mxu0
    %8931 = vdwg.mxu0
    %8932 = vmatpush.bf16.msra.mxu0 %v6801
    %8933 = vmatpush.bf16.msra.mxu0 %v6800
    %8934 = vmatpush.bf16.msra.mxu0 %v6799
    %8935 = vmatpush.bf16.msra.mxu0 %v6798
    %8936 = vmatpush.bf16.msra.mxu0 %v6797
    %8937 = vmatpush.bf16.msra.mxu0 %v6796
    %8938 = vmatpush.bf16.msra.mxu0 %v6795
    %8939 = vmatpush.bf16.msra.mxu0 %v6794
    %8940 = vmatmul.bf16.gmra.mxu0 %v392
    %v8941 = vpop.f32.mrf.mxu0
    %v8942 = vadd.f32 %v8929, %v8941
    %v8943 = vpop.f32.mrf.mxu0
    %8944 = vdwg.mxu0
    %8945 = vmatpush.bf16.msra.mxu0 %v6809
    %8946 = vmatpush.bf16.msra.mxu0 %v6808
    %8947 = vmatpush.bf16.msra.mxu0 %v6807
    %8948 = vmatpush.bf16.msra.mxu0 %v6806
    %8949 = vmatpush.bf16.msra.mxu0 %v6805
    %8950 = vmatpush.bf16.msra.mxu0 %v6804
    %8951 = vmatpush.bf16.msra.mxu0 %v6803
    %8952 = vmatpush.bf16.msra.mxu0 %v6802
    %8953 = vmatmul.bf16.gmra.mxu0 %v393
    %v8954 = vpop.f32.mrf.mxu0
    %v8955 = vadd.f32 %v8942, %v8954
    %v8956 = vpop.f32.mrf.mxu0
    %8957 = vdwg.mxu0
    %8958 = vmatpush.bf16.msra.mxu0 %v6817
    %8959 = vmatpush.bf16.msra.mxu0 %v6816
    %8960 = vmatpush.bf16.msra.mxu0 %v6815
    %8961 = vmatpush.bf16.msra.mxu0 %v6814
    %8962 = vmatpush.bf16.msra.mxu0 %v6813
    %8963 = vmatpush.bf16.msra.mxu0 %v6812
    %8964 = vmatpush.bf16.msra.mxu0 %v6811
    %8965 = vmatpush.bf16.msra.mxu0 %v6810
    %8966 = vmatmul.bf16.gmra.mxu0 %v394
    %v8967 = vpop.f32.mrf.mxu0
    %v8968 = vadd.f32 %v8955, %v8967
    %v8969 = vpop.f32.mrf.mxu0
    %8970 = vdwg.mxu0
    %8971 = vmatpush.bf16.msra.mxu0 %v6825
    %8972 = vmatpush.bf16.msra.mxu0 %v6824
    %8973 = vmatpush.bf16.msra.mxu0 %v6823
    %8974 = vmatpush.bf16.msra.mxu0 %v6822
    %8975 = vmatpush.bf16.msra.mxu0 %v6821
    %8976 = vmatpush.bf16.msra.mxu0 %v6820
    %8977 = vmatpush.bf16.msra.mxu0 %v6819
    %8978 = vmatpush.bf16.msra.mxu0 %v6818
    %8979 = vmatmul.bf16.gmra.mxu0 %v395
    %v8980 = vpop.f32.mrf.mxu0
    %v8981 = vadd.f32 %v8968, %v8980
    %v8982 = vpop.f32.mrf.mxu0
    %8983 = vdwg.mxu0
    %8984 = vmatpush.bf16.msra.mxu0 %v6833
    %8985 = vmatpush.bf16.msra.mxu0 %v6832
    %8986 = vmatpush.bf16.msra.mxu0 %v6831
    %8987 = vmatpush.bf16.msra.mxu0 %v6830
    %8988 = vmatpush.bf16.msra.mxu0 %v6829
    %8989 = vmatpush.bf16.msra.mxu0 %v6828
    %8990 = vmatpush.bf16.msra.mxu0 %v6827
    %8991 = vmatpush.bf16.msra.mxu0 %v6826
    %8992 = vmatmul.bf16.gmra.mxu0 %v396
    %v8993 = vpop.f32.mrf.mxu0
    %v8994 = vadd.f32 %v8981, %v8993
    %v8995 = vpop.f32.mrf.mxu0
    %8996 = vdwg.mxu0
    %8997 = vmatpush.bf16.msra.mxu0 %v6841
    %8998 = vmatpush.bf16.msra.mxu0 %v6840
    %8999 = vmatpush.bf16.msra.mxu0 %v6839
    %9000 = vmatpush.bf16.msra.mxu0 %v6838
    %9001 = vmatpush.bf16.msra.mxu0 %v6837
    %9002 = vmatpush.bf16.msra.mxu0 %v6836
    %9003 = vmatpush.bf16.msra.mxu0 %v6835
    %9004 = vmatpush.bf16.msra.mxu0 %v6834
    %9005 = vmatmul.bf16.gmra.mxu0 %v397
    %v9006 = vpop.f32.mrf.mxu0
    %v9007 = vadd.f32 %v8994, %v9006
    %v9008 = vpop.f32.mrf.mxu0
    %9009 = vdwg.mxu0
    %9010 = vmatpush.bf16.msra.mxu0 %v6849
    %9011 = vmatpush.bf16.msra.mxu0 %v6848
    %9012 = vmatpush.bf16.msra.mxu0 %v6847
    %9013 = vmatpush.bf16.msra.mxu0 %v6846
    %9014 = vmatpush.bf16.msra.mxu0 %v6845
    %9015 = vmatpush.bf16.msra.mxu0 %v6844
    %9016 = vmatpush.bf16.msra.mxu0 %v6843
    %9017 = vmatpush.bf16.msra.mxu0 %v6842
    %9018 = vmatmul.bf16.gmra.mxu0 %v398
    %v9019 = vpop.f32.mrf.mxu0
    %v9020 = vadd.f32 %v9007, %v9019
    %v9021 = vpop.f32.mrf.mxu0
    %9022 = vdwg.mxu0
    %9023 = vmatpush.bf16.msra.mxu0 %v6857
    %9024 = vmatpush.bf16.msra.mxu0 %v6856
    %9025 = vmatpush.bf16.msra.mxu0 %v6855
    %9026 = vmatpush.bf16.msra.mxu0 %v6854
    %9027 = vmatpush.bf16.msra.mxu0 %v6853
    %9028 = vmatpush.bf16.msra.mxu0 %v6852
    %9029 = vmatpush.bf16.msra.mxu0 %v6851
    %9030 = vmatpush.bf16.msra.mxu0 %v6850
    %9031 = vmatmul.bf16.gmra.mxu0 %v399
    %v9032 = vpop.f32.mrf.mxu0
    %v9033 = vadd.f32 %v9020, %v9032
    %v9034 = vpop.f32.mrf.mxu0
    %9035 = vdwg.mxu0
    %9036 = vmatpush.bf16.msra.mxu0 %v6865
    %9037 = vmatpush.bf16.msra.mxu0 %v6864
    %9038 = vmatpush.bf16.msra.mxu0 %v6863
    %9039 = vmatpush.bf16.msra.mxu0 %v6862
    %9040 = vmatpush.bf16.msra.mxu0 %v6861
    %9041 = vmatpush.bf16.msra.mxu0 %v6860
    %9042 = vmatpush.bf16.msra.mxu0 %v6859
    %9043 = vmatpush.bf16.msra.mxu0 %v6858
    %9044 = vmatmul.bf16.gmra.mxu0 %v400
    %v9045 = vpop.f32.mrf.mxu0
    %v9046 = vadd.f32 %v9033, %v9045
    %v9047 = vpop.f32.mrf.mxu0
    %9048 = vdwg.mxu0
    %9049 = vmatpush.bf16.msra.mxu0 %v6873
    %9050 = vmatpush.bf16.msra.mxu0 %v6872
    %9051 = vmatpush.bf16.msra.mxu0 %v6871
    %9052 = vmatpush.bf16.msra.mxu0 %v6870
    %9053 = vmatpush.bf16.msra.mxu0 %v6869
    %9054 = vmatpush.bf16.msra.mxu0 %v6868
    %9055 = vmatpush.bf16.msra.mxu0 %v6867
    %9056 = vmatpush.bf16.msra.mxu0 %v6866
    %9057 = vmatmul.bf16.gmra.mxu0 %v401
    %v9058 = vpop.f32.mrf.mxu0
    %v9059 = vadd.f32 %v9046, %v9058
    %v9060 = vpop.f32.mrf.mxu0
    %9061 = vdwg.mxu0
    %9062 = vmatpush.bf16.msra.mxu0 %v6881
    %9063 = vmatpush.bf16.msra.mxu0 %v6880
    %9064 = vmatpush.bf16.msra.mxu0 %v6879
    %9065 = vmatpush.bf16.msra.mxu0 %v6878
    %9066 = vmatpush.bf16.msra.mxu0 %v6877
    %9067 = vmatpush.bf16.msra.mxu0 %v6876
    %9068 = vmatpush.bf16.msra.mxu0 %v6875
    %9069 = vmatpush.bf16.msra.mxu0 %v6874
    %9070 = vmatmul.bf16.gmra.mxu0 %v402
    %v9071 = vpop.f32.mrf.mxu0
    %v9072 = vadd.f32 %v9059, %v9071
    %v9073 = vpop.f32.mrf.mxu0
    %9074 = vdwg.mxu0
    %9075 = vmatpush.bf16.msra.mxu0 %v6889
    %9076 = vmatpush.bf16.msra.mxu0 %v6888
    %9077 = vmatpush.bf16.msra.mxu0 %v6887
    %9078 = vmatpush.bf16.msra.mxu0 %v6886
    %9079 = vmatpush.bf16.msra.mxu0 %v6885
    %9080 = vmatpush.bf16.msra.mxu0 %v6884
    %9081 = vmatpush.bf16.msra.mxu0 %v6883
    %9082 = vmatpush.bf16.msra.mxu0 %v6882
    %9083 = vmatmul.bf16.gmra.mxu0 %v403
    %v9084 = vpop.f32.mrf.mxu0
    %v9085 = vadd.f32 %v9072, %v9084
    %v9086 = vpop.f32.mrf.mxu0
    %9087 = vdwg.mxu0
    %9088 = vmatpush.bf16.msra.mxu0 %v6897
    %9089 = vmatpush.bf16.msra.mxu0 %v6896
    %9090 = vmatpush.bf16.msra.mxu0 %v6895
    %9091 = vmatpush.bf16.msra.mxu0 %v6894
    %9092 = vmatpush.bf16.msra.mxu0 %v6893
    %9093 = vmatpush.bf16.msra.mxu0 %v6892
    %9094 = vmatpush.bf16.msra.mxu0 %v6891
    %9095 = vmatpush.bf16.msra.mxu0 %v6890
    %9096 = vmatmul.bf16.gmra.mxu0 %v404
    %v9097 = vpop.f32.mrf.mxu0
    %v9098 = vadd.f32 %v9085, %v9097
    %v9099 = vpop.f32.mrf.mxu0
    %9100 = vdwg.mxu0
    %9101 = vmatpush.bf16.msra.mxu0 %v6905
    %9102 = vmatpush.bf16.msra.mxu0 %v6904
    %9103 = vmatpush.bf16.msra.mxu0 %v6903
    %9104 = vmatpush.bf16.msra.mxu0 %v6902
    %9105 = vmatpush.bf16.msra.mxu0 %v6901
    %9106 = vmatpush.bf16.msra.mxu0 %v6900
    %9107 = vmatpush.bf16.msra.mxu0 %v6899
    %9108 = vmatpush.bf16.msra.mxu0 %v6898
    %9109 = vmatmul.bf16.gmra.mxu0 %v405
    %v9110 = vpop.f32.mrf.mxu0
    %v9111 = vadd.f32 %v9098, %v9110
    %v9112 = vpop.f32.mrf.mxu0
    %9113 = vdwg.mxu0
    %9114 = vmatpush.bf16.msra.mxu0 %v6913
    %9115 = vmatpush.bf16.msra.mxu0 %v6912
    %9116 = vmatpush.bf16.msra.mxu0 %v6911
    %9117 = vmatpush.bf16.msra.mxu0 %v6910
    %9118 = vmatpush.bf16.msra.mxu0 %v6909
    %9119 = vmatpush.bf16.msra.mxu0 %v6908
    %9120 = vmatpush.bf16.msra.mxu0 %v6907
    %9121 = vmatpush.bf16.msra.mxu0 %v6906
    %9122 = vmatmul.bf16.gmra.mxu0 %v406
    %v9123 = vpop.f32.mrf.mxu0
    %v9124 = vadd.f32 %v9111, %v9123
    %v9125 = vpop.f32.mrf.mxu0
    %9126 = vdwg.mxu0
    %9127 = vmatpush.bf16.msra.mxu0 %v6921
    %9128 = vmatpush.bf16.msra.mxu0 %v6920
    %9129 = vmatpush.bf16.msra.mxu0 %v6919
    %9130 = vmatpush.bf16.msra.mxu0 %v6918
    %9131 = vmatpush.bf16.msra.mxu0 %v6917
    %9132 = vmatpush.bf16.msra.mxu0 %v6916
    %9133 = vmatpush.bf16.msra.mxu0 %v6915
    %9134 = vmatpush.bf16.msra.mxu0 %v6914
    %9135 = vmatmul.bf16.gmra.mxu0 %v407
    %v9136 = vpop.f32.mrf.mxu0
    %v9137 = vadd.f32 %v9124, %v9136
    %v9138 = vpop.f32.mrf.mxu0
    %9139 = vdwg.mxu0
    %9140 = vmatpush.bf16.msra.mxu0 %v6929
    %9141 = vmatpush.bf16.msra.mxu0 %v6928
    %9142 = vmatpush.bf16.msra.mxu0 %v6927
    %9143 = vmatpush.bf16.msra.mxu0 %v6926
    %9144 = vmatpush.bf16.msra.mxu0 %v6925
    %9145 = vmatpush.bf16.msra.mxu0 %v6924
    %9146 = vmatpush.bf16.msra.mxu0 %v6923
    %9147 = vmatpush.bf16.msra.mxu0 %v6922
    %9148 = vmatmul.bf16.gmra.mxu0 %v408
    %v9149 = vpop.f32.mrf.mxu0
    %v9150 = vadd.f32 %v9137, %v9149
    %v9151 = vpop.f32.mrf.mxu0
    %9152 = vdwg.mxu0
    %9153 = vmatpush.bf16.msra.mxu0 %v6937
    %9154 = vmatpush.bf16.msra.mxu0 %v6936
    %9155 = vmatpush.bf16.msra.mxu0 %v6935
    %9156 = vmatpush.bf16.msra.mxu0 %v6934
    %9157 = vmatpush.bf16.msra.mxu0 %v6933
    %9158 = vmatpush.bf16.msra.mxu0 %v6932
    %9159 = vmatpush.bf16.msra.mxu0 %v6931
    %9160 = vmatpush.bf16.msra.mxu0 %v6930
    %9161 = vmatmul.bf16.gmra.mxu0 %v409
    %v9162 = vpop.f32.mrf.mxu0
    %v9163 = vadd.f32 %v9150, %v9162
    %v9164 = vpop.f32.mrf.mxu0
    %9165 = vdwg.mxu0
    %9166 = vmatpush.bf16.msra.mxu0 %v6945
    %9167 = vmatpush.bf16.msra.mxu0 %v6944
    %9168 = vmatpush.bf16.msra.mxu0 %v6943
    %9169 = vmatpush.bf16.msra.mxu0 %v6942
    %9170 = vmatpush.bf16.msra.mxu0 %v6941
    %9171 = vmatpush.bf16.msra.mxu0 %v6940
    %9172 = vmatpush.bf16.msra.mxu0 %v6939
    %9173 = vmatpush.bf16.msra.mxu0 %v6938
    %9174 = vmatmul.bf16.gmra.mxu0 %v410
    %v9175 = vpop.f32.mrf.mxu0
    %v9176 = vadd.f32 %v9163, %v9175
    %v9177 = vpop.f32.mrf.mxu0
    %9178 = vdwg.mxu0
    %9179 = vmatpush.bf16.msra.mxu0 %v6953
    %9180 = vmatpush.bf16.msra.mxu0 %v6952
    %9181 = vmatpush.bf16.msra.mxu0 %v6951
    %9182 = vmatpush.bf16.msra.mxu0 %v6950
    %9183 = vmatpush.bf16.msra.mxu0 %v6949
    %9184 = vmatpush.bf16.msra.mxu0 %v6948
    %9185 = vmatpush.bf16.msra.mxu0 %v6947
    %9186 = vmatpush.bf16.msra.mxu0 %v6946
    %9187 = vmatmul.bf16.gmra.mxu0 %v411
    %v9188 = vpop.f32.mrf.mxu0
    %v9189 = vadd.f32 %v9176, %v9188
    %v9190 = vpop.f32.mrf.mxu0
    %9191 = vdwg.mxu0
    %9192 = vmatpush.bf16.msra.mxu0 %v6961
    %9193 = vmatpush.bf16.msra.mxu0 %v6960
    %9194 = vmatpush.bf16.msra.mxu0 %v6959
    %9195 = vmatpush.bf16.msra.mxu0 %v6958
    %9196 = vmatpush.bf16.msra.mxu0 %v6957
    %9197 = vmatpush.bf16.msra.mxu0 %v6956
    %9198 = vmatpush.bf16.msra.mxu0 %v6955
    %9199 = vmatpush.bf16.msra.mxu0 %v6954
    %9200 = vmatmul.bf16.gmra.mxu0 %v412
    %v9201 = vpop.f32.mrf.mxu0
    %v9202 = vadd.f32 %v9189, %v9201
    %v9203 = vpop.f32.mrf.mxu0
    %9204 = vdwg.mxu0
    %9205 = vmatpush.bf16.msra.mxu0 %v6969
    %9206 = vmatpush.bf16.msra.mxu0 %v6968
    %9207 = vmatpush.bf16.msra.mxu0 %v6967
    %9208 = vmatpush.bf16.msra.mxu0 %v6966
    %9209 = vmatpush.bf16.msra.mxu0 %v6965
    %9210 = vmatpush.bf16.msra.mxu0 %v6964
    %9211 = vmatpush.bf16.msra.mxu0 %v6963
    %9212 = vmatpush.bf16.msra.mxu0 %v6962
    %9213 = vmatmul.bf16.gmra.mxu0 %v413
    %v9214 = vpop.f32.mrf.mxu0
    %v9215 = vadd.f32 %v9202, %v9214
    %v9216 = vpop.f32.mrf.mxu0
    %9217 = vdwg.mxu0
    %9218 = vmatpush.bf16.msra.mxu0 %v6977
    %9219 = vmatpush.bf16.msra.mxu0 %v6976
    %9220 = vmatpush.bf16.msra.mxu0 %v6975
    %9221 = vmatpush.bf16.msra.mxu0 %v6974
    %9222 = vmatpush.bf16.msra.mxu0 %v6973
    %9223 = vmatpush.bf16.msra.mxu0 %v6972
    %9224 = vmatpush.bf16.msra.mxu0 %v6971
    %9225 = vmatpush.bf16.msra.mxu0 %v6970
    %9226 = vmatmul.bf16.gmra.mxu0 %v414
    %v9227 = vpop.f32.mrf.mxu0
    %v9228 = vadd.f32 %v9215, %v9227
    %v9229 = vpop.f32.mrf.mxu0
    %9230 = vdwg.mxu0
    %9231 = vmatpush.bf16.msra.mxu0 %v6985
    %9232 = vmatpush.bf16.msra.mxu0 %v6984
    %9233 = vmatpush.bf16.msra.mxu0 %v6983
    %9234 = vmatpush.bf16.msra.mxu0 %v6982
    %9235 = vmatpush.bf16.msra.mxu0 %v6981
    %9236 = vmatpush.bf16.msra.mxu0 %v6980
    %9237 = vmatpush.bf16.msra.mxu0 %v6979
    %9238 = vmatpush.bf16.msra.mxu0 %v6978
    %9239 = vmatmul.bf16.gmra.mxu0 %v415
    %v9240 = vpop.f32.mrf.mxu0
    %v9241 = vadd.f32 %v9228, %v9240
    %v9242 = vpop.f32.mrf.mxu0
    %9243 = vdwg.mxu0
    %9244 = vmatpush.bf16.msra.mxu0 %v6993
    %9245 = vmatpush.bf16.msra.mxu0 %v6992
    %9246 = vmatpush.bf16.msra.mxu0 %v6991
    %9247 = vmatpush.bf16.msra.mxu0 %v6990
    %9248 = vmatpush.bf16.msra.mxu0 %v6989
    %9249 = vmatpush.bf16.msra.mxu0 %v6988
    %9250 = vmatpush.bf16.msra.mxu0 %v6987
    %9251 = vmatpush.bf16.msra.mxu0 %v6986
    %9252 = vmatmul.bf16.gmra.mxu0 %v416
    %v9253 = vpop.f32.mrf.mxu0
    %v9254 = vadd.f32 %v9241, %v9253
    %v9255 = vpop.f32.mrf.mxu0
    %9256 = vdwg.mxu0
    %9257 = vmatpush.bf16.msra.mxu0 %v7001
    %9258 = vmatpush.bf16.msra.mxu0 %v7000
    %9259 = vmatpush.bf16.msra.mxu0 %v6999
    %9260 = vmatpush.bf16.msra.mxu0 %v6998
    %9261 = vmatpush.bf16.msra.mxu0 %v6997
    %9262 = vmatpush.bf16.msra.mxu0 %v6996
    %9263 = vmatpush.bf16.msra.mxu0 %v6995
    %9264 = vmatpush.bf16.msra.mxu0 %v6994
    %9265 = vmatmul.bf16.gmra.mxu0 %v417
    %v9266 = vpop.f32.mrf.mxu0
    %v9267 = vadd.f32 %v9254, %v9266
    %v9268 = vpop.f32.mrf.mxu0
    %9269 = vdwg.mxu0
    %9270 = vmatpush.bf16.msra.mxu0 %v7009
    %9271 = vmatpush.bf16.msra.mxu0 %v7008
    %9272 = vmatpush.bf16.msra.mxu0 %v7007
    %9273 = vmatpush.bf16.msra.mxu0 %v7006
    %9274 = vmatpush.bf16.msra.mxu0 %v7005
    %9275 = vmatpush.bf16.msra.mxu0 %v7004
    %9276 = vmatpush.bf16.msra.mxu0 %v7003
    %9277 = vmatpush.bf16.msra.mxu0 %v7002
    %9278 = vmatmul.bf16.gmra.mxu0 %v418
    %v9279 = vpop.f32.mrf.mxu0
    %v9280 = vadd.f32 %v9267, %v9279
    %v9281 = vpop.f32.mrf.mxu0
    %9282 = vdwg.mxu0
    %9283 = vmatpush.bf16.msra.mxu0 %v7017
    %9284 = vmatpush.bf16.msra.mxu0 %v7016
    %9285 = vmatpush.bf16.msra.mxu0 %v7015
    %9286 = vmatpush.bf16.msra.mxu0 %v7014
    %9287 = vmatpush.bf16.msra.mxu0 %v7013
    %9288 = vmatpush.bf16.msra.mxu0 %v7012
    %9289 = vmatpush.bf16.msra.mxu0 %v7011
    %9290 = vmatpush.bf16.msra.mxu0 %v7010
    %9291 = vmatmul.bf16.gmra.mxu0 %v419
    %v9292 = vpop.f32.mrf.mxu0
    %v9293 = vadd.f32 %v9280, %v9292
    %v9294 = vpop.f32.mrf.mxu0
    %9295 = vdwg.mxu0
    %9296 = vmatpush.bf16.msra.mxu0 %v7025
    %9297 = vmatpush.bf16.msra.mxu0 %v7024
    %9298 = vmatpush.bf16.msra.mxu0 %v7023
    %9299 = vmatpush.bf16.msra.mxu0 %v7022
    %9300 = vmatpush.bf16.msra.mxu0 %v7021
    %9301 = vmatpush.bf16.msra.mxu0 %v7020
    %9302 = vmatpush.bf16.msra.mxu0 %v7019
    %9303 = vmatpush.bf16.msra.mxu0 %v7018
    %9304 = vmatmul.bf16.gmra.mxu0 %v420
    %v9305 = vpop.f32.mrf.mxu0
    %v9306 = vadd.f32 %v9293, %v9305
    %v9307 = vpop.f32.mrf.mxu0
    %9308 = vdwg.mxu0
    %9309 = vmatpush.bf16.msra.mxu0 %v7033
    %9310 = vmatpush.bf16.msra.mxu0 %v7032
    %9311 = vmatpush.bf16.msra.mxu0 %v7031
    %9312 = vmatpush.bf16.msra.mxu0 %v7030
    %9313 = vmatpush.bf16.msra.mxu0 %v7029
    %9314 = vmatpush.bf16.msra.mxu0 %v7028
    %9315 = vmatpush.bf16.msra.mxu0 %v7027
    %9316 = vmatpush.bf16.msra.mxu0 %v7026
    %9317 = vmatmul.bf16.gmra.mxu0 %v421
    %v9318 = vpop.f32.mrf.mxu0
    %v9319 = vadd.f32 %v9306, %v9318
    %v9320 = vpop.f32.mrf.mxu0
    %9321 = vdwg.mxu0
    %9322 = vmatpush.bf16.msra.mxu0 %v7041
    %9323 = vmatpush.bf16.msra.mxu0 %v7040
    %9324 = vmatpush.bf16.msra.mxu0 %v7039
    %9325 = vmatpush.bf16.msra.mxu0 %v7038
    %9326 = vmatpush.bf16.msra.mxu0 %v7037
    %9327 = vmatpush.bf16.msra.mxu0 %v7036
    %9328 = vmatpush.bf16.msra.mxu0 %v7035
    %9329 = vmatpush.bf16.msra.mxu0 %v7034
    %9330 = vmatmul.bf16.gmra.mxu0 %v422
    %v9331 = vpop.f32.mrf.mxu0
    %v9332 = vadd.f32 %v9319, %v9331
    %v9333 = vpop.f32.mrf.mxu0
    %9334 = vdwg.mxu0
    %9335 = vmatpush.bf16.msra.mxu0 %v7049
    %9336 = vmatpush.bf16.msra.mxu0 %v7048
    %9337 = vmatpush.bf16.msra.mxu0 %v7047
    %9338 = vmatpush.bf16.msra.mxu0 %v7046
    %9339 = vmatpush.bf16.msra.mxu0 %v7045
    %9340 = vmatpush.bf16.msra.mxu0 %v7044
    %9341 = vmatpush.bf16.msra.mxu0 %v7043
    %9342 = vmatpush.bf16.msra.mxu0 %v7042
    %9343 = vmatmul.bf16.gmra.mxu0 %v423
    %v9344 = vpop.f32.mrf.mxu0
    %v9345 = vadd.f32 %v9332, %v9344
    %v9346 = vpop.f32.mrf.mxu0
    %9347 = vdwg.mxu0
    %9348 = vmatpush.bf16.msra.mxu0 %v7057
    %9349 = vmatpush.bf16.msra.mxu0 %v7056
    %9350 = vmatpush.bf16.msra.mxu0 %v7055
    %9351 = vmatpush.bf16.msra.mxu0 %v7054
    %9352 = vmatpush.bf16.msra.mxu0 %v7053
    %9353 = vmatpush.bf16.msra.mxu0 %v7052
    %9354 = vmatpush.bf16.msra.mxu0 %v7051
    %9355 = vmatpush.bf16.msra.mxu0 %v7050
    %9356 = vmatmul.bf16.gmra.mxu0 %v424
    %v9357 = vpop.f32.mrf.mxu0
    %v9358 = vadd.f32 %v9345, %v9357
    %v9359 = vpop.f32.mrf.mxu0
    %9360 = vdwg.mxu0
    %9361 = vmatpush.bf16.msra.mxu0 %v7065
    %9362 = vmatpush.bf16.msra.mxu0 %v7064
    %9363 = vmatpush.bf16.msra.mxu0 %v7063
    %9364 = vmatpush.bf16.msra.mxu0 %v7062
    %9365 = vmatpush.bf16.msra.mxu0 %v7061
    %9366 = vmatpush.bf16.msra.mxu0 %v7060
    %9367 = vmatpush.bf16.msra.mxu0 %v7059
    %9368 = vmatpush.bf16.msra.mxu0 %v7058
    %9369 = vmatmul.bf16.gmra.mxu0 %v425
    %v9370 = vpop.f32.mrf.mxu0
    %v9371 = vadd.f32 %v9358, %v9370
    %v9372 = vpop.f32.mrf.mxu0
    %9373 = vdwg.mxu0
    %9374 = vmatpush.bf16.msra.mxu0 %v7073
    %9375 = vmatpush.bf16.msra.mxu0 %v7072
    %9376 = vmatpush.bf16.msra.mxu0 %v7071
    %9377 = vmatpush.bf16.msra.mxu0 %v7070
    %9378 = vmatpush.bf16.msra.mxu0 %v7069
    %9379 = vmatpush.bf16.msra.mxu0 %v7068
    %9380 = vmatpush.bf16.msra.mxu0 %v7067
    %9381 = vmatpush.bf16.msra.mxu0 %v7066
    %9382 = vmatmul.bf16.gmra.mxu0 %v426
    %v9383 = vpop.f32.mrf.mxu0
    %v9384 = vadd.f32 %v9371, %v9383
    %v9385 = vpop.f32.mrf.mxu0
    %9386 = vdwg.mxu0
    %9387 = vmatpush.bf16.msra.mxu0 %v7081
    %9388 = vmatpush.bf16.msra.mxu0 %v7080
    %9389 = vmatpush.bf16.msra.mxu0 %v7079
    %9390 = vmatpush.bf16.msra.mxu0 %v7078
    %9391 = vmatpush.bf16.msra.mxu0 %v7077
    %9392 = vmatpush.bf16.msra.mxu0 %v7076
    %9393 = vmatpush.bf16.msra.mxu0 %v7075
    %9394 = vmatpush.bf16.msra.mxu0 %v7074
    %9395 = vmatmul.bf16.gmra.mxu0 %v427
    %v9396 = vpop.f32.mrf.mxu0
    %v9397 = vadd.f32 %v9384, %v9396
    %v9398 = vpop.f32.mrf.mxu0
    %9399 = vdwg.mxu0
    %9400 = vmatpush.bf16.msra.mxu0 %v7089
    %9401 = vmatpush.bf16.msra.mxu0 %v7088
    %9402 = vmatpush.bf16.msra.mxu0 %v7087
    %9403 = vmatpush.bf16.msra.mxu0 %v7086
    %9404 = vmatpush.bf16.msra.mxu0 %v7085
    %9405 = vmatpush.bf16.msra.mxu0 %v7084
    %9406 = vmatpush.bf16.msra.mxu0 %v7083
    %9407 = vmatpush.bf16.msra.mxu0 %v7082
    %9408 = vmatmul.bf16.gmra.mxu0 %v428
    %v9409 = vpop.f32.mrf.mxu0
    %v9410 = vadd.f32 %v9397, %v9409
    %v9411 = vpop.f32.mrf.mxu0
    %9412 = vdwg.mxu0
    %9413 = vmatpush.bf16.msra.mxu0 %v7097
    %9414 = vmatpush.bf16.msra.mxu0 %v7096
    %9415 = vmatpush.bf16.msra.mxu0 %v7095
    %9416 = vmatpush.bf16.msra.mxu0 %v7094
    %9417 = vmatpush.bf16.msra.mxu0 %v7093
    %9418 = vmatpush.bf16.msra.mxu0 %v7092
    %9419 = vmatpush.bf16.msra.mxu0 %v7091
    %9420 = vmatpush.bf16.msra.mxu0 %v7090
    %9421 = vmatmul.bf16.gmra.mxu0 %v429
    %v9422 = vpop.f32.mrf.mxu0
    %v9423 = vadd.f32 %v9410, %v9422
    %v9424 = vpop.f32.mrf.mxu0
    %9425 = vdwg.mxu0
    %9426 = vmatpush.bf16.msra.mxu0 %v7105
    %9427 = vmatpush.bf16.msra.mxu0 %v7104
    %9428 = vmatpush.bf16.msra.mxu0 %v7103
    %9429 = vmatpush.bf16.msra.mxu0 %v7102
    %9430 = vmatpush.bf16.msra.mxu0 %v7101
    %9431 = vmatpush.bf16.msra.mxu0 %v7100
    %9432 = vmatpush.bf16.msra.mxu0 %v7099
    %9433 = vmatpush.bf16.msra.mxu0 %v7098
    %9434 = vmatmul.bf16.gmra.mxu0 %v430
    %v9435 = vpop.f32.mrf.mxu0
    %v9436 = vadd.f32 %v9423, %v9435
    %v9437 = vpop.f32.mrf.mxu0
    %9438 = vdwg.mxu0
    %9439 = vmatpush.bf16.msra.mxu0 %v7113
    %9440 = vmatpush.bf16.msra.mxu0 %v7112
    %9441 = vmatpush.bf16.msra.mxu0 %v7111
    %9442 = vmatpush.bf16.msra.mxu0 %v7110
    %9443 = vmatpush.bf16.msra.mxu0 %v7109
    %9444 = vmatpush.bf16.msra.mxu0 %v7108
    %9445 = vmatpush.bf16.msra.mxu0 %v7107
    %9446 = vmatpush.bf16.msra.mxu0 %v7106
    %9447 = vmatmul.bf16.gmra.mxu0 %v431
    %v9448 = vpop.f32.mrf.mxu0
    %v9449 = vadd.f32 %v9436, %v9448
    %v9450 = vpop.f32.mrf.mxu0
    %9451 = vdwg.mxu0
    %9452 = vmatpush.bf16.msra.mxu0 %v7121
    %9453 = vmatpush.bf16.msra.mxu0 %v7120
    %9454 = vmatpush.bf16.msra.mxu0 %v7119
    %9455 = vmatpush.bf16.msra.mxu0 %v7118
    %9456 = vmatpush.bf16.msra.mxu0 %v7117
    %9457 = vmatpush.bf16.msra.mxu0 %v7116
    %9458 = vmatpush.bf16.msra.mxu0 %v7115
    %9459 = vmatpush.bf16.msra.mxu0 %v7114
    %9460 = vmatmul.bf16.gmra.mxu0 %v432
    %v9461 = vpop.f32.mrf.mxu0
    %v9462 = vadd.f32 %v9449, %v9461
    %v9463 = vpop.f32.mrf.mxu0
    %9464 = vdwg.mxu0
    %9465 = vmatpush.bf16.msra.mxu0 %v7129
    %9466 = vmatpush.bf16.msra.mxu0 %v7128
    %9467 = vmatpush.bf16.msra.mxu0 %v7127
    %9468 = vmatpush.bf16.msra.mxu0 %v7126
    %9469 = vmatpush.bf16.msra.mxu0 %v7125
    %9470 = vmatpush.bf16.msra.mxu0 %v7124
    %9471 = vmatpush.bf16.msra.mxu0 %v7123
    %9472 = vmatpush.bf16.msra.mxu0 %v7122
    %9473 = vmatmul.bf16.gmra.mxu0 %v433
    %v9474 = vpop.f32.mrf.mxu0
    %v9475 = vadd.f32 %v9462, %v9474
    %v9476 = vpop.f32.mrf.mxu0
    %9477 = vdwg.mxu0
    %9478 = vmatpush.bf16.msra.mxu0 %v7137
    %9479 = vmatpush.bf16.msra.mxu0 %v7136
    %9480 = vmatpush.bf16.msra.mxu0 %v7135
    %9481 = vmatpush.bf16.msra.mxu0 %v7134
    %9482 = vmatpush.bf16.msra.mxu0 %v7133
    %9483 = vmatpush.bf16.msra.mxu0 %v7132
    %9484 = vmatpush.bf16.msra.mxu0 %v7131
    %9485 = vmatpush.bf16.msra.mxu0 %v7130
    %9486 = vmatmul.bf16.gmra.mxu0 %v434
    %v9487 = vpop.f32.mrf.mxu0
    %v9488 = vadd.f32 %v9475, %v9487
    %v9489 = vpop.f32.mrf.mxu0
    %9490 = vdwg.mxu0
    %9491 = vmatpush.bf16.msra.mxu0 %v7145
    %9492 = vmatpush.bf16.msra.mxu0 %v7144
    %9493 = vmatpush.bf16.msra.mxu0 %v7143
    %9494 = vmatpush.bf16.msra.mxu0 %v7142
    %9495 = vmatpush.bf16.msra.mxu0 %v7141
    %9496 = vmatpush.bf16.msra.mxu0 %v7140
    %9497 = vmatpush.bf16.msra.mxu0 %v7139
    %9498 = vmatpush.bf16.msra.mxu0 %v7138
    %9499 = vmatmul.bf16.gmra.mxu0 %v435
    %v9500 = vpop.f32.mrf.mxu0
    %v9501 = vadd.f32 %v9488, %v9500
    %v9502 = vpop.f32.mrf.mxu0
    %9503 = vdwg.mxu0
    %9504 = vmatpush.bf16.msra.mxu0 %v7153
    %9505 = vmatpush.bf16.msra.mxu0 %v7152
    %9506 = vmatpush.bf16.msra.mxu0 %v7151
    %9507 = vmatpush.bf16.msra.mxu0 %v7150
    %9508 = vmatpush.bf16.msra.mxu0 %v7149
    %9509 = vmatpush.bf16.msra.mxu0 %v7148
    %9510 = vmatpush.bf16.msra.mxu0 %v7147
    %9511 = vmatpush.bf16.msra.mxu0 %v7146
    %9512 = vmatmul.bf16.gmra.mxu0 %v436
    %v9513 = vpop.f32.mrf.mxu0
    %v9514 = vadd.f32 %v9501, %v9513
    %v9515 = vpop.f32.mrf.mxu0
    %9516 = vdwg.mxu0
    %9517 = vmatpush.bf16.msra.mxu0 %v7161
    %9518 = vmatpush.bf16.msra.mxu0 %v7160
    %9519 = vmatpush.bf16.msra.mxu0 %v7159
    %9520 = vmatpush.bf16.msra.mxu0 %v7158
    %9521 = vmatpush.bf16.msra.mxu0 %v7157
    %9522 = vmatpush.bf16.msra.mxu0 %v7156
    %9523 = vmatpush.bf16.msra.mxu0 %v7155
    %9524 = vmatpush.bf16.msra.mxu0 %v7154
    %9525 = vmatmul.bf16.gmra.mxu0 %v437
    %v9526 = vpop.f32.mrf.mxu0
    %v9527 = vadd.f32 %v9514, %v9526
    %v9528 = vpop.f32.mrf.mxu0
    %9529 = vdwg.mxu0
    %9530 = vmatpush.bf16.msra.mxu0 %v7169
    %9531 = vmatpush.bf16.msra.mxu0 %v7168
    %9532 = vmatpush.bf16.msra.mxu0 %v7167
    %9533 = vmatpush.bf16.msra.mxu0 %v7166
    %9534 = vmatpush.bf16.msra.mxu0 %v7165
    %9535 = vmatpush.bf16.msra.mxu0 %v7164
    %9536 = vmatpush.bf16.msra.mxu0 %v7163
    %9537 = vmatpush.bf16.msra.mxu0 %v7162
    %9538 = vmatmul.bf16.gmra.mxu0 %v438
    %v9539 = vpop.f32.mrf.mxu0
    %v9540 = vadd.f32 %v9527, %v9539
    %v9541 = vpop.f32.mrf.mxu0
    %9542 = vdwg.mxu0
    %9543 = vmatpush.bf16.msra.mxu0 %v7177
    %9544 = vmatpush.bf16.msra.mxu0 %v7176
    %9545 = vmatpush.bf16.msra.mxu0 %v7175
    %9546 = vmatpush.bf16.msra.mxu0 %v7174
    %9547 = vmatpush.bf16.msra.mxu0 %v7173
    %9548 = vmatpush.bf16.msra.mxu0 %v7172
    %9549 = vmatpush.bf16.msra.mxu0 %v7171
    %9550 = vmatpush.bf16.msra.mxu0 %v7170
    %9551 = vmatmul.bf16.gmra.mxu0 %v439
    %v9552 = vpop.f32.mrf.mxu0
    %v9553 = vadd.f32 %v9540, %v9552
    %v9554 = vpop.f32.mrf.mxu0
    %9555 = vdwg.mxu0
    %9556 = vmatpush.bf16.msra.mxu0 %v7185
    %9557 = vmatpush.bf16.msra.mxu0 %v7184
    %9558 = vmatpush.bf16.msra.mxu0 %v7183
    %9559 = vmatpush.bf16.msra.mxu0 %v7182
    %9560 = vmatpush.bf16.msra.mxu0 %v7181
    %9561 = vmatpush.bf16.msra.mxu0 %v7180
    %9562 = vmatpush.bf16.msra.mxu0 %v7179
    %9563 = vmatpush.bf16.msra.mxu0 %v7178
    %9564 = vmatmul.bf16.gmra.mxu0 %v440
    %v9565 = vpop.f32.mrf.mxu0
    %v9566 = vadd.f32 %v9553, %v9565
    %v9567 = vpop.f32.mrf.mxu0
    %9568 = vdwg.mxu0
    %9569 = vmatpush.bf16.msra.mxu0 %v7193
    %9570 = vmatpush.bf16.msra.mxu0 %v7192
    %9571 = vmatpush.bf16.msra.mxu0 %v7191
    %9572 = vmatpush.bf16.msra.mxu0 %v7190
    %9573 = vmatpush.bf16.msra.mxu0 %v7189
    %9574 = vmatpush.bf16.msra.mxu0 %v7188
    %9575 = vmatpush.bf16.msra.mxu0 %v7187
    %9576 = vmatpush.bf16.msra.mxu0 %v7186
    %9577 = vmatmul.bf16.gmra.mxu0 %v441
    %v9578 = vpop.f32.mrf.mxu0
    %v9579 = vadd.f32 %v9566, %v9578
    %v9580 = vpop.f32.mrf.mxu0
    %9581 = vdwg.mxu0
    %9582 = vmatpush.bf16.msra.mxu0 %v7201
    %9583 = vmatpush.bf16.msra.mxu0 %v7200
    %9584 = vmatpush.bf16.msra.mxu0 %v7199
    %9585 = vmatpush.bf16.msra.mxu0 %v7198
    %9586 = vmatpush.bf16.msra.mxu0 %v7197
    %9587 = vmatpush.bf16.msra.mxu0 %v7196
    %9588 = vmatpush.bf16.msra.mxu0 %v7195
    %9589 = vmatpush.bf16.msra.mxu0 %v7194
    %9590 = vmatmul.bf16.gmra.mxu0 %v442
    %v9591 = vpop.f32.mrf.mxu0
    %v9592 = vadd.f32 %v9579, %v9591
    %v9593 = vpop.f32.mrf.mxu0
    %9594 = vdwg.mxu0
    %9595 = vmatpush.bf16.msra.mxu0 %v7209
    %9596 = vmatpush.bf16.msra.mxu0 %v7208
    %9597 = vmatpush.bf16.msra.mxu0 %v7207
    %9598 = vmatpush.bf16.msra.mxu0 %v7206
    %9599 = vmatpush.bf16.msra.mxu0 %v7205
    %9600 = vmatpush.bf16.msra.mxu0 %v7204
    %9601 = vmatpush.bf16.msra.mxu0 %v7203
    %9602 = vmatpush.bf16.msra.mxu0 %v7202
    %9603 = vmatmul.bf16.gmra.mxu0 %v443
    %v9604 = vpop.f32.mrf.mxu0
    %v9605 = vadd.f32 %v9592, %v9604
    %v9606 = vpop.f32.mrf.mxu0
    %9607 = vdwg.mxu0
    %9608 = vmatpush.bf16.msra.mxu0 %v7217
    %9609 = vmatpush.bf16.msra.mxu0 %v7216
    %9610 = vmatpush.bf16.msra.mxu0 %v7215
    %9611 = vmatpush.bf16.msra.mxu0 %v7214
    %9612 = vmatpush.bf16.msra.mxu0 %v7213
    %9613 = vmatpush.bf16.msra.mxu0 %v7212
    %9614 = vmatpush.bf16.msra.mxu0 %v7211
    %9615 = vmatpush.bf16.msra.mxu0 %v7210
    %9616 = vmatmul.bf16.gmra.mxu0 %v444
    %v9617 = vpop.f32.mrf.mxu0
    %v9618 = vadd.f32 %v9605, %v9617
    %v9619 = vpop.f32.mrf.mxu0
    %9620 = vdwg.mxu0
    %9621 = vmatpush.bf16.msra.mxu0 %v7225
    %9622 = vmatpush.bf16.msra.mxu0 %v7224
    %9623 = vmatpush.bf16.msra.mxu0 %v7223
    %9624 = vmatpush.bf16.msra.mxu0 %v7222
    %9625 = vmatpush.bf16.msra.mxu0 %v7221
    %9626 = vmatpush.bf16.msra.mxu0 %v7220
    %9627 = vmatpush.bf16.msra.mxu0 %v7219
    %9628 = vmatpush.bf16.msra.mxu0 %v7218
    %9629 = vmatmul.bf16.gmra.mxu0 %v445
    %v9630 = vpop.f32.mrf.mxu0
    %v9631 = vadd.f32 %v9618, %v9630
    %v9632 = vpop.f32.mrf.mxu0
    %9633 = vdwg.mxu0
    %9634 = vmatpush.bf16.msra.mxu0 %v7233
    %9635 = vmatpush.bf16.msra.mxu0 %v7232
    %9636 = vmatpush.bf16.msra.mxu0 %v7231
    %9637 = vmatpush.bf16.msra.mxu0 %v7230
    %9638 = vmatpush.bf16.msra.mxu0 %v7229
    %9639 = vmatpush.bf16.msra.mxu0 %v7228
    %9640 = vmatpush.bf16.msra.mxu0 %v7227
    %9641 = vmatpush.bf16.msra.mxu0 %v7226
    %9642 = vmatmul.bf16.gmra.mxu0 %v446
    %v9643 = vpop.f32.mrf.mxu0
    %v9644 = vadd.f32 %v9631, %v9643
    %v9645 = vpop.f32.mrf.mxu0
    %9646 = vdwg.mxu0
    %9647 = vmatpush.bf16.msra.mxu0 %v7241
    %9648 = vmatpush.bf16.msra.mxu0 %v7240
    %9649 = vmatpush.bf16.msra.mxu0 %v7239
    %9650 = vmatpush.bf16.msra.mxu0 %v7238
    %9651 = vmatpush.bf16.msra.mxu0 %v7237
    %9652 = vmatpush.bf16.msra.mxu0 %v7236
    %9653 = vmatpush.bf16.msra.mxu0 %v7235
    %9654 = vmatpush.bf16.msra.mxu0 %v7234
    %9655 = vmatmul.bf16.gmra.mxu0 %v447
    %v9656 = vpop.f32.mrf.mxu0
    %v9657 = vadd.f32 %v9644, %v9656
    %v9658 = vpop.f32.mrf.mxu0
    %9659 = vdwg.mxu0
    %9660 = vmatpush.bf16.msra.mxu0 %v7249
    %9661 = vmatpush.bf16.msra.mxu0 %v7248
    %9662 = vmatpush.bf16.msra.mxu0 %v7247
    %9663 = vmatpush.bf16.msra.mxu0 %v7246
    %9664 = vmatpush.bf16.msra.mxu0 %v7245
    %9665 = vmatpush.bf16.msra.mxu0 %v7244
    %9666 = vmatpush.bf16.msra.mxu0 %v7243
    %9667 = vmatpush.bf16.msra.mxu0 %v7242
    %9668 = vmatmul.bf16.gmra.mxu0 %v448
    %v9669 = vpop.f32.mrf.mxu0
    %v9670 = vadd.f32 %v9657, %v9669
    %v9671 = vpop.f32.mrf.mxu0
    %9672 = vdwg.mxu0
    %9673 = vmatpush.bf16.msra.mxu0 %v7257
    %9674 = vmatpush.bf16.msra.mxu0 %v7256
    %9675 = vmatpush.bf16.msra.mxu0 %v7255
    %9676 = vmatpush.bf16.msra.mxu0 %v7254
    %9677 = vmatpush.bf16.msra.mxu0 %v7253
    %9678 = vmatpush.bf16.msra.mxu0 %v7252
    %9679 = vmatpush.bf16.msra.mxu0 %v7251
    %9680 = vmatpush.bf16.msra.mxu0 %v7250
    %9681 = vmatmul.bf16.gmra.mxu0 %v449
    %v9682 = vpop.f32.mrf.mxu0
    %v9683 = vadd.f32 %v9670, %v9682
    %v9684 = vpop.f32.mrf.mxu0
    %9685 = vdwg.mxu0
    %9686 = vmatpush.bf16.msra.mxu0 %v7265
    %9687 = vmatpush.bf16.msra.mxu0 %v7264
    %9688 = vmatpush.bf16.msra.mxu0 %v7263
    %9689 = vmatpush.bf16.msra.mxu0 %v7262
    %9690 = vmatpush.bf16.msra.mxu0 %v7261
    %9691 = vmatpush.bf16.msra.mxu0 %v7260
    %9692 = vmatpush.bf16.msra.mxu0 %v7259
    %9693 = vmatpush.bf16.msra.mxu0 %v7258
    %9694 = vmatmul.bf16.gmra.mxu0 %v450
    %v9695 = vpop.f32.mrf.mxu0
    %v9696 = vadd.f32 %v9683, %v9695
    %v9697 = vpop.f32.mrf.mxu0
    %9698 = vdwg.mxu0
    %9699 = vmatpush.bf16.msra.mxu0 %v7273
    %9700 = vmatpush.bf16.msra.mxu0 %v7272
    %9701 = vmatpush.bf16.msra.mxu0 %v7271
    %9702 = vmatpush.bf16.msra.mxu0 %v7270
    %9703 = vmatpush.bf16.msra.mxu0 %v7269
    %9704 = vmatpush.bf16.msra.mxu0 %v7268
    %9705 = vmatpush.bf16.msra.mxu0 %v7267
    %9706 = vmatpush.bf16.msra.mxu0 %v7266
    %9707 = vmatmul.bf16.gmra.mxu0 %v451
    %v9708 = vpop.f32.mrf.mxu0
    %v9709 = vadd.f32 %v9696, %v9708
    %v9710 = vpop.f32.mrf.mxu0
    %9711 = vdwg.mxu0
    %9712 = vmatpush.bf16.msra.mxu0 %v7281
    %9713 = vmatpush.bf16.msra.mxu0 %v7280
    %9714 = vmatpush.bf16.msra.mxu0 %v7279
    %9715 = vmatpush.bf16.msra.mxu0 %v7278
    %9716 = vmatpush.bf16.msra.mxu0 %v7277
    %9717 = vmatpush.bf16.msra.mxu0 %v7276
    %9718 = vmatpush.bf16.msra.mxu0 %v7275
    %9719 = vmatpush.bf16.msra.mxu0 %v7274
    %9720 = vmatmul.bf16.gmra.mxu0 %v452
    %v9721 = vpop.f32.mrf.mxu0
    %v9722 = vadd.f32 %v9709, %v9721
    %v9723 = vpop.f32.mrf.mxu0
    %9724 = vdwg.mxu0
    %9725 = vmatpush.bf16.msra.mxu0 %v7289
    %9726 = vmatpush.bf16.msra.mxu0 %v7288
    %9727 = vmatpush.bf16.msra.mxu0 %v7287
    %9728 = vmatpush.bf16.msra.mxu0 %v7286
    %9729 = vmatpush.bf16.msra.mxu0 %v7285
    %9730 = vmatpush.bf16.msra.mxu0 %v7284
    %9731 = vmatpush.bf16.msra.mxu0 %v7283
    %9732 = vmatpush.bf16.msra.mxu0 %v7282
    %9733 = vmatmul.bf16.gmra.mxu0 %v453
    %v9734 = vpop.f32.mrf.mxu0
    %v9735 = vadd.f32 %v9722, %v9734
    %v9736 = vpop.f32.mrf.mxu0
    %9737 = vdwg.mxu0
    %9738 = vmatpush.bf16.msra.mxu0 %v7297
    %9739 = vmatpush.bf16.msra.mxu0 %v7296
    %9740 = vmatpush.bf16.msra.mxu0 %v7295
    %9741 = vmatpush.bf16.msra.mxu0 %v7294
    %9742 = vmatpush.bf16.msra.mxu0 %v7293
    %9743 = vmatpush.bf16.msra.mxu0 %v7292
    %9744 = vmatpush.bf16.msra.mxu0 %v7291
    %9745 = vmatpush.bf16.msra.mxu0 %v7290
    %9746 = vmatmul.bf16.gmra.mxu0 %v454
    %v9747 = vpop.f32.mrf.mxu0
    %v9748 = vadd.f32 %v9735, %v9747
    %v9749 = vpop.f32.mrf.mxu0
    %9750 = vdwg.mxu0
    %9751 = vmatpush.bf16.msra.mxu0 %v7305
    %9752 = vmatpush.bf16.msra.mxu0 %v7304
    %9753 = vmatpush.bf16.msra.mxu0 %v7303
    %9754 = vmatpush.bf16.msra.mxu0 %v7302
    %9755 = vmatpush.bf16.msra.mxu0 %v7301
    %9756 = vmatpush.bf16.msra.mxu0 %v7300
    %9757 = vmatpush.bf16.msra.mxu0 %v7299
    %9758 = vmatpush.bf16.msra.mxu0 %v7298
    %9759 = vmatmul.bf16.gmra.mxu0 %v455
    %v9760 = vpop.f32.mrf.mxu0
    %v9761 = vadd.f32 %v9748, %v9760
    %v9762 = vpop.f32.mrf.mxu0
    %9763 = vdwg.mxu0
    %9764 = vmatpush.bf16.msra.mxu0 %v7313
    %9765 = vmatpush.bf16.msra.mxu0 %v7312
    %9766 = vmatpush.bf16.msra.mxu0 %v7311
    %9767 = vmatpush.bf16.msra.mxu0 %v7310
    %9768 = vmatpush.bf16.msra.mxu0 %v7309
    %9769 = vmatpush.bf16.msra.mxu0 %v7308
    %9770 = vmatpush.bf16.msra.mxu0 %v7307
    %9771 = vmatpush.bf16.msra.mxu0 %v7306
    %9772 = vmatmul.bf16.gmra.mxu0 %v456
    %v9773 = vpop.f32.mrf.mxu0
    %v9774 = vadd.f32 %v9761, %v9773
    %v9775 = vpop.f32.mrf.mxu0
    %9776 = vdwg.mxu0
    %9777 = vmatpush.bf16.msra.mxu0 %v7321
    %9778 = vmatpush.bf16.msra.mxu0 %v7320
    %9779 = vmatpush.bf16.msra.mxu0 %v7319
    %9780 = vmatpush.bf16.msra.mxu0 %v7318
    %9781 = vmatpush.bf16.msra.mxu0 %v7317
    %9782 = vmatpush.bf16.msra.mxu0 %v7316
    %9783 = vmatpush.bf16.msra.mxu0 %v7315
    %9784 = vmatpush.bf16.msra.mxu0 %v7314
    %9785 = vmatmul.bf16.gmra.mxu0 %v457
    %v9786 = vpop.f32.mrf.mxu0
    %v9787 = vadd.f32 %v9774, %v9786
    %v9788 = vpop.f32.mrf.mxu0
    %9789 = vdwg.mxu0
    %9790 = vmatpush.bf16.msra.mxu0 %v7329
    %9791 = vmatpush.bf16.msra.mxu0 %v7328
    %9792 = vmatpush.bf16.msra.mxu0 %v7327
    %9793 = vmatpush.bf16.msra.mxu0 %v7326
    %9794 = vmatpush.bf16.msra.mxu0 %v7325
    %9795 = vmatpush.bf16.msra.mxu0 %v7324
    %9796 = vmatpush.bf16.msra.mxu0 %v7323
    %9797 = vmatpush.bf16.msra.mxu0 %v7322
    %9798 = vmatmul.bf16.gmra.mxu0 %v458
    %v9799 = vpop.f32.mrf.mxu0
    %v9800 = vadd.f32 %v9787, %v9799
    %v9801 = vpop.f32.mrf.mxu0
    %9802 = vdwg.mxu0
    %9803 = vmatpush.bf16.msra.mxu0 %v7337
    %9804 = vmatpush.bf16.msra.mxu0 %v7336
    %9805 = vmatpush.bf16.msra.mxu0 %v7335
    %9806 = vmatpush.bf16.msra.mxu0 %v7334
    %9807 = vmatpush.bf16.msra.mxu0 %v7333
    %9808 = vmatpush.bf16.msra.mxu0 %v7332
    %9809 = vmatpush.bf16.msra.mxu0 %v7331
    %9810 = vmatpush.bf16.msra.mxu0 %v7330
    %9811 = vmatmul.bf16.gmra.mxu0 %v459
    %v9812 = vpop.f32.mrf.mxu0
    %v9813 = vadd.f32 %v9800, %v9812
    %v9814 = vpop.f32.mrf.mxu0
    %9815 = vdwg.mxu0
    %9816 = vmatpush.bf16.msra.mxu0 %v7345
    %9817 = vmatpush.bf16.msra.mxu0 %v7344
    %9818 = vmatpush.bf16.msra.mxu0 %v7343
    %9819 = vmatpush.bf16.msra.mxu0 %v7342
    %9820 = vmatpush.bf16.msra.mxu0 %v7341
    %9821 = vmatpush.bf16.msra.mxu0 %v7340
    %9822 = vmatpush.bf16.msra.mxu0 %v7339
    %9823 = vmatpush.bf16.msra.mxu0 %v7338
    %9824 = vmatmul.bf16.gmra.mxu0 %v460
    %v9825 = vpop.f32.mrf.mxu0
    %v9826 = vadd.f32 %v9813, %v9825
    %v9827 = vpop.f32.mrf.mxu0
    %9828 = vdwg.mxu0
    %9829 = vmatpush.bf16.msra.mxu0 %v7353
    %9830 = vmatpush.bf16.msra.mxu0 %v7352
    %9831 = vmatpush.bf16.msra.mxu0 %v7351
    %9832 = vmatpush.bf16.msra.mxu0 %v7350
    %9833 = vmatpush.bf16.msra.mxu0 %v7349
    %9834 = vmatpush.bf16.msra.mxu0 %v7348
    %9835 = vmatpush.bf16.msra.mxu0 %v7347
    %9836 = vmatpush.bf16.msra.mxu0 %v7346
    %9837 = vmatmul.bf16.gmra.mxu0 %v461
    %v9838 = vpop.f32.mrf.mxu0
    %v9839 = vadd.f32 %v9826, %v9838
    %v9840 = vpop.f32.mrf.mxu0
    %9841 = vdwg.mxu0
    %9842 = vmatpush.bf16.msra.mxu0 %v7361
    %9843 = vmatpush.bf16.msra.mxu0 %v7360
    %9844 = vmatpush.bf16.msra.mxu0 %v7359
    %9845 = vmatpush.bf16.msra.mxu0 %v7358
    %9846 = vmatpush.bf16.msra.mxu0 %v7357
    %9847 = vmatpush.bf16.msra.mxu0 %v7356
    %9848 = vmatpush.bf16.msra.mxu0 %v7355
    %9849 = vmatpush.bf16.msra.mxu0 %v7354
    %9850 = vmatmul.bf16.gmra.mxu0 %v462
    %v9851 = vpop.f32.mrf.mxu0
    %v9852 = vadd.f32 %v9839, %v9851
    %v9853 = vpop.f32.mrf.mxu0
    %9854 = vdwg.mxu0
    %9855 = vmatpush.bf16.msra.mxu0 %v7369
    %9856 = vmatpush.bf16.msra.mxu0 %v7368
    %9857 = vmatpush.bf16.msra.mxu0 %v7367
    %9858 = vmatpush.bf16.msra.mxu0 %v7366
    %9859 = vmatpush.bf16.msra.mxu0 %v7365
    %9860 = vmatpush.bf16.msra.mxu0 %v7364
    %9861 = vmatpush.bf16.msra.mxu0 %v7363
    %9862 = vmatpush.bf16.msra.mxu0 %v7362
    %9863 = vmatmul.bf16.gmra.mxu0 %v463
    %v9864 = vpop.f32.mrf.mxu0
    %v9865 = vadd.f32 %v9852, %v9864
    %v9866 = vpop.f32.mrf.mxu0
    %9867 = vdwg.mxu0
    %9868 = vmatpush.bf16.msra.mxu0 %v7377
    %9869 = vmatpush.bf16.msra.mxu0 %v7376
    %9870 = vmatpush.bf16.msra.mxu0 %v7375
    %9871 = vmatpush.bf16.msra.mxu0 %v7374
    %9872 = vmatpush.bf16.msra.mxu0 %v7373
    %9873 = vmatpush.bf16.msra.mxu0 %v7372
    %9874 = vmatpush.bf16.msra.mxu0 %v7371
    %9875 = vmatpush.bf16.msra.mxu0 %v7370
    %9876 = vmatmul.bf16.gmra.mxu0 %v464
    %v9877 = vpop.f32.mrf.mxu0
    %v9878 = vadd.f32 %v9865, %v9877
    %v9879 = vpop.f32.mrf.mxu0
    %9880 = vdwg.mxu0
    %9881 = vmatpush.bf16.msra.mxu0 %v7385
    %9882 = vmatpush.bf16.msra.mxu0 %v7384
    %9883 = vmatpush.bf16.msra.mxu0 %v7383
    %9884 = vmatpush.bf16.msra.mxu0 %v7382
    %9885 = vmatpush.bf16.msra.mxu0 %v7381
    %9886 = vmatpush.bf16.msra.mxu0 %v7380
    %9887 = vmatpush.bf16.msra.mxu0 %v7379
    %9888 = vmatpush.bf16.msra.mxu0 %v7378
    %9889 = vmatmul.bf16.gmra.mxu0 %v465
    %v9890 = vpop.f32.mrf.mxu0
    %v9891 = vadd.f32 %v9878, %v9890
    %v9892 = vpop.f32.mrf.mxu0
    %9893 = vdwg.mxu0
    %9894 = vmatpush.bf16.msra.mxu0 %v7393
    %9895 = vmatpush.bf16.msra.mxu0 %v7392
    %9896 = vmatpush.bf16.msra.mxu0 %v7391
    %9897 = vmatpush.bf16.msra.mxu0 %v7390
    %9898 = vmatpush.bf16.msra.mxu0 %v7389
    %9899 = vmatpush.bf16.msra.mxu0 %v7388
    %9900 = vmatpush.bf16.msra.mxu0 %v7387
    %9901 = vmatpush.bf16.msra.mxu0 %v7386
    %9902 = vmatmul.bf16.gmra.mxu0 %v466
    %v9903 = vpop.f32.mrf.mxu0
    %v9904 = vadd.f32 %v9891, %v9903
    %v9905 = vpop.f32.mrf.mxu0
    %9906 = vdwg.mxu0
    %9907 = vmatpush.bf16.msra.mxu0 %v7401
    %9908 = vmatpush.bf16.msra.mxu0 %v7400
    %9909 = vmatpush.bf16.msra.mxu0 %v7399
    %9910 = vmatpush.bf16.msra.mxu0 %v7398
    %9911 = vmatpush.bf16.msra.mxu0 %v7397
    %9912 = vmatpush.bf16.msra.mxu0 %v7396
    %9913 = vmatpush.bf16.msra.mxu0 %v7395
    %9914 = vmatpush.bf16.msra.mxu0 %v7394
    %9915 = vmatmul.bf16.gmra.mxu0 %v467
    %v9916 = vpop.f32.mrf.mxu0
    %v9917 = vadd.f32 %v9904, %v9916
    %v9918 = vpop.f32.mrf.mxu0
    %9919 = vdwg.mxu0
    %9920 = vmatpush.bf16.msra.mxu0 %v7409
    %9921 = vmatpush.bf16.msra.mxu0 %v7408
    %9922 = vmatpush.bf16.msra.mxu0 %v7407
    %9923 = vmatpush.bf16.msra.mxu0 %v7406
    %9924 = vmatpush.bf16.msra.mxu0 %v7405
    %9925 = vmatpush.bf16.msra.mxu0 %v7404
    %9926 = vmatpush.bf16.msra.mxu0 %v7403
    %9927 = vmatpush.bf16.msra.mxu0 %v7402
    %9928 = vmatmul.bf16.gmra.mxu0 %v468
    %v9929 = vpop.f32.mrf.mxu0
    %v9930 = vadd.f32 %v9917, %v9929
    %v9931 = vpop.f32.mrf.mxu0
    %9932 = vdwg.mxu0
    %9933 = vmatpush.bf16.msra.mxu0 %v7417
    %9934 = vmatpush.bf16.msra.mxu0 %v7416
    %9935 = vmatpush.bf16.msra.mxu0 %v7415
    %9936 = vmatpush.bf16.msra.mxu0 %v7414
    %9937 = vmatpush.bf16.msra.mxu0 %v7413
    %9938 = vmatpush.bf16.msra.mxu0 %v7412
    %9939 = vmatpush.bf16.msra.mxu0 %v7411
    %9940 = vmatpush.bf16.msra.mxu0 %v7410
    %9941 = vmatmul.bf16.gmra.mxu0 %v469
    %v9942 = vpop.f32.mrf.mxu0
    %v9943 = vadd.f32 %v9930, %v9942
    %v9944 = vpop.f32.mrf.mxu0
    %9945 = vdwg.mxu0
    %9946 = vmatpush.bf16.msra.mxu0 %v7425
    %9947 = vmatpush.bf16.msra.mxu0 %v7424
    %9948 = vmatpush.bf16.msra.mxu0 %v7423
    %9949 = vmatpush.bf16.msra.mxu0 %v7422
    %9950 = vmatpush.bf16.msra.mxu0 %v7421
    %9951 = vmatpush.bf16.msra.mxu0 %v7420
    %9952 = vmatpush.bf16.msra.mxu0 %v7419
    %9953 = vmatpush.bf16.msra.mxu0 %v7418
    %9954 = vmatmul.bf16.gmra.mxu0 %v470
    %v9955 = vpop.f32.mrf.mxu0
    %v9956 = vadd.f32 %v9943, %v9955
    %v9957 = vpop.f32.mrf.mxu0
    %9958 = vdwg.mxu0
    %9959 = vmatpush.bf16.msra.mxu0 %v7433
    %9960 = vmatpush.bf16.msra.mxu0 %v7432
    %9961 = vmatpush.bf16.msra.mxu0 %v7431
    %9962 = vmatpush.bf16.msra.mxu0 %v7430
    %9963 = vmatpush.bf16.msra.mxu0 %v7429
    %9964 = vmatpush.bf16.msra.mxu0 %v7428
    %9965 = vmatpush.bf16.msra.mxu0 %v7427
    %9966 = vmatpush.bf16.msra.mxu0 %v7426
    %9967 = vmatmul.bf16.gmra.mxu0 %v471
    %v9968 = vpop.f32.mrf.mxu0
    %v9969 = vadd.f32 %v9956, %v9968
    %v9970 = vpop.f32.mrf.mxu0
    %9971 = vdwg.mxu0
    %9972 = vmatpush.bf16.msra.mxu0 %v7441
    %9973 = vmatpush.bf16.msra.mxu0 %v7440
    %9974 = vmatpush.bf16.msra.mxu0 %v7439
    %9975 = vmatpush.bf16.msra.mxu0 %v7438
    %9976 = vmatpush.bf16.msra.mxu0 %v7437
    %9977 = vmatpush.bf16.msra.mxu0 %v7436
    %9978 = vmatpush.bf16.msra.mxu0 %v7435
    %9979 = vmatpush.bf16.msra.mxu0 %v7434
    %9980 = vmatmul.bf16.gmra.mxu0 %v472
    %v9981 = vpop.f32.mrf.mxu0
    %v9982 = vadd.f32 %v9969, %v9981
    %v9983 = vpop.f32.mrf.mxu0
    %9984 = vdwg.mxu0
    %9985 = vmatpush.bf16.msra.mxu0 %v7449
    %9986 = vmatpush.bf16.msra.mxu0 %v7448
    %9987 = vmatpush.bf16.msra.mxu0 %v7447
    %9988 = vmatpush.bf16.msra.mxu0 %v7446
    %9989 = vmatpush.bf16.msra.mxu0 %v7445
    %9990 = vmatpush.bf16.msra.mxu0 %v7444
    %9991 = vmatpush.bf16.msra.mxu0 %v7443
    %9992 = vmatpush.bf16.msra.mxu0 %v7442
    %9993 = vmatmul.bf16.gmra.mxu0 %v473
    %v9994 = vpop.f32.mrf.mxu0
    %v9995 = vadd.f32 %v9982, %v9994
    %v9996 = vpop.f32.mrf.mxu0
    %9997 = vdwg.mxu0
    %9998 = vmatpush.bf16.msra.mxu0 %v7457
    %9999 = vmatpush.bf16.msra.mxu0 %v7456
    %10000 = vmatpush.bf16.msra.mxu0 %v7455
    %10001 = vmatpush.bf16.msra.mxu0 %v7454
    %10002 = vmatpush.bf16.msra.mxu0 %v7453
    %10003 = vmatpush.bf16.msra.mxu0 %v7452
    %10004 = vmatpush.bf16.msra.mxu0 %v7451
    %10005 = vmatpush.bf16.msra.mxu0 %v7450
    %10006 = vmatmul.bf16.gmra.mxu0 %v474
    %v10007 = vpop.f32.mrf.mxu0
    %v10008 = vadd.f32 %v9995, %v10007
    %v10009 = vpop.f32.mrf.mxu0
    %10010 = vdwg.mxu0
    %10011 = vmatpush.bf16.msra.mxu0 %v7465
    %10012 = vmatpush.bf16.msra.mxu0 %v7464
    %10013 = vmatpush.bf16.msra.mxu0 %v7463
    %10014 = vmatpush.bf16.msra.mxu0 %v7462
    %10015 = vmatpush.bf16.msra.mxu0 %v7461
    %10016 = vmatpush.bf16.msra.mxu0 %v7460
    %10017 = vmatpush.bf16.msra.mxu0 %v7459
    %10018 = vmatpush.bf16.msra.mxu0 %v7458
    %10019 = vmatmul.bf16.gmra.mxu0 %v475
    %v10020 = vpop.f32.mrf.mxu0
    %v10021 = vadd.f32 %v10008, %v10020
    %v10022 = vpop.f32.mrf.mxu0
    %10023 = vdwg.mxu0
    %10024 = vmatpush.bf16.msra.mxu0 %v7473
    %10025 = vmatpush.bf16.msra.mxu0 %v7472
    %10026 = vmatpush.bf16.msra.mxu0 %v7471
    %10027 = vmatpush.bf16.msra.mxu0 %v7470
    %10028 = vmatpush.bf16.msra.mxu0 %v7469
    %10029 = vmatpush.bf16.msra.mxu0 %v7468
    %10030 = vmatpush.bf16.msra.mxu0 %v7467
    %10031 = vmatpush.bf16.msra.mxu0 %v7466
    %10032 = vmatmul.bf16.gmra.mxu0 %v476
    %v10033 = vpop.f32.mrf.mxu0
    %v10034 = vadd.f32 %v10021, %v10033
    %v10035 = vpop.f32.mrf.mxu0
    %10036 = vdwg.mxu0
    %10037 = vmatpush.bf16.msra.mxu0 %v7481
    %10038 = vmatpush.bf16.msra.mxu0 %v7480
    %10039 = vmatpush.bf16.msra.mxu0 %v7479
    %10040 = vmatpush.bf16.msra.mxu0 %v7478
    %10041 = vmatpush.bf16.msra.mxu0 %v7477
    %10042 = vmatpush.bf16.msra.mxu0 %v7476
    %10043 = vmatpush.bf16.msra.mxu0 %v7475
    %10044 = vmatpush.bf16.msra.mxu0 %v7474
    %10045 = vmatmul.bf16.gmra.mxu0 %v477
    %v10046 = vpop.f32.mrf.mxu0
    %v10047 = vadd.f32 %v10034, %v10046
    %v10048 = vpop.f32.mrf.mxu0
    %10049 = vdwg.mxu0
    %10050 = vmatpush.bf16.msra.mxu0 %v7489
    %10051 = vmatpush.bf16.msra.mxu0 %v7488
    %10052 = vmatpush.bf16.msra.mxu0 %v7487
    %10053 = vmatpush.bf16.msra.mxu0 %v7486
    %10054 = vmatpush.bf16.msra.mxu0 %v7485
    %10055 = vmatpush.bf16.msra.mxu0 %v7484
    %10056 = vmatpush.bf16.msra.mxu0 %v7483
    %10057 = vmatpush.bf16.msra.mxu0 %v7482
    %10058 = vmatmul.bf16.gmra.mxu0 %v478
    %v10059 = vpop.f32.mrf.mxu0
    %v10060 = vadd.f32 %v10047, %v10059
    %v10061 = vpop.f32.mrf.mxu0
    %10062 = vdwg.mxu0
    %10063 = vmatpush.bf16.msra.mxu0 %v7497
    %10064 = vmatpush.bf16.msra.mxu0 %v7496
    %10065 = vmatpush.bf16.msra.mxu0 %v7495
    %10066 = vmatpush.bf16.msra.mxu0 %v7494
    %10067 = vmatpush.bf16.msra.mxu0 %v7493
    %10068 = vmatpush.bf16.msra.mxu0 %v7492
    %10069 = vmatpush.bf16.msra.mxu0 %v7491
    %10070 = vmatpush.bf16.msra.mxu0 %v7490
    %10071 = vmatmul.bf16.gmra.mxu0 %v479
    %v10072 = vpop.f32.mrf.mxu0
    %v10073 = vadd.f32 %v10060, %v10072
    %v10074 = vpop.f32.mrf.mxu0
    %10075 = vdwg.mxu0
    %10076 = vmatpush.bf16.msra.mxu0 %v7505
    %10077 = vmatpush.bf16.msra.mxu0 %v7504
    %10078 = vmatpush.bf16.msra.mxu0 %v7503
    %10079 = vmatpush.bf16.msra.mxu0 %v7502
    %10080 = vmatpush.bf16.msra.mxu0 %v7501
    %10081 = vmatpush.bf16.msra.mxu0 %v7500
    %10082 = vmatpush.bf16.msra.mxu0 %v7499
    %10083 = vmatpush.bf16.msra.mxu0 %v7498
    %10084 = vmatmul.bf16.gmra.mxu0 %v480
    %v10085 = vpop.f32.mrf.mxu0
    %v10086 = vadd.f32 %v10073, %v10085
    %v10087 = vpop.f32.mrf.mxu0
    %10088 = vdwg.mxu0
    %10089 = vmatpush.bf16.msra.mxu0 %v7513
    %10090 = vmatpush.bf16.msra.mxu0 %v7512
    %10091 = vmatpush.bf16.msra.mxu0 %v7511
    %10092 = vmatpush.bf16.msra.mxu0 %v7510
    %10093 = vmatpush.bf16.msra.mxu0 %v7509
    %10094 = vmatpush.bf16.msra.mxu0 %v7508
    %10095 = vmatpush.bf16.msra.mxu0 %v7507
    %10096 = vmatpush.bf16.msra.mxu0 %v7506
    %10097 = vmatmul.bf16.gmra.mxu0 %v481
    %v10098 = vpop.f32.mrf.mxu0
    %v10099 = vadd.f32 %v10086, %v10098
    %v10100 = vpop.f32.mrf.mxu0
    %10101 = vdwg.mxu0
    %10102 = vmatpush.bf16.msra.mxu0 %v7521
    %10103 = vmatpush.bf16.msra.mxu0 %v7520
    %10104 = vmatpush.bf16.msra.mxu0 %v7519
    %10105 = vmatpush.bf16.msra.mxu0 %v7518
    %10106 = vmatpush.bf16.msra.mxu0 %v7517
    %10107 = vmatpush.bf16.msra.mxu0 %v7516
    %10108 = vmatpush.bf16.msra.mxu0 %v7515
    %10109 = vmatpush.bf16.msra.mxu0 %v7514
    %10110 = vmatmul.bf16.gmra.mxu0 %v482
    %v10111 = vpop.f32.mrf.mxu0
    %v10112 = vadd.f32 %v10099, %v10111
    %v10113 = vpop.f32.mrf.mxu0
    %10114 = vdwg.mxu0
    %10115 = vmatpush.bf16.msra.mxu0 %v7529
    %10116 = vmatpush.bf16.msra.mxu0 %v7528
    %10117 = vmatpush.bf16.msra.mxu0 %v7527
    %10118 = vmatpush.bf16.msra.mxu0 %v7526
    %10119 = vmatpush.bf16.msra.mxu0 %v7525
    %10120 = vmatpush.bf16.msra.mxu0 %v7524
    %10121 = vmatpush.bf16.msra.mxu0 %v7523
    %10122 = vmatpush.bf16.msra.mxu0 %v7522
    %10123 = vmatmul.bf16.gmra.mxu0 %v483
    %v10124 = vpop.f32.mrf.mxu0
    %v10125 = vadd.f32 %v10112, %v10124
    %v10126 = vpop.f32.mrf.mxu0
    %10127 = vdwg.mxu0
    %10128 = vmatpush.bf16.msra.mxu0 %v7537
    %10129 = vmatpush.bf16.msra.mxu0 %v7536
    %10130 = vmatpush.bf16.msra.mxu0 %v7535
    %10131 = vmatpush.bf16.msra.mxu0 %v7534
    %10132 = vmatpush.bf16.msra.mxu0 %v7533
    %10133 = vmatpush.bf16.msra.mxu0 %v7532
    %10134 = vmatpush.bf16.msra.mxu0 %v7531
    %10135 = vmatpush.bf16.msra.mxu0 %v7530
    %10136 = vmatmul.bf16.gmra.mxu0 %v484
    %v10137 = vpop.f32.mrf.mxu0
    %v10138 = vadd.f32 %v10125, %v10137
    %v10139 = vpop.f32.mrf.mxu0
    %10140 = vdwg.mxu0
    %10141 = vmatpush.bf16.msra.mxu0 %v7545
    %10142 = vmatpush.bf16.msra.mxu0 %v7544
    %10143 = vmatpush.bf16.msra.mxu0 %v7543
    %10144 = vmatpush.bf16.msra.mxu0 %v7542
    %10145 = vmatpush.bf16.msra.mxu0 %v7541
    %10146 = vmatpush.bf16.msra.mxu0 %v7540
    %10147 = vmatpush.bf16.msra.mxu0 %v7539
    %10148 = vmatpush.bf16.msra.mxu0 %v7538
    %10149 = vmatmul.bf16.gmra.mxu0 %v485
    %v10150 = vpop.f32.mrf.mxu0
    %v10151 = vadd.f32 %v10138, %v10150
    %v10152 = vpop.f32.mrf.mxu0
    %10153 = vdwg.mxu0
    %10154 = vmatpush.bf16.msra.mxu0 %v7553
    %10155 = vmatpush.bf16.msra.mxu0 %v7552
    %10156 = vmatpush.bf16.msra.mxu0 %v7551
    %10157 = vmatpush.bf16.msra.mxu0 %v7550
    %10158 = vmatpush.bf16.msra.mxu0 %v7549
    %10159 = vmatpush.bf16.msra.mxu0 %v7548
    %10160 = vmatpush.bf16.msra.mxu0 %v7547
    %10161 = vmatpush.bf16.msra.mxu0 %v7546
    %10162 = vmatmul.bf16.gmra.mxu0 %v486
    %v10163 = vpop.f32.mrf.mxu0
    %v10164 = vadd.f32 %v10151, %v10163
    %v10165 = vpop.f32.mrf.mxu0
    %10166 = vdwg.mxu0
    %10167 = vmatpush.bf16.msra.mxu0 %v7561
    %10168 = vmatpush.bf16.msra.mxu0 %v7560
    %10169 = vmatpush.bf16.msra.mxu0 %v7559
    %10170 = vmatpush.bf16.msra.mxu0 %v7558
    %10171 = vmatpush.bf16.msra.mxu0 %v7557
    %10172 = vmatpush.bf16.msra.mxu0 %v7556
    %10173 = vmatpush.bf16.msra.mxu0 %v7555
    %10174 = vmatpush.bf16.msra.mxu0 %v7554
    %10175 = vmatmul.bf16.gmra.mxu0 %v487
    %v10176 = vpop.f32.mrf.mxu0
    %v10177 = vadd.f32 %v10164, %v10176
    %v10178 = vpop.f32.mrf.mxu0
    %10179 = vdwg.mxu0
    %10180 = vmatpush.bf16.msra.mxu0 %v7569
    %10181 = vmatpush.bf16.msra.mxu0 %v7568
    %10182 = vmatpush.bf16.msra.mxu0 %v7567
    %10183 = vmatpush.bf16.msra.mxu0 %v7566
    %10184 = vmatpush.bf16.msra.mxu0 %v7565
    %10185 = vmatpush.bf16.msra.mxu0 %v7564
    %10186 = vmatpush.bf16.msra.mxu0 %v7563
    %10187 = vmatpush.bf16.msra.mxu0 %v7562
    %10188 = vmatmul.bf16.gmra.mxu0 %v488
    %v10189 = vpop.f32.mrf.mxu0
    %v10190 = vadd.f32 %v10177, %v10189
    %v10191 = vpop.f32.mrf.mxu0
    %10192 = vdwg.mxu0
    %10193 = vmatpush.bf16.msra.mxu0 %v7577
    %10194 = vmatpush.bf16.msra.mxu0 %v7576
    %10195 = vmatpush.bf16.msra.mxu0 %v7575
    %10196 = vmatpush.bf16.msra.mxu0 %v7574
    %10197 = vmatpush.bf16.msra.mxu0 %v7573
    %10198 = vmatpush.bf16.msra.mxu0 %v7572
    %10199 = vmatpush.bf16.msra.mxu0 %v7571
    %10200 = vmatpush.bf16.msra.mxu0 %v7570
    %10201 = vmatmul.bf16.gmra.mxu0 %v489
    %v10202 = vpop.f32.mrf.mxu0
    %v10203 = vadd.f32 %v10190, %v10202
    %v10204 = vpop.f32.mrf.mxu0
    %10205 = vdwg.mxu0
    %10206 = vmatpush.bf16.msra.mxu0 %v7585
    %10207 = vmatpush.bf16.msra.mxu0 %v7584
    %10208 = vmatpush.bf16.msra.mxu0 %v7583
    %10209 = vmatpush.bf16.msra.mxu0 %v7582
    %10210 = vmatpush.bf16.msra.mxu0 %v7581
    %10211 = vmatpush.bf16.msra.mxu0 %v7580
    %10212 = vmatpush.bf16.msra.mxu0 %v7579
    %10213 = vmatpush.bf16.msra.mxu0 %v7578
    %10214 = vmatmul.bf16.gmra.mxu0 %v490
    %v10215 = vpop.f32.mrf.mxu0
    %v10216 = vadd.f32 %v10203, %v10215
    %v10217 = vpop.f32.mrf.mxu0
    %10218 = vdwg.mxu0
    %10219 = vmatpush.bf16.msra.mxu0 %v7593
    %10220 = vmatpush.bf16.msra.mxu0 %v7592
    %10221 = vmatpush.bf16.msra.mxu0 %v7591
    %10222 = vmatpush.bf16.msra.mxu0 %v7590
    %10223 = vmatpush.bf16.msra.mxu0 %v7589
    %10224 = vmatpush.bf16.msra.mxu0 %v7588
    %10225 = vmatpush.bf16.msra.mxu0 %v7587
    %10226 = vmatpush.bf16.msra.mxu0 %v7586
    %10227 = vmatmul.bf16.gmra.mxu0 %v491
    %v10228 = vpop.f32.mrf.mxu0
    %v10229 = vadd.f32 %v10216, %v10228
    %v10230 = vpop.f32.mrf.mxu0
    %10231 = vdwg.mxu0
    %10232 = vmatpush.bf16.msra.mxu0 %v7601
    %10233 = vmatpush.bf16.msra.mxu0 %v7600
    %10234 = vmatpush.bf16.msra.mxu0 %v7599
    %10235 = vmatpush.bf16.msra.mxu0 %v7598
    %10236 = vmatpush.bf16.msra.mxu0 %v7597
    %10237 = vmatpush.bf16.msra.mxu0 %v7596
    %10238 = vmatpush.bf16.msra.mxu0 %v7595
    %10239 = vmatpush.bf16.msra.mxu0 %v7594
    %10240 = vmatmul.bf16.gmra.mxu0 %v492
    %v10241 = vpop.f32.mrf.mxu0
    %v10242 = vadd.f32 %v10229, %v10241
    %v10243 = vpop.f32.mrf.mxu0
    %10244 = vdwg.mxu0
    %10245 = vmatpush.bf16.msra.mxu0 %v7609
    %10246 = vmatpush.bf16.msra.mxu0 %v7608
    %10247 = vmatpush.bf16.msra.mxu0 %v7607
    %10248 = vmatpush.bf16.msra.mxu0 %v7606
    %10249 = vmatpush.bf16.msra.mxu0 %v7605
    %10250 = vmatpush.bf16.msra.mxu0 %v7604
    %10251 = vmatpush.bf16.msra.mxu0 %v7603
    %10252 = vmatpush.bf16.msra.mxu0 %v7602
    %10253 = vmatmul.bf16.gmra.mxu0 %v493
    %v10254 = vpop.f32.mrf.mxu0
    %v10255 = vadd.f32 %v10242, %v10254
    %v10256 = vpop.f32.mrf.mxu0
    %10257 = vdwg.mxu0
    %10258 = vmatpush.bf16.msra.mxu0 %v7617
    %10259 = vmatpush.bf16.msra.mxu0 %v7616
    %10260 = vmatpush.bf16.msra.mxu0 %v7615
    %10261 = vmatpush.bf16.msra.mxu0 %v7614
    %10262 = vmatpush.bf16.msra.mxu0 %v7613
    %10263 = vmatpush.bf16.msra.mxu0 %v7612
    %10264 = vmatpush.bf16.msra.mxu0 %v7611
    %10265 = vmatpush.bf16.msra.mxu0 %v7610
    %10266 = vmatmul.bf16.gmra.mxu0 %v494
    %v10267 = vpop.f32.mrf.mxu0
    %v10268 = vadd.f32 %v10255, %v10267
    %v10269 = vpop.f32.mrf.mxu0
    %10270 = vdwg.mxu0
    %10271 = vmatpush.bf16.msra.mxu0 %v7625
    %10272 = vmatpush.bf16.msra.mxu0 %v7624
    %10273 = vmatpush.bf16.msra.mxu0 %v7623
    %10274 = vmatpush.bf16.msra.mxu0 %v7622
    %10275 = vmatpush.bf16.msra.mxu0 %v7621
    %10276 = vmatpush.bf16.msra.mxu0 %v7620
    %10277 = vmatpush.bf16.msra.mxu0 %v7619
    %10278 = vmatpush.bf16.msra.mxu0 %v7618
    %10279 = vmatmul.bf16.gmra.mxu0 %v495
    %v10280 = vpop.f32.mrf.mxu0
    %v10281 = vadd.f32 %v10268, %v10280
    %v10282 = vpop.f32.mrf.mxu0
    %10283 = vdwg.mxu0
    %10284 = vmatpush.bf16.msra.mxu0 %v7633
    %10285 = vmatpush.bf16.msra.mxu0 %v7632
    %10286 = vmatpush.bf16.msra.mxu0 %v7631
    %10287 = vmatpush.bf16.msra.mxu0 %v7630
    %10288 = vmatpush.bf16.msra.mxu0 %v7629
    %10289 = vmatpush.bf16.msra.mxu0 %v7628
    %10290 = vmatpush.bf16.msra.mxu0 %v7627
    %10291 = vmatpush.bf16.msra.mxu0 %v7626
    %10292 = vmatmul.bf16.gmra.mxu0 %v496
    %v10293 = vpop.f32.mrf.mxu0
    %v10294 = vadd.f32 %v10281, %v10293
    %v10295 = vpop.f32.mrf.mxu0
    %10296 = vdwg.mxu0
    %10297 = vmatpush.bf16.msra.mxu0 %v7641
    %10298 = vmatpush.bf16.msra.mxu0 %v7640
    %10299 = vmatpush.bf16.msra.mxu0 %v7639
    %10300 = vmatpush.bf16.msra.mxu0 %v7638
    %10301 = vmatpush.bf16.msra.mxu0 %v7637
    %10302 = vmatpush.bf16.msra.mxu0 %v7636
    %10303 = vmatpush.bf16.msra.mxu0 %v7635
    %10304 = vmatpush.bf16.msra.mxu0 %v7634
    %10305 = vmatmul.bf16.gmra.mxu0 %v497
    %v10306 = vpop.f32.mrf.mxu0
    %v10307 = vadd.f32 %v10294, %v10306
    %v10308 = vpop.f32.mrf.mxu0
    %10309 = vdwg.mxu0
    %10310 = vmatpush.bf16.msra.mxu0 %v7649
    %10311 = vmatpush.bf16.msra.mxu0 %v7648
    %10312 = vmatpush.bf16.msra.mxu0 %v7647
    %10313 = vmatpush.bf16.msra.mxu0 %v7646
    %10314 = vmatpush.bf16.msra.mxu0 %v7645
    %10315 = vmatpush.bf16.msra.mxu0 %v7644
    %10316 = vmatpush.bf16.msra.mxu0 %v7643
    %10317 = vmatpush.bf16.msra.mxu0 %v7642
    %10318 = vmatmul.bf16.gmra.mxu0 %v498
    %v10319 = vpop.f32.mrf.mxu0
    %v10320 = vadd.f32 %v10307, %v10319
    %v10321 = vpop.f32.mrf.mxu0
    %10322 = vdwg.mxu0
    %10323 = vmatpush.bf16.msra.mxu0 %v7657
    %10324 = vmatpush.bf16.msra.mxu0 %v7656
    %10325 = vmatpush.bf16.msra.mxu0 %v7655
    %10326 = vmatpush.bf16.msra.mxu0 %v7654
    %10327 = vmatpush.bf16.msra.mxu0 %v7653
    %10328 = vmatpush.bf16.msra.mxu0 %v7652
    %10329 = vmatpush.bf16.msra.mxu0 %v7651
    %10330 = vmatpush.bf16.msra.mxu0 %v7650
    %10331 = vmatmul.bf16.gmra.mxu0 %v499
    %v10332 = vpop.f32.mrf.mxu0
    %v10333 = vadd.f32 %v10320, %v10332
    %v10334 = vpop.f32.mrf.mxu0
    %10335 = vdwg.mxu0
    %10336 = vmatpush.bf16.msra.mxu0 %v7665
    %10337 = vmatpush.bf16.msra.mxu0 %v7664
    %10338 = vmatpush.bf16.msra.mxu0 %v7663
    %10339 = vmatpush.bf16.msra.mxu0 %v7662
    %10340 = vmatpush.bf16.msra.mxu0 %v7661
    %10341 = vmatpush.bf16.msra.mxu0 %v7660
    %10342 = vmatpush.bf16.msra.mxu0 %v7659
    %10343 = vmatpush.bf16.msra.mxu0 %v7658
    %10344 = vmatmul.bf16.gmra.mxu0 %v500
    %v10345 = vpop.f32.mrf.mxu0
    %v10346 = vadd.f32 %v10333, %v10345
    %v10347 = vpop.f32.mrf.mxu0
    %10348 = vdwg.mxu0
    %10349 = vmatpush.bf16.msra.mxu0 %v7673
    %10350 = vmatpush.bf16.msra.mxu0 %v7672
    %10351 = vmatpush.bf16.msra.mxu0 %v7671
    %10352 = vmatpush.bf16.msra.mxu0 %v7670
    %10353 = vmatpush.bf16.msra.mxu0 %v7669
    %10354 = vmatpush.bf16.msra.mxu0 %v7668
    %10355 = vmatpush.bf16.msra.mxu0 %v7667
    %10356 = vmatpush.bf16.msra.mxu0 %v7666
    %10357 = vmatmul.bf16.gmra.mxu0 %v501
    %v10358 = vpop.f32.mrf.mxu0
    %v10359 = vadd.f32 %v10346, %v10358
    %v10360 = vpop.f32.mrf.mxu0
    %10361 = vdwg.mxu0
    %v10362 = vmax.f32 %v10359, 0.0
    %v10363 = vld [vmem:[%s3] sm:$0xff]
    %v10364 = vld [vmem:[%s3 + $0x8] sm:$0xff]
    %v10365 = vld [vmem:[%s3 + $0x10] sm:$0xff]
    %v10366 = vld [vmem:[%s3 + $0x18] sm:$0xff]
    %v10367 = vld [vmem:[%s3 + $0x20] sm:$0xff]
    %v10368 = vld [vmem:[%s3 + $0x28] sm:$0xff]
    %v10369 = vld [vmem:[%s3 + $0x30] sm:$0xff]
    %v10370 = vld [vmem:[%s3 + $0x38] sm:$0xff]
    %v10371 = vld [vmem:[%s3 + $0x40] sm:$0xff]
    %v10372 = vld [vmem:[%s3 + $0x48] sm:$0xff]
    %v10373 = vld [vmem:[%s3 + $0x50] sm:$0xff]
    %v10374 = vld [vmem:[%s3 + $0x58] sm:$0xff]
    %v10375 = vld [vmem:[%s3 + $0x60] sm:$0xf]
    %v10376 = vld [vmem:[%s4] sm:$0x1]
    %v10378 = vperm.slane %v10376, 0
    %vm10380 = vcmask 818176
    %v10382 = vsel %vm10380, %v10362, 0
    %vm10384 = vcmask 1043456
    %v10386 = vsel %vm10384, %v10375, 0
    %10388 = vmatpush.msra.mxu0 0.0
    %10389 = vmatpush.msra.mxu0 0.0
    %10390 = vmatpush.msra.mxu0 0.0
    %10391 = vmatpush.msra.mxu0 %v10386
    %10392 = vmatpush.msra.mxu0 %v10374
    %10393 = vmatpush.msra.mxu0 %v10373
    %10394 = vmatpush.msra.mxu0 %v10372
    %10395 = vmatpush.msra.mxu0 %v10371
    %10396 = vmatpush.msra.mxu0 %v10370
    %10397 = vmatpush.msra.mxu0 %v10369
    %10398 = vmatpush.msra.mxu0 %v10368
    %10399 = vmatpush.msra.mxu0 %v10367
    %10400 = vmatpush.msra.mxu0 %v10366
    %10401 = vmatpush.msra.mxu0 %v10365
    %10402 = vmatpush.msra.mxu0 %v10364
    %10403 = vmatpush.msra.mxu0 %v10363
    %10404 = vmatmul.f32.gmra.mxu0 %v10382
    %v10405 = vpop.f32.mrf.mxu0
    %v10406 = vadd.f32 %v10378, %v10405
    %10407 = vdwg.mxu0
    %10408 = vst [vmem:[#allocation2] sm:$0x3] %v10406
    // Predicated region
    $region22: #{tpu_custom_call.1} parent=1 // pred_check
      _
    $region23: #{tpu_custom_call.1} parent=1 // pred_check_branch
      %10410 = sbr.rel (0) target = $region25
    $region24: #{tpu_custom_call.1} parent=1 // pred_region
      %10412 = vsyncadd [#allocation3], 0
      %s10414 = sshll.u32 [#allocation2], 4
      %s10415 = int_to_ptr.vmem [resolvable:$true] %s10414
      %s10416 = sshll.u32 %s5, 4
      %s10417 = int_to_ptr.hbm [resolvable:$true] %s10416
      %10419 = dma.vmem_to_hbm [thread:$0]  %s10415, 32, %s10417, [#allocation3]
    $region25: #{tpu_custom_call.1} parent=1 // pred_fallthru
      _
    // Predicated region
    $region26: #{tpu_custom_call.1} parent=1 // pred_check
      _
    $region27: #{tpu_custom_call.1} parent=1 // pred_check_branch
      %10421 = sbr.rel (0) target = $region29
    $region28: #{tpu_custom_call.1} parent=1 // pred_region
      %10423 = dma.done [#allocation3], 32
    $region29: #{tpu_custom_call.1} parent=1 // pred_fallthru
      _
    %10424 = vsyncpa [#allocation3], 1

</llo_original>
